<compile_context>
chip_gen: v7x
topology: tpu7x:2x2x1
jax: 0.10.0
libtpu: 0.0.40
codegen_flags: <defaults>
</compile_context>

<pallas_src>
import math

import jax
import jax.numpy as jnp
from jax import lax
from jax.experimental import pallas as pl
from jax.experimental.pallas import tpu as pltpu


_KPARAM_ORDER = (
    "w_emb", "b_emb",
    "wq", "bq", "wk", "bk", "wv", "bv", "wo", "bo",
    "w1", "b1", "w2", "b2",
    "g1", "be1", "g2", "be2",
    "w_out", "b_out",
    "wc1", "bc1", "wc2", "bc2",
)

_GELU_C = math.sqrt(2.0 / math.pi)


def _gelu_tanh(x):
    # tanh-approximate GELU (lowers to the EUP); <=1e-3 abs deviation from
    # PyTorch's default exact-erf GELU.  The reference uses the same formula.
    return 0.5 * x * (1.0 + jnp.tanh(_GELU_C * (x + 0.044715 * x * x * x)))


def _make_kernel(cfg):
    B = cfg["batch_graphs"]
    N = cfg["num_nodes"]
    nh = cfg["nhead"]
    L = cfg["num_layers"]
    H = cfg["hidden_dim"]
    F = cfg["out_feats"]
    T = B * N
    eps = 1e-5

    def mm(a, b):
        return jnp.dot(a, b, preferred_element_type=jnp.float32)

    def layer_norm(x, gamma, beta):
        mu = jnp.mean(x, axis=-1, keepdims=True)
        xc = x - mu
        var = jnp.mean(xc * xc, axis=-1, keepdims=True)
        return xc * lax.rsqrt(var + eps) * gamma + beta

    def kernel(feat_ref, pe_ref, bias_ref,
               wemb_ref, bemb_ref,
               wq_ref, bq_ref, wk_ref, bk_ref, wv_ref, bv_ref, wo_ref, bo_ref,
               w1_ref, b1_ref, w2_ref, b2_ref,
               g1_ref, be1_ref, g2_ref, be2_ref,
               wout_ref, bout_ref,
               wc1_ref, bc1_ref, wc2_ref, bc2_ref,
               node_ref, graph_ref, logit_ref):
        bias = bias_ref[...]                       # (T, T) additive block-diag mask

        # --- input embedding + (host-precomputed) positional encoding ---
        x = mm(feat_ref[...], wemb_ref[...]) + bemb_ref[...] + pe_ref[...]

        # --- transformer encoder layers (static unroll; fine at L=2) ---
        for l in range(L):
            # per-head projections (scale already folded into wq/bq on host)
            v_heads = []
            s_list = []
            for h in range(nh):
                qh = mm(x, wq_ref[l, h]) + bq_ref[l, h]        # (T, hd)
                kh = mm(x, wk_ref[l, h]) + bk_ref[l, h]        # (T, hd)
                vh = mm(x, wv_ref[l, h]) + bv_ref[l, h]        # (T, hd)
                s = lax.dot_general(qh, kh, (((1,), (1,)), ((), ())),
                                    preferred_element_type=jnp.float32)
                s_list.append(s + bias)                        # (T, T)
                v_heads.append(vh)

            # batched softmax over all heads of this layer (sublane concat)
            scores = jnp.concatenate(s_list, axis=0)           # (nh*T, T)
            m = jnp.max(scores, axis=-1, keepdims=True)
            p = jnp.exp(scores - m)
            p = p * pl.reciprocal(jnp.sum(p, axis=-1, keepdims=True), approx=True)

            # fold each head's context straight through its slice of Wo into a
            # lane-dense (T, H) accumulator -> no concatenate, no 32-lane stores
            attn = bo_ref[l]                                   # (1, H), broadcasts
            for h in range(nh):
                oh = mm(p[h * T:(h + 1) * T, :], v_heads[h])   # (T, hd)
                attn = attn + mm(oh, wo_ref[l, h])             # (T, H)

            x = layer_norm(x + attn, g1_ref[l], be1_ref[l])

            ff = _gelu_tanh(mm(x, w1_ref[l]) + b1_ref[l])
            ff = mm(ff, w2_ref[l]) + b2_ref[l]
            x = layer_norm(x + ff, g2_ref[l], be2_ref[l])

        # --- output projection: node embeddings ---
        node = mm(x, wout_ref[...]) + bout_ref[...]
        node_ref[...] = node

        # --- per-graph average pooling (AvgPooling) ---
        gemb = jnp.mean(node.reshape(B, N, F), axis=1)         # (B, out_feats)
        graph_ref[...] = gemb

        # --- classifier head ---
        hc = _gelu_tanh(mm(gemb, wc1_ref[...]) + bc1_ref[...])
        # num_classes=1 -> sub-lane masked store; harmless at this size.
        logit_ref[...] = mm(hc, wc2_ref[...]) + bc2_ref[...]

    return kernel


def graph_transformer_forward(features, pe, attn_bias, kparams, cfg):
    B, N = cfg["batch_graphs"], cfg["num_nodes"]
    T = B * N
    out_shapes = (
        jax.ShapeDtypeStruct((T, cfg["out_feats"]), jnp.float32),    # node embeddings
        jax.ShapeDtypeStruct((B, cfg["out_feats"]), jnp.float32),    # graph embedding
        jax.ShapeDtypeStruct((B, cfg["num_classes"]), jnp.float32),  # logits
    )
    kernel = _make_kernel(cfg)
    inputs = [features, pe, attn_bias] + [kparams[k] for k in _KPARAM_ORDER]
    return pl.pallas_call(
        kernel,
        out_shape=out_shapes,
        # actual footprint is ~2 MiB; 8 MiB documents comfortable headroom on
        # every generation (v5e/v6e/v7x) instead of an arbitrary 32 MiB cap.
        compiler_params=pltpu.CompilerParams(vmem_limit_bytes=8 * 1024 * 1024),
    )(*inputs)


# ----------------------------------------------------------------------------
# Host-side precomputation (perf review: hoist constants / re-layout weights)
# ----------------------------------------------------------------------------
def precompute_position_encoding(params, positions):
    """pe = Linear(1->H/2) -> GELU -> Linear(H/2->H), a per-graph constant."""
    h = jax.nn.gelu(positions @ params["wp1"] + params["bp1"], approximate=False)
    return h @ params["wp2"] + params["bp2"]


def build_attention_bias(mask, cfg):
    """Additive (T, T) block-diagonal bias: 0 on edges/self-loops, -1e9 else."""
    B, N = cfg["batch_graphs"], cfg["num_nodes"]
    T = B * N
    bias = jnp.full((T, T), -1e9, jnp.float32)
    for b in range(B):
        blk = jnp.where(mask[b] > 0, 0.0, -1e9).astype(jnp.float32)
        bias = bias.at[b * N:(b + 1) * N, b * N:(b + 1) * N].set(blk)
    return bias


def prepare_kernel_params(params, cfg):
    """Fold 1/sqrt(hd) into q, split q/k/v (column) and o (row) per head."""
    L, nh = cfg["num_layers"], cfg["nhead"]
    H = cfg["hidden_dim"]
    hd = H // nh
    scale = 1.0 / math.sqrt(hd)

    def split_cols(w):       # (L, H, H) -> (L, nh, H, hd)
        return w.reshape(L, H, nh, hd).transpose(0, 2, 1, 3)

    def split_cols_bias(b):  # (L, 1, H) -> (L, nh, 1, hd)
        return b.reshape(L, 1, nh, hd).transpose(0, 2, 1, 3)

    kp = dict(params)
    # q stays f32 so the scale fold (done in f32) matches the reference exactly
    kp["wq"] = split_cols(params["wq"] * scale)
    kp["bq"] = split_cols_bias(params["bq"] * scale)
    kp["wk"] = split_cols(params["wk"])
    kp["bk"] = split_cols_bias(params["bk"])
    kp["wv"] = split_cols(params["wv"])
    kp["bv"] = split_cols_bias(params["bv"])
    kp["wo"] = params["wo"].reshape(L, nh, hd, H)     # per-head row blocks
    for k in ("wp1", "bp1", "wp2", "bp2"):            # hoisted to the host
        kp.pop(k, None)
    return kp


# ----------------------------------------------------------------------------
# Pure-JAX reference mirroring the PyTorch forward (eval mode)
# ----------------------------------------------------------------------------
def _reference(features, positions, mask, params, cfg):
    B, N, nh, L = (cfg["batch_graphs"], cfg["num_nodes"], cfg["nhead"],
                   cfg["num_layers"])
    H = cfg["hidden_dim"]
    hd = H // nh
    scale = 1.0 / math.sqrt(hd)
    f32 = jnp.float32

    def ln(y, g, b):
        mu = y.mean(-1, keepdims=True)
        var = ((y - mu) ** 2).mean(-1, keepdims=True)
        return (y - mu) / jnp.sqrt(var + 1e-5) * g + b

    def gelu(x):  # same tanh approximation as the kernel
        return jax.nn.gelu(x, approximate=True)

    pe = precompute_position_encoding(params, positions)
    x = features @ params["w_emb"] + params["b_emb"] + pe

    for l in range(L):
        q = (x @ params["wq"][l] + params["bq"][l]).reshape(B, N, nh, hd).transpose(0, 2, 1, 3)
        k = (x @ params["wk"][l].astype(f32) + params["bk"][l]).reshape(B, N, nh, hd).transpose(0, 2, 1, 3)
        v = (x @ params["wv"][l].astype(f32) + params["bv"][l]).reshape(B, N, nh, hd).transpose(0, 2, 1, 3)
        s = jnp.einsum("bhnd,bhmd->bhnm", q, k) * scale
        s = jnp.where(mask[:, None, :, :] > 0, s, -1e9)
        w = jax.nn.softmax(s, axis=-1)
        o = jnp.einsum("bhnm,bhmd->bhnd", w, v).transpose(0, 2, 1, 3).reshape(B * N, H)
        o = o @ params["wo"][l].astype(f32) + params["bo"][l]
        x = ln(x + o, params["g1"][l], params["be1"][l])
        ff = gelu(x @ params["w1"][l].astype(f32) + params["b1"][l])
        ff = ff @ params["w2"][l].astype(f32) + params["b2"][l]
        x = ln(x + ff, params["g2"][l], params["be2"][l])

    node = x @ params["w_out"].astype(f32) + params["b_out"]
    graph = node.reshape(B, N, -1).mean(axis=1)
    hc = gelu(graph @ params["wc1"].astype(f32) + params["bc1"])
    logits = hc @ params["wc2"] + params["bc2"]
    return node, graph, logits


def _init_params(key, cfg):
    H, FF = cfg["hidden_dim"], cfg["dim_feedforward"]
    in_f, out_f, C, L = (cfg["in_feats"], cfg["out_feats"], cfg["num_classes"],
                         cfg["num_layers"])
    H2 = H // 2
    keys = iter(jax.random.split(key, 64))
    bf16 = jnp.bfloat16

    def lin(fan_in, fan_out, wdtype=jnp.float32):
        lim = 1.0 / math.sqrt(fan_in)
        w = jax.random.uniform(next(keys), (fan_in, fan_out), jnp.float32, -lim, lim)
        b = jax.random.uniform(next(keys), (1, fan_out), jnp.float32, -lim, lim)
        return w.astype(wdtype), b

    def stack_lin(fan_in, fan_out, wdtype=jnp.float32):
        ws, bs = zip(*[lin(fan_in, fan_out, wdtype) for _ in range(L)])
        return jnp.stack(ws), jnp.stack(bs)

    p = {}
    p["w_emb"], p["b_emb"] = lin(in_f, H)
    p["wp1"], p["bp1"] = lin(1, H2)
    p["wp2"], p["bp2"] = lin(H2, H)
    # large weights stored bf16 (HBM traffic), biases / q-projection stay f32
    p["wq"], p["bq"] = stack_lin(H, H)
    p["wk"], p["bk"] = stack_lin(H, H, bf16)
    p["wv"], p["bv"] = stack_lin(H, H, bf16)
    p["wo"], p["bo"] = stack_lin(H, H, bf16)
    p["w1"], p["b1"] = stack_lin(H, FF, bf16)
    p["w2"], p["b2"] = stack_lin(FF, H, bf16)
    p["g1"] = 1.0 + 0.1 * jax.random.normal(next(keys), (L, 1, H), jnp.float32)
    p["be1"] = 0.1 * jax.random.normal(next(keys), (L, 1, H), jnp.float32)
    p["g2"] = 1.0 + 0.1 * jax.random.normal(next(keys), (L, 1, H), jnp.float32)
    p["be2"] = 0.1 * jax.random.normal(next(keys), (L, 1, H), jnp.float32)
    p["w_out"], p["b_out"] = lin(H, out_f, bf16)
    p["wc1"], p["bc1"] = lin(out_f, H, bf16)
    p["wc2"], p["bc2"] = lin(H, C)
    return p


if __name__ == "__main__":
    cfg = dict(batch_graphs=2, num_nodes=8, in_feats=16,
               hidden_dim=128, dim_feedforward=256, out_feats=128,
               num_classes=1, nhead=4, num_layers=2)
    B, N = cfg["batch_graphs"], cfg["num_nodes"]
    T = B * N

    key = jax.random.PRNGKey(0)
    k_feat, k_adj, k_par = jax.random.split(key, 3)

    features = jax.random.normal(k_feat, (T, cfg["in_feats"]), jnp.float32)

    # per-graph node positions in [0, 1] (host-side constant)
    pos1 = jnp.arange(N, dtype=jnp.float32) / max(N - 1, 1)
    positions = jnp.tile(pos1, (B,)).reshape(T, 1)

    # dense adjacency standing in for the DGL graph: random edges + self loops
    adj = jax.random.bernoulli(k_adj, 0.3, (B, N, N))
    adj = jnp.logical_or(adj, jnp.eye(N, dtype=bool)[None])
    mask = adj.astype(jnp.float32)

    params = _init_params(k_par, cfg)

    # host-side precompute: positional encoding, additive mask bias, weight re-layout
    pe = precompute_position_encoding(params, positions)
    attn_bias = build_attention_bias(mask, cfg)
    kparams = prepare_kernel_params(params, cfg)

    node, graph, logits = graph_transformer_forward(features, pe, attn_bias,
                                                    kparams, cfg)
    node, graph, logits = jax.block_until_ready((node, graph, logits))

    with jax.default_matmul_precision("float32"):
        node_r, graph_r, logits_r = _reference(features, positions, mask,
                                               params, cfg)

    assert node.shape == (T, cfg["out_feats"])
    assert graph.shape == (B, cfg["out_feats"])
    assert logits.shape == (B, cfg["num_classes"])
    # 2e-3 tolerance: approx-reciprocal softmax + MXU accumulation order vs the
    # XLA f32 reference (weights are bit-identical bf16/f32 on both paths).
    assert jnp.allclose(node, node_r, atol=2e-3, rtol=2e-3), "node embeddings mismatch"
    assert jnp.allclose(graph, graph_r, atol=2e-3, rtol=2e-3), "graph embedding mismatch"
    assert jnp.allclose(logits, logits_r, atol=2e-3, rtol=2e-3), "logits mismatch"

    print("KERNEL_OK")
</pallas_src>

<mosaic_0001>
module attributes {stable_mosaic.version = 11 : i64} {
  func.func @kernel(%arg0: memref<16x16xf32, #tpu.memory_space<vmem>>, %arg1: memref<16x128xf32, #tpu.memory_space<vmem>>, %arg2: memref<16x16xf32, #tpu.memory_space<vmem>>, %arg3: memref<16x128xf32, #tpu.memory_space<vmem>>, %arg4: memref<1x128xf32, #tpu.memory_space<vmem>>, %arg5: memref<2x4x128x32xf32, #tpu.memory_space<vmem>>, %arg6: memref<2x4x1x32xf32, #tpu.memory_space<vmem>>, %arg7: memref<2x4x128x32xbf16, #tpu.memory_space<vmem>>, %arg8: memref<2x4x1x32xf32, #tpu.memory_space<vmem>>, %arg9: memref<2x4x128x32xbf16, #tpu.memory_space<vmem>>, %arg10: memref<2x4x1x32xf32, #tpu.memory_space<vmem>>, %arg11: memref<2x4x32x128xbf16, #tpu.memory_space<vmem>>, %arg12: memref<2x1x128xf32, #tpu.memory_space<vmem>>, %arg13: memref<2x128x256xbf16, #tpu.memory_space<vmem>>, %arg14: memref<2x1x256xf32, #tpu.memory_space<vmem>>, %arg15: memref<2x256x128xbf16, #tpu.memory_space<vmem>>, %arg16: memref<2x1x128xf32, #tpu.memory_space<vmem>>, %arg17: memref<2x1x128xf32, #tpu.memory_space<vmem>>, %arg18: memref<2x1x128xf32, #tpu.memory_space<vmem>>, %arg19: memref<2x1x128xf32, #tpu.memory_space<vmem>>, %arg20: memref<2x1x128xf32, #tpu.memory_space<vmem>>, %arg21: memref<128x128xbf16, #tpu.memory_space<vmem>>, %arg22: memref<1x128xf32, #tpu.memory_space<vmem>>, %arg23: memref<128x128xbf16, #tpu.memory_space<vmem>>, %arg24: memref<1x128xf32, #tpu.memory_space<vmem>>, %arg25: memref<128x1xf32, #tpu.memory_space<vmem>>, %arg26: memref<1x1xf32, #tpu.memory_space<vmem>>, %arg27: memref<16x128xf32, #tpu.memory_space<vmem>>, %arg28: memref<2x128xf32, #tpu.memory_space<vmem>>, %arg29: memref<2x1xf32, #tpu.memory_space<vmem>>) attributes {dimension_semantics = [], scalar_prefetch = 0 : i64, scratch_operands = 0 : i64, tpu.core_type = #tpu.core_type<tc>} {
    %c0 = arith.constant 0 : index
    %c0_0 = arith.constant 0 : index
    %0 = vector.load %arg2[%c0, %c0_0] : memref<16x16xf32, #tpu.memory_space<vmem>>, vector<16x16xf32>
    %c0_1 = arith.constant 0 : index
    %c0_2 = arith.constant 0 : index
    %1 = vector.load %arg0[%c0_1, %c0_2] : memref<16x16xf32, #tpu.memory_space<vmem>>, vector<16x16xf32>
    %c0_3 = arith.constant 0 : index
    %c0_4 = arith.constant 0 : index
    %2 = vector.load %arg3[%c0_3, %c0_4] : memref<16x128xf32, #tpu.memory_space<vmem>>, vector<16x128xf32>
    %cst = arith.constant dense<0.000000e+00> : vector<16x128xf32>
    %3 = tpu.matmul %1, %2, %cst {dimension_numbers = #tpu.dot_dimension_numbers<[1], [0], [0], [1], [0, 0, 1, 1], [], []>} : vector<16x16xf32>, vector<16x128xf32>, vector<16x128xf32> -> vector<16x128xf32>
    %c0_5 = arith.constant 0 : index
    %c0_6 = arith.constant 0 : index
    %4 = vector.load %arg4[%c0_5, %c0_6] : memref<1x128xf32, #tpu.memory_space<vmem>>, vector<1x128xf32>
    %5 = vector.broadcast %4 : vector<1x128xf32> to vector<16x128xf32>
    %6 = arith.addf %3, %5 : vector<16x128xf32>
    %c0_7 = arith.constant 0 : index
    %c0_8 = arith.constant 0 : index
    %7 = vector.load %arg1[%c0_7, %c0_8] : memref<16x128xf32, #tpu.memory_space<vmem>>, vector<16x128xf32>
    %8 = arith.addf %6, %7 : vector<16x128xf32>
    %c0_9 = arith.constant 0 : index
    %c0_10 = arith.constant 0 : index
    %c0_11 = arith.constant 0 : index
    %c0_12 = arith.constant 0 : index
    %9 = vector.load %arg5[%c0_9, %c0_10, %c0_11, %c0_12] : memref<2x4x128x32xf32, #tpu.memory_space<vmem>>, vector<1x1x128x32xf32>
    %10 = vector.shape_cast %9 : vector<1x1x128x32xf32> to vector<128x32xf32>
    %cst_13 = arith.constant dense<0.000000e+00> : vector<16x32xf32>
    %11 = tpu.matmul %8, %10, %cst_13 {dimension_numbers = #tpu.dot_dimension_numbers<[1], [0], [0], [1], [0, 0, 1, 1], [], []>} : vector<16x128xf32>, vector<128x32xf32>, vector<16x32xf32> -> vector<16x32xf32>
    %c0_14 = arith.constant 0 : index
    %c0_15 = arith.constant 0 : index
    %c0_16 = arith.constant 0 : index
    %c0_17 = arith.constant 0 : index
    %12 = vector.load %arg6[%c0_14, %c0_15, %c0_16, %c0_17] : memref<2x4x1x32xf32, #tpu.memory_space<vmem>>, vector<1x1x1x32xf32>
    %13 = vector.shape_cast %12 : vector<1x1x1x32xf32> to vector<1x32xf32>
    %14 = vector.broadcast %13 : vector<1x32xf32> to vector<16x32xf32>
    %15 = arith.addf %11, %14 : vector<16x32xf32>
    %c0_18 = arith.constant 0 : index
    %c0_19 = arith.constant 0 : index
    %c0_20 = arith.constant 0 : index
    %c0_21 = arith.constant 0 : index
    %16 = vector.load %arg7[%c0_18, %c0_19, %c0_20, %c0_21] : memref<2x4x128x32xbf16, #tpu.memory_space<vmem>>, vector<1x1x128x32xbf16>
    %17 = vector.shape_cast %16 : vector<1x1x128x32xbf16> to vector<128x32xbf16>
    %cst_22 = arith.constant dense<0.000000e+00> : vector<16x32xf32>
    %18 = tpu.matmul %8, %17, %cst_22 {dimension_numbers = #tpu.dot_dimension_numbers<[1], [0], [0], [1], [0, 0, 1, 1], [], []>} : vector<16x128xf32>, vector<128x32xbf16>, vector<16x32xf32> -> vector<16x32xf32>
    %c0_23 = arith.constant 0 : index
    %c0_24 = arith.constant 0 : index
    %c0_25 = arith.constant 0 : index
    %c0_26 = arith.constant 0 : index
    %19 = vector.load %arg8[%c0_23, %c0_24, %c0_25, %c0_26] : memref<2x4x1x32xf32, #tpu.memory_space<vmem>>, vector<1x1x1x32xf32>
    %20 = vector.shape_cast %19 : vector<1x1x1x32xf32> to vector<1x32xf32>
    %21 = vector.broadcast %20 : vector<1x32xf32> to vector<16x32xf32>
    %22 = arith.addf %18, %21 : vector<16x32xf32>
    %c0_27 = arith.constant 0 : index
    %c0_28 = arith.constant 0 : index
    %c0_29 = arith.constant 0 : index
    %c0_30 = arith.constant 0 : index
    %23 = vector.load %arg9[%c0_27, %c0_28, %c0_29, %c0_30] : memref<2x4x128x32xbf16, #tpu.memory_space<vmem>>, vector<1x1x128x32xbf16>
    %24 = vector.shape_cast %23 : vector<1x1x128x32xbf16> to vector<128x32xbf16>
    %cst_31 = arith.constant dense<0.000000e+00> : vector<16x32xf32>
    %25 = tpu.matmul %8, %24, %cst_31 {dimension_numbers = #tpu.dot_dimension_numbers<[1], [0], [0], [1], [0, 0, 1, 1], [], []>} : vector<16x128xf32>, vector<128x32xbf16>, vector<16x32xf32> -> vector<16x32xf32>
    %c0_32 = arith.constant 0 : index
    %c0_33 = arith.constant 0 : index
    %c0_34 = arith.constant 0 : index
    %c0_35 = arith.constant 0 : index
    %26 = vector.load %arg10[%c0_32, %c0_33, %c0_34, %c0_35] : memref<2x4x1x32xf32, #tpu.memory_space<vmem>>, vector<1x1x1x32xf32>
    %27 = vector.shape_cast %26 : vector<1x1x1x32xf32> to vector<1x32xf32>
    %28 = vector.broadcast %27 : vector<1x32xf32> to vector<16x32xf32>
    %29 = arith.addf %25, %28 : vector<16x32xf32>
    %cst_36 = arith.constant dense<0.000000e+00> : vector<16x16xf32>
    %30 = tpu.matmul %15, %22, %cst_36 {dimension_numbers = #tpu.dot_dimension_numbers<[1], [1], [0], [0], [0, 0, 1, 0], [], []>} : vector<16x32xf32>, vector<16x32xf32>, vector<16x16xf32> -> vector<16x16xf32>
    %31 = arith.addf %30, %0 : vector<16x16xf32>
    %c0_37 = arith.constant 0 : index
    %c1 = arith.constant 1 : index
    %c0_38 = arith.constant 0 : index
    %c0_39 = arith.constant 0 : index
    %32 = vector.load %arg5[%c0_37, %c1, %c0_38, %c0_39] : memref<2x4x128x32xf32, #tpu.memory_space<vmem>>, vector<1x1x128x32xf32>
    %33 = vector.shape_cast %32 : vector<1x1x128x32xf32> to vector<128x32xf32>
    %cst_40 = arith.constant dense<0.000000e+00> : vector<16x32xf32>
    %34 = tpu.matmul %8, %33, %cst_40 {dimension_numbers = #tpu.dot_dimension_numbers<[1], [0], [0], [1], [0, 0, 1, 1], [], []>} : vector<16x128xf32>, vector<128x32xf32>, vector<16x32xf32> -> vector<16x32xf32>
    %c0_41 = arith.constant 0 : index
    %c1_42 = arith.constant 1 : index
    %c0_43 = arith.constant 0 : index
    %c0_44 = arith.constant 0 : index
    %35 = vector.load %arg6[%c0_41, %c1_42, %c0_43, %c0_44] : memref<2x4x1x32xf32, #tpu.memory_space<vmem>>, vector<1x1x1x32xf32>
    %36 = vector.shape_cast %35 : vector<1x1x1x32xf32> to vector<1x32xf32>
    %37 = vector.broadcast %36 : vector<1x32xf32> to vector<16x32xf32>
    %38 = arith.addf %34, %37 : vector<16x32xf32>
    %c0_45 = arith.constant 0 : index
    %c1_46 = arith.constant 1 : index
    %c0_47 = arith.constant 0 : index
    %c0_48 = arith.constant 0 : index
    %39 = vector.load %arg7[%c0_45, %c1_46, %c0_47, %c0_48] : memref<2x4x128x32xbf16, #tpu.memory_space<vmem>>, vector<1x1x128x32xbf16>
    %40 = vector.shape_cast %39 : vector<1x1x128x32xbf16> to vector<128x32xbf16>
    %cst_49 = arith.constant dense<0.000000e+00> : vector<16x32xf32>
    %41 = tpu.matmul %8, %40, %cst_49 {dimension_numbers = #tpu.dot_dimension_numbers<[1], [0], [0], [1], [0, 0, 1, 1], [], []>} : vector<16x128xf32>, vector<128x32xbf16>, vector<16x32xf32> -> vector<16x32xf32>
    %c0_50 = arith.constant 0 : index
    %c1_51 = arith.constant 1 : index
    %c0_52 = arith.constant 0 : index
    %c0_53 = arith.constant 0 : index
    %42 = vector.load %arg8[%c0_50, %c1_51, %c0_52, %c0_53] : memref<2x4x1x32xf32, #tpu.memory_space<vmem>>, vector<1x1x1x32xf32>
    %43 = vector.shape_cast %42 : vector<1x1x1x32xf32> to vector<1x32xf32>
    %44 = vector.broadcast %43 : vector<1x32xf32> to vector<16x32xf32>
    %45 = arith.addf %41, %44 : vector<16x32xf32>
    %c0_54 = arith.constant 0 : index
    %c1_55 = arith.constant 1 : index
    %c0_56 = arith.constant 0 : index
    %c0_57 = arith.constant 0 : index
    %46 = vector.load %arg9[%c0_54, %c1_55, %c0_56, %c0_57] : memref<2x4x128x32xbf16, #tpu.memory_space<vmem>>, vector<1x1x128x32xbf16>
    %47 = vector.shape_cast %46 : vector<1x1x128x32xbf16> to vector<128x32xbf16>
    %cst_58 = arith.constant dense<0.000000e+00> : vector<16x32xf32>
    %48 = tpu.matmul %8, %47, %cst_58 {dimension_numbers = #tpu.dot_dimension_numbers<[1], [0], [0], [1], [0, 0, 1, 1], [], []>} : vector<16x128xf32>, vector<128x32xbf16>, vector<16x32xf32> -> vector<16x32xf32>
    %c0_59 = arith.constant 0 : index
    %c1_60 = arith.constant 1 : index
    %c0_61 = arith.constant 0 : index
    %c0_62 = arith.constant 0 : index
    %49 = vector.load %arg10[%c0_59, %c1_60, %c0_61, %c0_62] : memref<2x4x1x32xf32, #tpu.memory_space<vmem>>, vector<1x1x1x32xf32>
    %50 = vector.shape_cast %49 : vector<1x1x1x32xf32> to vector<1x32xf32>
    %51 = vector.broadcast %50 : vector<1x32xf32> to vector<16x32xf32>
    %52 = arith.addf %48, %51 : vector<16x32xf32>
    %cst_63 = arith.constant dense<0.000000e+00> : vector<16x16xf32>
    %53 = tpu.matmul %38, %45, %cst_63 {dimension_numbers = #tpu.dot_dimension_numbers<[1], [1], [0], [0], [0, 0, 1, 0], [], []>} : vector<16x32xf32>, vector<16x32xf32>, vector<16x16xf32> -> vector<16x16xf32>
    %54 = arith.addf %53, %0 : vector<16x16xf32>
    %c0_64 = arith.constant 0 : index
    %c2 = arith.constant 2 : index
    %c0_65 = arith.constant 0 : index
    %c0_66 = arith.constant 0 : index
    %55 = vector.load %arg5[%c0_64, %c2, %c0_65, %c0_66] : memref<2x4x128x32xf32, #tpu.memory_space<vmem>>, vector<1x1x128x32xf32>
    %56 = vector.shape_cast %55 : vector<1x1x128x32xf32> to vector<128x32xf32>
    %cst_67 = arith.constant dense<0.000000e+00> : vector<16x32xf32>
    %57 = tpu.matmul %8, %56, %cst_67 {dimension_numbers = #tpu.dot_dimension_numbers<[1], [0], [0], [1], [0, 0, 1, 1], [], []>} : vector<16x128xf32>, vector<128x32xf32>, vector<16x32xf32> -> vector<16x32xf32>
    %c0_68 = arith.constant 0 : index
    %c2_69 = arith.constant 2 : index
    %c0_70 = arith.constant 0 : index
    %c0_71 = arith.constant 0 : index
    %58 = vector.load %arg6[%c0_68, %c2_69, %c0_70, %c0_71] : memref<2x4x1x32xf32, #tpu.memory_space<vmem>>, vector<1x1x1x32xf32>
    %59 = vector.shape_cast %58 : vector<1x1x1x32xf32> to vector<1x32xf32>
    %60 = vector.broadcast %59 : vector<1x32xf32> to vector<16x32xf32>
    %61 = arith.addf %57, %60 : vector<16x32xf32>
    %c0_72 = arith.constant 0 : index
    %c2_73 = arith.constant 2 : index
    %c0_74 = arith.constant 0 : index
    %c0_75 = arith.constant 0 : index
    %62 = vector.load %arg7[%c0_72, %c2_73, %c0_74, %c0_75] : memref<2x4x128x32xbf16, #tpu.memory_space<vmem>>, vector<1x1x128x32xbf16>
    %63 = vector.shape_cast %62 : vector<1x1x128x32xbf16> to vector<128x32xbf16>
    %cst_76 = arith.constant dense<0.000000e+00> : vector<16x32xf32>
    %64 = tpu.matmul %8, %63, %cst_76 {dimension_numbers = #tpu.dot_dimension_numbers<[1], [0], [0], [1], [0, 0, 1, 1], [], []>} : vector<16x128xf32>, vector<128x32xbf16>, vector<16x32xf32> -> vector<16x32xf32>
    %c0_77 = arith.constant 0 : index
    %c2_78 = arith.constant 2 : index
    %c0_79 = arith.constant 0 : index
    %c0_80 = arith.constant 0 : index
    %65 = vector.load %arg8[%c0_77, %c2_78, %c0_79, %c0_80] : memref<2x4x1x32xf32, #tpu.memory_space<vmem>>, vector<1x1x1x32xf32>
    %66 = vector.shape_cast %65 : vector<1x1x1x32xf32> to vector<1x32xf32>
    %67 = vector.broadcast %66 : vector<1x32xf32> to vector<16x32xf32>
    %68 = arith.addf %64, %67 : vector<16x32xf32>
    %c0_81 = arith.constant 0 : index
    %c2_82 = arith.constant 2 : index
    %c0_83 = arith.constant 0 : index
    %c0_84 = arith.constant 0 : index
    %69 = vector.load %arg9[%c0_81, %c2_82, %c0_83, %c0_84] : memref<2x4x128x32xbf16, #tpu.memory_space<vmem>>, vector<1x1x128x32xbf16>
    %70 = vector.shape_cast %69 : vector<1x1x128x32xbf16> to vector<128x32xbf16>
    %cst_85 = arith.constant dense<0.000000e+00> : vector<16x32xf32>
    %71 = tpu.matmul %8, %70, %cst_85 {dimension_numbers = #tpu.dot_dimension_numbers<[1], [0], [0], [1], [0, 0, 1, 1], [], []>} : vector<16x128xf32>, vector<128x32xbf16>, vector<16x32xf32> -> vector<16x32xf32>
    %c0_86 = arith.constant 0 : index
    %c2_87 = arith.constant 2 : index
    %c0_88 = arith.constant 0 : index
    %c0_89 = arith.constant 0 : index
    %72 = vector.load %arg10[%c0_86, %c2_87, %c0_88, %c0_89] : memref<2x4x1x32xf32, #tpu.memory_space<vmem>>, vector<1x1x1x32xf32>
    %73 = vector.shape_cast %72 : vector<1x1x1x32xf32> to vector<1x32xf32>
    %74 = vector.broadcast %73 : vector<1x32xf32> to vector<16x32xf32>
    %75 = arith.addf %71, %74 : vector<16x32xf32>
    %cst_90 = arith.constant dense<0.000000e+00> : vector<16x16xf32>
    %76 = tpu.matmul %61, %68, %cst_90 {dimension_numbers = #tpu.dot_dimension_numbers<[1], [1], [0], [0], [0, 0, 1, 0], [], []>} : vector<16x32xf32>, vector<16x32xf32>, vector<16x16xf32> -> vector<16x16xf32>
    %77 = arith.addf %76, %0 : vector<16x16xf32>
    %c0_91 = arith.constant 0 : index
    %c3 = arith.constant 3 : index
    %c0_92 = arith.constant 0 : index
    %c0_93 = arith.constant 0 : index
    %78 = vector.load %arg5[%c0_91, %c3, %c0_92, %c0_93] : memref<2x4x128x32xf32, #tpu.memory_space<vmem>>, vector<1x1x128x32xf32>
    %79 = vector.shape_cast %78 : vector<1x1x128x32xf32> to vector<128x32xf32>
    %cst_94 = arith.constant dense<0.000000e+00> : vector<16x32xf32>
    %80 = tpu.matmul %8, %79, %cst_94 {dimension_numbers = #tpu.dot_dimension_numbers<[1], [0], [0], [1], [0, 0, 1, 1], [], []>} : vector<16x128xf32>, vector<128x32xf32>, vector<16x32xf32> -> vector<16x32xf32>
    %c0_95 = arith.constant 0 : index
    %c3_96 = arith.constant 3 : index
    %c0_97 = arith.constant 0 : index
    %c0_98 = arith.constant 0 : index
    %81 = vector.load %arg6[%c0_95, %c3_96, %c0_97, %c0_98] : memref<2x4x1x32xf32, #tpu.memory_space<vmem>>, vector<1x1x1x32xf32>
    %82 = vector.shape_cast %81 : vector<1x1x1x32xf32> to vector<1x32xf32>
    %83 = vector.broadcast %82 : vector<1x32xf32> to vector<16x32xf32>
    %84 = arith.addf %80, %83 : vector<16x32xf32>
    %c0_99 = arith.constant 0 : index
    %c3_100 = arith.constant 3 : index
    %c0_101 = arith.constant 0 : index
    %c0_102 = arith.constant 0 : index
    %85 = vector.load %arg7[%c0_99, %c3_100, %c0_101, %c0_102] : memref<2x4x128x32xbf16, #tpu.memory_space<vmem>>, vector<1x1x128x32xbf16>
    %86 = vector.shape_cast %85 : vector<1x1x128x32xbf16> to vector<128x32xbf16>
    %cst_103 = arith.constant dense<0.000000e+00> : vector<16x32xf32>
    %87 = tpu.matmul %8, %86, %cst_103 {dimension_numbers = #tpu.dot_dimension_numbers<[1], [0], [0], [1], [0, 0, 1, 1], [], []>} : vector<16x128xf32>, vector<128x32xbf16>, vector<16x32xf32> -> vector<16x32xf32>
    %c0_104 = arith.constant 0 : index
    %c3_105 = arith.constant 3 : index
    %c0_106 = arith.constant 0 : index
    %c0_107 = arith.constant 0 : index
    %88 = vector.load %arg8[%c0_104, %c3_105, %c0_106, %c0_107] : memref<2x4x1x32xf32, #tpu.memory_space<vmem>>, vector<1x1x1x32xf32>
    %89 = vector.shape_cast %88 : vector<1x1x1x32xf32> to vector<1x32xf32>
    %90 = vector.broadcast %89 : vector<1x32xf32> to vector<16x32xf32>
    %91 = arith.addf %87, %90 : vector<16x32xf32>
    %c0_108 = arith.constant 0 : index
    %c3_109 = arith.constant 3 : index
    %c0_110 = arith.constant 0 : index
    %c0_111 = arith.constant 0 : index
    %92 = vector.load %arg9[%c0_108, %c3_109, %c0_110, %c0_111] : memref<2x4x128x32xbf16, #tpu.memory_space<vmem>>, vector<1x1x128x32xbf16>
    %93 = vector.shape_cast %92 : vector<1x1x128x32xbf16> to vector<128x32xbf16>
    %cst_112 = arith.constant dense<0.000000e+00> : vector<16x32xf32>
    %94 = tpu.matmul %8, %93, %cst_112 {dimension_numbers = #tpu.dot_dimension_numbers<[1], [0], [0], [1], [0, 0, 1, 1], [], []>} : vector<16x128xf32>, vector<128x32xbf16>, vector<16x32xf32> -> vector<16x32xf32>
    %c0_113 = arith.constant 0 : index
    %c3_114 = arith.constant 3 : index
    %c0_115 = arith.constant 0 : index
    %c0_116 = arith.constant 0 : index
    %95 = vector.load %arg10[%c0_113, %c3_114, %c0_115, %c0_116] : memref<2x4x1x32xf32, #tpu.memory_space<vmem>>, vector<1x1x1x32xf32>
    %96 = vector.shape_cast %95 : vector<1x1x1x32xf32> to vector<1x32xf32>
    %97 = vector.broadcast %96 : vector<1x32xf32> to vector<16x32xf32>
    %98 = arith.addf %94, %97 : vector<16x32xf32>
    %cst_117 = arith.constant dense<0.000000e+00> : vector<16x16xf32>
    %99 = tpu.matmul %84, %91, %cst_117 {dimension_numbers = #tpu.dot_dimension_numbers<[1], [1], [0], [0], [0, 0, 1, 0], [], []>} : vector<16x32xf32>, vector<16x32xf32>, vector<16x16xf32> -> vector<16x16xf32>
    %100 = arith.addf %99, %0 : vector<16x16xf32>
    %101 = tpu.concatenate %31, %54, %77, %100 in 0 : vector<16x16xf32>, vector<16x16xf32>, vector<16x16xf32>, vector<16x16xf32> -> vector<64x16xf32>
    %cst_118 = arith.constant dense<0xFF800000> : vector<64xf32>
    %102 = vector.multi_reduction <maximumf>, %101, %cst_118 [1] : vector<64x16xf32> to vector<64xf32>
    %103 = vector.shape_cast %102 : vector<64xf32> to vector<64x1xf32>
    %104 = vector.broadcast %103 : vector<64x1xf32> to vector<64x16xf32>
    %105 = arith.subf %101, %104 : vector<64x16xf32>
    %106 = math.exp %105 : vector<64x16xf32>
    %cst_119 = arith.constant dense<0.000000e+00> : vector<64xf32>
    %107 = vector.multi_reduction <add>, %106, %cst_119 [1] : vector<64x16xf32> to vector<64xf32>
    %108 = vector.shape_cast %107 : vector<64xf32> to vector<64x1xf32>
    %109 = tpu.reciprocal %108 {approx = true} : vector<64x1xf32> -> vector<64x1xf32>
    %110 = vector.broadcast %109 : vector<64x1xf32> to vector<64x16xf32>
    %111 = arith.mulf %106, %110 : vector<64x16xf32>
    %c0_120 = arith.constant 0 : index
    %c0_121 = arith.constant 0 : index
    %c0_122 = arith.constant 0 : index
    %112 = vector.load %arg12[%c0_120, %c0_121, %c0_122] : memref<2x1x128xf32, #tpu.memory_space<vmem>>, vector<1x1x128xf32>
    %113 = vector.shape_cast %112 : vector<1x1x128xf32> to vector<1x128xf32>
    %114 = vector.extract_strided_slice %111 {offsets = [0, 0], sizes = [16, 16], strides = [1, 1]} : vector<64x16xf32> to vector<16x16xf32>
    %cst_123 = arith.constant dense<0.000000e+00> : vector<16x32xf32>
    %115 = tpu.matmul %114, %29, %cst_123 {dimension_numbers = #tpu.dot_dimension_numbers<[1], [0], [0], [1], [0, 0, 1, 1], [], []>} : vector<16x16xf32>, vector<16x32xf32>, vector<16x32xf32> -> vector<16x32xf32>
    %c0_124 = arith.constant 0 : index
    %c0_125 = arith.constant 0 : index
    %c0_126 = arith.constant 0 : index
    %c0_127 = arith.constant 0 : index
    %116 = vector.load %arg11[%c0_124, %c0_125, %c0_126, %c0_127] : memref<2x4x32x128xbf16, #tpu.memory_space<vmem>>, vector<1x1x32x128xbf16>
    %117 = vector.shape_cast %116 : vector<1x1x32x128xbf16> to vector<32x128xbf16>
    %cst_128 = arith.constant dense<0.000000e+00> : vector<16x128xf32>
    %118 = tpu.matmul %115, %117, %cst_128 {dimension_numbers = #tpu.dot_dimension_numbers<[1], [0], [0], [1], [0, 0, 1, 1], [], []>} : vector<16x32xf32>, vector<32x128xbf16>, vector<16x128xf32> -> vector<16x128xf32>
    %119 = vector.broadcast %113 : vector<1x128xf32> to vector<16x128xf32>
    %120 = arith.addf %119, %118 : vector<16x128xf32>
    %121 = vector.extract_strided_slice %111 {offsets = [16, 0], sizes = [16, 16], strides = [1, 1]} : vector<64x16xf32> to vector<16x16xf32>
    %cst_129 = arith.constant dense<0.000000e+00> : vector<16x32xf32>
    %122 = tpu.matmul %121, %52, %cst_129 {dimension_numbers = #tpu.dot_dimension_numbers<[1], [0], [0], [1], [0, 0, 1, 1], [], []>} : vector<16x16xf32>, vector<16x32xf32>, vector<16x32xf32> -> vector<16x32xf32>
    %c0_130 = arith.constant 0 : index
    %c1_131 = arith.constant 1 : index
    %c0_132 = arith.constant 0 : index
    %c0_133 = arith.constant 0 : index
    %123 = vector.load %arg11[%c0_130, %c1_131, %c0_132, %c0_133] : memref<2x4x32x128xbf16, #tpu.memory_space<vmem>>, vector<1x1x32x128xbf16>
    %124 = vector.shape_cast %123 : vector<1x1x32x128xbf16> to vector<32x128xbf16>
    %cst_134 = arith.constant dense<0.000000e+00> : vector<16x128xf32>
    %125 = tpu.matmul %122, %124, %cst_134 {dimension_numbers = #tpu.dot_dimension_numbers<[1], [0], [0], [1], [0, 0, 1, 1], [], []>} : vector<16x32xf32>, vector<32x128xbf16>, vector<16x128xf32> -> vector<16x128xf32>
    %126 = arith.addf %120, %125 : vector<16x128xf32>
    %127 = vector.extract_strided_slice %111 {offsets = [32, 0], sizes = [16, 16], strides = [1, 1]} : vector<64x16xf32> to vector<16x16xf32>
    %cst_135 = arith.constant dense<0.000000e+00> : vector<16x32xf32>
    %128 = tpu.matmul %127, %75, %cst_135 {dimension_numbers = #tpu.dot_dimension_numbers<[1], [0], [0], [1], [0, 0, 1, 1], [], []>} : vector<16x16xf32>, vector<16x32xf32>, vector<16x32xf32> -> vector<16x32xf32>
    %c0_136 = arith.constant 0 : index
    %c2_137 = arith.constant 2 : index
    %c0_138 = arith.constant 0 : index
    %c0_139 = arith.constant 0 : index
    %129 = vector.load %arg11[%c0_136, %c2_137, %c0_138, %c0_139] : memref<2x4x32x128xbf16, #tpu.memory_space<vmem>>, vector<1x1x32x128xbf16>
    %130 = vector.shape_cast %129 : vector<1x1x32x128xbf16> to vector<32x128xbf16>
    %cst_140 = arith.constant dense<0.000000e+00> : vector<16x128xf32>
    %131 = tpu.matmul %128, %130, %cst_140 {dimension_numbers = #tpu.dot_dimension_numbers<[1], [0], [0], [1], [0, 0, 1, 1], [], []>} : vector<16x32xf32>, vector<32x128xbf16>, vector<16x128xf32> -> vector<16x128xf32>
    %132 = arith.addf %126, %131 : vector<16x128xf32>
    %133 = vector.extract_strided_slice %111 {offsets = [48, 0], sizes = [16, 16], strides = [1, 1]} : vector<64x16xf32> to vector<16x16xf32>
    %cst_141 = arith.constant dense<0.000000e+00> : vector<16x32xf32>
    %134 = tpu.matmul %133, %98, %cst_141 {dimension_numbers = #tpu.dot_dimension_numbers<[1], [0], [0], [1], [0, 0, 1, 1], [], []>} : vector<16x16xf32>, vector<16x32xf32>, vector<16x32xf32> -> vector<16x32xf32>
    %c0_142 = arith.constant 0 : index
    %c3_143 = arith.constant 3 : index
    %c0_144 = arith.constant 0 : index
    %c0_145 = arith.constant 0 : index
    %135 = vector.load %arg11[%c0_142, %c3_143, %c0_144, %c0_145] : memref<2x4x32x128xbf16, #tpu.memory_space<vmem>>, vector<1x1x32x128xbf16>
    %136 = vector.shape_cast %135 : vector<1x1x32x128xbf16> to vector<32x128xbf16>
    %cst_146 = arith.constant dense<0.000000e+00> : vector<16x128xf32>
    %137 = tpu.matmul %134, %136, %cst_146 {dimension_numbers = #tpu.dot_dimension_numbers<[1], [0], [0], [1], [0, 0, 1, 1], [], []>} : vector<16x32xf32>, vector<32x128xbf16>, vector<16x128xf32> -> vector<16x128xf32>
    %138 = arith.addf %132, %137 : vector<16x128xf32>
    %139 = arith.addf %8, %138 : vector<16x128xf32>
    %c0_147 = arith.constant 0 : index
    %c0_148 = arith.constant 0 : index
    %c0_149 = arith.constant 0 : index
    %140 = vector.load %arg17[%c0_147, %c0_148, %c0_149] : memref<2x1x128xf32, #tpu.memory_space<vmem>>, vector<1x1x128xf32>
    %141 = vector.shape_cast %140 : vector<1x1x128xf32> to vector<1x128xf32>
    %c0_150 = arith.constant 0 : index
    %c0_151 = arith.constant 0 : index
    %c0_152 = arith.constant 0 : index
    %142 = vector.load %arg18[%c0_150, %c0_151, %c0_152] : memref<2x1x128xf32, #tpu.memory_space<vmem>>, vector<1x1x128xf32>
    %143 = vector.shape_cast %142 : vector<1x1x128xf32> to vector<1x128xf32>
    %cst_153 = arith.constant dense<0.000000e+00> : vector<16xf32>
    %144 = vector.multi_reduction <add>, %139, %cst_153 [1] : vector<16x128xf32> to vector<16xf32>
    %145 = vector.shape_cast %144 : vector<16xf32> to vector<16x1xf32>
    %cst_154 = arith.constant 1.280000e+02 : f32
    %146 = vector.broadcast %cst_154 : f32 to vector<16x1xf32>
    %147 = arith.divf %145, %146 : vector<16x1xf32>
    %148 = vector.broadcast %147 : vector<16x1xf32> to vector<16x128xf32>
    %149 = arith.subf %139, %148 : vector<16x128xf32>
    %150 = arith.mulf %149, %149 : vector<16x128xf32>
    %cst_155 = arith.constant dense<0.000000e+00> : vector<16xf32>
    %151 = vector.multi_reduction <add>, %150, %cst_155 [1] : vector<16x128xf32> to vector<16xf32>
    %152 = vector.shape_cast %151 : vector<16xf32> to vector<16x1xf32>
    %cst_156 = arith.constant 1.280000e+02 : f32
    %153 = vector.broadcast %cst_156 : f32 to vector<16x1xf32>
    %154 = arith.divf %152, %153 : vector<16x1xf32>
    %cst_157 = arith.constant 9.99999974E-6 : f32
    %155 = vector.broadcast %cst_157 : f32 to vector<16x1xf32>
    %156 = arith.addf %154, %155 : vector<16x1xf32>
    %157 = math.rsqrt %156 : vector<16x1xf32>
    %158 = vector.broadcast %157 : vector<16x1xf32> to vector<16x128xf32>
    %159 = arith.mulf %149, %158 : vector<16x128xf32>
    %160 = vector.broadcast %141 : vector<1x128xf32> to vector<16x128xf32>
    %161 = arith.mulf %159, %160 : vector<16x128xf32>
    %162 = vector.broadcast %143 : vector<1x128xf32> to vector<16x128xf32>
    %163 = arith.addf %161, %162 : vector<16x128xf32>
    %c0_158 = arith.constant 0 : index
    %c0_159 = arith.constant 0 : index
    %c0_160 = arith.constant 0 : index
    %164 = vector.load %arg13[%c0_158, %c0_159, %c0_160] : memref<2x128x256xbf16, #tpu.memory_space<vmem>>, vector<1x128x256xbf16>
    %165 = vector.shape_cast %164 : vector<1x128x256xbf16> to vector<128x256xbf16>
    %cst_161 = arith.constant dense<0.000000e+00> : vector<16x256xf32>
    %166 = tpu.matmul %163, %165, %cst_161 {dimension_numbers = #tpu.dot_dimension_numbers<[1], [0], [0], [1], [0, 0, 1, 1], [], []>} : vector<16x128xf32>, vector<128x256xbf16>, vector<16x256xf32> -> vector<16x256xf32>
    %c0_162 = arith.constant 0 : index
    %c0_163 = arith.constant 0 : index
    %c0_164 = arith.constant 0 : index
    %167 = vector.load %arg14[%c0_162, %c0_163, %c0_164] : memref<2x1x256xf32, #tpu.memory_space<vmem>>, vector<1x1x256xf32>
    %168 = vector.shape_cast %167 : vector<1x1x256xf32> to vector<1x256xf32>
    %169 = vector.broadcast %168 : vector<1x256xf32> to vector<16x256xf32>
    %170 = arith.addf %166, %169 : vector<16x256xf32>
    %cst_165 = arith.constant 5.000000e-01 : f32
    %171 = vector.broadcast %cst_165 : f32 to vector<16x256xf32>
    %172 = arith.mulf %171, %170 : vector<16x256xf32>
    %cst_166 = arith.constant 4.471500e-02 : f32
    %173 = vector.broadcast %cst_166 : f32 to vector<16x256xf32>
    %174 = arith.mulf %173, %170 : vector<16x256xf32>
    %175 = arith.mulf %174, %170 : vector<16x256xf32>
    %176 = arith.mulf %175, %170 : vector<16x256xf32>
    %177 = arith.addf %170, %176 : vector<16x256xf32>
    %cst_167 = arith.constant 0.797884583 : f32
    %178 = vector.broadcast %cst_167 : f32 to vector<16x256xf32>
    %179 = arith.mulf %178, %177 : vector<16x256xf32>
    %180 = math.tanh %179 : vector<16x256xf32>
    %cst_168 = arith.constant 1.000000e+00 : f32
    %181 = vector.broadcast %cst_168 : f32 to vector<16x256xf32>
    %182 = arith.addf %181, %180 : vector<16x256xf32>
    %183 = arith.mulf %172, %182 : vector<16x256xf32>
    %c0_169 = arith.constant 0 : index
    %c0_170 = arith.constant 0 : index
    %c0_171 = arith.constant 0 : index
    %184 = vector.load %arg15[%c0_169, %c0_170, %c0_171] : memref<2x256x128xbf16, #tpu.memory_space<vmem>>, vector<1x256x128xbf16>
    %185 = vector.shape_cast %184 : vector<1x256x128xbf16> to vector<256x128xbf16>
    %cst_172 = arith.constant dense<0.000000e+00> : vector<16x128xf32>
    %186 = tpu.matmul %183, %185, %cst_172 {dimension_numbers = #tpu.dot_dimension_numbers<[1], [0], [0], [1], [0, 0, 1, 1], [], []>} : vector<16x256xf32>, vector<256x128xbf16>, vector<16x128xf32> -> vector<16x128xf32>
    %c0_173 = arith.constant 0 : index
    %c0_174 = arith.constant 0 : index
    %c0_175 = arith.constant 0 : index
    %187 = vector.load %arg16[%c0_173, %c0_174, %c0_175] : memref<2x1x128xf32, #tpu.memory_space<vmem>>, vector<1x1x128xf32>
    %188 = vector.shape_cast %187 : vector<1x1x128xf32> to vector<1x128xf32>
    %189 = vector.broadcast %188 : vector<1x128xf32> to vector<16x128xf32>
    %190 = arith.addf %186, %189 : vector<16x128xf32>
    %191 = arith.addf %163, %190 : vector<16x128xf32>
    %c0_176 = arith.constant 0 : index
    %c0_177 = arith.constant 0 : index
    %c0_178 = arith.constant 0 : index
    %192 = vector.load %arg19[%c0_176, %c0_177, %c0_178] : memref<2x1x128xf32, #tpu.memory_space<vmem>>, vector<1x1x128xf32>
    %193 = vector.shape_cast %192 : vector<1x1x128xf32> to vector<1x128xf32>
    %c0_179 = arith.constant 0 : index
    %c0_180 = arith.constant 0 : index
    %c0_181 = arith.constant 0 : index
    %194 = vector.load %arg20[%c0_179, %c0_180, %c0_181] : memref<2x1x128xf32, #tpu.memory_space<vmem>>, vector<1x1x128xf32>
    %195 = vector.shape_cast %194 : vector<1x1x128xf32> to vector<1x128xf32>
    %cst_182 = arith.constant dense<0.000000e+00> : vector<16xf32>
    %196 = vector.multi_reduction <add>, %191, %cst_182 [1] : vector<16x128xf32> to vector<16xf32>
    %197 = vector.shape_cast %196 : vector<16xf32> to vector<16x1xf32>
    %cst_183 = arith.constant 1.280000e+02 : f32
    %198 = vector.broadcast %cst_183 : f32 to vector<16x1xf32>
    %199 = arith.divf %197, %198 : vector<16x1xf32>
    %200 = vector.broadcast %199 : vector<16x1xf32> to vector<16x128xf32>
    %201 = arith.subf %191, %200 : vector<16x128xf32>
    %202 = arith.mulf %201, %201 : vector<16x128xf32>
    %cst_184 = arith.constant dense<0.000000e+00> : vector<16xf32>
    %203 = vector.multi_reduction <add>, %202, %cst_184 [1] : vector<16x128xf32> to vector<16xf32>
    %204 = vector.shape_cast %203 : vector<16xf32> to vector<16x1xf32>
    %cst_185 = arith.constant 1.280000e+02 : f32
    %205 = vector.broadcast %cst_185 : f32 to vector<16x1xf32>
    %206 = arith.divf %204, %205 : vector<16x1xf32>
    %cst_186 = arith.constant 9.99999974E-6 : f32
    %207 = vector.broadcast %cst_186 : f32 to vector<16x1xf32>
    %208 = arith.addf %206, %207 : vector<16x1xf32>
    %209 = math.rsqrt %208 : vector<16x1xf32>
    %210 = vector.broadcast %209 : vector<16x1xf32> to vector<16x128xf32>
    %211 = arith.mulf %201, %210 : vector<16x128xf32>
    %212 = vector.broadcast %193 : vector<1x128xf32> to vector<16x128xf32>
    %213 = arith.mulf %211, %212 : vector<16x128xf32>
    %214 = vector.broadcast %195 : vector<1x128xf32> to vector<16x128xf32>
    %215 = arith.addf %213, %214 : vector<16x128xf32>
    %c1_187 = arith.constant 1 : index
    %c0_188 = arith.constant 0 : index
    %c0_189 = arith.constant 0 : index
    %c0_190 = arith.constant 0 : index
    %216 = vector.load %arg5[%c1_187, %c0_188, %c0_189, %c0_190] : memref<2x4x128x32xf32, #tpu.memory_space<vmem>>, vector<1x1x128x32xf32>
    %217 = vector.shape_cast %216 : vector<1x1x128x32xf32> to vector<128x32xf32>
    %cst_191 = arith.constant dense<0.000000e+00> : vector<16x32xf32>
    %218 = tpu.matmul %215, %217, %cst_191 {dimension_numbers = #tpu.dot_dimension_numbers<[1], [0], [0], [1], [0, 0, 1, 1], [], []>} : vector<16x128xf32>, vector<128x32xf32>, vector<16x32xf32> -> vector<16x32xf32>
    %c1_192 = arith.constant 1 : index
    %c0_193 = arith.constant 0 : index
    %c0_194 = arith.constant 0 : index
    %c0_195 = arith.constant 0 : index
    %219 = vector.load %arg6[%c1_192, %c0_193, %c0_194, %c0_195] : memref<2x4x1x32xf32, #tpu.memory_space<vmem>>, vector<1x1x1x32xf32>
    %220 = vector.shape_cast %219 : vector<1x1x1x32xf32> to vector<1x32xf32>
    %221 = vector.broadcast %220 : vector<1x32xf32> to vector<16x32xf32>
    %222 = arith.addf %218, %221 : vector<16x32xf32>
    %c1_196 = arith.constant 1 : index
    %c0_197 = arith.constant 0 : index
    %c0_198 = arith.constant 0 : index
    %c0_199 = arith.constant 0 : index
    %223 = vector.load %arg7[%c1_196, %c0_197, %c0_198, %c0_199] : memref<2x4x128x32xbf16, #tpu.memory_space<vmem>>, vector<1x1x128x32xbf16>
    %224 = vector.shape_cast %223 : vector<1x1x128x32xbf16> to vector<128x32xbf16>
    %cst_200 = arith.constant dense<0.000000e+00> : vector<16x32xf32>
    %225 = tpu.matmul %215, %224, %cst_200 {dimension_numbers = #tpu.dot_dimension_numbers<[1], [0], [0], [1], [0, 0, 1, 1], [], []>} : vector<16x128xf32>, vector<128x32xbf16>, vector<16x32xf32> -> vector<16x32xf32>
    %c1_201 = arith.constant 1 : index
    %c0_202 = arith.constant 0 : index
    %c0_203 = arith.constant 0 : index
    %c0_204 = arith.constant 0 : index
    %226 = vector.load %arg8[%c1_201, %c0_202, %c0_203, %c0_204] : memref<2x4x1x32xf32, #tpu.memory_space<vmem>>, vector<1x1x1x32xf32>
    %227 = vector.shape_cast %226 : vector<1x1x1x32xf32> to vector<1x32xf32>
    %228 = vector.broadcast %227 : vector<1x32xf32> to vector<16x32xf32>
    %229 = arith.addf %225, %228 : vector<16x32xf32>
    %c1_205 = arith.constant 1 : index
    %c0_206 = arith.constant 0 : index
    %c0_207 = arith.constant 0 : index
    %c0_208 = arith.constant 0 : index
    %230 = vector.load %arg9[%c1_205, %c0_206, %c0_207, %c0_208] : memref<2x4x128x32xbf16, #tpu.memory_space<vmem>>, vector<1x1x128x32xbf16>
    %231 = vector.shape_cast %230 : vector<1x1x128x32xbf16> to vector<128x32xbf16>
    %cst_209 = arith.constant dense<0.000000e+00> : vector<16x32xf32>
    %232 = tpu.matmul %215, %231, %cst_209 {dimension_numbers = #tpu.dot_dimension_numbers<[1], [0], [0], [1], [0, 0, 1, 1], [], []>} : vector<16x128xf32>, vector<128x32xbf16>, vector<16x32xf32> -> vector<16x32xf32>
    %c1_210 = arith.constant 1 : index
    %c0_211 = arith.constant 0 : index
    %c0_212 = arith.constant 0 : index
    %c0_213 = arith.constant 0 : index
    %233 = vector.load %arg10[%c1_210, %c0_211, %c0_212, %c0_213] : memref<2x4x1x32xf32, #tpu.memory_space<vmem>>, vector<1x1x1x32xf32>
    %234 = vector.shape_cast %233 : vector<1x1x1x32xf32> to vector<1x32xf32>
    %235 = vector.broadcast %234 : vector<1x32xf32> to vector<16x32xf32>
    %236 = arith.addf %232, %235 : vector<16x32xf32>
    %cst_214 = arith.constant dense<0.000000e+00> : vector<16x16xf32>
    %237 = tpu.matmul %222, %229, %cst_214 {dimension_numbers = #tpu.dot_dimension_numbers<[1], [1], [0], [0], [0, 0, 1, 0], [], []>} : vector<16x32xf32>, vector<16x32xf32>, vector<16x16xf32> -> vector<16x16xf32>
    %238 = arith.addf %237, %0 : vector<16x16xf32>
    %c1_215 = arith.constant 1 : index
    %c1_216 = arith.constant 1 : index
    %c0_217 = arith.constant 0 : index
    %c0_218 = arith.constant 0 : index
    %239 = vector.load %arg5[%c1_215, %c1_216, %c0_217, %c0_218] : memref<2x4x128x32xf32, #tpu.memory_space<vmem>>, vector<1x1x128x32xf32>
    %240 = vector.shape_cast %239 : vector<1x1x128x32xf32> to vector<128x32xf32>
    %cst_219 = arith.constant dense<0.000000e+00> : vector<16x32xf32>
    %241 = tpu.matmul %215, %240, %cst_219 {dimension_numbers = #tpu.dot_dimension_numbers<[1], [0], [0], [1], [0, 0, 1, 1], [], []>} : vector<16x128xf32>, vector<128x32xf32>, vector<16x32xf32> -> vector<16x32xf32>
    %c1_220 = arith.constant 1 : index
    %c1_221 = arith.constant 1 : index
    %c0_222 = arith.constant 0 : index
    %c0_223 = arith.constant 0 : index
    %242 = vector.load %arg6[%c1_220, %c1_221, %c0_222, %c0_223] : memref<2x4x1x32xf32, #tpu.memory_space<vmem>>, vector<1x1x1x32xf32>
    %243 = vector.shape_cast %242 : vector<1x1x1x32xf32> to vector<1x32xf32>
    %244 = vector.broadcast %243 : vector<1x32xf32> to vector<16x32xf32>
    %245 = arith.addf %241, %244 : vector<16x32xf32>
    %c1_224 = arith.constant 1 : index
    %c1_225 = arith.constant 1 : index
    %c0_226 = arith.constant 0 : index
    %c0_227 = arith.constant 0 : index
    %246 = vector.load %arg7[%c1_224, %c1_225, %c0_226, %c0_227] : memref<2x4x128x32xbf16, #tpu.memory_space<vmem>>, vector<1x1x128x32xbf16>
    %247 = vector.shape_cast %246 : vector<1x1x128x32xbf16> to vector<128x32xbf16>
    %cst_228 = arith.constant dense<0.000000e+00> : vector<16x32xf32>
    %248 = tpu.matmul %215, %247, %cst_228 {dimension_numbers = #tpu.dot_dimension_numbers<[1], [0], [0], [1], [0, 0, 1, 1], [], []>} : vector<16x128xf32>, vector<128x32xbf16>, vector<16x32xf32> -> vector<16x32xf32>
    %c1_229 = arith.constant 1 : index
    %c1_230 = arith.constant 1 : index
    %c0_231 = arith.constant 0 : index
    %c0_232 = arith.constant 0 : index
    %249 = vector.load %arg8[%c1_229, %c1_230, %c0_231, %c0_232] : memref<2x4x1x32xf32, #tpu.memory_space<vmem>>, vector<1x1x1x32xf32>
    %250 = vector.shape_cast %249 : vector<1x1x1x32xf32> to vector<1x32xf32>
    %251 = vector.broadcast %250 : vector<1x32xf32> to vector<16x32xf32>
    %252 = arith.addf %248, %251 : vector<16x32xf32>
    %c1_233 = arith.constant 1 : index
    %c1_234 = arith.constant 1 : index
    %c0_235 = arith.constant 0 : index
    %c0_236 = arith.constant 0 : index
    %253 = vector.load %arg9[%c1_233, %c1_234, %c0_235, %c0_236] : memref<2x4x128x32xbf16, #tpu.memory_space<vmem>>, vector<1x1x128x32xbf16>
    %254 = vector.shape_cast %253 : vector<1x1x128x32xbf16> to vector<128x32xbf16>
    %cst_237 = arith.constant dense<0.000000e+00> : vector<16x32xf32>
    %255 = tpu.matmul %215, %254, %cst_237 {dimension_numbers = #tpu.dot_dimension_numbers<[1], [0], [0], [1], [0, 0, 1, 1], [], []>} : vector<16x128xf32>, vector<128x32xbf16>, vector<16x32xf32> -> vector<16x32xf32>
    %c1_238 = arith.constant 1 : index
    %c1_239 = arith.constant 1 : index
    %c0_240 = arith.constant 0 : index
    %c0_241 = arith.constant 0 : index
    %256 = vector.load %arg10[%c1_238, %c1_239, %c0_240, %c0_241] : memref<2x4x1x32xf32, #tpu.memory_space<vmem>>, vector<1x1x1x32xf32>
    %257 = vector.shape_cast %256 : vector<1x1x1x32xf32> to vector<1x32xf32>
    %258 = vector.broadcast %257 : vector<1x32xf32> to vector<16x32xf32>
    %259 = arith.addf %255, %258 : vector<16x32xf32>
    %cst_242 = arith.constant dense<0.000000e+00> : vector<16x16xf32>
    %260 = tpu.matmul %245, %252, %cst_242 {dimension_numbers = #tpu.dot_dimension_numbers<[1], [1], [0], [0], [0, 0, 1, 0], [], []>} : vector<16x32xf32>, vector<16x32xf32>, vector<16x16xf32> -> vector<16x16xf32>
    %261 = arith.addf %260, %0 : vector<16x16xf32>
    %c1_243 = arith.constant 1 : index
    %c2_244 = arith.constant 2 : index
    %c0_245 = arith.constant 0 : index
    %c0_246 = arith.constant 0 : index
    %262 = vector.load %arg5[%c1_243, %c2_244, %c0_245, %c0_246] : memref<2x4x128x32xf32, #tpu.memory_space<vmem>>, vector<1x1x128x32xf32>
    %263 = vector.shape_cast %262 : vector<1x1x128x32xf32> to vector<128x32xf32>
    %cst_247 = arith.constant dense<0.000000e+00> : vector<16x32xf32>
    %264 = tpu.matmul %215, %263, %cst_247 {dimension_numbers = #tpu.dot_dimension_numbers<[1], [0], [0], [1], [0, 0, 1, 1], [], []>} : vector<16x128xf32>, vector<128x32xf32>, vector<16x32xf32> -> vector<16x32xf32>
    %c1_248 = arith.constant 1 : index
    %c2_249 = arith.constant 2 : index
    %c0_250 = arith.constant 0 : index
    %c0_251 = arith.constant 0 : index
    %265 = vector.load %arg6[%c1_248, %c2_249, %c0_250, %c0_251] : memref<2x4x1x32xf32, #tpu.memory_space<vmem>>, vector<1x1x1x32xf32>
    %266 = vector.shape_cast %265 : vector<1x1x1x32xf32> to vector<1x32xf32>
    %267 = vector.broadcast %266 : vector<1x32xf32> to vector<16x32xf32>
    %268 = arith.addf %264, %267 : vector<16x32xf32>
    %c1_252 = arith.constant 1 : index
    %c2_253 = arith.constant 2 : index
    %c0_254 = arith.constant 0 : index
    %c0_255 = arith.constant 0 : index
    %269 = vector.load %arg7[%c1_252, %c2_253, %c0_254, %c0_255] : memref<2x4x128x32xbf16, #tpu.memory_space<vmem>>, vector<1x1x128x32xbf16>
    %270 = vector.shape_cast %269 : vector<1x1x128x32xbf16> to vector<128x32xbf16>
    %cst_256 = arith.constant dense<0.000000e+00> : vector<16x32xf32>
    %271 = tpu.matmul %215, %270, %cst_256 {dimension_numbers = #tpu.dot_dimension_numbers<[1], [0], [0], [1], [0, 0, 1, 1], [], []>} : vector<16x128xf32>, vector<128x32xbf16>, vector<16x32xf32> -> vector<16x32xf32>
    %c1_257 = arith.constant 1 : index
    %c2_258 = arith.constant 2 : index
    %c0_259 = arith.constant 0 : index
    %c0_260 = arith.constant 0 : index
    %272 = vector.load %arg8[%c1_257, %c2_258, %c0_259, %c0_260] : memref<2x4x1x32xf32, #tpu.memory_space<vmem>>, vector<1x1x1x32xf32>
    %273 = vector.shape_cast %272 : vector<1x1x1x32xf32> to vector<1x32xf32>
    %274 = vector.broadcast %273 : vector<1x32xf32> to vector<16x32xf32>
    %275 = arith.addf %271, %274 : vector<16x32xf32>
    %c1_261 = arith.constant 1 : index
    %c2_262 = arith.constant 2 : index
    %c0_263 = arith.constant 0 : index
    %c0_264 = arith.constant 0 : index
    %276 = vector.load %arg9[%c1_261, %c2_262, %c0_263, %c0_264] : memref<2x4x128x32xbf16, #tpu.memory_space<vmem>>, vector<1x1x128x32xbf16>
    %277 = vector.shape_cast %276 : vector<1x1x128x32xbf16> to vector<128x32xbf16>
    %cst_265 = arith.constant dense<0.000000e+00> : vector<16x32xf32>
    %278 = tpu.matmul %215, %277, %cst_265 {dimension_numbers = #tpu.dot_dimension_numbers<[1], [0], [0], [1], [0, 0, 1, 1], [], []>} : vector<16x128xf32>, vector<128x32xbf16>, vector<16x32xf32> -> vector<16x32xf32>
    %c1_266 = arith.constant 1 : index
    %c2_267 = arith.constant 2 : index
    %c0_268 = arith.constant 0 : index
    %c0_269 = arith.constant 0 : index
    %279 = vector.load %arg10[%c1_266, %c2_267, %c0_268, %c0_269] : memref<2x4x1x32xf32, #tpu.memory_space<vmem>>, vector<1x1x1x32xf32>
    %280 = vector.shape_cast %279 : vector<1x1x1x32xf32> to vector<1x32xf32>
    %281 = vector.broadcast %280 : vector<1x32xf32> to vector<16x32xf32>
    %282 = arith.addf %278, %281 : vector<16x32xf32>
    %cst_270 = arith.constant dense<0.000000e+00> : vector<16x16xf32>
    %283 = tpu.matmul %268, %275, %cst_270 {dimension_numbers = #tpu.dot_dimension_numbers<[1], [1], [0], [0], [0, 0, 1, 0], [], []>} : vector<16x32xf32>, vector<16x32xf32>, vector<16x16xf32> -> vector<16x16xf32>
    %284 = arith.addf %283, %0 : vector<16x16xf32>
    %c1_271 = arith.constant 1 : index
    %c3_272 = arith.constant 3 : index
    %c0_273 = arith.constant 0 : index
    %c0_274 = arith.constant 0 : index
    %285 = vector.load %arg5[%c1_271, %c3_272, %c0_273, %c0_274] : memref<2x4x128x32xf32, #tpu.memory_space<vmem>>, vector<1x1x128x32xf32>
    %286 = vector.shape_cast %285 : vector<1x1x128x32xf32> to vector<128x32xf32>
    %cst_275 = arith.constant dense<0.000000e+00> : vector<16x32xf32>
    %287 = tpu.matmul %215, %286, %cst_275 {dimension_numbers = #tpu.dot_dimension_numbers<[1], [0], [0], [1], [0, 0, 1, 1], [], []>} : vector<16x128xf32>, vector<128x32xf32>, vector<16x32xf32> -> vector<16x32xf32>
    %c1_276 = arith.constant 1 : index
    %c3_277 = arith.constant 3 : index
    %c0_278 = arith.constant 0 : index
    %c0_279 = arith.constant 0 : index
    %288 = vector.load %arg6[%c1_276, %c3_277, %c0_278, %c0_279] : memref<2x4x1x32xf32, #tpu.memory_space<vmem>>, vector<1x1x1x32xf32>
    %289 = vector.shape_cast %288 : vector<1x1x1x32xf32> to vector<1x32xf32>
    %290 = vector.broadcast %289 : vector<1x32xf32> to vector<16x32xf32>
    %291 = arith.addf %287, %290 : vector<16x32xf32>
    %c1_280 = arith.constant 1 : index
    %c3_281 = arith.constant 3 : index
    %c0_282 = arith.constant 0 : index
    %c0_283 = arith.constant 0 : index
    %292 = vector.load %arg7[%c1_280, %c3_281, %c0_282, %c0_283] : memref<2x4x128x32xbf16, #tpu.memory_space<vmem>>, vector<1x1x128x32xbf16>
    %293 = vector.shape_cast %292 : vector<1x1x128x32xbf16> to vector<128x32xbf16>
    %cst_284 = arith.constant dense<0.000000e+00> : vector<16x32xf32>
    %294 = tpu.matmul %215, %293, %cst_284 {dimension_numbers = #tpu.dot_dimension_numbers<[1], [0], [0], [1], [0, 0, 1, 1], [], []>} : vector<16x128xf32>, vector<128x32xbf16>, vector<16x32xf32> -> vector<16x32xf32>
    %c1_285 = arith.constant 1 : index
    %c3_286 = arith.constant 3 : index
    %c0_287 = arith.constant 0 : index
    %c0_288 = arith.constant 0 : index
    %295 = vector.load %arg8[%c1_285, %c3_286, %c0_287, %c0_288] : memref<2x4x1x32xf32, #tpu.memory_space<vmem>>, vector<1x1x1x32xf32>
    %296 = vector.shape_cast %295 : vector<1x1x1x32xf32> to vector<1x32xf32>
    %297 = vector.broadcast %296 : vector<1x32xf32> to vector<16x32xf32>
    %298 = arith.addf %294, %297 : vector<16x32xf32>
    %c1_289 = arith.constant 1 : index
    %c3_290 = arith.constant 3 : index
    %c0_291 = arith.constant 0 : index
    %c0_292 = arith.constant 0 : index
    %299 = vector.load %arg9[%c1_289, %c3_290, %c0_291, %c0_292] : memref<2x4x128x32xbf16, #tpu.memory_space<vmem>>, vector<1x1x128x32xbf16>
    %300 = vector.shape_cast %299 : vector<1x1x128x32xbf16> to vector<128x32xbf16>
    %cst_293 = arith.constant dense<0.000000e+00> : vector<16x32xf32>
    %301 = tpu.matmul %215, %300, %cst_293 {dimension_numbers = #tpu.dot_dimension_numbers<[1], [0], [0], [1], [0, 0, 1, 1], [], []>} : vector<16x128xf32>, vector<128x32xbf16>, vector<16x32xf32> -> vector<16x32xf32>
    %c1_294 = arith.constant 1 : index
    %c3_295 = arith.constant 3 : index
    %c0_296 = arith.constant 0 : index
    %c0_297 = arith.constant 0 : index
    %302 = vector.load %arg10[%c1_294, %c3_295, %c0_296, %c0_297] : memref<2x4x1x32xf32, #tpu.memory_space<vmem>>, vector<1x1x1x32xf32>
    %303 = vector.shape_cast %302 : vector<1x1x1x32xf32> to vector<1x32xf32>
    %304 = vector.broadcast %303 : vector<1x32xf32> to vector<16x32xf32>
    %305 = arith.addf %301, %304 : vector<16x32xf32>
    %cst_298 = arith.constant dense<0.000000e+00> : vector<16x16xf32>
    %306 = tpu.matmul %291, %298, %cst_298 {dimension_numbers = #tpu.dot_dimension_numbers<[1], [1], [0], [0], [0, 0, 1, 0], [], []>} : vector<16x32xf32>, vector<16x32xf32>, vector<16x16xf32> -> vector<16x16xf32>
    %307 = arith.addf %306, %0 : vector<16x16xf32>
    %308 = tpu.concatenate %238, %261, %284, %307 in 0 : vector<16x16xf32>, vector<16x16xf32>, vector<16x16xf32>, vector<16x16xf32> -> vector<64x16xf32>
    %cst_299 = arith.constant dense<0xFF800000> : vector<64xf32>
    %309 = vector.multi_reduction <maximumf>, %308, %cst_299 [1] : vector<64x16xf32> to vector<64xf32>
    %310 = vector.shape_cast %309 : vector<64xf32> to vector<64x1xf32>
    %311 = vector.broadcast %310 : vector<64x1xf32> to vector<64x16xf32>
    %312 = arith.subf %308, %311 : vector<64x16xf32>
    %313 = math.exp %312 : vector<64x16xf32>
    %cst_300 = arith.constant dense<0.000000e+00> : vector<64xf32>
    %314 = vector.multi_reduction <add>, %313, %cst_300 [1] : vector<64x16xf32> to vector<64xf32>
    %315 = vector.shape_cast %314 : vector<64xf32> to vector<64x1xf32>
    %316 = tpu.reciprocal %315 {approx = true} : vector<64x1xf32> -> vector<64x1xf32>
    %317 = vector.broadcast %316 : vector<64x1xf32> to vector<64x16xf32>
    %318 = arith.mulf %313, %317 : vector<64x16xf32>
    %c1_301 = arith.constant 1 : index
    %c0_302 = arith.constant 0 : index
    %c0_303 = arith.constant 0 : index
    %319 = vector.load %arg12[%c1_301, %c0_302, %c0_303] : memref<2x1x128xf32, #tpu.memory_space<vmem>>, vector<1x1x128xf32>
    %320 = vector.shape_cast %319 : vector<1x1x128xf32> to vector<1x128xf32>
    %321 = vector.extract_strided_slice %318 {offsets = [0, 0], sizes = [16, 16], strides = [1, 1]} : vector<64x16xf32> to vector<16x16xf32>
    %cst_304 = arith.constant dense<0.000000e+00> : vector<16x32xf32>
    %322 = tpu.matmul %321, %236, %cst_304 {dimension_numbers = #tpu.dot_dimension_numbers<[1], [0], [0], [1], [0, 0, 1, 1], [], []>} : vector<16x16xf32>, vector<16x32xf32>, vector<16x32xf32> -> vector<16x32xf32>
    %c1_305 = arith.constant 1 : index
    %c0_306 = arith.constant 0 : index
    %c0_307 = arith.constant 0 : index
    %c0_308 = arith.constant 0 : index
    %323 = vector.load %arg11[%c1_305, %c0_306, %c0_307, %c0_308] : memref<2x4x32x128xbf16, #tpu.memory_space<vmem>>, vector<1x1x32x128xbf16>
    %324 = vector.shape_cast %323 : vector<1x1x32x128xbf16> to vector<32x128xbf16>
    %cst_309 = arith.constant dense<0.000000e+00> : vector<16x128xf32>
    %325 = tpu.matmul %322, %324, %cst_309 {dimension_numbers = #tpu.dot_dimension_numbers<[1], [0], [0], [1], [0, 0, 1, 1], [], []>} : vector<16x32xf32>, vector<32x128xbf16>, vector<16x128xf32> -> vector<16x128xf32>
    %326 = vector.broadcast %320 : vector<1x128xf32> to vector<16x128xf32>
    %327 = arith.addf %326, %325 : vector<16x128xf32>
    %328 = vector.extract_strided_slice %318 {offsets = [16, 0], sizes = [16, 16], strides = [1, 1]} : vector<64x16xf32> to vector<16x16xf32>
    %cst_310 = arith.constant dense<0.000000e+00> : vector<16x32xf32>
    %329 = tpu.matmul %328, %259, %cst_310 {dimension_numbers = #tpu.dot_dimension_numbers<[1], [0], [0], [1], [0, 0, 1, 1], [], []>} : vector<16x16xf32>, vector<16x32xf32>, vector<16x32xf32> -> vector<16x32xf32>
    %c1_311 = arith.constant 1 : index
    %c1_312 = arith.constant 1 : index
    %c0_313 = arith.constant 0 : index
    %c0_314 = arith.constant 0 : index
    %330 = vector.load %arg11[%c1_311, %c1_312, %c0_313, %c0_314] : memref<2x4x32x128xbf16, #tpu.memory_space<vmem>>, vector<1x1x32x128xbf16>
    %331 = vector.shape_cast %330 : vector<1x1x32x128xbf16> to vector<32x128xbf16>
    %cst_315 = arith.constant dense<0.000000e+00> : vector<16x128xf32>
    %332 = tpu.matmul %329, %331, %cst_315 {dimension_numbers = #tpu.dot_dimension_numbers<[1], [0], [0], [1], [0, 0, 1, 1], [], []>} : vector<16x32xf32>, vector<32x128xbf16>, vector<16x128xf32> -> vector<16x128xf32>
    %333 = arith.addf %327, %332 : vector<16x128xf32>
    %334 = vector.extract_strided_slice %318 {offsets = [32, 0], sizes = [16, 16], strides = [1, 1]} : vector<64x16xf32> to vector<16x16xf32>
    %cst_316 = arith.constant dense<0.000000e+00> : vector<16x32xf32>
    %335 = tpu.matmul %334, %282, %cst_316 {dimension_numbers = #tpu.dot_dimension_numbers<[1], [0], [0], [1], [0, 0, 1, 1], [], []>} : vector<16x16xf32>, vector<16x32xf32>, vector<16x32xf32> -> vector<16x32xf32>
    %c1_317 = arith.constant 1 : index
    %c2_318 = arith.constant 2 : index
    %c0_319 = arith.constant 0 : index
    %c0_320 = arith.constant 0 : index
    %336 = vector.load %arg11[%c1_317, %c2_318, %c0_319, %c0_320] : memref<2x4x32x128xbf16, #tpu.memory_space<vmem>>, vector<1x1x32x128xbf16>
    %337 = vector.shape_cast %336 : vector<1x1x32x128xbf16> to vector<32x128xbf16>
    %cst_321 = arith.constant dense<0.000000e+00> : vector<16x128xf32>
    %338 = tpu.matmul %335, %337, %cst_321 {dimension_numbers = #tpu.dot_dimension_numbers<[1], [0], [0], [1], [0, 0, 1, 1], [], []>} : vector<16x32xf32>, vector<32x128xbf16>, vector<16x128xf32> -> vector<16x128xf32>
    %339 = arith.addf %333, %338 : vector<16x128xf32>
    %340 = vector.extract_strided_slice %318 {offsets = [48, 0], sizes = [16, 16], strides = [1, 1]} : vector<64x16xf32> to vector<16x16xf32>
    %cst_322 = arith.constant dense<0.000000e+00> : vector<16x32xf32>
    %341 = tpu.matmul %340, %305, %cst_322 {dimension_numbers = #tpu.dot_dimension_numbers<[1], [0], [0], [1], [0, 0, 1, 1], [], []>} : vector<16x16xf32>, vector<16x32xf32>, vector<16x32xf32> -> vector<16x32xf32>
    %c1_323 = arith.constant 1 : index
    %c3_324 = arith.constant 3 : index
    %c0_325 = arith.constant 0 : index
    %c0_326 = arith.constant 0 : index
    %342 = vector.load %arg11[%c1_323, %c3_324, %c0_325, %c0_326] : memref<2x4x32x128xbf16, #tpu.memory_space<vmem>>, vector<1x1x32x128xbf16>
    %343 = vector.shape_cast %342 : vector<1x1x32x128xbf16> to vector<32x128xbf16>
    %cst_327 = arith.constant dense<0.000000e+00> : vector<16x128xf32>
    %344 = tpu.matmul %341, %343, %cst_327 {dimension_numbers = #tpu.dot_dimension_numbers<[1], [0], [0], [1], [0, 0, 1, 1], [], []>} : vector<16x32xf32>, vector<32x128xbf16>, vector<16x128xf32> -> vector<16x128xf32>
    %345 = arith.addf %339, %344 : vector<16x128xf32>
    %346 = arith.addf %215, %345 : vector<16x128xf32>
    %c1_328 = arith.constant 1 : index
    %c0_329 = arith.constant 0 : index
    %c0_330 = arith.constant 0 : index
    %347 = vector.load %arg17[%c1_328, %c0_329, %c0_330] : memref<2x1x128xf32, #tpu.memory_space<vmem>>, vector<1x1x128xf32>
    %348 = vector.shape_cast %347 : vector<1x1x128xf32> to vector<1x128xf32>
    %c1_331 = arith.constant 1 : index
    %c0_332 = arith.constant 0 : index
    %c0_333 = arith.constant 0 : index
    %349 = vector.load %arg18[%c1_331, %c0_332, %c0_333] : memref<2x1x128xf32, #tpu.memory_space<vmem>>, vector<1x1x128xf32>
    %350 = vector.shape_cast %349 : vector<1x1x128xf32> to vector<1x128xf32>
    %cst_334 = arith.constant dense<0.000000e+00> : vector<16xf32>
    %351 = vector.multi_reduction <add>, %346, %cst_334 [1] : vector<16x128xf32> to vector<16xf32>
    %352 = vector.shape_cast %351 : vector<16xf32> to vector<16x1xf32>
    %cst_335 = arith.constant 1.280000e+02 : f32
    %353 = vector.broadcast %cst_335 : f32 to vector<16x1xf32>
    %354 = arith.divf %352, %353 : vector<16x1xf32>
    %355 = vector.broadcast %354 : vector<16x1xf32> to vector<16x128xf32>
    %356 = arith.subf %346, %355 : vector<16x128xf32>
    %357 = arith.mulf %356, %356 : vector<16x128xf32>
    %cst_336 = arith.constant dense<0.000000e+00> : vector<16xf32>
    %358 = vector.multi_reduction <add>, %357, %cst_336 [1] : vector<16x128xf32> to vector<16xf32>
    %359 = vector.shape_cast %358 : vector<16xf32> to vector<16x1xf32>
    %cst_337 = arith.constant 1.280000e+02 : f32
    %360 = vector.broadcast %cst_337 : f32 to vector<16x1xf32>
    %361 = arith.divf %359, %360 : vector<16x1xf32>
    %cst_338 = arith.constant 9.99999974E-6 : f32
    %362 = vector.broadcast %cst_338 : f32 to vector<16x1xf32>
    %363 = arith.addf %361, %362 : vector<16x1xf32>
    %364 = math.rsqrt %363 : vector<16x1xf32>
    %365 = vector.broadcast %364 : vector<16x1xf32> to vector<16x128xf32>
    %366 = arith.mulf %356, %365 : vector<16x128xf32>
    %367 = vector.broadcast %348 : vector<1x128xf32> to vector<16x128xf32>
    %368 = arith.mulf %366, %367 : vector<16x128xf32>
    %369 = vector.broadcast %350 : vector<1x128xf32> to vector<16x128xf32>
    %370 = arith.addf %368, %369 : vector<16x128xf32>
    %c1_339 = arith.constant 1 : index
    %c0_340 = arith.constant 0 : index
    %c0_341 = arith.constant 0 : index
    %371 = vector.load %arg13[%c1_339, %c0_340, %c0_341] : memref<2x128x256xbf16, #tpu.memory_space<vmem>>, vector<1x128x256xbf16>
    %372 = vector.shape_cast %371 : vector<1x128x256xbf16> to vector<128x256xbf16>
    %cst_342 = arith.constant dense<0.000000e+00> : vector<16x256xf32>
    %373 = tpu.matmul %370, %372, %cst_342 {dimension_numbers = #tpu.dot_dimension_numbers<[1], [0], [0], [1], [0, 0, 1, 1], [], []>} : vector<16x128xf32>, vector<128x256xbf16>, vector<16x256xf32> -> vector<16x256xf32>
    %c1_343 = arith.constant 1 : index
    %c0_344 = arith.constant 0 : index
    %c0_345 = arith.constant 0 : index
    %374 = vector.load %arg14[%c1_343, %c0_344, %c0_345] : memref<2x1x256xf32, #tpu.memory_space<vmem>>, vector<1x1x256xf32>
    %375 = vector.shape_cast %374 : vector<1x1x256xf32> to vector<1x256xf32>
    %376 = vector.broadcast %375 : vector<1x256xf32> to vector<16x256xf32>
    %377 = arith.addf %373, %376 : vector<16x256xf32>
    %cst_346 = arith.constant 5.000000e-01 : f32
    %378 = vector.broadcast %cst_346 : f32 to vector<16x256xf32>
    %379 = arith.mulf %378, %377 : vector<16x256xf32>
    %cst_347 = arith.constant 4.471500e-02 : f32
    %380 = vector.broadcast %cst_347 : f32 to vector<16x256xf32>
    %381 = arith.mulf %380, %377 : vector<16x256xf32>
    %382 = arith.mulf %381, %377 : vector<16x256xf32>
    %383 = arith.mulf %382, %377 : vector<16x256xf32>
    %384 = arith.addf %377, %383 : vector<16x256xf32>
    %cst_348 = arith.constant 0.797884583 : f32
    %385 = vector.broadcast %cst_348 : f32 to vector<16x256xf32>
    %386 = arith.mulf %385, %384 : vector<16x256xf32>
    %387 = math.tanh %386 : vector<16x256xf32>
    %cst_349 = arith.constant 1.000000e+00 : f32
    %388 = vector.broadcast %cst_349 : f32 to vector<16x256xf32>
    %389 = arith.addf %388, %387 : vector<16x256xf32>
    %390 = arith.mulf %379, %389 : vector<16x256xf32>
    %c1_350 = arith.constant 1 : index
    %c0_351 = arith.constant 0 : index
    %c0_352 = arith.constant 0 : index
    %391 = vector.load %arg15[%c1_350, %c0_351, %c0_352] : memref<2x256x128xbf16, #tpu.memory_space<vmem>>, vector<1x256x128xbf16>
    %392 = vector.shape_cast %391 : vector<1x256x128xbf16> to vector<256x128xbf16>
    %cst_353 = arith.constant dense<0.000000e+00> : vector<16x128xf32>
    %393 = tpu.matmul %390, %392, %cst_353 {dimension_numbers = #tpu.dot_dimension_numbers<[1], [0], [0], [1], [0, 0, 1, 1], [], []>} : vector<16x256xf32>, vector<256x128xbf16>, vector<16x128xf32> -> vector<16x128xf32>
    %c1_354 = arith.constant 1 : index
    %c0_355 = arith.constant 0 : index
    %c0_356 = arith.constant 0 : index
    %394 = vector.load %arg16[%c1_354, %c0_355, %c0_356] : memref<2x1x128xf32, #tpu.memory_space<vmem>>, vector<1x1x128xf32>
    %395 = vector.shape_cast %394 : vector<1x1x128xf32> to vector<1x128xf32>
    %396 = vector.broadcast %395 : vector<1x128xf32> to vector<16x128xf32>
    %397 = arith.addf %393, %396 : vector<16x128xf32>
    %398 = arith.addf %370, %397 : vector<16x128xf32>
    %c1_357 = arith.constant 1 : index
    %c0_358 = arith.constant 0 : index
    %c0_359 = arith.constant 0 : index
    %399 = vector.load %arg19[%c1_357, %c0_358, %c0_359] : memref<2x1x128xf32, #tpu.memory_space<vmem>>, vector<1x1x128xf32>
    %400 = vector.shape_cast %399 : vector<1x1x128xf32> to vector<1x128xf32>
    %c1_360 = arith.constant 1 : index
    %c0_361 = arith.constant 0 : index
    %c0_362 = arith.constant 0 : index
    %401 = vector.load %arg20[%c1_360, %c0_361, %c0_362] : memref<2x1x128xf32, #tpu.memory_space<vmem>>, vector<1x1x128xf32>
    %402 = vector.shape_cast %401 : vector<1x1x128xf32> to vector<1x128xf32>
    %cst_363 = arith.constant dense<0.000000e+00> : vector<16xf32>
    %403 = vector.multi_reduction <add>, %398, %cst_363 [1] : vector<16x128xf32> to vector<16xf32>
    %404 = vector.shape_cast %403 : vector<16xf32> to vector<16x1xf32>
    %cst_364 = arith.constant 1.280000e+02 : f32
    %405 = vector.broadcast %cst_364 : f32 to vector<16x1xf32>
    %406 = arith.divf %404, %405 : vector<16x1xf32>
    %407 = vector.broadcast %406 : vector<16x1xf32> to vector<16x128xf32>
    %408 = arith.subf %398, %407 : vector<16x128xf32>
    %409 = arith.mulf %408, %408 : vector<16x128xf32>
    %cst_365 = arith.constant dense<0.000000e+00> : vector<16xf32>
    %410 = vector.multi_reduction <add>, %409, %cst_365 [1] : vector<16x128xf32> to vector<16xf32>
    %411 = vector.shape_cast %410 : vector<16xf32> to vector<16x1xf32>
    %cst_366 = arith.constant 1.280000e+02 : f32
    %412 = vector.broadcast %cst_366 : f32 to vector<16x1xf32>
    %413 = arith.divf %411, %412 : vector<16x1xf32>
    %cst_367 = arith.constant 9.99999974E-6 : f32
    %414 = vector.broadcast %cst_367 : f32 to vector<16x1xf32>
    %415 = arith.addf %413, %414 : vector<16x1xf32>
    %416 = math.rsqrt %415 : vector<16x1xf32>
    %417 = vector.broadcast %416 : vector<16x1xf32> to vector<16x128xf32>
    %418 = arith.mulf %408, %417 : vector<16x128xf32>
    %419 = vector.broadcast %400 : vector<1x128xf32> to vector<16x128xf32>
    %420 = arith.mulf %418, %419 : vector<16x128xf32>
    %421 = vector.broadcast %402 : vector<1x128xf32> to vector<16x128xf32>
    %422 = arith.addf %420, %421 : vector<16x128xf32>
    %c0_368 = arith.constant 0 : index
    %c0_369 = arith.constant 0 : index
    %423 = vector.load %arg21[%c0_368, %c0_369] : memref<128x128xbf16, #tpu.memory_space<vmem>>, vector<128x128xbf16>
    %cst_370 = arith.constant dense<0.000000e+00> : vector<16x128xf32>
    %424 = tpu.matmul %422, %423, %cst_370 {dimension_numbers = #tpu.dot_dimension_numbers<[1], [0], [0], [1], [0, 0, 1, 1], [], []>} : vector<16x128xf32>, vector<128x128xbf16>, vector<16x128xf32> -> vector<16x128xf32>
    %c0_371 = arith.constant 0 : index
    %c0_372 = arith.constant 0 : index
    %425 = vector.load %arg22[%c0_371, %c0_372] : memref<1x128xf32, #tpu.memory_space<vmem>>, vector<1x128xf32>
    %426 = vector.broadcast %425 : vector<1x128xf32> to vector<16x128xf32>
    %427 = arith.addf %424, %426 : vector<16x128xf32>
    %c0_373 = arith.constant 0 : index
    %c0_374 = arith.constant 0 : index
    %428 = vector.load %arg27[%c0_373, %c0_374] : memref<16x128xf32, #tpu.memory_space<vmem>>, vector<16x128xf32>
    tpu.vector_store %arg27[%c0_373, %c0_374], %427 {strides = array<i32>} : memref<16x128xf32, #tpu.memory_space<vmem>>, vector<16x128xf32>,
    %429 = vector.shape_cast %427 : vector<16x128xf32> to vector<2x8x128xf32>
    %cst_375 = arith.constant dense<0.000000e+00> : vector<2x128xf32>
    %430 = vector.multi_reduction <add>, %429, %cst_375 [1] : vector<2x8x128xf32> to vector<2x128xf32>
    %cst_376 = arith.constant 8.000000e+00 : f32
    %431 = vector.broadcast %cst_376 : f32 to vector<2x128xf32>
    %432 = arith.divf %430, %431 : vector<2x128xf32>
    %c0_377 = arith.constant 0 : index
    %c0_378 = arith.constant 0 : index
    %433 = vector.load %arg28[%c0_377, %c0_378] : memref<2x128xf32, #tpu.memory_space<vmem>>, vector<2x128xf32>
    tpu.vector_store %arg28[%c0_377, %c0_378], %432 {strides = array<i32>} : memref<2x128xf32, #tpu.memory_space<vmem>>, vector<2x128xf32>,
    %c0_379 = arith.constant 0 : index
    %c0_380 = arith.constant 0 : index
    %434 = vector.load %arg23[%c0_379, %c0_380] : memref<128x128xbf16, #tpu.memory_space<vmem>>, vector<128x128xbf16>
    %cst_381 = arith.constant dense<0.000000e+00> : vector<2x128xf32>
    %435 = tpu.matmul %432, %434, %cst_381 {dimension_numbers = #tpu.dot_dimension_numbers<[1], [0], [0], [1], [0, 0, 1, 1], [], []>} : vector<2x128xf32>, vector<128x128xbf16>, vector<2x128xf32> -> vector<2x128xf32>
    %c0_382 = arith.constant 0 : index
    %c0_383 = arith.constant 0 : index
    %436 = vector.load %arg24[%c0_382, %c0_383] : memref<1x128xf32, #tpu.memory_space<vmem>>, vector<1x128xf32>
    %437 = vector.broadcast %436 : vector<1x128xf32> to vector<2x128xf32>
    %438 = arith.addf %435, %437 : vector<2x128xf32>
    %cst_384 = arith.constant 5.000000e-01 : f32
    %439 = vector.broadcast %cst_384 : f32 to vector<2x128xf32>
    %440 = arith.mulf %439, %438 : vector<2x128xf32>
    %cst_385 = arith.constant 4.471500e-02 : f32
    %441 = vector.broadcast %cst_385 : f32 to vector<2x128xf32>
    %442 = arith.mulf %441, %438 : vector<2x128xf32>
    %443 = arith.mulf %442, %438 : vector<2x128xf32>
    %444 = arith.mulf %443, %438 : vector<2x128xf32>
    %445 = arith.addf %438, %444 : vector<2x128xf32>
    %cst_386 = arith.constant 0.797884583 : f32
    %446 = vector.broadcast %cst_386 : f32 to vector<2x128xf32>
    %447 = arith.mulf %446, %445 : vector<2x128xf32>
    %448 = math.tanh %447 : vector<2x128xf32>
    %cst_387 = arith.constant 1.000000e+00 : f32
    %449 = vector.broadcast %cst_387 : f32 to vector<2x128xf32>
    %450 = arith.addf %449, %448 : vector<2x128xf32>
    %451 = arith.mulf %440, %450 : vector<2x128xf32>
    %c0_388 = arith.constant 0 : index
    %c0_389 = arith.constant 0 : index
    %452 = vector.load %arg25[%c0_388, %c0_389] : memref<128x1xf32, #tpu.memory_space<vmem>>, vector<128x1xf32>
    %cst_390 = arith.constant dense<0.000000e+00> : vector<2x1xf32>
    %453 = tpu.matmul %451, %452, %cst_390 {dimension_numbers = #tpu.dot_dimension_numbers<[1], [0], [0], [1], [0, 0, 1, 1], [], []>} : vector<2x128xf32>, vector<128x1xf32>, vector<2x1xf32> -> vector<2x1xf32>
    %c0_391 = arith.constant 0 : index
    %c0_392 = arith.constant 0 : index
    %454 = vector.load %arg26[%c0_391, %c0_392] : memref<1x1xf32, #tpu.memory_space<vmem>>, vector<1x1xf32>
    %455 = vector.broadcast %454 : vector<1x1xf32> to vector<2x1xf32>
    %456 = arith.addf %453, %455 : vector<2x1xf32>
    %c0_393 = arith.constant 0 : index
    %c0_394 = arith.constant 0 : index
    %457 = vector.load %arg29[%c0_393, %c0_394] : memref<2x1xf32, #tpu.memory_space<vmem>>, vector<2x1xf32>
    tpu.vector_store %arg29[%c0_393, %c0_394], %456 {strides = array<i32>} : memref<2x1xf32, #tpu.memory_space<vmem>>, vector<2x1xf32>,
    return
  }
}

</mosaic_0001>

<llo_original>
// kernel: tpu_custom_call.1
$region0: #{tpu_custom_call.1}
  #allocation0 [shape = 'u32[]', space=smem, size = 0x4, offset = 0x4, fixed_abs, tag = 'smem constant byte address 0x4 - core index']
  #allocation1 [shape = 'u32[144,128]{1,0:T(1,128)}', space=vmem, size = 0x12000, scoped, tag = 'internal scratch']
  #allocation2 [shape = 'f32[1,1]{1,0:T(1,128)S(1)}', space=vmem, size = 0x200, scoped, tag = 'scoped memory for tpu_custom_call.1']
  %s0 = inlined_call_operand.smem [shape: u32[30], index: -1, kind: input, shape index: {}]
  %s1 = sld [smem:[%s0]]
  %s2 = scalar_lea.smem %s0, 1
  %s3 = sld [smem:[%s2]]
  %s4 = scalar_lea.smem %s0, 2
  %s5 = sld [smem:[%s4]]
  %s6 = scalar_lea.smem %s0, 3
  %s7 = sld [smem:[%s6]]
  %s8 = scalar_lea.smem %s0, 4
  %s9 = sld [smem:[%s8]]
  %s10 = scalar_lea.smem %s0, 5
  %s11 = sld [smem:[%s10]]
  %s12 = scalar_lea.smem %s0, 6
  %s13 = sld [smem:[%s12]]
  %s14 = scalar_lea.smem %s0, 7
  %s15 = sld [smem:[%s14]]
  %s16 = scalar_lea.smem %s0, 8
  %s17 = sld [smem:[%s16]]
  %s18 = scalar_lea.smem %s0, 9
  %s19 = sld [smem:[%s18]]
  %s20 = scalar_lea.smem %s0, 10
  %s21 = sld [smem:[%s20]]
  %s22 = scalar_lea.smem %s0, 11
  %s23 = sld [smem:[%s22]]
  %s24 = scalar_lea.smem %s0, 12
  %s25 = sld [smem:[%s24]]
  %s26 = scalar_lea.smem %s0, 13
  %s27 = sld [smem:[%s26]]
  %s28 = scalar_lea.smem %s0, 14
  %s29 = sld [smem:[%s28]]
  %s30 = scalar_lea.smem %s0, 15
  %s31 = sld [smem:[%s30]]
  %s32 = scalar_lea.smem %s0, 16
  %s33 = sld [smem:[%s32]]
  %s34 = scalar_lea.smem %s0, 17
  %s35 = sld [smem:[%s34]]
  %s36 = scalar_lea.smem %s0, 18
  %s37 = sld [smem:[%s36]]
  %s38 = scalar_lea.smem %s0, 19
  %s39 = sld [smem:[%s38]]
  %s40 = scalar_lea.smem %s0, 20
  %s41 = sld [smem:[%s40]]
  %s42 = scalar_lea.smem %s0, 21
  %s43 = sld [smem:[%s42]]
  %s44 = scalar_lea.smem %s0, 22
  %s45 = sld [smem:[%s44]]
  %s46 = scalar_lea.smem %s0, 23
  %s47 = sld [smem:[%s46]]
  %s48 = scalar_lea.smem %s0, 24
  %s49 = sld [smem:[%s48]]
  %s50 = scalar_lea.smem %s0, 25
  %s51 = sld [smem:[%s50]]
  %s52 = scalar_lea.smem %s0, 26
  %s53 = sld [smem:[%s52]]
  %s54 = scalar_lea.smem %s0, 27
  %s55 = sld [smem:[%s54]]
  %s56 = scalar_lea.smem %s0, 28
  %s57 = sld [smem:[%s56]]
  %s58 = scalar_lea.smem %s0, 29
  %s59 = sld [smem:[%s58]]
  %60 = xla_tuple %s55, %s57, %s59
  %s61 = sld [smem:[#allocation0]]
  $region134: #{tpu_custom_call.1} parent=0
    _
  %s63 = ssub.s32 1, %s61
  %s64 = scalar_select 0, %s63, %s61
  %v65 = vstv %s53
  %66 = vst [vmem:[#allocation2] sm:$0x1] %v65
  $region1: #{tpu_custom_call.1} parent=0
    #allocation3 [shape = 'u8[8192]{0}', space=vmem, size = 0x2000, scoped, tag = 'output window, operand 0, single buffered']
    #allocation4 [shape = 's32[1]{0}', space=sflag, size = 0x4, scoped, tag = 'scoped memory for tpu_custom_call.1']
    #allocation5 [shape = 'u8[1024]{0}', space=vmem, size = 0x400, scoped, tag = 'output window, operand 1, single buffered']
    #allocation6 [shape = 's32[1]{0}', space=sflag, size = 0x4, scoped, tag = 'scoped memory for tpu_custom_call.1']
    %67 = vsyncpa [#allocation4], 0
    %68 = vsyncpa [#allocation6], 0
    // Predicated region
    $region2: #{tpu_custom_call.1} parent=1 // pred_check
      _
    $region3: #{tpu_custom_call.1} parent=1 // pred_check_branch
      %70 = sbr.rel (0) target = $region5
    $region4: #{tpu_custom_call.1} parent=1 // pred_region
      _
    $region5: #{tpu_custom_call.1} parent=1 // pred_fallthru
      _
    // Predicated region
    $region6: #{tpu_custom_call.1} parent=1 // pred_check
      _
    $region7: #{tpu_custom_call.1} parent=1 // pred_check_branch
      %72 = sbr.rel (0) target = $region9
    $region8: #{tpu_custom_call.1} parent=1 // pred_region
      _
    $region9: #{tpu_custom_call.1} parent=1 // pred_fallthru
      _
    // Predicated region
    $region10: #{tpu_custom_call.1} parent=1 // pred_check
      _
    $region11: #{tpu_custom_call.1} parent=1 // pred_check_branch
      %74 = sbr.rel (0) target = $region13
    $region12: #{tpu_custom_call.1} parent=1 // pred_region
      _
    $region13: #{tpu_custom_call.1} parent=1 // pred_fallthru
      _
    // Predicated region
    $region14: #{tpu_custom_call.1} parent=1 // pred_check
      _
    $region15: #{tpu_custom_call.1} parent=1 // pred_check_branch
      %76 = sbr.rel (0) target = $region17
    $region16: #{tpu_custom_call.1} parent=1 // pred_region
      _
    $region17: #{tpu_custom_call.1} parent=1 // pred_fallthru
      _
    // Predicated region
    $region18: #{tpu_custom_call.1} parent=1 // pred_check
      _
    $region19: #{tpu_custom_call.1} parent=1 // pred_check_branch
      %78 = sbr.rel (0) target = $region21
    $region20: #{tpu_custom_call.1} parent=1 // pred_region
      _
    $region21: #{tpu_custom_call.1} parent=1 // pred_fallthru
      _
    // Predicated region
    $region22: #{tpu_custom_call.1} parent=1 // pred_check
      _
    $region23: #{tpu_custom_call.1} parent=1 // pred_check_branch
      %80 = sbr.rel (0) target = $region25
    $region24: #{tpu_custom_call.1} parent=1 // pred_region
      _
    $region25: #{tpu_custom_call.1} parent=1 // pred_fallthru
      _
    // Predicated region
    $region26: #{tpu_custom_call.1} parent=1 // pred_check
      _
    $region27: #{tpu_custom_call.1} parent=1 // pred_check_branch
      %82 = sbr.rel (0) target = $region29
    $region28: #{tpu_custom_call.1} parent=1 // pred_region
      _
    $region29: #{tpu_custom_call.1} parent=1 // pred_fallthru
      _
    // Predicated region
    $region30: #{tpu_custom_call.1} parent=1 // pred_check
      _
    $region31: #{tpu_custom_call.1} parent=1 // pred_check_branch
      %84 = sbr.rel (0) target = $region33
    $region32: #{tpu_custom_call.1} parent=1 // pred_region
      _
    $region33: #{tpu_custom_call.1} parent=1 // pred_fallthru
      _
    // Predicated region
    $region34: #{tpu_custom_call.1} parent=1 // pred_check
      _
    $region35: #{tpu_custom_call.1} parent=1 // pred_check_branch
      %86 = sbr.rel (0) target = $region37
    $region36: #{tpu_custom_call.1} parent=1 // pred_region
      _
    $region37: #{tpu_custom_call.1} parent=1 // pred_fallthru
      _
    // Predicated region
    $region38: #{tpu_custom_call.1} parent=1 // pred_check
      _
    $region39: #{tpu_custom_call.1} parent=1 // pred_check_branch
      %88 = sbr.rel (0) target = $region41
    $region40: #{tpu_custom_call.1} parent=1 // pred_region
      _
    $region41: #{tpu_custom_call.1} parent=1 // pred_fallthru
      _
    // Predicated region
    $region42: #{tpu_custom_call.1} parent=1 // pred_check
      _
    $region43: #{tpu_custom_call.1} parent=1 // pred_check_branch
      %90 = sbr.rel (0) target = $region45
    $region44: #{tpu_custom_call.1} parent=1 // pred_region
      _
    $region45: #{tpu_custom_call.1} parent=1 // pred_fallthru
      _
    // Predicated region
    $region46: #{tpu_custom_call.1} parent=1 // pred_check
      _
    $region47: #{tpu_custom_call.1} parent=1 // pred_check_branch
      %92 = sbr.rel (0) target = $region49
    $region48: #{tpu_custom_call.1} parent=1 // pred_region
      _
    $region49: #{tpu_custom_call.1} parent=1 // pred_fallthru
      _
    // Predicated region
    $region50: #{tpu_custom_call.1} parent=1 // pred_check
      _
    $region51: #{tpu_custom_call.1} parent=1 // pred_check_branch
      %94 = sbr.rel (0) target = $region53
    $region52: #{tpu_custom_call.1} parent=1 // pred_region
      _
    $region53: #{tpu_custom_call.1} parent=1 // pred_fallthru
      _
    // Predicated region
    $region54: #{tpu_custom_call.1} parent=1 // pred_check
      _
    $region55: #{tpu_custom_call.1} parent=1 // pred_check_branch
      %96 = sbr.rel (0) target = $region57
    $region56: #{tpu_custom_call.1} parent=1 // pred_region
      _
    $region57: #{tpu_custom_call.1} parent=1 // pred_fallthru
      _
    // Predicated region
    $region58: #{tpu_custom_call.1} parent=1 // pred_check
      _
    $region59: #{tpu_custom_call.1} parent=1 // pred_check_branch
      %98 = sbr.rel (0) target = $region61
    $region60: #{tpu_custom_call.1} parent=1 // pred_region
      _
    $region61: #{tpu_custom_call.1} parent=1 // pred_fallthru
      _
    // Predicated region
    $region62: #{tpu_custom_call.1} parent=1 // pred_check
      _
    $region63: #{tpu_custom_call.1} parent=1 // pred_check_branch
      %100 = sbr.rel (0) target = $region65
    $region64: #{tpu_custom_call.1} parent=1 // pred_region
      _
    $region65: #{tpu_custom_call.1} parent=1 // pred_fallthru
      _
    // Predicated region
    $region66: #{tpu_custom_call.1} parent=1 // pred_check
      _
    $region67: #{tpu_custom_call.1} parent=1 // pred_check_branch
      %102 = sbr.rel (0) target = $region69
    $region68: #{tpu_custom_call.1} parent=1 // pred_region
      _
    $region69: #{tpu_custom_call.1} parent=1 // pred_fallthru
      _
    // Predicated region
    $region70: #{tpu_custom_call.1} parent=1 // pred_check
      _
    $region71: #{tpu_custom_call.1} parent=1 // pred_check_branch
      %104 = sbr.rel (0) target = $region73
    $region72: #{tpu_custom_call.1} parent=1 // pred_region
      _
    $region73: #{tpu_custom_call.1} parent=1 // pred_fallthru
      _
    // Predicated region
    $region74: #{tpu_custom_call.1} parent=1 // pred_check
      _
    $region75: #{tpu_custom_call.1} parent=1 // pred_check_branch
      %106 = sbr.rel (0) target = $region77
    $region76: #{tpu_custom_call.1} parent=1 // pred_region
      _
    $region77: #{tpu_custom_call.1} parent=1 // pred_fallthru
      _
    // Predicated region
    $region78: #{tpu_custom_call.1} parent=1 // pred_check
      _
    $region79: #{tpu_custom_call.1} parent=1 // pred_check_branch
      %108 = sbr.rel (0) target = $region81
    $region80: #{tpu_custom_call.1} parent=1 // pred_region
      _
    $region81: #{tpu_custom_call.1} parent=1 // pred_fallthru
      _
    // Predicated region
    $region82: #{tpu_custom_call.1} parent=1 // pred_check
      _
    $region83: #{tpu_custom_call.1} parent=1 // pred_check_branch
      %110 = sbr.rel (0) target = $region85
    $region84: #{tpu_custom_call.1} parent=1 // pred_region
      _
    $region85: #{tpu_custom_call.1} parent=1 // pred_fallthru
      _
    // Predicated region
    $region86: #{tpu_custom_call.1} parent=1 // pred_check
      _
    $region87: #{tpu_custom_call.1} parent=1 // pred_check_branch
      %112 = sbr.rel (0) target = $region89
    $region88: #{tpu_custom_call.1} parent=1 // pred_region
      _
    $region89: #{tpu_custom_call.1} parent=1 // pred_fallthru
      _
    // Predicated region
    $region90: #{tpu_custom_call.1} parent=1 // pred_check
      _
    $region91: #{tpu_custom_call.1} parent=1 // pred_check_branch
      %114 = sbr.rel (0) target = $region93
    $region92: #{tpu_custom_call.1} parent=1 // pred_region
      _
    $region93: #{tpu_custom_call.1} parent=1 // pred_fallthru
      _
    // Predicated region
    $region94: #{tpu_custom_call.1} parent=1 // pred_check
      _
    $region95: #{tpu_custom_call.1} parent=1 // pred_check_branch
      %116 = sbr.rel (0) target = $region97
    $region96: #{tpu_custom_call.1} parent=1 // pred_region
      _
    $region97: #{tpu_custom_call.1} parent=1 // pred_fallthru
      _
    // Predicated region
    $region98: #{tpu_custom_call.1} parent=1 // pred_check
      _
    $region99: #{tpu_custom_call.1} parent=1 // pred_check_branch
      %118 = sbr.rel (0) target = $region101
    $region100: #{tpu_custom_call.1} parent=1 // pred_region
      _
    $region101: #{tpu_custom_call.1} parent=1 // pred_fallthru
      _
    // Predicated region
    $region102: #{tpu_custom_call.1} parent=1 // pred_check
      _
    $region103: #{tpu_custom_call.1} parent=1 // pred_check_branch
      %120 = sbr.rel (0) target = $region105
    $region104: #{tpu_custom_call.1} parent=1 // pred_region
      _
    $region105: #{tpu_custom_call.1} parent=1 // pred_fallthru
      _
    // Predicated region
    $region106: #{tpu_custom_call.1} parent=1 // pred_check
      _
    $region107: #{tpu_custom_call.1} parent=1 // pred_check_branch
      %122 = sbr.rel (0) target = $region109
    $region108: #{tpu_custom_call.1} parent=1 // pred_region
      _
    $region109: #{tpu_custom_call.1} parent=1 // pred_fallthru
      _
    %v124 = vld [vmem:[%s5] sm:$0xff]
    %v125 = vld [vmem:[%s5 + $0x8] sm:$0xff]
    %v126 = vld [vmem:[%s1] sm:$0xff]
    %v127 = vld [vmem:[%s1 + $0x8] sm:$0xff]
    %v128 = vld [vmem:[%s7] sm:$0xff]
    %v129 = vld [vmem:[%s7 + $0x8] sm:$0xff]
    %v130 = vld [vmem:[%s9] sm:$0x1]
    %v132 = vlaneseq
    %v133 = vshrl.u32 %v132, 7
    %v134 = vsub.s32 0, %v133
    %v135 = vrot.slane %v130, %v134
    %vm137 = vcmask 130048
    %v139 = vsel %vm137, %v126, 0
    %v142 = vsel %vm137, %v127, 0
    %144 = vmatprep.subr.mxu0 0.0
    %145 = vmatpush1.msra.mxu0 %v128
    %146 = vmatprep.subr.mxu0 0.0
    %147 = vmatpush1.msra.mxu0 %v129
    %148 = vmatprep.subr.mxu0 0.0
    %149 = vmatpush1.msra.mxu0 0.0
    %150 = vmatprep.subr.mxu0 0.0
    %151 = vmatpush1.msra.mxu0 0.0
    %152 = vmatprep.subr.mxu0 0.0
    %153 = vmatpush1.msra.mxu0 0.0
    %154 = vmatprep.subr.mxu0 0.0
    %155 = vmatpush1.msra.mxu0 0.0
    %156 = vmatprep.subr.mxu0 0.0
    %157 = vmatpush1.msra.mxu0 0.0
    %158 = vmatprep.subr.mxu0 0.0
    %159 = vmatpush1.msra.mxu0 0.0
    %160 = vmatprep.subr.mxu0 0.0
    %161 = vmatpush1.msra.mxu0 0.0
    %162 = vmatprep.subr.mxu0 0.0
    %163 = vmatpush1.msra.mxu0 0.0
    %164 = vmatprep.subr.mxu0 0.0
    %165 = vmatpush1.msra.mxu0 0.0
    %166 = vmatprep.subr.mxu0 0.0
    %167 = vmatpush1.msra.mxu0 0.0
    %168 = vmatprep.subr.mxu0 0.0
    %169 = vmatpush1.msra.mxu0 0.0
    %170 = vmatprep.subr.mxu0 0.0
    %171 = vmatpush1.msra.mxu0 0.0
    %172 = vmatprep.subr.mxu0 0.0
    %173 = vmatpush1.msra.mxu0 0.0
    %174 = vmatprep.subr.mxu0 0.0
    %175 = vmatpush1.msra.mxu0 0.0
    %176 = vmatprep.subr.mxu0 0.0
    %177 = vmatpush1.msra.mxu0 0.0
    %178 = vmatprep.subr.mxu0 0.0
    %179 = vmatpush1.msra.mxu0 0.0
    %180 = vmatprep.subr.mxu0 0.0
    %181 = vmatpush1.msra.mxu0 0.0
    %182 = vmatprep.subr.mxu0 0.0
    %183 = vmatpush1.msra.mxu0 0.0
    %184 = vmatprep.subr.mxu0 0.0
    %185 = vmatpush1.msra.mxu0 0.0
    %186 = vmatprep.subr.mxu0 0.0
    %187 = vmatpush1.msra.mxu0 0.0
    %188 = vmatprep.subr.mxu0 0.0
    %189 = vmatpush1.msra.mxu0 0.0
    %190 = vmatprep.subr.mxu0 0.0
    %191 = vmatpush1.msra.mxu0 0.0
    %192 = vmatprep.subr.mxu0 0.0
    %193 = vmatpush1.msra.mxu0 0.0
    %194 = vmatprep.subr.mxu0 0.0
    %195 = vmatpush1.msra.mxu0 0.0
    %196 = vmatprep.subr.mxu0 0.0
    %197 = vmatpush1.msra.mxu0 0.0
    %198 = vmatprep.subr.mxu0 0.0
    %199 = vmatpush1.msra.mxu0 0.0
    %200 = vmatprep.subr.mxu0 0.0
    %201 = vmatpush1.msra.mxu0 0.0
    %202 = vmatprep.subr.mxu0 0.0
    %203 = vmatpush1.msra.mxu0 0.0
    %204 = vmatprep.subr.mxu0 0.0
    %205 = vmatpush1.msra.mxu0 0.0
    %206 = vmatprep.subr.mxu0 0.0
    %207 = vmatpush1.msra.mxu0 0.0
    %208 = vmatprep.mubr.f32.mxu0 0.0
    %209 = vmatmul.mubr.f32.gmra.mrb[0].mxu0 %v139
    %v210 = vpop.f32.mrb[0].mxu0
    %v211 = vadd.f32 %v135, %v210
    %v212 = vpop.f32.mrb[0].mxu0
    %213 = vmatprep.mubr.f32.mxu0 0.0
    %214 = vmatmul.mubr.f32.gmra.mrb[0].mxu0 %v142
    %v215 = vpop.f32.mrb[0].mxu0
    %v216 = vadd.f32 %v135, %v215
    %v217 = vpop.f32.mrb[0].mxu0
    %218 = vdwg.mxu0
    %v219 = vld [vmem:[%s3] sm:$0xff]
    %v220 = vld [vmem:[%s3 + $0x8] sm:$0xff]
    %v221 = vadd.f32 %v211, %v219
    %v222 = vadd.f32 %v216, %v220
    %v223 = vld [vmem:[%s11] sm:$0xff]
    %v224 = vld [vmem:[%s11 + $0x8] sm:$0xff]
    %v225 = vld [vmem:[%s11 + $0x10] sm:$0xff]
    %v226 = vld [vmem:[%s11 + $0x18] sm:$0xff]
    %v227 = vld [vmem:[%s11 + $0x20] sm:$0xff]
    %v228 = vld [vmem:[%s11 + $0x28] sm:$0xff]
    %v229 = vld [vmem:[%s11 + $0x30] sm:$0xff]
    %v230 = vld [vmem:[%s11 + $0x38] sm:$0xff]
    %v231 = vld [vmem:[%s11 + $0x40] sm:$0xff]
    %v232 = vld [vmem:[%s11 + $0x48] sm:$0xff]
    %v233 = vld [vmem:[%s11 + $0x50] sm:$0xff]
    %v234 = vld [vmem:[%s11 + $0x58] sm:$0xff]
    %v235 = vld [vmem:[%s11 + $0x60] sm:$0xff]
    %v236 = vld [vmem:[%s11 + $0x68] sm:$0xff]
    %v237 = vld [vmem:[%s11 + $0x70] sm:$0xff]
    %v238 = vld [vmem:[%s11 + $0x78] sm:$0xff]
    %v239 = vld [vmem:[%s13] sm:$0x1]
    %v241 = vlaneseq
    %v242 = vshrl.u32 %v241, 7
    %v243 = vsub.s32 0, %v242
    %v244 = vrot.slane %v239, %v243
    %246 = vmatprep.subr.mxu0 0.0
    %247 = vmatpush1.msra.mxu0 %v223
    %248 = vmatprep.subr.mxu0 0.0
    %249 = vmatpush1.msra.mxu0 %v224
    %250 = vmatprep.subr.mxu0 0.0
    %251 = vmatpush1.msra.mxu0 %v225
    %252 = vmatprep.subr.mxu0 0.0
    %253 = vmatpush1.msra.mxu0 %v226
    %254 = vmatprep.subr.mxu0 0.0
    %255 = vmatpush1.msra.mxu0 %v227
    %256 = vmatprep.subr.mxu0 0.0
    %257 = vmatpush1.msra.mxu0 %v228
    %258 = vmatprep.subr.mxu0 0.0
    %259 = vmatpush1.msra.mxu0 %v229
    %260 = vmatprep.subr.mxu0 0.0
    %261 = vmatpush1.msra.mxu0 %v230
    %262 = vmatprep.subr.mxu0 0.0
    %263 = vmatpush1.msra.mxu0 %v231
    %264 = vmatprep.subr.mxu0 0.0
    %265 = vmatpush1.msra.mxu0 %v232
    %266 = vmatprep.subr.mxu0 0.0
    %267 = vmatpush1.msra.mxu0 %v233
    %268 = vmatprep.subr.mxu0 0.0
    %269 = vmatpush1.msra.mxu0 %v234
    %270 = vmatprep.subr.mxu0 0.0
    %271 = vmatpush1.msra.mxu0 %v235
    %272 = vmatprep.subr.mxu0 0.0
    %273 = vmatpush1.msra.mxu0 %v236
    %274 = vmatprep.subr.mxu0 0.0
    %275 = vmatpush1.msra.mxu0 %v237
    %276 = vmatprep.subr.mxu0 0.0
    %277 = vmatpush1.msra.mxu0 %v238
    %278 = vmatprep.subr.mxu0 0.0
    %279 = vmatpush1.msra.mxu0 0.0
    %280 = vmatprep.subr.mxu0 0.0
    %281 = vmatpush1.msra.mxu0 0.0
    %282 = vmatprep.subr.mxu0 0.0
    %283 = vmatpush1.msra.mxu0 0.0
    %284 = vmatprep.subr.mxu0 0.0
    %285 = vmatpush1.msra.mxu0 0.0
    %286 = vmatprep.subr.mxu0 0.0
    %287 = vmatpush1.msra.mxu0 0.0
    %288 = vmatprep.subr.mxu0 0.0
    %289 = vmatpush1.msra.mxu0 0.0
    %290 = vmatprep.subr.mxu0 0.0
    %291 = vmatpush1.msra.mxu0 0.0
    %292 = vmatprep.subr.mxu0 0.0
    %293 = vmatpush1.msra.mxu0 0.0
    %294 = vmatprep.subr.mxu0 0.0
    %295 = vmatpush1.msra.mxu0 0.0
    %296 = vmatprep.subr.mxu0 0.0
    %297 = vmatpush1.msra.mxu0 0.0
    %298 = vmatprep.subr.mxu0 0.0
    %299 = vmatpush1.msra.mxu0 0.0
    %300 = vmatprep.subr.mxu0 0.0
    %301 = vmatpush1.msra.mxu0 0.0
    %302 = vmatprep.subr.mxu0 0.0
    %303 = vmatpush1.msra.mxu0 0.0
    %304 = vmatprep.subr.mxu0 0.0
    %305 = vmatpush1.msra.mxu0 0.0
    %306 = vmatprep.subr.mxu0 0.0
    %307 = vmatpush1.msra.mxu0 0.0
    %308 = vmatprep.subr.mxu0 0.0
    %309 = vmatpush1.msra.mxu0 0.0
    %310 = vmatprep.mubr.f32.mxu0 0.0
    %311 = vmatmul.mubr.f32.gmra.mrb[0].mxu0 %v221
    %v312 = vpop.f32.mrb[0].mxu0
    %v313 = vadd.f32 %v244, %v312
    %v314 = vpop.f32.mrb[0].mxu0
    %315 = vmatprep.mubr.f32.mxu0 0.0
    %316 = vmatmul.mubr.f32.gmra.mrb[0].mxu0 %v222
    %v317 = vpop.f32.mrb[0].mxu0
    %v318 = vadd.f32 %v244, %v317
    %v319 = vpop.f32.mrb[0].mxu0
    %320 = vdwg.mxu0
    %v321 = vld [vmem:[%s15] sm:$0xf]
    %v322 = vld [vmem:[%s15 + $0x4] sm:$0xf]
    %v323 = vld [vmem:[%s15 + $0x8] sm:$0xf]
    %v324 = vld [vmem:[%s15 + $0xc] sm:$0xf]
    %v325 = vld [vmem:[%s15 + $0x10] sm:$0xf]
    %v326 = vld [vmem:[%s15 + $0x14] sm:$0xf]
    %v327 = vld [vmem:[%s15 + $0x18] sm:$0xf]
    %v328 = vld [vmem:[%s15 + $0x1c] sm:$0xf]
    %v329 = vld [vmem:[%s15 + $0x20] sm:$0xf]
    %v330 = vld [vmem:[%s15 + $0x24] sm:$0xf]
    %v331 = vld [vmem:[%s15 + $0x28] sm:$0xf]
    %v332 = vld [vmem:[%s15 + $0x2c] sm:$0xf]
    %v333 = vld [vmem:[%s15 + $0x30] sm:$0xf]
    %v334 = vld [vmem:[%s15 + $0x34] sm:$0xf]
    %v335 = vld [vmem:[%s15 + $0x38] sm:$0xf]
    %v336 = vld [vmem:[%s15 + $0x3c] sm:$0xf]
    %v337 = vld [vmem:[%s17] sm:$0x1]
    %v339 = vlaneseq
    %v340 = vshrl.u32 %v339, 7
    %v341 = vsub.s32 0, %v340
    %v342 = vrot.slane %v337, %v341
    %v360 = vunpack.c.l.b16 %v321
    %v361 = vunpack.c.l.b16 %v322
    %v362 = vunpack.c.l.b16 %v323
    %v363 = vunpack.c.l.b16 %v324
    %v364 = vunpack.c.l.b16 %v325
    %v365 = vunpack.c.l.b16 %v326
    %v366 = vunpack.c.l.b16 %v327
    %v367 = vunpack.c.l.b16 %v328
    %v368 = vunpack.c.l.b16 %v329
    %v369 = vunpack.c.l.b16 %v330
    %v370 = vunpack.c.l.b16 %v331
    %v371 = vunpack.c.l.b16 %v332
    %v372 = vunpack.c.l.b16 %v333
    %v373 = vunpack.c.l.b16 %v334
    %v374 = vunpack.c.l.b16 %v335
    %v375 = vunpack.c.l.b16 %v336
    %v376 = vpack.c.b16 %v361, %v360
    %v377 = vpack.c.b16 %v363, %v362
    %v378 = vpack.c.b16 %v365, %v364
    %v379 = vpack.c.b16 %v367, %v366
    %v380 = vpack.c.b16 %v369, %v368
    %v381 = vpack.c.b16 %v371, %v370
    %v382 = vpack.c.b16 %v373, %v372
    %v383 = vpack.c.b16 %v375, %v374
    %392 = vmatprep.subr.bf16.mxu0 0
    %393 = vmatpush1.bf16.msra.mxu0 %v376
    %394 = vmatprep.subr.bf16.mxu0 0
    %395 = vmatpush1.bf16.msra.mxu0 %v377
    %396 = vmatprep.subr.bf16.mxu0 0
    %397 = vmatpush1.bf16.msra.mxu0 %v378
    %398 = vmatprep.subr.bf16.mxu0 0
    %399 = vmatpush1.bf16.msra.mxu0 %v379
    %400 = vmatprep.subr.bf16.mxu0 0
    %401 = vmatpush1.bf16.msra.mxu0 %v380
    %402 = vmatprep.subr.bf16.mxu0 0
    %403 = vmatpush1.bf16.msra.mxu0 %v381
    %404 = vmatprep.subr.bf16.mxu0 0
    %405 = vmatpush1.bf16.msra.mxu0 %v382
    %406 = vmatprep.subr.bf16.mxu0 0
    %407 = vmatpush1.bf16.msra.mxu0 %v383
    %408 = vmatprep.subr.bf16.mxu0 0
    %409 = vmatpush1.bf16.msra.mxu0 0
    %410 = vmatprep.subr.bf16.mxu0 0
    %411 = vmatpush1.bf16.msra.mxu0 0
    %412 = vmatprep.subr.bf16.mxu0 0
    %413 = vmatpush1.bf16.msra.mxu0 0
    %414 = vmatprep.subr.bf16.mxu0 0
    %415 = vmatpush1.bf16.msra.mxu0 0
    %416 = vmatprep.subr.bf16.mxu0 0
    %417 = vmatpush1.bf16.msra.mxu0 0
    %418 = vmatprep.subr.bf16.mxu0 0
    %419 = vmatpush1.bf16.msra.mxu0 0
    %420 = vmatprep.subr.bf16.mxu0 0
    %421 = vmatpush1.bf16.msra.mxu0 0
    %422 = vmatprep.subr.bf16.mxu0 0
    %423 = vmatpush1.bf16.msra.mxu0 0
    %424 = vmatprep.mubr.f32.mxu0 0.0
    %425 = vmatmul.mubr.f32.gmra.mrb[0].mxu0 %v221
    %v426 = vpop.f32.mrb[0].mxu0
    %v427 = vadd.f32 %v342, %v426
    %v428 = vpop.f32.mrb[0].mxu0
    %429 = vmatprep.mubr.f32.mxu0 0.0
    %430 = vmatmul.mubr.f32.gmra.mrb[0].mxu0 %v222
    %v431 = vpop.f32.mrb[0].mxu0
    %v432 = vadd.f32 %v342, %v431
    %v433 = vpop.f32.mrb[0].mxu0
    %434 = vdwg.mxu0
    %v435 = vld [vmem:[%s19] sm:$0xf]
    %v436 = vld [vmem:[%s19 + $0x4] sm:$0xf]
    %v437 = vld [vmem:[%s19 + $0x8] sm:$0xf]
    %v438 = vld [vmem:[%s19 + $0xc] sm:$0xf]
    %v439 = vld [vmem:[%s19 + $0x10] sm:$0xf]
    %v440 = vld [vmem:[%s19 + $0x14] sm:$0xf]
    %v441 = vld [vmem:[%s19 + $0x18] sm:$0xf]
    %v442 = vld [vmem:[%s19 + $0x1c] sm:$0xf]
    %v443 = vld [vmem:[%s19 + $0x20] sm:$0xf]
    %v444 = vld [vmem:[%s19 + $0x24] sm:$0xf]
    %v445 = vld [vmem:[%s19 + $0x28] sm:$0xf]
    %v446 = vld [vmem:[%s19 + $0x2c] sm:$0xf]
    %v447 = vld [vmem:[%s19 + $0x30] sm:$0xf]
    %v448 = vld [vmem:[%s19 + $0x34] sm:$0xf]
    %v449 = vld [vmem:[%s19 + $0x38] sm:$0xf]
    %v450 = vld [vmem:[%s19 + $0x3c] sm:$0xf]
    %v451 = vld [vmem:[%s21] sm:$0x1]
    %v453 = vlaneseq
    %v454 = vshrl.u32 %v453, 7
    %v455 = vsub.s32 0, %v454
    %v456 = vrot.slane %v451, %v455
    %v474 = vunpack.c.l.b16 %v435
    %v475 = vunpack.c.l.b16 %v436
    %v476 = vunpack.c.l.b16 %v437
    %v477 = vunpack.c.l.b16 %v438
    %v478 = vunpack.c.l.b16 %v439
    %v479 = vunpack.c.l.b16 %v440
    %v480 = vunpack.c.l.b16 %v441
    %v481 = vunpack.c.l.b16 %v442
    %v482 = vunpack.c.l.b16 %v443
    %v483 = vunpack.c.l.b16 %v444
    %v484 = vunpack.c.l.b16 %v445
    %v485 = vunpack.c.l.b16 %v446
    %v486 = vunpack.c.l.b16 %v447
    %v487 = vunpack.c.l.b16 %v448
    %v488 = vunpack.c.l.b16 %v449
    %v489 = vunpack.c.l.b16 %v450
    %v490 = vpack.c.b16 %v475, %v474
    %v491 = vpack.c.b16 %v477, %v476
    %v492 = vpack.c.b16 %v479, %v478
    %v493 = vpack.c.b16 %v481, %v480
    %v494 = vpack.c.b16 %v483, %v482
    %v495 = vpack.c.b16 %v485, %v484
    %v496 = vpack.c.b16 %v487, %v486
    %v497 = vpack.c.b16 %v489, %v488
    %506 = vmatprep.subr.bf16.mxu0 0
    %507 = vmatpush1.bf16.msra.mxu0 %v490
    %508 = vmatprep.subr.bf16.mxu0 0
    %509 = vmatpush1.bf16.msra.mxu0 %v491
    %510 = vmatprep.subr.bf16.mxu0 0
    %511 = vmatpush1.bf16.msra.mxu0 %v492
    %512 = vmatprep.subr.bf16.mxu0 0
    %513 = vmatpush1.bf16.msra.mxu0 %v493
    %514 = vmatprep.subr.bf16.mxu0 0
    %515 = vmatpush1.bf16.msra.mxu0 %v494
    %516 = vmatprep.subr.bf16.mxu0 0
    %517 = vmatpush1.bf16.msra.mxu0 %v495
    %518 = vmatprep.subr.bf16.mxu0 0
    %519 = vmatpush1.bf16.msra.mxu0 %v496
    %520 = vmatprep.subr.bf16.mxu0 0
    %521 = vmatpush1.bf16.msra.mxu0 %v497
    %522 = vmatprep.subr.bf16.mxu0 0
    %523 = vmatpush1.bf16.msra.mxu0 0
    %524 = vmatprep.subr.bf16.mxu0 0
    %525 = vmatpush1.bf16.msra.mxu0 0
    %526 = vmatprep.subr.bf16.mxu0 0
    %527 = vmatpush1.bf16.msra.mxu0 0
    %528 = vmatprep.subr.bf16.mxu0 0
    %529 = vmatpush1.bf16.msra.mxu0 0
    %530 = vmatprep.subr.bf16.mxu0 0
    %531 = vmatpush1.bf16.msra.mxu0 0
    %532 = vmatprep.subr.bf16.mxu0 0
    %533 = vmatpush1.bf16.msra.mxu0 0
    %534 = vmatprep.subr.bf16.mxu0 0
    %535 = vmatpush1.bf16.msra.mxu0 0
    %536 = vmatprep.subr.bf16.mxu0 0
    %537 = vmatpush1.bf16.msra.mxu0 0
    %538 = vmatprep.mubr.f32.mxu0 0.0
    %539 = vmatmul.mubr.f32.gmra.mrb[0].mxu0 %v221
    %v540 = vpop.f32.mrb[0].mxu0
    %v541 = vadd.f32 %v456, %v540
    %v542 = vpop.f32.mrb[0].mxu0
    %543 = vmatprep.mubr.f32.mxu0 0.0
    %544 = vmatmul.mubr.f32.gmra.mrb[0].mxu0 %v222
    %v545 = vpop.f32.mrb[0].mxu0
    %v546 = vadd.f32 %v456, %v545
    %v547 = vpop.f32.mrb[0].mxu0
    %548 = vdwg.mxu0
    %vm549 = vcmask 261120
    %v551 = vsel %vm549, %v313, 0
    %v554 = vsel %vm549, %v318, 0
    %v557 = vsel %vm549, %v427, 0
    %v560 = vsel %vm549, %v432, 0
    %562 = vmatprep.subr.mxu0 0.0
    %563 = vmatpush1.xpose.msra.mxu0 %v557
    %564 = vmatprep.subr.mxu0 0.0
    %565 = vmatpush1.xpose.msra.mxu0 %v560
    %566 = vmatprep.subr.mxu0 0.0
    %567 = vmatpush1.xpose.msra.mxu0 0.0
    %568 = vmatprep.subr.mxu0 0.0
    %569 = vmatpush1.xpose.msra.mxu0 0.0
    %570 = vmatprep.subr.mxu0 0.0
    %571 = vmatpush1.xpose.msra.mxu0 0.0
    %572 = vmatprep.subr.mxu0 0.0
    %573 = vmatpush1.xpose.msra.mxu0 0.0
    %574 = vmatprep.subr.mxu0 0.0
    %575 = vmatpush1.xpose.msra.mxu0 0.0
    %576 = vmatprep.subr.mxu0 0.0
    %577 = vmatpush1.xpose.msra.mxu0 0.0
    %578 = vmatprep.subr.mxu0 0.0
    %579 = vmatpush1.xpose.msra.mxu0 0.0
    %580 = vmatprep.subr.mxu0 0.0
    %581 = vmatpush1.xpose.msra.mxu0 0.0
    %582 = vmatprep.subr.mxu0 0.0
    %583 = vmatpush1.xpose.msra.mxu0 0.0
    %584 = vmatprep.subr.mxu0 0.0
    %585 = vmatpush1.xpose.msra.mxu0 0.0
    %586 = vmatprep.subr.mxu0 0.0
    %587 = vmatpush1.xpose.msra.mxu0 0.0
    %588 = vmatprep.subr.mxu0 0.0
    %589 = vmatpush1.xpose.msra.mxu0 0.0
    %590 = vmatprep.subr.mxu0 0.0
    %591 = vmatpush1.xpose.msra.mxu0 0.0
    %592 = vmatprep.subr.mxu0 0.0
    %593 = vmatpush1.xpose.msra.mxu0 0.0
    %594 = vmatprep.subr.mxu0 0.0
    %595 = vmatpush1.xpose.msra.mxu0 0.0
    %596 = vmatprep.subr.mxu0 0.0
    %597 = vmatpush1.xpose.msra.mxu0 0.0
    %598 = vmatprep.subr.mxu0 0.0
    %599 = vmatpush1.xpose.msra.mxu0 0.0
    %600 = vmatprep.subr.mxu0 0.0
    %601 = vmatpush1.xpose.msra.mxu0 0.0
    %602 = vmatprep.subr.mxu0 0.0
    %603 = vmatpush1.xpose.msra.mxu0 0.0
    %604 = vmatprep.subr.mxu0 0.0
    %605 = vmatpush1.xpose.msra.mxu0 0.0
    %606 = vmatprep.subr.mxu0 0.0
    %607 = vmatpush1.xpose.msra.mxu0 0.0
    %608 = vmatprep.subr.mxu0 0.0
    %609 = vmatpush1.xpose.msra.mxu0 0.0
    %610 = vmatprep.subr.mxu0 0.0
    %611 = vmatpush1.xpose.msra.mxu0 0.0
    %612 = vmatprep.subr.mxu0 0.0
    %613 = vmatpush1.xpose.msra.mxu0 0.0
    %614 = vmatprep.subr.mxu0 0.0
    %615 = vmatpush1.xpose.msra.mxu0 0.0
    %616 = vmatprep.subr.mxu0 0.0
    %617 = vmatpush1.xpose.msra.mxu0 0.0
    %618 = vmatprep.subr.mxu0 0.0
    %619 = vmatpush1.xpose.msra.mxu0 0.0
    %620 = vmatprep.subr.mxu0 0.0
    %621 = vmatpush1.xpose.msra.mxu0 0.0
    %622 = vmatprep.subr.mxu0 0.0
    %623 = vmatpush1.xpose.msra.mxu0 0.0
    %624 = vmatprep.subr.mxu0 0.0
    %625 = vmatpush1.xpose.msra.mxu0 0.0
    %626 = vmatprep.mubr.f32.mxu0 0.0
    %627 = vmatmul.mubr.f32.gmra.mrb[0].mxu0 %v551
    %v628 = vpop.f32.mrb[0].mxu0
    %v629 = vadd.f32 %v124, %v628
    %v630 = vpop.f32.mrb[0].mxu0
    %631 = vmatprep.mubr.f32.mxu0 0.0
    %632 = vmatmul.mubr.f32.gmra.mrb[0].mxu0 %v554
    %v633 = vpop.f32.mrb[0].mxu0
    %v634 = vadd.f32 %v125, %v633
    %v635 = vpop.f32.mrb[0].mxu0
    %636 = vdwg.mxu0
    %s637 = scalar_lea.vmem %s11, 128
    %v638 = vld [vmem:[%s637] sm:$0xff]
    %v639 = vld [vmem:[%s637 + $0x8] sm:$0xff]
    %v640 = vld [vmem:[%s637 + $0x10] sm:$0xff]
    %v641 = vld [vmem:[%s637 + $0x18] sm:$0xff]
    %v642 = vld [vmem:[%s637 + $0x20] sm:$0xff]
    %v643 = vld [vmem:[%s637 + $0x28] sm:$0xff]
    %v644 = vld [vmem:[%s637 + $0x30] sm:$0xff]
    %v645 = vld [vmem:[%s637 + $0x38] sm:$0xff]
    %v646 = vld [vmem:[%s637 + $0x40] sm:$0xff]
    %v647 = vld [vmem:[%s637 + $0x48] sm:$0xff]
    %v648 = vld [vmem:[%s637 + $0x50] sm:$0xff]
    %v649 = vld [vmem:[%s637 + $0x58] sm:$0xff]
    %v650 = vld [vmem:[%s637 + $0x60] sm:$0xff]
    %v651 = vld [vmem:[%s637 + $0x68] sm:$0xff]
    %v652 = vld [vmem:[%s637 + $0x70] sm:$0xff]
    %v653 = vld [vmem:[%s637 + $0x78] sm:$0xff]
    %s654 = scalar_lea.vmem %s13, 1
    %v655 = vld [vmem:[%s654] sm:$0x1]
    %v657 = vlaneseq
    %v658 = vshrl.u32 %v657, 7
    %v659 = vsub.s32 0, %v658
    %v660 = vrot.slane %v655, %v659
    %662 = vmatprep.subr.mxu0 0.0
    %663 = vmatpush1.msra.mxu0 %v638
    %664 = vmatprep.subr.mxu0 0.0
    %665 = vmatpush1.msra.mxu0 %v639
    %666 = vmatprep.subr.mxu0 0.0
    %667 = vmatpush1.msra.mxu0 %v640
    %668 = vmatprep.subr.mxu0 0.0
    %669 = vmatpush1.msra.mxu0 %v641
    %670 = vmatprep.subr.mxu0 0.0
    %671 = vmatpush1.msra.mxu0 %v642
    %672 = vmatprep.subr.mxu0 0.0
    %673 = vmatpush1.msra.mxu0 %v643
    %674 = vmatprep.subr.mxu0 0.0
    %675 = vmatpush1.msra.mxu0 %v644
    %676 = vmatprep.subr.mxu0 0.0
    %677 = vmatpush1.msra.mxu0 %v645
    %678 = vmatprep.subr.mxu0 0.0
    %679 = vmatpush1.msra.mxu0 %v646
    %680 = vmatprep.subr.mxu0 0.0
    %681 = vmatpush1.msra.mxu0 %v647
    %682 = vmatprep.subr.mxu0 0.0
    %683 = vmatpush1.msra.mxu0 %v648
    %684 = vmatprep.subr.mxu0 0.0
    %685 = vmatpush1.msra.mxu0 %v649
    %686 = vmatprep.subr.mxu0 0.0
    %687 = vmatpush1.msra.mxu0 %v650
    %688 = vmatprep.subr.mxu0 0.0
    %689 = vmatpush1.msra.mxu0 %v651
    %690 = vmatprep.subr.mxu0 0.0
    %691 = vmatpush1.msra.mxu0 %v652
    %692 = vmatprep.subr.mxu0 0.0
    %693 = vmatpush1.msra.mxu0 %v653
    %694 = vmatprep.subr.mxu0 0.0
    %695 = vmatpush1.msra.mxu0 0.0
    %696 = vmatprep.subr.mxu0 0.0
    %697 = vmatpush1.msra.mxu0 0.0
    %698 = vmatprep.subr.mxu0 0.0
    %699 = vmatpush1.msra.mxu0 0.0
    %700 = vmatprep.subr.mxu0 0.0
    %701 = vmatpush1.msra.mxu0 0.0
    %702 = vmatprep.subr.mxu0 0.0
    %703 = vmatpush1.msra.mxu0 0.0
    %704 = vmatprep.subr.mxu0 0.0
    %705 = vmatpush1.msra.mxu0 0.0
    %706 = vmatprep.subr.mxu0 0.0
    %707 = vmatpush1.msra.mxu0 0.0
    %708 = vmatprep.subr.mxu0 0.0
    %709 = vmatpush1.msra.mxu0 0.0
    %710 = vmatprep.subr.mxu0 0.0
    %711 = vmatpush1.msra.mxu0 0.0
    %712 = vmatprep.subr.mxu0 0.0
    %713 = vmatpush1.msra.mxu0 0.0
    %714 = vmatprep.subr.mxu0 0.0
    %715 = vmatpush1.msra.mxu0 0.0
    %716 = vmatprep.subr.mxu0 0.0
    %717 = vmatpush1.msra.mxu0 0.0
    %718 = vmatprep.subr.mxu0 0.0
    %719 = vmatpush1.msra.mxu0 0.0
    %720 = vmatprep.subr.mxu0 0.0
    %721 = vmatpush1.msra.mxu0 0.0
    %722 = vmatprep.subr.mxu0 0.0
    %723 = vmatpush1.msra.mxu0 0.0
    %724 = vmatprep.subr.mxu0 0.0
    %725 = vmatpush1.msra.mxu0 0.0
    %726 = vmatprep.mubr.f32.mxu0 0.0
    %727 = vmatmul.mubr.f32.gmra.mrb[0].mxu0 %v221
    %v728 = vpop.f32.mrb[0].mxu0
    %v729 = vadd.f32 %v660, %v728
    %v730 = vpop.f32.mrb[0].mxu0
    %731 = vmatprep.mubr.f32.mxu0 0.0
    %732 = vmatmul.mubr.f32.gmra.mrb[0].mxu0 %v222
    %v733 = vpop.f32.mrb[0].mxu0
    %v734 = vadd.f32 %v660, %v733
    %v735 = vpop.f32.mrb[0].mxu0
    %736 = vdwg.mxu0
    %s737 = scalar_lea.vmem %s15, 64
    %v738 = vld [vmem:[%s737] sm:$0xf]
    %v739 = vld [vmem:[%s737 + $0x4] sm:$0xf]
    %v740 = vld [vmem:[%s737 + $0x8] sm:$0xf]
    %v741 = vld [vmem:[%s737 + $0xc] sm:$0xf]
    %v742 = vld [vmem:[%s737 + $0x10] sm:$0xf]
    %v743 = vld [vmem:[%s737 + $0x14] sm:$0xf]
    %v744 = vld [vmem:[%s737 + $0x18] sm:$0xf]
    %v745 = vld [vmem:[%s737 + $0x1c] sm:$0xf]
    %v746 = vld [vmem:[%s737 + $0x20] sm:$0xf]
    %v747 = vld [vmem:[%s737 + $0x24] sm:$0xf]
    %v748 = vld [vmem:[%s737 + $0x28] sm:$0xf]
    %v749 = vld [vmem:[%s737 + $0x2c] sm:$0xf]
    %v750 = vld [vmem:[%s737 + $0x30] sm:$0xf]
    %v751 = vld [vmem:[%s737 + $0x34] sm:$0xf]
    %v752 = vld [vmem:[%s737 + $0x38] sm:$0xf]
    %v753 = vld [vmem:[%s737 + $0x3c] sm:$0xf]
    %s754 = scalar_lea.vmem %s17, 1
    %v755 = vld [vmem:[%s754] sm:$0x1]
    %v757 = vlaneseq
    %v758 = vshrl.u32 %v757, 7
    %v759 = vsub.s32 0, %v758
    %v760 = vrot.slane %v755, %v759
    %v778 = vunpack.c.l.b16 %v738
    %v779 = vunpack.c.l.b16 %v739
    %v780 = vunpack.c.l.b16 %v740
    %v781 = vunpack.c.l.b16 %v741
    %v782 = vunpack.c.l.b16 %v742
    %v783 = vunpack.c.l.b16 %v743
    %v784 = vunpack.c.l.b16 %v744
    %v785 = vunpack.c.l.b16 %v745
    %v786 = vunpack.c.l.b16 %v746
    %v787 = vunpack.c.l.b16 %v747
    %v788 = vunpack.c.l.b16 %v748
    %v789 = vunpack.c.l.b16 %v749
    %v790 = vunpack.c.l.b16 %v750
    %v791 = vunpack.c.l.b16 %v751
    %v792 = vunpack.c.l.b16 %v752
    %v793 = vunpack.c.l.b16 %v753
    %v794 = vpack.c.b16 %v779, %v778
    %v795 = vpack.c.b16 %v781, %v780
    %v796 = vpack.c.b16 %v783, %v782
    %v797 = vpack.c.b16 %v785, %v784
    %v798 = vpack.c.b16 %v787, %v786
    %v799 = vpack.c.b16 %v789, %v788
    %v800 = vpack.c.b16 %v791, %v790
    %v801 = vpack.c.b16 %v793, %v792
    %810 = vmatprep.subr.bf16.mxu0 0
    %811 = vmatpush1.bf16.msra.mxu0 %v794
    %812 = vmatprep.subr.bf16.mxu0 0
    %813 = vmatpush1.bf16.msra.mxu0 %v795
    %814 = vmatprep.subr.bf16.mxu0 0
    %815 = vmatpush1.bf16.msra.mxu0 %v796
    %816 = vmatprep.subr.bf16.mxu0 0
    %817 = vmatpush1.bf16.msra.mxu0 %v797
    %818 = vmatprep.subr.bf16.mxu0 0
    %819 = vmatpush1.bf16.msra.mxu0 %v798
    %820 = vmatprep.subr.bf16.mxu0 0
    %821 = vmatpush1.bf16.msra.mxu0 %v799
    %822 = vmatprep.subr.bf16.mxu0 0
    %823 = vmatpush1.bf16.msra.mxu0 %v800
    %824 = vmatprep.subr.bf16.mxu0 0
    %825 = vmatpush1.bf16.msra.mxu0 %v801
    %826 = vmatprep.subr.bf16.mxu0 0
    %827 = vmatpush1.bf16.msra.mxu0 0
    %828 = vmatprep.subr.bf16.mxu0 0
    %829 = vmatpush1.bf16.msra.mxu0 0
    %830 = vmatprep.subr.bf16.mxu0 0
    %831 = vmatpush1.bf16.msra.mxu0 0
    %832 = vmatprep.subr.bf16.mxu0 0
    %833 = vmatpush1.bf16.msra.mxu0 0
    %834 = vmatprep.subr.bf16.mxu0 0
    %835 = vmatpush1.bf16.msra.mxu0 0
    %836 = vmatprep.subr.bf16.mxu0 0
    %837 = vmatpush1.bf16.msra.mxu0 0
    %838 = vmatprep.subr.bf16.mxu0 0
    %839 = vmatpush1.bf16.msra.mxu0 0
    %840 = vmatprep.subr.bf16.mxu0 0
    %841 = vmatpush1.bf16.msra.mxu0 0
    %842 = vmatprep.mubr.f32.mxu0 0.0
    %843 = vmatmul.mubr.f32.gmra.mrb[0].mxu0 %v221
    %v844 = vpop.f32.mrb[0].mxu0
    %v845 = vadd.f32 %v760, %v844
    %v846 = vpop.f32.mrb[0].mxu0
    %847 = vmatprep.mubr.f32.mxu0 0.0
    %848 = vmatmul.mubr.f32.gmra.mrb[0].mxu0 %v222
    %v849 = vpop.f32.mrb[0].mxu0
    %v850 = vadd.f32 %v760, %v849
    %v851 = vpop.f32.mrb[0].mxu0
    %852 = vdwg.mxu0
    %s853 = scalar_lea.vmem %s19, 64
    %v854 = vld [vmem:[%s853] sm:$0xf]
    %v855 = vld [vmem:[%s853 + $0x4] sm:$0xf]
    %v856 = vld [vmem:[%s853 + $0x8] sm:$0xf]
    %v857 = vld [vmem:[%s853 + $0xc] sm:$0xf]
    %v858 = vld [vmem:[%s853 + $0x10] sm:$0xf]
    %v859 = vld [vmem:[%s853 + $0x14] sm:$0xf]
    %v860 = vld [vmem:[%s853 + $0x18] sm:$0xf]
    %v861 = vld [vmem:[%s853 + $0x1c] sm:$0xf]
    %v862 = vld [vmem:[%s853 + $0x20] sm:$0xf]
    %v863 = vld [vmem:[%s853 + $0x24] sm:$0xf]
    %v864 = vld [vmem:[%s853 + $0x28] sm:$0xf]
    %v865 = vld [vmem:[%s853 + $0x2c] sm:$0xf]
    %v866 = vld [vmem:[%s853 + $0x30] sm:$0xf]
    %v867 = vld [vmem:[%s853 + $0x34] sm:$0xf]
    %v868 = vld [vmem:[%s853 + $0x38] sm:$0xf]
    %v869 = vld [vmem:[%s853 + $0x3c] sm:$0xf]
    %s870 = scalar_lea.vmem %s21, 1
    %v871 = vld [vmem:[%s870] sm:$0x1]
    %v873 = vlaneseq
    %v874 = vshrl.u32 %v873, 7
    %v875 = vsub.s32 0, %v874
    %v876 = vrot.slane %v871, %v875
    %v894 = vunpack.c.l.b16 %v854
    %v895 = vunpack.c.l.b16 %v855
    %v896 = vunpack.c.l.b16 %v856
    %v897 = vunpack.c.l.b16 %v857
    %v898 = vunpack.c.l.b16 %v858
    %v899 = vunpack.c.l.b16 %v859
    %v900 = vunpack.c.l.b16 %v860
    %v901 = vunpack.c.l.b16 %v861
    %v902 = vunpack.c.l.b16 %v862
    %v903 = vunpack.c.l.b16 %v863
    %v904 = vunpack.c.l.b16 %v864
    %v905 = vunpack.c.l.b16 %v865
    %v906 = vunpack.c.l.b16 %v866
    %v907 = vunpack.c.l.b16 %v867
    %v908 = vunpack.c.l.b16 %v868
    %v909 = vunpack.c.l.b16 %v869
    %v910 = vpack.c.b16 %v895, %v894
    %v911 = vpack.c.b16 %v897, %v896
    %v912 = vpack.c.b16 %v899, %v898
    %v913 = vpack.c.b16 %v901, %v900
    %v914 = vpack.c.b16 %v903, %v902
    %v915 = vpack.c.b16 %v905, %v904
    %v916 = vpack.c.b16 %v907, %v906
    %v917 = vpack.c.b16 %v909, %v908
    %926 = vmatprep.subr.bf16.mxu0 0
    %927 = vmatpush1.bf16.msra.mxu0 %v910
    %928 = vmatprep.subr.bf16.mxu0 0
    %929 = vmatpush1.bf16.msra.mxu0 %v911
    %930 = vmatprep.subr.bf16.mxu0 0
    %931 = vmatpush1.bf16.msra.mxu0 %v912
    %932 = vmatprep.subr.bf16.mxu0 0
    %933 = vmatpush1.bf16.msra.mxu0 %v913
    %934 = vmatprep.subr.bf16.mxu0 0
    %935 = vmatpush1.bf16.msra.mxu0 %v914
    %936 = vmatprep.subr.bf16.mxu0 0
    %937 = vmatpush1.bf16.msra.mxu0 %v915
    %938 = vmatprep.subr.bf16.mxu0 0
    %939 = vmatpush1.bf16.msra.mxu0 %v916
    %940 = vmatprep.subr.bf16.mxu0 0
    %941 = vmatpush1.bf16.msra.mxu0 %v917
    %942 = vmatprep.subr.bf16.mxu0 0
    %943 = vmatpush1.bf16.msra.mxu0 0
    %944 = vmatprep.subr.bf16.mxu0 0
    %945 = vmatpush1.bf16.msra.mxu0 0
    %946 = vmatprep.subr.bf16.mxu0 0
    %947 = vmatpush1.bf16.msra.mxu0 0
    %948 = vmatprep.subr.bf16.mxu0 0
    %949 = vmatpush1.bf16.msra.mxu0 0
    %950 = vmatprep.subr.bf16.mxu0 0
    %951 = vmatpush1.bf16.msra.mxu0 0
    %952 = vmatprep.subr.bf16.mxu0 0
    %953 = vmatpush1.bf16.msra.mxu0 0
    %954 = vmatprep.subr.bf16.mxu0 0
    %955 = vmatpush1.bf16.msra.mxu0 0
    %956 = vmatprep.subr.bf16.mxu0 0
    %957 = vmatpush1.bf16.msra.mxu0 0
    %958 = vmatprep.mubr.f32.mxu0 0.0
    %959 = vmatmul.mubr.f32.gmra.mrb[0].mxu0 %v221
    %v960 = vpop.f32.mrb[0].mxu0
    %v961 = vadd.f32 %v876, %v960
    %v962 = vpop.f32.mrb[0].mxu0
    %963 = vmatprep.mubr.f32.mxu0 0.0
    %964 = vmatmul.mubr.f32.gmra.mrb[0].mxu0 %v222
    %v965 = vpop.f32.mrb[0].mxu0
    %v966 = vadd.f32 %v876, %v965
    %v967 = vpop.f32.mrb[0].mxu0
    %968 = vdwg.mxu0
    %v970 = vsel %vm549, %v729, 0
    %v973 = vsel %vm549, %v734, 0
    %v976 = vsel %vm549, %v845, 0
    %v979 = vsel %vm549, %v850, 0
    %981 = vmatprep.subr.mxu0 0.0
    %982 = vmatpush1.xpose.msra.mxu0 %v976
    %983 = vmatprep.subr.mxu0 0.0
    %984 = vmatpush1.xpose.msra.mxu0 %v979
    %985 = vmatprep.subr.mxu0 0.0
    %986 = vmatpush1.xpose.msra.mxu0 0.0
    %987 = vmatprep.subr.mxu0 0.0
    %988 = vmatpush1.xpose.msra.mxu0 0.0
    %989 = vmatprep.subr.mxu0 0.0
    %990 = vmatpush1.xpose.msra.mxu0 0.0
    %991 = vmatprep.subr.mxu0 0.0
    %992 = vmatpush1.xpose.msra.mxu0 0.0
    %993 = vmatprep.subr.mxu0 0.0
    %994 = vmatpush1.xpose.msra.mxu0 0.0
    %995 = vmatprep.subr.mxu0 0.0
    %996 = vmatpush1.xpose.msra.mxu0 0.0
    %997 = vmatprep.subr.mxu0 0.0
    %998 = vmatpush1.xpose.msra.mxu0 0.0
    %999 = vmatprep.subr.mxu0 0.0
    %1000 = vmatpush1.xpose.msra.mxu0 0.0
    %1001 = vmatprep.subr.mxu0 0.0
    %1002 = vmatpush1.xpose.msra.mxu0 0.0
    %1003 = vmatprep.subr.mxu0 0.0
    %1004 = vmatpush1.xpose.msra.mxu0 0.0
    %1005 = vmatprep.subr.mxu0 0.0
    %1006 = vmatpush1.xpose.msra.mxu0 0.0
    %1007 = vmatprep.subr.mxu0 0.0
    %1008 = vmatpush1.xpose.msra.mxu0 0.0
    %1009 = vmatprep.subr.mxu0 0.0
    %1010 = vmatpush1.xpose.msra.mxu0 0.0
    %1011 = vmatprep.subr.mxu0 0.0
    %1012 = vmatpush1.xpose.msra.mxu0 0.0
    %1013 = vmatprep.subr.mxu0 0.0
    %1014 = vmatpush1.xpose.msra.mxu0 0.0
    %1015 = vmatprep.subr.mxu0 0.0
    %1016 = vmatpush1.xpose.msra.mxu0 0.0
    %1017 = vmatprep.subr.mxu0 0.0
    %1018 = vmatpush1.xpose.msra.mxu0 0.0
    %1019 = vmatprep.subr.mxu0 0.0
    %1020 = vmatpush1.xpose.msra.mxu0 0.0
    %1021 = vmatprep.subr.mxu0 0.0
    %1022 = vmatpush1.xpose.msra.mxu0 0.0
    %1023 = vmatprep.subr.mxu0 0.0
    %1024 = vmatpush1.xpose.msra.mxu0 0.0
    %1025 = vmatprep.subr.mxu0 0.0
    %1026 = vmatpush1.xpose.msra.mxu0 0.0
    %1027 = vmatprep.subr.mxu0 0.0
    %1028 = vmatpush1.xpose.msra.mxu0 0.0
    %1029 = vmatprep.subr.mxu0 0.0
    %1030 = vmatpush1.xpose.msra.mxu0 0.0
    %1031 = vmatprep.subr.mxu0 0.0
    %1032 = vmatpush1.xpose.msra.mxu0 0.0
    %1033 = vmatprep.subr.mxu0 0.0
    %1034 = vmatpush1.xpose.msra.mxu0 0.0
    %1035 = vmatprep.subr.mxu0 0.0
    %1036 = vmatpush1.xpose.msra.mxu0 0.0
    %1037 = vmatprep.subr.mxu0 0.0
    %1038 = vmatpush1.xpose.msra.mxu0 0.0
    %1039 = vmatprep.subr.mxu0 0.0
    %1040 = vmatpush1.xpose.msra.mxu0 0.0
    %1041 = vmatprep.subr.mxu0 0.0
    %1042 = vmatpush1.xpose.msra.mxu0 0.0
    %1043 = vmatprep.subr.mxu0 0.0
    %1044 = vmatpush1.xpose.msra.mxu0 0.0
    %1045 = vmatprep.mubr.f32.mxu0 0.0
    %1046 = vmatmul.mubr.f32.gmra.mrb[0].mxu0 %v970
    %v1047 = vpop.f32.mrb[0].mxu0
    %v1048 = vadd.f32 %v124, %v1047
    %v1049 = vpop.f32.mrb[0].mxu0
    %1050 = vmatprep.mubr.f32.mxu0 0.0
    %1051 = vmatmul.mubr.f32.gmra.mrb[0].mxu0 %v973
    %v1052 = vpop.f32.mrb[0].mxu0
    %v1053 = vadd.f32 %v125, %v1052
    %v1054 = vpop.f32.mrb[0].mxu0
    %1055 = vdwg.mxu0
    %s1056 = scalar_lea.vmem %s11, 256
    %v1057 = vld [vmem:[%s1056] sm:$0xff]
    %v1058 = vld [vmem:[%s1056 + $0x8] sm:$0xff]
    %v1059 = vld [vmem:[%s1056 + $0x10] sm:$0xff]
    %v1060 = vld [vmem:[%s1056 + $0x18] sm:$0xff]
    %v1061 = vld [vmem:[%s1056 + $0x20] sm:$0xff]
    %v1062 = vld [vmem:[%s1056 + $0x28] sm:$0xff]
    %v1063 = vld [vmem:[%s1056 + $0x30] sm:$0xff]
    %v1064 = vld [vmem:[%s1056 + $0x38] sm:$0xff]
    %v1065 = vld [vmem:[%s1056 + $0x40] sm:$0xff]
    %v1066 = vld [vmem:[%s1056 + $0x48] sm:$0xff]
    %v1067 = vld [vmem:[%s1056 + $0x50] sm:$0xff]
    %v1068 = vld [vmem:[%s1056 + $0x58] sm:$0xff]
    %v1069 = vld [vmem:[%s1056 + $0x60] sm:$0xff]
    %v1070 = vld [vmem:[%s1056 + $0x68] sm:$0xff]
    %v1071 = vld [vmem:[%s1056 + $0x70] sm:$0xff]
    %v1072 = vld [vmem:[%s1056 + $0x78] sm:$0xff]
    %s1073 = scalar_lea.vmem %s13, 2
    %v1074 = vld [vmem:[%s1073] sm:$0x1]
    %v1076 = vlaneseq
    %v1077 = vshrl.u32 %v1076, 7
    %v1078 = vsub.s32 0, %v1077
    %v1079 = vrot.slane %v1074, %v1078
    %1081 = vmatprep.subr.mxu0 0.0
    %1082 = vmatpush1.msra.mxu0 %v1057
    %1083 = vmatprep.subr.mxu0 0.0
    %1084 = vmatpush1.msra.mxu0 %v1058
    %1085 = vmatprep.subr.mxu0 0.0
    %1086 = vmatpush1.msra.mxu0 %v1059
    %1087 = vmatprep.subr.mxu0 0.0
    %1088 = vmatpush1.msra.mxu0 %v1060
    %1089 = vmatprep.subr.mxu0 0.0
    %1090 = vmatpush1.msra.mxu0 %v1061
    %1091 = vmatprep.subr.mxu0 0.0
    %1092 = vmatpush1.msra.mxu0 %v1062
    %1093 = vmatprep.subr.mxu0 0.0
    %1094 = vmatpush1.msra.mxu0 %v1063
    %1095 = vmatprep.subr.mxu0 0.0
    %1096 = vmatpush1.msra.mxu0 %v1064
    %1097 = vmatprep.subr.mxu0 0.0
    %1098 = vmatpush1.msra.mxu0 %v1065
    %1099 = vmatprep.subr.mxu0 0.0
    %1100 = vmatpush1.msra.mxu0 %v1066
    %1101 = vmatprep.subr.mxu0 0.0
    %1102 = vmatpush1.msra.mxu0 %v1067
    %1103 = vmatprep.subr.mxu0 0.0
    %1104 = vmatpush1.msra.mxu0 %v1068
    %1105 = vmatprep.subr.mxu0 0.0
    %1106 = vmatpush1.msra.mxu0 %v1069
    %1107 = vmatprep.subr.mxu0 0.0
    %1108 = vmatpush1.msra.mxu0 %v1070
    %1109 = vmatprep.subr.mxu0 0.0
    %1110 = vmatpush1.msra.mxu0 %v1071
    %1111 = vmatprep.subr.mxu0 0.0
    %1112 = vmatpush1.msra.mxu0 %v1072
    %1113 = vmatprep.subr.mxu0 0.0
    %1114 = vmatpush1.msra.mxu0 0.0
    %1115 = vmatprep.subr.mxu0 0.0
    %1116 = vmatpush1.msra.mxu0 0.0
    %1117 = vmatprep.subr.mxu0 0.0
    %1118 = vmatpush1.msra.mxu0 0.0
    %1119 = vmatprep.subr.mxu0 0.0
    %1120 = vmatpush1.msra.mxu0 0.0
    %1121 = vmatprep.subr.mxu0 0.0
    %1122 = vmatpush1.msra.mxu0 0.0
    %1123 = vmatprep.subr.mxu0 0.0
    %1124 = vmatpush1.msra.mxu0 0.0
    %1125 = vmatprep.subr.mxu0 0.0
    %1126 = vmatpush1.msra.mxu0 0.0
    %1127 = vmatprep.subr.mxu0 0.0
    %1128 = vmatpush1.msra.mxu0 0.0
    %1129 = vmatprep.subr.mxu0 0.0
    %1130 = vmatpush1.msra.mxu0 0.0
    %1131 = vmatprep.subr.mxu0 0.0
    %1132 = vmatpush1.msra.mxu0 0.0
    %1133 = vmatprep.subr.mxu0 0.0
    %1134 = vmatpush1.msra.mxu0 0.0
    %1135 = vmatprep.subr.mxu0 0.0
    %1136 = vmatpush1.msra.mxu0 0.0
    %1137 = vmatprep.subr.mxu0 0.0
    %1138 = vmatpush1.msra.mxu0 0.0
    %1139 = vmatprep.subr.mxu0 0.0
    %1140 = vmatpush1.msra.mxu0 0.0
    %1141 = vmatprep.subr.mxu0 0.0
    %1142 = vmatpush1.msra.mxu0 0.0
    %1143 = vmatprep.subr.mxu0 0.0
    %1144 = vmatpush1.msra.mxu0 0.0
    %1145 = vmatprep.mubr.f32.mxu0 0.0
    %1146 = vmatmul.mubr.f32.gmra.mrb[0].mxu0 %v221
    %v1147 = vpop.f32.mrb[0].mxu0
    %v1148 = vadd.f32 %v1079, %v1147
    %v1149 = vpop.f32.mrb[0].mxu0
    %1150 = vmatprep.mubr.f32.mxu0 0.0
    %1151 = vmatmul.mubr.f32.gmra.mrb[0].mxu0 %v222
    %v1152 = vpop.f32.mrb[0].mxu0
    %v1153 = vadd.f32 %v1079, %v1152
    %v1154 = vpop.f32.mrb[0].mxu0
    %1155 = vdwg.mxu0
    %s1156 = scalar_lea.vmem %s15, 128
    %v1157 = vld [vmem:[%s1156] sm:$0xf]
    %v1158 = vld [vmem:[%s1156 + $0x4] sm:$0xf]
    %v1159 = vld [vmem:[%s1156 + $0x8] sm:$0xf]
    %v1160 = vld [vmem:[%s1156 + $0xc] sm:$0xf]
    %v1161 = vld [vmem:[%s1156 + $0x10] sm:$0xf]
    %v1162 = vld [vmem:[%s1156 + $0x14] sm:$0xf]
    %v1163 = vld [vmem:[%s1156 + $0x18] sm:$0xf]
    %v1164 = vld [vmem:[%s1156 + $0x1c] sm:$0xf]
    %v1165 = vld [vmem:[%s1156 + $0x20] sm:$0xf]
    %v1166 = vld [vmem:[%s1156 + $0x24] sm:$0xf]
    %v1167 = vld [vmem:[%s1156 + $0x28] sm:$0xf]
    %v1168 = vld [vmem:[%s1156 + $0x2c] sm:$0xf]
    %v1169 = vld [vmem:[%s1156 + $0x30] sm:$0xf]
    %v1170 = vld [vmem:[%s1156 + $0x34] sm:$0xf]
    %v1171 = vld [vmem:[%s1156 + $0x38] sm:$0xf]
    %v1172 = vld [vmem:[%s1156 + $0x3c] sm:$0xf]
    %s1173 = scalar_lea.vmem %s17, 2
    %v1174 = vld [vmem:[%s1173] sm:$0x1]
    %v1176 = vlaneseq
    %v1177 = vshrl.u32 %v1176, 7
    %v1178 = vsub.s32 0, %v1177
    %v1179 = vrot.slane %v1174, %v1178
    %v1197 = vunpack.c.l.b16 %v1157
    %v1198 = vunpack.c.l.b16 %v1158
    %v1199 = vunpack.c.l.b16 %v1159
    %v1200 = vunpack.c.l.b16 %v1160
    %v1201 = vunpack.c.l.b16 %v1161
    %v1202 = vunpack.c.l.b16 %v1162
    %v1203 = vunpack.c.l.b16 %v1163
    %v1204 = vunpack.c.l.b16 %v1164
    %v1205 = vunpack.c.l.b16 %v1165
    %v1206 = vunpack.c.l.b16 %v1166
    %v1207 = vunpack.c.l.b16 %v1167
    %v1208 = vunpack.c.l.b16 %v1168
    %v1209 = vunpack.c.l.b16 %v1169
    %v1210 = vunpack.c.l.b16 %v1170
    %v1211 = vunpack.c.l.b16 %v1171
    %v1212 = vunpack.c.l.b16 %v1172
    %v1213 = vpack.c.b16 %v1198, %v1197
    %v1214 = vpack.c.b16 %v1200, %v1199
    %v1215 = vpack.c.b16 %v1202, %v1201
    %v1216 = vpack.c.b16 %v1204, %v1203
    %v1217 = vpack.c.b16 %v1206, %v1205
    %v1218 = vpack.c.b16 %v1208, %v1207
    %v1219 = vpack.c.b16 %v1210, %v1209
    %v1220 = vpack.c.b16 %v1212, %v1211
    %1229 = vmatprep.subr.bf16.mxu0 0
    %1230 = vmatpush1.bf16.msra.mxu0 %v1213
    %1231 = vmatprep.subr.bf16.mxu0 0
    %1232 = vmatpush1.bf16.msra.mxu0 %v1214
    %1233 = vmatprep.subr.bf16.mxu0 0
    %1234 = vmatpush1.bf16.msra.mxu0 %v1215
    %1235 = vmatprep.subr.bf16.mxu0 0
    %1236 = vmatpush1.bf16.msra.mxu0 %v1216
    %1237 = vmatprep.subr.bf16.mxu0 0
    %1238 = vmatpush1.bf16.msra.mxu0 %v1217
    %1239 = vmatprep.subr.bf16.mxu0 0
    %1240 = vmatpush1.bf16.msra.mxu0 %v1218
    %1241 = vmatprep.subr.bf16.mxu0 0
    %1242 = vmatpush1.bf16.msra.mxu0 %v1219
    %1243 = vmatprep.subr.bf16.mxu0 0
    %1244 = vmatpush1.bf16.msra.mxu0 %v1220
    %1245 = vmatprep.subr.bf16.mxu0 0
    %1246 = vmatpush1.bf16.msra.mxu0 0
    %1247 = vmatprep.subr.bf16.mxu0 0
    %1248 = vmatpush1.bf16.msra.mxu0 0
    %1249 = vmatprep.subr.bf16.mxu0 0
    %1250 = vmatpush1.bf16.msra.mxu0 0
    %1251 = vmatprep.subr.bf16.mxu0 0
    %1252 = vmatpush1.bf16.msra.mxu0 0
    %1253 = vmatprep.subr.bf16.mxu0 0
    %1254 = vmatpush1.bf16.msra.mxu0 0
    %1255 = vmatprep.subr.bf16.mxu0 0
    %1256 = vmatpush1.bf16.msra.mxu0 0
    %1257 = vmatprep.subr.bf16.mxu0 0
    %1258 = vmatpush1.bf16.msra.mxu0 0
    %1259 = vmatprep.subr.bf16.mxu0 0
    %1260 = vmatpush1.bf16.msra.mxu0 0
    %1261 = vmatprep.mubr.f32.mxu0 0.0
    %1262 = vmatmul.mubr.f32.gmra.mrb[0].mxu0 %v221
    %v1263 = vpop.f32.mrb[0].mxu0
    %v1264 = vadd.f32 %v1179, %v1263
    %v1265 = vpop.f32.mrb[0].mxu0
    %1266 = vmatprep.mubr.f32.mxu0 0.0
    %1267 = vmatmul.mubr.f32.gmra.mrb[0].mxu0 %v222
    %v1268 = vpop.f32.mrb[0].mxu0
    %v1269 = vadd.f32 %v1179, %v1268
    %v1270 = vpop.f32.mrb[0].mxu0
    %1271 = vdwg.mxu0
    %s1272 = scalar_lea.vmem %s19, 128
    %v1273 = vld [vmem:[%s1272] sm:$0xf]
    %v1274 = vld [vmem:[%s1272 + $0x4] sm:$0xf]
    %v1275 = vld [vmem:[%s1272 + $0x8] sm:$0xf]
    %v1276 = vld [vmem:[%s1272 + $0xc] sm:$0xf]
    %v1277 = vld [vmem:[%s1272 + $0x10] sm:$0xf]
    %v1278 = vld [vmem:[%s1272 + $0x14] sm:$0xf]
    %v1279 = vld [vmem:[%s1272 + $0x18] sm:$0xf]
    %v1280 = vld [vmem:[%s1272 + $0x1c] sm:$0xf]
    %v1281 = vld [vmem:[%s1272 + $0x20] sm:$0xf]
    %v1282 = vld [vmem:[%s1272 + $0x24] sm:$0xf]
    %v1283 = vld [vmem:[%s1272 + $0x28] sm:$0xf]
    %v1284 = vld [vmem:[%s1272 + $0x2c] sm:$0xf]
    %v1285 = vld [vmem:[%s1272 + $0x30] sm:$0xf]
    %v1286 = vld [vmem:[%s1272 + $0x34] sm:$0xf]
    %v1287 = vld [vmem:[%s1272 + $0x38] sm:$0xf]
    %v1288 = vld [vmem:[%s1272 + $0x3c] sm:$0xf]
    %s1289 = scalar_lea.vmem %s21, 2
    %v1290 = vld [vmem:[%s1289] sm:$0x1]
    %v1292 = vlaneseq
    %v1293 = vshrl.u32 %v1292, 7
    %v1294 = vsub.s32 0, %v1293
    %v1295 = vrot.slane %v1290, %v1294
    %v1313 = vunpack.c.l.b16 %v1273
    %v1314 = vunpack.c.l.b16 %v1274
    %v1315 = vunpack.c.l.b16 %v1275
    %v1316 = vunpack.c.l.b16 %v1276
    %v1317 = vunpack.c.l.b16 %v1277
    %v1318 = vunpack.c.l.b16 %v1278
    %v1319 = vunpack.c.l.b16 %v1279
    %v1320 = vunpack.c.l.b16 %v1280
    %v1321 = vunpack.c.l.b16 %v1281
    %v1322 = vunpack.c.l.b16 %v1282
    %v1323 = vunpack.c.l.b16 %v1283
    %v1324 = vunpack.c.l.b16 %v1284
    %v1325 = vunpack.c.l.b16 %v1285
    %v1326 = vunpack.c.l.b16 %v1286
    %v1327 = vunpack.c.l.b16 %v1287
    %v1328 = vunpack.c.l.b16 %v1288
    %v1329 = vpack.c.b16 %v1314, %v1313
    %v1330 = vpack.c.b16 %v1316, %v1315
    %v1331 = vpack.c.b16 %v1318, %v1317
    %v1332 = vpack.c.b16 %v1320, %v1319
    %v1333 = vpack.c.b16 %v1322, %v1321
    %v1334 = vpack.c.b16 %v1324, %v1323
    %v1335 = vpack.c.b16 %v1326, %v1325
    %v1336 = vpack.c.b16 %v1328, %v1327
    %1345 = vmatprep.subr.bf16.mxu0 0
    %1346 = vmatpush1.bf16.msra.mxu0 %v1329
    %1347 = vmatprep.subr.bf16.mxu0 0
    %1348 = vmatpush1.bf16.msra.mxu0 %v1330
    %1349 = vmatprep.subr.bf16.mxu0 0
    %1350 = vmatpush1.bf16.msra.mxu0 %v1331
    %1351 = vmatprep.subr.bf16.mxu0 0
    %1352 = vmatpush1.bf16.msra.mxu0 %v1332
    %1353 = vmatprep.subr.bf16.mxu0 0
    %1354 = vmatpush1.bf16.msra.mxu0 %v1333
    %1355 = vmatprep.subr.bf16.mxu0 0
    %1356 = vmatpush1.bf16.msra.mxu0 %v1334
    %1357 = vmatprep.subr.bf16.mxu0 0
    %1358 = vmatpush1.bf16.msra.mxu0 %v1335
    %1359 = vmatprep.subr.bf16.mxu0 0
    %1360 = vmatpush1.bf16.msra.mxu0 %v1336
    %1361 = vmatprep.subr.bf16.mxu0 0
    %1362 = vmatpush1.bf16.msra.mxu0 0
    %1363 = vmatprep.subr.bf16.mxu0 0
    %1364 = vmatpush1.bf16.msra.mxu0 0
    %1365 = vmatprep.subr.bf16.mxu0 0
    %1366 = vmatpush1.bf16.msra.mxu0 0
    %1367 = vmatprep.subr.bf16.mxu0 0
    %1368 = vmatpush1.bf16.msra.mxu0 0
    %1369 = vmatprep.subr.bf16.mxu0 0
    %1370 = vmatpush1.bf16.msra.mxu0 0
    %1371 = vmatprep.subr.bf16.mxu0 0
    %1372 = vmatpush1.bf16.msra.mxu0 0
    %1373 = vmatprep.subr.bf16.mxu0 0
    %1374 = vmatpush1.bf16.msra.mxu0 0
    %1375 = vmatprep.subr.bf16.mxu0 0
    %1376 = vmatpush1.bf16.msra.mxu0 0
    %1377 = vmatprep.mubr.f32.mxu0 0.0
    %1378 = vmatmul.mubr.f32.gmra.mrb[0].mxu0 %v221
    %v1379 = vpop.f32.mrb[0].mxu0
    %v1380 = vadd.f32 %v1295, %v1379
    %v1381 = vpop.f32.mrb[0].mxu0
    %1382 = vmatprep.mubr.f32.mxu0 0.0
    %1383 = vmatmul.mubr.f32.gmra.mrb[0].mxu0 %v222
    %v1384 = vpop.f32.mrb[0].mxu0
    %v1385 = vadd.f32 %v1295, %v1384
    %v1386 = vpop.f32.mrb[0].mxu0
    %1387 = vdwg.mxu0
    %v1389 = vsel %vm549, %v1148, 0
    %v1392 = vsel %vm549, %v1153, 0
    %v1395 = vsel %vm549, %v1264, 0
    %v1398 = vsel %vm549, %v1269, 0
    %1400 = vmatprep.subr.mxu0 0.0
    %1401 = vmatpush1.xpose.msra.mxu0 %v1395
    %1402 = vmatprep.subr.mxu0 0.0
    %1403 = vmatpush1.xpose.msra.mxu0 %v1398
    %1404 = vmatprep.subr.mxu0 0.0
    %1405 = vmatpush1.xpose.msra.mxu0 0.0
    %1406 = vmatprep.subr.mxu0 0.0
    %1407 = vmatpush1.xpose.msra.mxu0 0.0
    %1408 = vmatprep.subr.mxu0 0.0
    %1409 = vmatpush1.xpose.msra.mxu0 0.0
    %1410 = vmatprep.subr.mxu0 0.0
    %1411 = vmatpush1.xpose.msra.mxu0 0.0
    %1412 = vmatprep.subr.mxu0 0.0
    %1413 = vmatpush1.xpose.msra.mxu0 0.0
    %1414 = vmatprep.subr.mxu0 0.0
    %1415 = vmatpush1.xpose.msra.mxu0 0.0
    %1416 = vmatprep.subr.mxu0 0.0
    %1417 = vmatpush1.xpose.msra.mxu0 0.0
    %1418 = vmatprep.subr.mxu0 0.0
    %1419 = vmatpush1.xpose.msra.mxu0 0.0
    %1420 = vmatprep.subr.mxu0 0.0
    %1421 = vmatpush1.xpose.msra.mxu0 0.0
    %1422 = vmatprep.subr.mxu0 0.0
    %1423 = vmatpush1.xpose.msra.mxu0 0.0
    %1424 = vmatprep.subr.mxu0 0.0
    %1425 = vmatpush1.xpose.msra.mxu0 0.0
    %1426 = vmatprep.subr.mxu0 0.0
    %1427 = vmatpush1.xpose.msra.mxu0 0.0
    %1428 = vmatprep.subr.mxu0 0.0
    %1429 = vmatpush1.xpose.msra.mxu0 0.0
    %1430 = vmatprep.subr.mxu0 0.0
    %1431 = vmatpush1.xpose.msra.mxu0 0.0
    %1432 = vmatprep.subr.mxu0 0.0
    %1433 = vmatpush1.xpose.msra.mxu0 0.0
    %1434 = vmatprep.subr.mxu0 0.0
    %1435 = vmatpush1.xpose.msra.mxu0 0.0
    %1436 = vmatprep.subr.mxu0 0.0
    %1437 = vmatpush1.xpose.msra.mxu0 0.0
    %1438 = vmatprep.subr.mxu0 0.0
    %1439 = vmatpush1.xpose.msra.mxu0 0.0
    %1440 = vmatprep.subr.mxu0 0.0
    %1441 = vmatpush1.xpose.msra.mxu0 0.0
    %1442 = vmatprep.subr.mxu0 0.0
    %1443 = vmatpush1.xpose.msra.mxu0 0.0
    %1444 = vmatprep.subr.mxu0 0.0
    %1445 = vmatpush1.xpose.msra.mxu0 0.0
    %1446 = vmatprep.subr.mxu0 0.0
    %1447 = vmatpush1.xpose.msra.mxu0 0.0
    %1448 = vmatprep.subr.mxu0 0.0
    %1449 = vmatpush1.xpose.msra.mxu0 0.0
    %1450 = vmatprep.subr.mxu0 0.0
    %1451 = vmatpush1.xpose.msra.mxu0 0.0
    %1452 = vmatprep.subr.mxu0 0.0
    %1453 = vmatpush1.xpose.msra.mxu0 0.0
    %1454 = vmatprep.subr.mxu0 0.0
    %1455 = vmatpush1.xpose.msra.mxu0 0.0
    %1456 = vmatprep.subr.mxu0 0.0
    %1457 = vmatpush1.xpose.msra.mxu0 0.0
    %1458 = vmatprep.subr.mxu0 0.0
    %1459 = vmatpush1.xpose.msra.mxu0 0.0
    %1460 = vmatprep.subr.mxu0 0.0
    %1461 = vmatpush1.xpose.msra.mxu0 0.0
    %1462 = vmatprep.subr.mxu0 0.0
    %1463 = vmatpush1.xpose.msra.mxu0 0.0
    %1464 = vmatprep.mubr.f32.mxu0 0.0
    %1465 = vmatmul.mubr.f32.gmra.mrb[0].mxu0 %v1389
    %v1466 = vpop.f32.mrb[0].mxu0
    %v1467 = vadd.f32 %v124, %v1466
    %v1468 = vpop.f32.mrb[0].mxu0
    %1469 = vmatprep.mubr.f32.mxu0 0.0
    %1470 = vmatmul.mubr.f32.gmra.mrb[0].mxu0 %v1392
    %v1471 = vpop.f32.mrb[0].mxu0
    %v1472 = vadd.f32 %v125, %v1471
    %v1473 = vpop.f32.mrb[0].mxu0
    %1474 = vdwg.mxu0
    %s1475 = scalar_lea.vmem %s11, 384
    %v1476 = vld [vmem:[%s1475] sm:$0xff]
    %v1477 = vld [vmem:[%s1475 + $0x8] sm:$0xff]
    %v1478 = vld [vmem:[%s1475 + $0x10] sm:$0xff]
    %v1479 = vld [vmem:[%s1475 + $0x18] sm:$0xff]
    %v1480 = vld [vmem:[%s1475 + $0x20] sm:$0xff]
    %v1481 = vld [vmem:[%s1475 + $0x28] sm:$0xff]
    %v1482 = vld [vmem:[%s1475 + $0x30] sm:$0xff]
    %v1483 = vld [vmem:[%s1475 + $0x38] sm:$0xff]
    %v1484 = vld [vmem:[%s1475 + $0x40] sm:$0xff]
    %v1485 = vld [vmem:[%s1475 + $0x48] sm:$0xff]
    %v1486 = vld [vmem:[%s1475 + $0x50] sm:$0xff]
    %v1487 = vld [vmem:[%s1475 + $0x58] sm:$0xff]
    %v1488 = vld [vmem:[%s1475 + $0x60] sm:$0xff]
    %v1489 = vld [vmem:[%s1475 + $0x68] sm:$0xff]
    %v1490 = vld [vmem:[%s1475 + $0x70] sm:$0xff]
    %v1491 = vld [vmem:[%s1475 + $0x78] sm:$0xff]
    %s1492 = scalar_lea.vmem %s13, 3
    %v1493 = vld [vmem:[%s1492] sm:$0x1]
    %v1495 = vlaneseq
    %v1496 = vshrl.u32 %v1495, 7
    %v1497 = vsub.s32 0, %v1496
    %v1498 = vrot.slane %v1493, %v1497
    %1500 = vmatprep.subr.mxu0 0.0
    %1501 = vmatpush1.msra.mxu0 %v1476
    %1502 = vmatprep.subr.mxu0 0.0
    %1503 = vmatpush1.msra.mxu0 %v1477
    %1504 = vmatprep.subr.mxu0 0.0
    %1505 = vmatpush1.msra.mxu0 %v1478
    %1506 = vmatprep.subr.mxu0 0.0
    %1507 = vmatpush1.msra.mxu0 %v1479
    %1508 = vmatprep.subr.mxu0 0.0
    %1509 = vmatpush1.msra.mxu0 %v1480
    %1510 = vmatprep.subr.mxu0 0.0
    %1511 = vmatpush1.msra.mxu0 %v1481
    %1512 = vmatprep.subr.mxu0 0.0
    %1513 = vmatpush1.msra.mxu0 %v1482
    %1514 = vmatprep.subr.mxu0 0.0
    %1515 = vmatpush1.msra.mxu0 %v1483
    %1516 = vmatprep.subr.mxu0 0.0
    %1517 = vmatpush1.msra.mxu0 %v1484
    %1518 = vmatprep.subr.mxu0 0.0
    %1519 = vmatpush1.msra.mxu0 %v1485
    %1520 = vmatprep.subr.mxu0 0.0
    %1521 = vmatpush1.msra.mxu0 %v1486
    %1522 = vmatprep.subr.mxu0 0.0
    %1523 = vmatpush1.msra.mxu0 %v1487
    %1524 = vmatprep.subr.mxu0 0.0
    %1525 = vmatpush1.msra.mxu0 %v1488
    %1526 = vmatprep.subr.mxu0 0.0
    %1527 = vmatpush1.msra.mxu0 %v1489
    %1528 = vmatprep.subr.mxu0 0.0
    %1529 = vmatpush1.msra.mxu0 %v1490
    %1530 = vmatprep.subr.mxu0 0.0
    %1531 = vmatpush1.msra.mxu0 %v1491
    %1532 = vmatprep.subr.mxu0 0.0
    %1533 = vmatpush1.msra.mxu0 0.0
    %1534 = vmatprep.subr.mxu0 0.0
    %1535 = vmatpush1.msra.mxu0 0.0
    %1536 = vmatprep.subr.mxu0 0.0
    %1537 = vmatpush1.msra.mxu0 0.0
    %1538 = vmatprep.subr.mxu0 0.0
    %1539 = vmatpush1.msra.mxu0 0.0
    %1540 = vmatprep.subr.mxu0 0.0
    %1541 = vmatpush1.msra.mxu0 0.0
    %1542 = vmatprep.subr.mxu0 0.0
    %1543 = vmatpush1.msra.mxu0 0.0
    %1544 = vmatprep.subr.mxu0 0.0
    %1545 = vmatpush1.msra.mxu0 0.0
    %1546 = vmatprep.subr.mxu0 0.0
    %1547 = vmatpush1.msra.mxu0 0.0
    %1548 = vmatprep.subr.mxu0 0.0
    %1549 = vmatpush1.msra.mxu0 0.0
    %1550 = vmatprep.subr.mxu0 0.0
    %1551 = vmatpush1.msra.mxu0 0.0
    %1552 = vmatprep.subr.mxu0 0.0
    %1553 = vmatpush1.msra.mxu0 0.0
    %1554 = vmatprep.subr.mxu0 0.0
    %1555 = vmatpush1.msra.mxu0 0.0
    %1556 = vmatprep.subr.mxu0 0.0
    %1557 = vmatpush1.msra.mxu0 0.0
    %1558 = vmatprep.subr.mxu0 0.0
    %1559 = vmatpush1.msra.mxu0 0.0
    %1560 = vmatprep.subr.mxu0 0.0
    %1561 = vmatpush1.msra.mxu0 0.0
    %1562 = vmatprep.subr.mxu0 0.0
    %1563 = vmatpush1.msra.mxu0 0.0
    %1564 = vmatprep.mubr.f32.mxu0 0.0
    %1565 = vmatmul.mubr.f32.gmra.mrb[0].mxu0 %v221
    %v1566 = vpop.f32.mrb[0].mxu0
    %v1567 = vadd.f32 %v1498, %v1566
    %v1568 = vpop.f32.mrb[0].mxu0
    %1569 = vmatprep.mubr.f32.mxu0 0.0
    %1570 = vmatmul.mubr.f32.gmra.mrb[0].mxu0 %v222
    %v1571 = vpop.f32.mrb[0].mxu0
    %v1572 = vadd.f32 %v1498, %v1571
    %v1573 = vpop.f32.mrb[0].mxu0
    %1574 = vdwg.mxu0
    %s1575 = scalar_lea.vmem %s15, 192
    %v1576 = vld [vmem:[%s1575] sm:$0xf]
    %v1577 = vld [vmem:[%s1575 + $0x4] sm:$0xf]
    %v1578 = vld [vmem:[%s1575 + $0x8] sm:$0xf]
    %v1579 = vld [vmem:[%s1575 + $0xc] sm:$0xf]
    %v1580 = vld [vmem:[%s1575 + $0x10] sm:$0xf]
    %v1581 = vld [vmem:[%s1575 + $0x14] sm:$0xf]
    %v1582 = vld [vmem:[%s1575 + $0x18] sm:$0xf]
    %v1583 = vld [vmem:[%s1575 + $0x1c] sm:$0xf]
    %v1584 = vld [vmem:[%s1575 + $0x20] sm:$0xf]
    %v1585 = vld [vmem:[%s1575 + $0x24] sm:$0xf]
    %v1586 = vld [vmem:[%s1575 + $0x28] sm:$0xf]
    %v1587 = vld [vmem:[%s1575 + $0x2c] sm:$0xf]
    %v1588 = vld [vmem:[%s1575 + $0x30] sm:$0xf]
    %v1589 = vld [vmem:[%s1575 + $0x34] sm:$0xf]
    %v1590 = vld [vmem:[%s1575 + $0x38] sm:$0xf]
    %v1591 = vld [vmem:[%s1575 + $0x3c] sm:$0xf]
    %s1592 = scalar_lea.vmem %s17, 3
    %v1593 = vld [vmem:[%s1592] sm:$0x1]
    %v1595 = vlaneseq
    %v1596 = vshrl.u32 %v1595, 7
    %v1597 = vsub.s32 0, %v1596
    %v1598 = vrot.slane %v1593, %v1597
    %v1616 = vunpack.c.l.b16 %v1576
    %v1617 = vunpack.c.l.b16 %v1577
    %v1618 = vunpack.c.l.b16 %v1578
    %v1619 = vunpack.c.l.b16 %v1579
    %v1620 = vunpack.c.l.b16 %v1580
    %v1621 = vunpack.c.l.b16 %v1581
    %v1622 = vunpack.c.l.b16 %v1582
    %v1623 = vunpack.c.l.b16 %v1583
    %v1624 = vunpack.c.l.b16 %v1584
    %v1625 = vunpack.c.l.b16 %v1585
    %v1626 = vunpack.c.l.b16 %v1586
    %v1627 = vunpack.c.l.b16 %v1587
    %v1628 = vunpack.c.l.b16 %v1588
    %v1629 = vunpack.c.l.b16 %v1589
    %v1630 = vunpack.c.l.b16 %v1590
    %v1631 = vunpack.c.l.b16 %v1591
    %v1632 = vpack.c.b16 %v1617, %v1616
    %v1633 = vpack.c.b16 %v1619, %v1618
    %v1634 = vpack.c.b16 %v1621, %v1620
    %v1635 = vpack.c.b16 %v1623, %v1622
    %v1636 = vpack.c.b16 %v1625, %v1624
    %v1637 = vpack.c.b16 %v1627, %v1626
    %v1638 = vpack.c.b16 %v1629, %v1628
    %v1639 = vpack.c.b16 %v1631, %v1630
    %1648 = vmatprep.subr.bf16.mxu0 0
    %1649 = vmatpush1.bf16.msra.mxu0 %v1632
    %1650 = vmatprep.subr.bf16.mxu0 0
    %1651 = vmatpush1.bf16.msra.mxu0 %v1633
    %1652 = vmatprep.subr.bf16.mxu0 0
    %1653 = vmatpush1.bf16.msra.mxu0 %v1634
    %1654 = vmatprep.subr.bf16.mxu0 0
    %1655 = vmatpush1.bf16.msra.mxu0 %v1635
    %1656 = vmatprep.subr.bf16.mxu0 0
    %1657 = vmatpush1.bf16.msra.mxu0 %v1636
    %1658 = vmatprep.subr.bf16.mxu0 0
    %1659 = vmatpush1.bf16.msra.mxu0 %v1637
    %1660 = vmatprep.subr.bf16.mxu0 0
    %1661 = vmatpush1.bf16.msra.mxu0 %v1638
    %1662 = vmatprep.subr.bf16.mxu0 0
    %1663 = vmatpush1.bf16.msra.mxu0 %v1639
    %1664 = vmatprep.subr.bf16.mxu0 0
    %1665 = vmatpush1.bf16.msra.mxu0 0
    %1666 = vmatprep.subr.bf16.mxu0 0
    %1667 = vmatpush1.bf16.msra.mxu0 0
    %1668 = vmatprep.subr.bf16.mxu0 0
    %1669 = vmatpush1.bf16.msra.mxu0 0
    %1670 = vmatprep.subr.bf16.mxu0 0
    %1671 = vmatpush1.bf16.msra.mxu0 0
    %1672 = vmatprep.subr.bf16.mxu0 0
    %1673 = vmatpush1.bf16.msra.mxu0 0
    %1674 = vmatprep.subr.bf16.mxu0 0
    %1675 = vmatpush1.bf16.msra.mxu0 0
    %1676 = vmatprep.subr.bf16.mxu0 0
    %1677 = vmatpush1.bf16.msra.mxu0 0
    %1678 = vmatprep.subr.bf16.mxu0 0
    %1679 = vmatpush1.bf16.msra.mxu0 0
    %1680 = vmatprep.mubr.f32.mxu0 0.0
    %1681 = vmatmul.mubr.f32.gmra.mrb[0].mxu0 %v221
    %v1682 = vpop.f32.mrb[0].mxu0
    %v1683 = vadd.f32 %v1598, %v1682
    %v1684 = vpop.f32.mrb[0].mxu0
    %1685 = vmatprep.mubr.f32.mxu0 0.0
    %1686 = vmatmul.mubr.f32.gmra.mrb[0].mxu0 %v222
    %v1687 = vpop.f32.mrb[0].mxu0
    %v1688 = vadd.f32 %v1598, %v1687
    %v1689 = vpop.f32.mrb[0].mxu0
    %1690 = vdwg.mxu0
    %s1691 = scalar_lea.vmem %s19, 192
    %v1692 = vld [vmem:[%s1691] sm:$0xf]
    %v1693 = vld [vmem:[%s1691 + $0x4] sm:$0xf]
    %v1694 = vld [vmem:[%s1691 + $0x8] sm:$0xf]
    %v1695 = vld [vmem:[%s1691 + $0xc] sm:$0xf]
    %v1696 = vld [vmem:[%s1691 + $0x10] sm:$0xf]
    %v1697 = vld [vmem:[%s1691 + $0x14] sm:$0xf]
    %v1698 = vld [vmem:[%s1691 + $0x18] sm:$0xf]
    %v1699 = vld [vmem:[%s1691 + $0x1c] sm:$0xf]
    %v1700 = vld [vmem:[%s1691 + $0x20] sm:$0xf]
    %v1701 = vld [vmem:[%s1691 + $0x24] sm:$0xf]
    %v1702 = vld [vmem:[%s1691 + $0x28] sm:$0xf]
    %v1703 = vld [vmem:[%s1691 + $0x2c] sm:$0xf]
    %v1704 = vld [vmem:[%s1691 + $0x30] sm:$0xf]
    %v1705 = vld [vmem:[%s1691 + $0x34] sm:$0xf]
    %v1706 = vld [vmem:[%s1691 + $0x38] sm:$0xf]
    %v1707 = vld [vmem:[%s1691 + $0x3c] sm:$0xf]
    %s1708 = scalar_lea.vmem %s21, 3
    %v1709 = vld [vmem:[%s1708] sm:$0x1]
    %v1711 = vlaneseq
    %v1712 = vshrl.u32 %v1711, 7
    %v1713 = vsub.s32 0, %v1712
    %v1714 = vrot.slane %v1709, %v1713
    %v1732 = vunpack.c.l.b16 %v1692
    %v1733 = vunpack.c.l.b16 %v1693
    %v1734 = vunpack.c.l.b16 %v1694
    %v1735 = vunpack.c.l.b16 %v1695
    %v1736 = vunpack.c.l.b16 %v1696
    %v1737 = vunpack.c.l.b16 %v1697
    %v1738 = vunpack.c.l.b16 %v1698
    %v1739 = vunpack.c.l.b16 %v1699
    %v1740 = vunpack.c.l.b16 %v1700
    %v1741 = vunpack.c.l.b16 %v1701
    %v1742 = vunpack.c.l.b16 %v1702
    %v1743 = vunpack.c.l.b16 %v1703
    %v1744 = vunpack.c.l.b16 %v1704
    %v1745 = vunpack.c.l.b16 %v1705
    %v1746 = vunpack.c.l.b16 %v1706
    %v1747 = vunpack.c.l.b16 %v1707
    %v1748 = vpack.c.b16 %v1733, %v1732
    %v1749 = vpack.c.b16 %v1735, %v1734
    %v1750 = vpack.c.b16 %v1737, %v1736
    %v1751 = vpack.c.b16 %v1739, %v1738
    %v1752 = vpack.c.b16 %v1741, %v1740
    %v1753 = vpack.c.b16 %v1743, %v1742
    %v1754 = vpack.c.b16 %v1745, %v1744
    %v1755 = vpack.c.b16 %v1747, %v1746
    %1764 = vmatprep.subr.bf16.mxu0 0
    %1765 = vmatpush1.bf16.msra.mxu0 %v1748
    %1766 = vmatprep.subr.bf16.mxu0 0
    %1767 = vmatpush1.bf16.msra.mxu0 %v1749
    %1768 = vmatprep.subr.bf16.mxu0 0
    %1769 = vmatpush1.bf16.msra.mxu0 %v1750
    %1770 = vmatprep.subr.bf16.mxu0 0
    %1771 = vmatpush1.bf16.msra.mxu0 %v1751
    %1772 = vmatprep.subr.bf16.mxu0 0
    %1773 = vmatpush1.bf16.msra.mxu0 %v1752
    %1774 = vmatprep.subr.bf16.mxu0 0
    %1775 = vmatpush1.bf16.msra.mxu0 %v1753
    %1776 = vmatprep.subr.bf16.mxu0 0
    %1777 = vmatpush1.bf16.msra.mxu0 %v1754
    %1778 = vmatprep.subr.bf16.mxu0 0
    %1779 = vmatpush1.bf16.msra.mxu0 %v1755
    %1780 = vmatprep.subr.bf16.mxu0 0
    %1781 = vmatpush1.bf16.msra.mxu0 0
    %1782 = vmatprep.subr.bf16.mxu0 0
    %1783 = vmatpush1.bf16.msra.mxu0 0
    %1784 = vmatprep.subr.bf16.mxu0 0
    %1785 = vmatpush1.bf16.msra.mxu0 0
    %1786 = vmatprep.subr.bf16.mxu0 0
    %1787 = vmatpush1.bf16.msra.mxu0 0
    %1788 = vmatprep.subr.bf16.mxu0 0
    %1789 = vmatpush1.bf16.msra.mxu0 0
    %1790 = vmatprep.subr.bf16.mxu0 0
    %1791 = vmatpush1.bf16.msra.mxu0 0
    %1792 = vmatprep.subr.bf16.mxu0 0
    %1793 = vmatpush1.bf16.msra.mxu0 0
    %1794 = vmatprep.subr.bf16.mxu0 0
    %1795 = vmatpush1.bf16.msra.mxu0 0
    %1796 = vmatprep.mubr.f32.mxu0 0.0
    %1797 = vmatmul.mubr.f32.gmra.mrb[0].mxu0 %v221
    %v1798 = vpop.f32.mrb[0].mxu0
    %v1799 = vadd.f32 %v1714, %v1798
    %v1800 = vpop.f32.mrb[0].mxu0
    %1801 = vmatprep.mubr.f32.mxu0 0.0
    %1802 = vmatmul.mubr.f32.gmra.mrb[0].mxu0 %v222
    %v1803 = vpop.f32.mrb[0].mxu0
    %v1804 = vadd.f32 %v1714, %v1803
    %v1805 = vpop.f32.mrb[0].mxu0
    %1806 = vdwg.mxu0
    %v1808 = vsel %vm549, %v1567, 0
    %v1811 = vsel %vm549, %v1572, 0
    %v1814 = vsel %vm549, %v1683, 0
    %v1817 = vsel %vm549, %v1688, 0
    %1819 = vmatprep.subr.mxu0 0.0
    %1820 = vmatpush1.xpose.msra.mxu0 %v1814
    %1821 = vmatprep.subr.mxu0 0.0
    %1822 = vmatpush1.xpose.msra.mxu0 %v1817
    %1823 = vmatprep.subr.mxu0 0.0
    %1824 = vmatpush1.xpose.msra.mxu0 0.0
    %1825 = vmatprep.subr.mxu0 0.0
    %1826 = vmatpush1.xpose.msra.mxu0 0.0
    %1827 = vmatprep.subr.mxu0 0.0
    %1828 = vmatpush1.xpose.msra.mxu0 0.0
    %1829 = vmatprep.subr.mxu0 0.0
    %1830 = vmatpush1.xpose.msra.mxu0 0.0
    %1831 = vmatprep.subr.mxu0 0.0
    %1832 = vmatpush1.xpose.msra.mxu0 0.0
    %1833 = vmatprep.subr.mxu0 0.0
    %1834 = vmatpush1.xpose.msra.mxu0 0.0
    %1835 = vmatprep.subr.mxu0 0.0
    %1836 = vmatpush1.xpose.msra.mxu0 0.0
    %1837 = vmatprep.subr.mxu0 0.0
    %1838 = vmatpush1.xpose.msra.mxu0 0.0
    %1839 = vmatprep.subr.mxu0 0.0
    %1840 = vmatpush1.xpose.msra.mxu0 0.0
    %1841 = vmatprep.subr.mxu0 0.0
    %1842 = vmatpush1.xpose.msra.mxu0 0.0
    %1843 = vmatprep.subr.mxu0 0.0
    %1844 = vmatpush1.xpose.msra.mxu0 0.0
    %1845 = vmatprep.subr.mxu0 0.0
    %1846 = vmatpush1.xpose.msra.mxu0 0.0
    %1847 = vmatprep.subr.mxu0 0.0
    %1848 = vmatpush1.xpose.msra.mxu0 0.0
    %1849 = vmatprep.subr.mxu0 0.0
    %1850 = vmatpush1.xpose.msra.mxu0 0.0
    %1851 = vmatprep.subr.mxu0 0.0
    %1852 = vmatpush1.xpose.msra.mxu0 0.0
    %1853 = vmatprep.subr.mxu0 0.0
    %1854 = vmatpush1.xpose.msra.mxu0 0.0
    %1855 = vmatprep.subr.mxu0 0.0
    %1856 = vmatpush1.xpose.msra.mxu0 0.0
    %1857 = vmatprep.subr.mxu0 0.0
    %1858 = vmatpush1.xpose.msra.mxu0 0.0
    %1859 = vmatprep.subr.mxu0 0.0
    %1860 = vmatpush1.xpose.msra.mxu0 0.0
    %1861 = vmatprep.subr.mxu0 0.0
    %1862 = vmatpush1.xpose.msra.mxu0 0.0
    %1863 = vmatprep.subr.mxu0 0.0
    %1864 = vmatpush1.xpose.msra.mxu0 0.0
    %1865 = vmatprep.subr.mxu0 0.0
    %1866 = vmatpush1.xpose.msra.mxu0 0.0
    %1867 = vmatprep.subr.mxu0 0.0
    %1868 = vmatpush1.xpose.msra.mxu0 0.0
    %1869 = vmatprep.subr.mxu0 0.0
    %1870 = vmatpush1.xpose.msra.mxu0 0.0
    %1871 = vmatprep.subr.mxu0 0.0
    %1872 = vmatpush1.xpose.msra.mxu0 0.0
    %1873 = vmatprep.subr.mxu0 0.0
    %1874 = vmatpush1.xpose.msra.mxu0 0.0
    %1875 = vmatprep.subr.mxu0 0.0
    %1876 = vmatpush1.xpose.msra.mxu0 0.0
    %1877 = vmatprep.subr.mxu0 0.0
    %1878 = vmatpush1.xpose.msra.mxu0 0.0
    %1879 = vmatprep.subr.mxu0 0.0
    %1880 = vmatpush1.xpose.msra.mxu0 0.0
    %1881 = vmatprep.subr.mxu0 0.0
    %1882 = vmatpush1.xpose.msra.mxu0 0.0
    %1883 = vmatprep.mubr.f32.mxu0 0.0
    %1884 = vmatmul.mubr.f32.gmra.mrb[0].mxu0 %v1808
    %v1885 = vpop.f32.mrb[0].mxu0
    %v1886 = vadd.f32 %v124, %v1885
    %v1887 = vpop.f32.mrb[0].mxu0
    %1888 = vmatprep.mubr.f32.mxu0 0.0
    %1889 = vmatmul.mubr.f32.gmra.mrb[0].mxu0 %v1811
    %v1890 = vpop.f32.mrb[0].mxu0
    %v1891 = vadd.f32 %v125, %v1890
    %v1892 = vpop.f32.mrb[0].mxu0
    %1893 = vdwg.mxu0
    %v1894 = vsel %vm137, %v629, -inf
    %1895 = vmax.xlane.f32.xlu0 %v1894
    %v1896 = vpop.xlane.xlu0 %1895
    %v1897 = vsel %vm137, %v634, -inf
    %1898 = vmax.xlane.f32.xlu0 %v1897
    %v1899 = vpop.xlane.xlu0 %1898
    %v1900 = vsel %vm137, %v1048, -inf
    %1901 = vmax.xlane.f32.xlu0 %v1900
    %v1902 = vpop.xlane.xlu0 %1901
    %v1903 = vsel %vm137, %v1053, -inf
    %1904 = vmax.xlane.f32.xlu0 %v1903
    %v1905 = vpop.xlane.xlu0 %1904
    %v1906 = vsel %vm137, %v1467, -inf
    %1907 = vmax.xlane.f32.xlu0 %v1906
    %v1908 = vpop.xlane.xlu0 %1907
    %v1909 = vsel %vm137, %v1472, -inf
    %1910 = vmax.xlane.f32.xlu0 %v1909
    %v1911 = vpop.xlane.xlu0 %1910
    %v1912 = vsel %vm137, %v1886, -inf
    %1913 = vmax.xlane.f32.xlu0 %v1912
    %v1914 = vpop.xlane.xlu0 %1913
    %v1915 = vsel %vm137, %v1891, -inf
    %1916 = vmax.xlane.f32.xlu0 %v1915
    %v1917 = vpop.xlane.xlu0 %1916
    %v1918 = vsub.f32 %v629, %v1896
    %v1919 = vsub.f32 %v634, %v1899
    %v1920 = vsub.f32 %v1048, %v1902
    %v1921 = vsub.f32 %v1053, %v1905
    %v1922 = vsub.f32 %v1467, %v1908
    %v1923 = vsub.f32 %v1472, %v1911
    %v1924 = vsub.f32 %v1886, %v1914
    %v1925 = vsub.f32 %v1891, %v1917
    %v1926 = vmul.f32 %v1918, 1.442695
    %v1927 = vpow.pop %v1926
    %v1928 = vmul.f32 %v1919, 1.442695
    %v1929 = vpow.pop %v1928
    %v1930 = vmul.f32 %v1920, 1.442695
    %v1931 = vpow.pop %v1930
    %v1932 = vmul.f32 %v1921, 1.442695
    %v1933 = vpow.pop %v1932
    %v1934 = vmul.f32 %v1922, 1.442695
    %v1935 = vpow.pop %v1934
    %v1936 = vmul.f32 %v1923, 1.442695
    %v1937 = vpow.pop %v1936
    %v1938 = vmul.f32 %v1924, 1.442695
    %v1939 = vpow.pop %v1938
    %v1940 = vmul.f32 %v1925, 1.442695
    %v1941 = vpow.pop %v1940
    %v1942 = vsel %vm137, %v1927, 0.0
    %1943 = vadd.xlane.f32.xlu0 %v1942
    %v1944 = vpop.xlane.xlu0 %1943
    %v1945 = vsel %vm137, %v1929, 0.0
    %1946 = vadd.xlane.f32.xlu0 %v1945
    %v1947 = vpop.xlane.xlu0 %1946
    %v1948 = vsel %vm137, %v1931, 0.0
    %1949 = vadd.xlane.f32.xlu0 %v1948
    %v1950 = vpop.xlane.xlu0 %1949
    %v1951 = vsel %vm137, %v1933, 0.0
    %1952 = vadd.xlane.f32.xlu0 %v1951
    %v1953 = vpop.xlane.xlu0 %1952
    %v1954 = vsel %vm137, %v1935, 0.0
    %1955 = vadd.xlane.f32.xlu0 %v1954
    %v1956 = vpop.xlane.xlu0 %1955
    %v1957 = vsel %vm137, %v1937, 0.0
    %1958 = vadd.xlane.f32.xlu0 %v1957
    %v1959 = vpop.xlane.xlu0 %1958
    %v1960 = vsel %vm137, %v1939, 0.0
    %1961 = vadd.xlane.f32.xlu0 %v1960
    %v1962 = vpop.xlane.xlu0 %1961
    %v1963 = vsel %vm137, %v1941, 0.0
    %1964 = vadd.xlane.f32.xlu0 %v1963
    %v1965 = vpop.xlane.xlu0 %1964
    %v1966 = vrcp.pop %v1944
    %v1967 = vrcp.pop %v1947
    %v1968 = vrcp.pop %v1950
    %v1969 = vrcp.pop %v1953
    %v1970 = vrcp.pop %v1956
    %v1971 = vrcp.pop %v1959
    %v1972 = vrcp.pop %v1962
    %v1973 = vrcp.pop %v1965
    %v1974 = vmul.f32 %v1927, %v1966
    %v1975 = vmul.f32 %v1929, %v1967
    %v1976 = vmul.f32 %v1931, %v1968
    %v1977 = vmul.f32 %v1933, %v1969
    %v1978 = vmul.f32 %v1935, %v1970
    %v1979 = vmul.f32 %v1937, %v1971
    %v1980 = vmul.f32 %v1939, %v1972
    %v1981 = vmul.f32 %v1941, %v1973
    %v1982 = vld [vmem:[%s25] sm:$0x1]
    %v1984 = vsel %vm137, %v1974, 0
    %v1987 = vsel %vm137, %v1975, 0
    %1989 = vmatprep.subr.mxu0 0.0
    %1990 = vmatpush1.msra.mxu0 %v541
    %1991 = vmatprep.subr.mxu0 0.0
    %1992 = vmatpush1.msra.mxu0 %v546
    %1993 = vmatprep.subr.mxu0 0.0
    %1994 = vmatpush1.msra.mxu0 0.0
    %1995 = vmatprep.subr.mxu0 0.0
    %1996 = vmatpush1.msra.mxu0 0.0
    %1997 = vmatprep.subr.mxu0 0.0
    %1998 = vmatpush1.msra.mxu0 0.0
    %1999 = vmatprep.subr.mxu0 0.0
    %2000 = vmatpush1.msra.mxu0 0.0
    %2001 = vmatprep.subr.mxu0 0.0
    %2002 = vmatpush1.msra.mxu0 0.0
    %2003 = vmatprep.subr.mxu0 0.0
    %2004 = vmatpush1.msra.mxu0 0.0
    %2005 = vmatprep.subr.mxu0 0.0
    %2006 = vmatpush1.msra.mxu0 0.0
    %2007 = vmatprep.subr.mxu0 0.0
    %2008 = vmatpush1.msra.mxu0 0.0
    %2009 = vmatprep.subr.mxu0 0.0
    %2010 = vmatpush1.msra.mxu0 0.0
    %2011 = vmatprep.subr.mxu0 0.0
    %2012 = vmatpush1.msra.mxu0 0.0
    %2013 = vmatprep.subr.mxu0 0.0
    %2014 = vmatpush1.msra.mxu0 0.0
    %2015 = vmatprep.subr.mxu0 0.0
    %2016 = vmatpush1.msra.mxu0 0.0
    %2017 = vmatprep.subr.mxu0 0.0
    %2018 = vmatpush1.msra.mxu0 0.0
    %2019 = vmatprep.subr.mxu0 0.0
    %2020 = vmatpush1.msra.mxu0 0.0
    %2021 = vmatprep.subr.mxu0 0.0
    %2022 = vmatpush1.msra.mxu0 0.0
    %2023 = vmatprep.subr.mxu0 0.0
    %2024 = vmatpush1.msra.mxu0 0.0
    %2025 = vmatprep.subr.mxu0 0.0
    %2026 = vmatpush1.msra.mxu0 0.0
    %2027 = vmatprep.subr.mxu0 0.0
    %2028 = vmatpush1.msra.mxu0 0.0
    %2029 = vmatprep.subr.mxu0 0.0
    %2030 = vmatpush1.msra.mxu0 0.0
    %2031 = vmatprep.subr.mxu0 0.0
    %2032 = vmatpush1.msra.mxu0 0.0
    %2033 = vmatprep.subr.mxu0 0.0
    %2034 = vmatpush1.msra.mxu0 0.0
    %2035 = vmatprep.subr.mxu0 0.0
    %2036 = vmatpush1.msra.mxu0 0.0
    %2037 = vmatprep.subr.mxu0 0.0
    %2038 = vmatpush1.msra.mxu0 0.0
    %2039 = vmatprep.subr.mxu0 0.0
    %2040 = vmatpush1.msra.mxu0 0.0
    %2041 = vmatprep.subr.mxu0 0.0
    %2042 = vmatpush1.msra.mxu0 0.0
    %2043 = vmatprep.subr.mxu0 0.0
    %2044 = vmatpush1.msra.mxu0 0.0
    %2045 = vmatprep.subr.mxu0 0.0
    %2046 = vmatpush1.msra.mxu0 0.0
    %2047 = vmatprep.subr.mxu0 0.0
    %2048 = vmatpush1.msra.mxu0 0.0
    %2049 = vmatprep.subr.mxu0 0.0
    %2050 = vmatpush1.msra.mxu0 0.0
    %2051 = vmatprep.subr.mxu0 0.0
    %2052 = vmatpush1.msra.mxu0 0.0
    %2053 = vmatprep.mubr.f32.mxu0 0.0
    %2054 = vmatmul.mubr.f32.gmra.mrb[0].mxu0 %v1984
    %v2055 = vpop.f32.mrb[0].mxu0
    %v2056 = vadd.f32 0.0, %v2055
    %v2057 = vpop.f32.mrb[0].mxu0
    %2058 = vmatprep.mubr.f32.mxu0 0.0
    %2059 = vmatmul.mubr.f32.gmra.mrb[0].mxu0 %v1987
    %v2060 = vpop.f32.mrb[0].mxu0
    %v2061 = vadd.f32 0.0, %v2060
    %v2062 = vpop.f32.mrb[0].mxu0
    %2063 = vdwg.mxu0
    %v2064 = vld [vmem:[%s23] sm:$0xf]
    %v2065 = vld [vmem:[%s23 + $0x4] sm:$0xf]
    %v2066 = vld [vmem:[%s23 + $0x8] sm:$0xf]
    %v2067 = vld [vmem:[%s23 + $0xc] sm:$0xf]
    %v2072 = vunpack.c.l.b16 %v2064
    %v2073 = vunpack.c.l.b16 %v2065
    %v2074 = vunpack.c.l.b16 %v2066
    %v2075 = vunpack.c.l.b16 %v2067
    %v2076 = vpack.c.b16 %v2073, %v2072
    %v2077 = vpack.c.b16 %v2075, %v2074
    %v2081 = vsel %vm549, %v2056, 0
    %v2084 = vsel %vm549, %v2061, 0
    %2086 = vmatprep.subr.bf16.mxu0 0
    %2087 = vmatpush1.bf16.msra.mxu0 %v2076
    %2088 = vmatprep.subr.bf16.mxu0 0
    %2089 = vmatpush1.bf16.msra.mxu0 %v2077
    %2090 = vmatprep.subr.bf16.mxu0 0
    %2091 = vmatpush1.bf16.msra.mxu0 0
    %2092 = vmatprep.subr.bf16.mxu0 0
    %2093 = vmatpush1.bf16.msra.mxu0 0
    %2094 = vmatprep.subr.bf16.mxu0 0
    %2095 = vmatpush1.bf16.msra.mxu0 0
    %2096 = vmatprep.subr.bf16.mxu0 0
    %2097 = vmatpush1.bf16.msra.mxu0 0
    %2098 = vmatprep.subr.bf16.mxu0 0
    %2099 = vmatpush1.bf16.msra.mxu0 0
    %2100 = vmatprep.subr.bf16.mxu0 0
    %2101 = vmatpush1.bf16.msra.mxu0 0
    %2102 = vmatprep.subr.bf16.mxu0 0
    %2103 = vmatpush1.bf16.msra.mxu0 0
    %2104 = vmatprep.subr.bf16.mxu0 0
    %2105 = vmatpush1.bf16.msra.mxu0 0
    %2106 = vmatprep.subr.bf16.mxu0 0
    %2107 = vmatpush1.bf16.msra.mxu0 0
    %2108 = vmatprep.subr.bf16.mxu0 0
    %2109 = vmatpush1.bf16.msra.mxu0 0
    %2110 = vmatprep.subr.bf16.mxu0 0
    %2111 = vmatpush1.bf16.msra.mxu0 0
    %2112 = vmatprep.subr.bf16.mxu0 0
    %2113 = vmatpush1.bf16.msra.mxu0 0
    %2114 = vmatprep.subr.bf16.mxu0 0
    %2115 = vmatpush1.bf16.msra.mxu0 0
    %2116 = vmatprep.subr.bf16.mxu0 0
    %2117 = vmatpush1.bf16.msra.mxu0 0
    %2118 = vmatprep.mubr.f32.mxu0 0.0
    %2119 = vmatmul.mubr.f32.gmra.mrb[0].mxu0 %v2081
    %v2120 = vpop.f32.mrb[0].mxu0
    %v2121 = vadd.f32 0.0, %v2120
    %v2122 = vpop.f32.mrb[0].mxu0
    %2123 = vmatprep.mubr.f32.mxu0 0.0
    %2124 = vmatmul.mubr.f32.gmra.mrb[0].mxu0 %v2084
    %v2125 = vpop.f32.mrb[0].mxu0
    %v2126 = vadd.f32 0.0, %v2125
    %v2127 = vpop.f32.mrb[0].mxu0
    %2128 = vdwg.mxu0
    %v2130 = vlaneseq
    %v2131 = vshrl.u32 %v2130, 7
    %v2132 = vsub.s32 0, %v2131
    %v2133 = vrot.slane %v1982, %v2132
    %v2135 = vadd.f32 %v2133, %v2121
    %v2136 = vadd.f32 %v2133, %v2126
    %v2138 = vsel %vm137, %v1976, 0
    %v2141 = vsel %vm137, %v1977, 0
    %2143 = vmatprep.subr.mxu0 0.0
    %2144 = vmatpush1.msra.mxu0 %v961
    %2145 = vmatprep.subr.mxu0 0.0
    %2146 = vmatpush1.msra.mxu0 %v966
    %2147 = vmatprep.subr.mxu0 0.0
    %2148 = vmatpush1.msra.mxu0 0.0
    %2149 = vmatprep.subr.mxu0 0.0
    %2150 = vmatpush1.msra.mxu0 0.0
    %2151 = vmatprep.subr.mxu0 0.0
    %2152 = vmatpush1.msra.mxu0 0.0
    %2153 = vmatprep.subr.mxu0 0.0
    %2154 = vmatpush1.msra.mxu0 0.0
    %2155 = vmatprep.subr.mxu0 0.0
    %2156 = vmatpush1.msra.mxu0 0.0
    %2157 = vmatprep.subr.mxu0 0.0
    %2158 = vmatpush1.msra.mxu0 0.0
    %2159 = vmatprep.subr.mxu0 0.0
    %2160 = vmatpush1.msra.mxu0 0.0
    %2161 = vmatprep.subr.mxu0 0.0
    %2162 = vmatpush1.msra.mxu0 0.0
    %2163 = vmatprep.subr.mxu0 0.0
    %2164 = vmatpush1.msra.mxu0 0.0
    %2165 = vmatprep.subr.mxu0 0.0
    %2166 = vmatpush1.msra.mxu0 0.0
    %2167 = vmatprep.subr.mxu0 0.0
    %2168 = vmatpush1.msra.mxu0 0.0
    %2169 = vmatprep.subr.mxu0 0.0
    %2170 = vmatpush1.msra.mxu0 0.0
    %2171 = vmatprep.subr.mxu0 0.0
    %2172 = vmatpush1.msra.mxu0 0.0
    %2173 = vmatprep.subr.mxu0 0.0
    %2174 = vmatpush1.msra.mxu0 0.0
    %2175 = vmatprep.subr.mxu0 0.0
    %2176 = vmatpush1.msra.mxu0 0.0
    %2177 = vmatprep.subr.mxu0 0.0
    %2178 = vmatpush1.msra.mxu0 0.0
    %2179 = vmatprep.subr.mxu0 0.0
    %2180 = vmatpush1.msra.mxu0 0.0
    %2181 = vmatprep.subr.mxu0 0.0
    %2182 = vmatpush1.msra.mxu0 0.0
    %2183 = vmatprep.subr.mxu0 0.0
    %2184 = vmatpush1.msra.mxu0 0.0
    %2185 = vmatprep.subr.mxu0 0.0
    %2186 = vmatpush1.msra.mxu0 0.0
    %2187 = vmatprep.subr.mxu0 0.0
    %2188 = vmatpush1.msra.mxu0 0.0
    %2189 = vmatprep.subr.mxu0 0.0
    %2190 = vmatpush1.msra.mxu0 0.0
    %2191 = vmatprep.subr.mxu0 0.0
    %2192 = vmatpush1.msra.mxu0 0.0
    %2193 = vmatprep.subr.mxu0 0.0
    %2194 = vmatpush1.msra.mxu0 0.0
    %2195 = vmatprep.subr.mxu0 0.0
    %2196 = vmatpush1.msra.mxu0 0.0
    %2197 = vmatprep.subr.mxu0 0.0
    %2198 = vmatpush1.msra.mxu0 0.0
    %2199 = vmatprep.subr.mxu0 0.0
    %2200 = vmatpush1.msra.mxu0 0.0
    %2201 = vmatprep.subr.mxu0 0.0
    %2202 = vmatpush1.msra.mxu0 0.0
    %2203 = vmatprep.subr.mxu0 0.0
    %2204 = vmatpush1.msra.mxu0 0.0
    %2205 = vmatprep.subr.mxu0 0.0
    %2206 = vmatpush1.msra.mxu0 0.0
    %2207 = vmatprep.mubr.f32.mxu0 0.0
    %2208 = vmatmul.mubr.f32.gmra.mrb[0].mxu0 %v2138
    %v2209 = vpop.f32.mrb[0].mxu0
    %v2210 = vadd.f32 0.0, %v2209
    %v2211 = vpop.f32.mrb[0].mxu0
    %2212 = vmatprep.mubr.f32.mxu0 0.0
    %2213 = vmatmul.mubr.f32.gmra.mrb[0].mxu0 %v2141
    %v2214 = vpop.f32.mrb[0].mxu0
    %v2215 = vadd.f32 0.0, %v2214
    %v2216 = vpop.f32.mrb[0].mxu0
    %2217 = vdwg.mxu0
    %s2218 = scalar_lea.vmem %s23, 16
    %v2219 = vld [vmem:[%s2218] sm:$0xf]
    %v2220 = vld [vmem:[%s2218 + $0x4] sm:$0xf]
    %v2221 = vld [vmem:[%s2218 + $0x8] sm:$0xf]
    %v2222 = vld [vmem:[%s2218 + $0xc] sm:$0xf]
    %v2227 = vunpack.c.l.b16 %v2219
    %v2228 = vunpack.c.l.b16 %v2220
    %v2229 = vunpack.c.l.b16 %v2221
    %v2230 = vunpack.c.l.b16 %v2222
    %v2231 = vpack.c.b16 %v2228, %v2227
    %v2232 = vpack.c.b16 %v2230, %v2229
    %v2236 = vsel %vm549, %v2210, 0
    %v2239 = vsel %vm549, %v2215, 0
    %2241 = vmatprep.subr.bf16.mxu0 0
    %2242 = vmatpush1.bf16.msra.mxu0 %v2231
    %2243 = vmatprep.subr.bf16.mxu0 0
    %2244 = vmatpush1.bf16.msra.mxu0 %v2232
    %2245 = vmatprep.subr.bf16.mxu0 0
    %2246 = vmatpush1.bf16.msra.mxu0 0
    %2247 = vmatprep.subr.bf16.mxu0 0
    %2248 = vmatpush1.bf16.msra.mxu0 0
    %2249 = vmatprep.subr.bf16.mxu0 0
    %2250 = vmatpush1.bf16.msra.mxu0 0
    %2251 = vmatprep.subr.bf16.mxu0 0
    %2252 = vmatpush1.bf16.msra.mxu0 0
    %2253 = vmatprep.subr.bf16.mxu0 0
    %2254 = vmatpush1.bf16.msra.mxu0 0
    %2255 = vmatprep.subr.bf16.mxu0 0
    %2256 = vmatpush1.bf16.msra.mxu0 0
    %2257 = vmatprep.subr.bf16.mxu0 0
    %2258 = vmatpush1.bf16.msra.mxu0 0
    %2259 = vmatprep.subr.bf16.mxu0 0
    %2260 = vmatpush1.bf16.msra.mxu0 0
    %2261 = vmatprep.subr.bf16.mxu0 0
    %2262 = vmatpush1.bf16.msra.mxu0 0
    %2263 = vmatprep.subr.bf16.mxu0 0
    %2264 = vmatpush1.bf16.msra.mxu0 0
    %2265 = vmatprep.subr.bf16.mxu0 0
    %2266 = vmatpush1.bf16.msra.mxu0 0
    %2267 = vmatprep.subr.bf16.mxu0 0
    %2268 = vmatpush1.bf16.msra.mxu0 0
    %2269 = vmatprep.subr.bf16.mxu0 0
    %2270 = vmatpush1.bf16.msra.mxu0 0
    %2271 = vmatprep.subr.bf16.mxu0 0
    %2272 = vmatpush1.bf16.msra.mxu0 0
    %2273 = vmatprep.mubr.f32.mxu0 0.0
    %2274 = vmatmul.mubr.f32.gmra.mrb[0].mxu0 %v2236
    %v2275 = vpop.f32.mrb[0].mxu0
    %v2276 = vadd.f32 0.0, %v2275
    %v2277 = vpop.f32.mrb[0].mxu0
    %2278 = vmatprep.mubr.f32.mxu0 0.0
    %2279 = vmatmul.mubr.f32.gmra.mrb[0].mxu0 %v2239
    %v2280 = vpop.f32.mrb[0].mxu0
    %v2281 = vadd.f32 0.0, %v2280
    %v2282 = vpop.f32.mrb[0].mxu0
    %2283 = vdwg.mxu0
    %v2284 = vadd.f32 %v2135, %v2276
    %v2285 = vadd.f32 %v2136, %v2281
    %v2287 = vsel %vm137, %v1978, 0
    %v2290 = vsel %vm137, %v1979, 0
    %2292 = vmatprep.subr.mxu0 0.0
    %2293 = vmatpush1.msra.mxu0 %v1380
    %2294 = vmatprep.subr.mxu0 0.0
    %2295 = vmatpush1.msra.mxu0 %v1385
    %2296 = vmatprep.subr.mxu0 0.0
    %2297 = vmatpush1.msra.mxu0 0.0
    %2298 = vmatprep.subr.mxu0 0.0
    %2299 = vmatpush1.msra.mxu0 0.0
    %2300 = vmatprep.subr.mxu0 0.0
    %2301 = vmatpush1.msra.mxu0 0.0
    %2302 = vmatprep.subr.mxu0 0.0
    %2303 = vmatpush1.msra.mxu0 0.0
    %2304 = vmatprep.subr.mxu0 0.0
    %2305 = vmatpush1.msra.mxu0 0.0
    %2306 = vmatprep.subr.mxu0 0.0
    %2307 = vmatpush1.msra.mxu0 0.0
    %2308 = vmatprep.subr.mxu0 0.0
    %2309 = vmatpush1.msra.mxu0 0.0
    %2310 = vmatprep.subr.mxu0 0.0
    %2311 = vmatpush1.msra.mxu0 0.0
    %2312 = vmatprep.subr.mxu0 0.0
    %2313 = vmatpush1.msra.mxu0 0.0
    %2314 = vmatprep.subr.mxu0 0.0
    %2315 = vmatpush1.msra.mxu0 0.0
    %2316 = vmatprep.subr.mxu0 0.0
    %2317 = vmatpush1.msra.mxu0 0.0
    %2318 = vmatprep.subr.mxu0 0.0
    %2319 = vmatpush1.msra.mxu0 0.0
    %2320 = vmatprep.subr.mxu0 0.0
    %2321 = vmatpush1.msra.mxu0 0.0
    %2322 = vmatprep.subr.mxu0 0.0
    %2323 = vmatpush1.msra.mxu0 0.0
    %2324 = vmatprep.subr.mxu0 0.0
    %2325 = vmatpush1.msra.mxu0 0.0
    %2326 = vmatprep.subr.mxu0 0.0
    %2327 = vmatpush1.msra.mxu0 0.0
    %2328 = vmatprep.subr.mxu0 0.0
    %2329 = vmatpush1.msra.mxu0 0.0
    %2330 = vmatprep.subr.mxu0 0.0
    %2331 = vmatpush1.msra.mxu0 0.0
    %2332 = vmatprep.subr.mxu0 0.0
    %2333 = vmatpush1.msra.mxu0 0.0
    %2334 = vmatprep.subr.mxu0 0.0
    %2335 = vmatpush1.msra.mxu0 0.0
    %2336 = vmatprep.subr.mxu0 0.0
    %2337 = vmatpush1.msra.mxu0 0.0
    %2338 = vmatprep.subr.mxu0 0.0
    %2339 = vmatpush1.msra.mxu0 0.0
    %2340 = vmatprep.subr.mxu0 0.0
    %2341 = vmatpush1.msra.mxu0 0.0
    %2342 = vmatprep.subr.mxu0 0.0
    %2343 = vmatpush1.msra.mxu0 0.0
    %2344 = vmatprep.subr.mxu0 0.0
    %2345 = vmatpush1.msra.mxu0 0.0
    %2346 = vmatprep.subr.mxu0 0.0
    %2347 = vmatpush1.msra.mxu0 0.0
    %2348 = vmatprep.subr.mxu0 0.0
    %2349 = vmatpush1.msra.mxu0 0.0
    %2350 = vmatprep.subr.mxu0 0.0
    %2351 = vmatpush1.msra.mxu0 0.0
    %2352 = vmatprep.subr.mxu0 0.0
    %2353 = vmatpush1.msra.mxu0 0.0
    %2354 = vmatprep.subr.mxu0 0.0
    %2355 = vmatpush1.msra.mxu0 0.0
    %2356 = vmatprep.mubr.f32.mxu0 0.0
    %2357 = vmatmul.mubr.f32.gmra.mrb[0].mxu0 %v2287
    %v2358 = vpop.f32.mrb[0].mxu0
    %v2359 = vadd.f32 0.0, %v2358
    %v2360 = vpop.f32.mrb[0].mxu0
    %2361 = vmatprep.mubr.f32.mxu0 0.0
    %2362 = vmatmul.mubr.f32.gmra.mrb[0].mxu0 %v2290
    %v2363 = vpop.f32.mrb[0].mxu0
    %v2364 = vadd.f32 0.0, %v2363
    %v2365 = vpop.f32.mrb[0].mxu0
    %2366 = vdwg.mxu0
    %s2367 = scalar_lea.vmem %s23, 32
    %v2368 = vld [vmem:[%s2367] sm:$0xf]
    %v2369 = vld [vmem:[%s2367 + $0x4] sm:$0xf]
    %v2370 = vld [vmem:[%s2367 + $0x8] sm:$0xf]
    %v2371 = vld [vmem:[%s2367 + $0xc] sm:$0xf]
    %v2376 = vunpack.c.l.b16 %v2368
    %v2377 = vunpack.c.l.b16 %v2369
    %v2378 = vunpack.c.l.b16 %v2370
    %v2379 = vunpack.c.l.b16 %v2371
    %v2380 = vpack.c.b16 %v2377, %v2376
    %v2381 = vpack.c.b16 %v2379, %v2378
    %v2385 = vsel %vm549, %v2359, 0
    %v2388 = vsel %vm549, %v2364, 0
    %2390 = vmatprep.subr.bf16.mxu0 0
    %2391 = vmatpush1.bf16.msra.mxu0 %v2380
    %2392 = vmatprep.subr.bf16.mxu0 0
    %2393 = vmatpush1.bf16.msra.mxu0 %v2381
    %2394 = vmatprep.subr.bf16.mxu0 0
    %2395 = vmatpush1.bf16.msra.mxu0 0
    %2396 = vmatprep.subr.bf16.mxu0 0
    %2397 = vmatpush1.bf16.msra.mxu0 0
    %2398 = vmatprep.subr.bf16.mxu0 0
    %2399 = vmatpush1.bf16.msra.mxu0 0
    %2400 = vmatprep.subr.bf16.mxu0 0
    %2401 = vmatpush1.bf16.msra.mxu0 0
    %2402 = vmatprep.subr.bf16.mxu0 0
    %2403 = vmatpush1.bf16.msra.mxu0 0
    %2404 = vmatprep.subr.bf16.mxu0 0
    %2405 = vmatpush1.bf16.msra.mxu0 0
    %2406 = vmatprep.subr.bf16.mxu0 0
    %2407 = vmatpush1.bf16.msra.mxu0 0
    %2408 = vmatprep.subr.bf16.mxu0 0
    %2409 = vmatpush1.bf16.msra.mxu0 0
    %2410 = vmatprep.subr.bf16.mxu0 0
    %2411 = vmatpush1.bf16.msra.mxu0 0
    %2412 = vmatprep.subr.bf16.mxu0 0
    %2413 = vmatpush1.bf16.msra.mxu0 0
    %2414 = vmatprep.subr.bf16.mxu0 0
    %2415 = vmatpush1.bf16.msra.mxu0 0
    %2416 = vmatprep.subr.bf16.mxu0 0
    %2417 = vmatpush1.bf16.msra.mxu0 0
    %2418 = vmatprep.subr.bf16.mxu0 0
    %2419 = vmatpush1.bf16.msra.mxu0 0
    %2420 = vmatprep.subr.bf16.mxu0 0
    %2421 = vmatpush1.bf16.msra.mxu0 0
    %2422 = vmatprep.mubr.f32.mxu0 0.0
    %2423 = vmatmul.mubr.f32.gmra.mrb[0].mxu0 %v2385
    %v2424 = vpop.f32.mrb[0].mxu0
    %v2425 = vadd.f32 0.0, %v2424
    %v2426 = vpop.f32.mrb[0].mxu0
    %2427 = vmatprep.mubr.f32.mxu0 0.0
    %2428 = vmatmul.mubr.f32.gmra.mrb[0].mxu0 %v2388
    %v2429 = vpop.f32.mrb[0].mxu0
    %v2430 = vadd.f32 0.0, %v2429
    %v2431 = vpop.f32.mrb[0].mxu0
    %2432 = vdwg.mxu0
    %v2433 = vadd.f32 %v2284, %v2425
    %v2434 = vadd.f32 %v2285, %v2430
    %v2436 = vsel %vm137, %v1980, 0
    %v2439 = vsel %vm137, %v1981, 0
    %2441 = vmatprep.subr.mxu0 0.0
    %2442 = vmatpush1.msra.mxu0 %v1799
    %2443 = vmatprep.subr.mxu0 0.0
    %2444 = vmatpush1.msra.mxu0 %v1804
    %2445 = vmatprep.subr.mxu0 0.0
    %2446 = vmatpush1.msra.mxu0 0.0
    %2447 = vmatprep.subr.mxu0 0.0
    %2448 = vmatpush1.msra.mxu0 0.0
    %2449 = vmatprep.subr.mxu0 0.0
    %2450 = vmatpush1.msra.mxu0 0.0
    %2451 = vmatprep.subr.mxu0 0.0
    %2452 = vmatpush1.msra.mxu0 0.0
    %2453 = vmatprep.subr.mxu0 0.0
    %2454 = vmatpush1.msra.mxu0 0.0
    %2455 = vmatprep.subr.mxu0 0.0
    %2456 = vmatpush1.msra.mxu0 0.0
    %2457 = vmatprep.subr.mxu0 0.0
    %2458 = vmatpush1.msra.mxu0 0.0
    %2459 = vmatprep.subr.mxu0 0.0
    %2460 = vmatpush1.msra.mxu0 0.0
    %2461 = vmatprep.subr.mxu0 0.0
    %2462 = vmatpush1.msra.mxu0 0.0
    %2463 = vmatprep.subr.mxu0 0.0
    %2464 = vmatpush1.msra.mxu0 0.0
    %2465 = vmatprep.subr.mxu0 0.0
    %2466 = vmatpush1.msra.mxu0 0.0
    %2467 = vmatprep.subr.mxu0 0.0
    %2468 = vmatpush1.msra.mxu0 0.0
    %2469 = vmatprep.subr.mxu0 0.0
    %2470 = vmatpush1.msra.mxu0 0.0
    %2471 = vmatprep.subr.mxu0 0.0
    %2472 = vmatpush1.msra.mxu0 0.0
    %2473 = vmatprep.subr.mxu0 0.0
    %2474 = vmatpush1.msra.mxu0 0.0
    %2475 = vmatprep.subr.mxu0 0.0
    %2476 = vmatpush1.msra.mxu0 0.0
    %2477 = vmatprep.subr.mxu0 0.0
    %2478 = vmatpush1.msra.mxu0 0.0
    %2479 = vmatprep.subr.mxu0 0.0
    %2480 = vmatpush1.msra.mxu0 0.0
    %2481 = vmatprep.subr.mxu0 0.0
    %2482 = vmatpush1.msra.mxu0 0.0
    %2483 = vmatprep.subr.mxu0 0.0
    %2484 = vmatpush1.msra.mxu0 0.0
    %2485 = vmatprep.subr.mxu0 0.0
    %2486 = vmatpush1.msra.mxu0 0.0
    %2487 = vmatprep.subr.mxu0 0.0
    %2488 = vmatpush1.msra.mxu0 0.0
    %2489 = vmatprep.subr.mxu0 0.0
    %2490 = vmatpush1.msra.mxu0 0.0
    %2491 = vmatprep.subr.mxu0 0.0
    %2492 = vmatpush1.msra.mxu0 0.0
    %2493 = vmatprep.subr.mxu0 0.0
    %2494 = vmatpush1.msra.mxu0 0.0
    %2495 = vmatprep.subr.mxu0 0.0
    %2496 = vmatpush1.msra.mxu0 0.0
    %2497 = vmatprep.subr.mxu0 0.0
    %2498 = vmatpush1.msra.mxu0 0.0
    %2499 = vmatprep.subr.mxu0 0.0
    %2500 = vmatpush1.msra.mxu0 0.0
    %2501 = vmatprep.subr.mxu0 0.0
    %2502 = vmatpush1.msra.mxu0 0.0
    %2503 = vmatprep.subr.mxu0 0.0
    %2504 = vmatpush1.msra.mxu0 0.0
    %2505 = vmatprep.mubr.f32.mxu0 0.0
    %2506 = vmatmul.mubr.f32.gmra.mrb[0].mxu0 %v2436
    %v2507 = vpop.f32.mrb[0].mxu0
    %v2508 = vadd.f32 0.0, %v2507
    %v2509 = vpop.f32.mrb[0].mxu0
    %2510 = vmatprep.mubr.f32.mxu0 0.0
    %2511 = vmatmul.mubr.f32.gmra.mrb[0].mxu0 %v2439
    %v2512 = vpop.f32.mrb[0].mxu0
    %v2513 = vadd.f32 0.0, %v2512
    %v2514 = vpop.f32.mrb[0].mxu0
    %2515 = vdwg.mxu0
    %s2516 = scalar_lea.vmem %s23, 48
    %v2517 = vld [vmem:[%s2516] sm:$0xf]
    %v2518 = vld [vmem:[%s2516 + $0x4] sm:$0xf]
    %v2519 = vld [vmem:[%s2516 + $0x8] sm:$0xf]
    %v2520 = vld [vmem:[%s2516 + $0xc] sm:$0xf]
    %v2525 = vunpack.c.l.b16 %v2517
    %v2526 = vunpack.c.l.b16 %v2518
    %v2527 = vunpack.c.l.b16 %v2519
    %v2528 = vunpack.c.l.b16 %v2520
    %v2529 = vpack.c.b16 %v2526, %v2525
    %v2530 = vpack.c.b16 %v2528, %v2527
    %v2534 = vsel %vm549, %v2508, 0
    %v2537 = vsel %vm549, %v2513, 0
    %2539 = vmatprep.subr.bf16.mxu0 0
    %2540 = vmatpush1.bf16.msra.mxu0 %v2529
    %2541 = vmatprep.subr.bf16.mxu0 0
    %2542 = vmatpush1.bf16.msra.mxu0 %v2530
    %2543 = vmatprep.subr.bf16.mxu0 0
    %2544 = vmatpush1.bf16.msra.mxu0 0
    %2545 = vmatprep.subr.bf16.mxu0 0
    %2546 = vmatpush1.bf16.msra.mxu0 0
    %2547 = vmatprep.subr.bf16.mxu0 0
    %2548 = vmatpush1.bf16.msra.mxu0 0
    %2549 = vmatprep.subr.bf16.mxu0 0
    %2550 = vmatpush1.bf16.msra.mxu0 0
    %2551 = vmatprep.subr.bf16.mxu0 0
    %2552 = vmatpush1.bf16.msra.mxu0 0
    %2553 = vmatprep.subr.bf16.mxu0 0
    %2554 = vmatpush1.bf16.msra.mxu0 0
    %2555 = vmatprep.subr.bf16.mxu0 0
    %2556 = vmatpush1.bf16.msra.mxu0 0
    %2557 = vmatprep.subr.bf16.mxu0 0
    %2558 = vmatpush1.bf16.msra.mxu0 0
    %2559 = vmatprep.subr.bf16.mxu0 0
    %2560 = vmatpush1.bf16.msra.mxu0 0
    %2561 = vmatprep.subr.bf16.mxu0 0
    %2562 = vmatpush1.bf16.msra.mxu0 0
    %2563 = vmatprep.subr.bf16.mxu0 0
    %2564 = vmatpush1.bf16.msra.mxu0 0
    %2565 = vmatprep.subr.bf16.mxu0 0
    %2566 = vmatpush1.bf16.msra.mxu0 0
    %2567 = vmatprep.subr.bf16.mxu0 0
    %2568 = vmatpush1.bf16.msra.mxu0 0
    %2569 = vmatprep.subr.bf16.mxu0 0
    %2570 = vmatpush1.bf16.msra.mxu0 0
    %2571 = vmatprep.mubr.f32.mxu0 0.0
    %2572 = vmatmul.mubr.f32.gmra.mrb[0].mxu0 %v2534
    %v2573 = vpop.f32.mrb[0].mxu0
    %v2574 = vadd.f32 0.0, %v2573
    %v2575 = vpop.f32.mrb[0].mxu0
    %2576 = vmatprep.mubr.f32.mxu0 0.0
    %2577 = vmatmul.mubr.f32.gmra.mrb[0].mxu0 %v2537
    %v2578 = vpop.f32.mrb[0].mxu0
    %v2579 = vadd.f32 0.0, %v2578
    %v2580 = vpop.f32.mrb[0].mxu0
    %2581 = vdwg.mxu0
    %v2582 = vadd.f32 %v2433, %v2574
    %v2583 = vadd.f32 %v2434, %v2579
    %v2584 = vadd.f32 %v221, %v2582
    %v2585 = vadd.f32 %v222, %v2583
    %v2586 = vld [vmem:[%s35] sm:$0x1]
    %v2587 = vld [vmem:[%s37] sm:$0x1]
    %2588 = vadd.xlane.f32.xlu0 %v2584
    %v2589 = vpop.xlane.xlu0 %2588
    %2590 = vadd.xlane.f32.xlu0 %v2585
    %v2591 = vpop.xlane.xlu0 %2590
    %v2592 = vrcp.pop 128.0
    %v2593 = vmul.f32 %v2589, %v2592
    %v2594 = vmul.f32 %v2591, %v2592
    %v2595 = vsub.f32 %v2584, %v2593
    %v2596 = vsub.f32 %v2585, %v2594
    %v2597 = vmul.f32 %v2595, %v2595
    %v2598 = vmul.f32 %v2596, %v2596
    %2599 = vadd.xlane.f32.xlu0 %v2597
    %v2600 = vpop.xlane.xlu0 %2599
    %2601 = vadd.xlane.f32.xlu0 %v2598
    %v2602 = vpop.xlane.xlu0 %2601
    %v2603 = vmul.f32 %v2600, %v2592
    %v2604 = vmul.f32 %v2602, %v2592
    %v2605 = vadd.f32 %v2603, 1e-05
    %v2606 = vadd.f32 %v2604, 1e-05
    %v2607 = vrsqrt.pop %v2605
    %v2608 = vrsqrt.pop %v2606
    %v2609 = vmul.f32 %v2595, %v2607
    %v2610 = vmul.f32 %v2596, %v2608
    %v2612 = vlaneseq
    %v2613 = vshrl.u32 %v2612, 7
    %v2614 = vsub.s32 0, %v2613
    %v2615 = vrot.slane %v2586, %v2614
    %v2617 = vmul.f32 %v2609, %v2615
    %v2618 = vmul.f32 %v2610, %v2615
    %v2620 = vlaneseq
    %v2621 = vshrl.u32 %v2620, 7
    %v2622 = vsub.s32 0, %v2621
    %v2623 = vrot.slane %v2587, %v2622
    %v2625 = vadd.f32 %v2617, %v2623
    %v2626 = vadd.f32 %v2618, %v2623
    %v2627 = vld [vmem:[%s27] sm:$0xff]
    %v2628 = vld [vmem:[%s27 + $0x8] sm:$0xff]
    %v2629 = vld [vmem:[%s27 + $0x10] sm:$0xff]
    %v2630 = vld [vmem:[%s27 + $0x18] sm:$0xff]
    %v2631 = vld [vmem:[%s27 + $0x20] sm:$0xff]
    %v2632 = vld [vmem:[%s27 + $0x28] sm:$0xff]
    %v2633 = vld [vmem:[%s27 + $0x30] sm:$0xff]
    %v2634 = vld [vmem:[%s27 + $0x38] sm:$0xff]
    %v2635 = vld [vmem:[%s27 + $0x40] sm:$0xff]
    %v2636 = vld [vmem:[%s27 + $0x48] sm:$0xff]
    %v2637 = vld [vmem:[%s27 + $0x50] sm:$0xff]
    %v2638 = vld [vmem:[%s27 + $0x58] sm:$0xff]
    %v2639 = vld [vmem:[%s27 + $0x60] sm:$0xff]
    %v2640 = vld [vmem:[%s27 + $0x68] sm:$0xff]
    %v2641 = vld [vmem:[%s27 + $0x70] sm:$0xff]
    %v2642 = vld [vmem:[%s27 + $0x78] sm:$0xff]
    %v2643 = vld [vmem:[%s29] sm:$0x3]
    %v2645 = vlaneseq
    %v2646 = vshrl.u32 %v2645, 7
    %v2647 = vsub.s32 0, %v2646
    %v2648 = vrot.slane %v2643, %v2647
    %v2649 = vlaneseq
    %v2650 = vshrl.u32 %v2649, 7
    %v2651 = vsub.s32 1, %v2650
    %v2652 = vrot.slane %v2643, %v2651
    %v2671 = vunpack.c.l.b16 %v2627
    %v2672 = vunpack.c.h.b16 %v2627
    %v2673 = vunpack.c.l.b16 %v2628
    %v2674 = vunpack.c.h.b16 %v2628
    %v2675 = vunpack.c.l.b16 %v2629
    %v2676 = vunpack.c.h.b16 %v2629
    %v2677 = vunpack.c.l.b16 %v2630
    %v2678 = vunpack.c.h.b16 %v2630
    %v2679 = vunpack.c.l.b16 %v2631
    %v2680 = vunpack.c.h.b16 %v2631
    %v2681 = vunpack.c.l.b16 %v2632
    %v2682 = vunpack.c.h.b16 %v2632
    %v2683 = vunpack.c.l.b16 %v2633
    %v2684 = vunpack.c.h.b16 %v2633
    %v2685 = vunpack.c.l.b16 %v2634
    %v2686 = vunpack.c.h.b16 %v2634
    %v2687 = vunpack.c.l.b16 %v2635
    %v2688 = vunpack.c.h.b16 %v2635
    %v2689 = vunpack.c.l.b16 %v2636
    %v2690 = vunpack.c.h.b16 %v2636
    %v2691 = vunpack.c.l.b16 %v2637
    %v2692 = vunpack.c.h.b16 %v2637
    %v2693 = vunpack.c.l.b16 %v2638
    %v2694 = vunpack.c.h.b16 %v2638
    %v2695 = vunpack.c.l.b16 %v2639
    %v2696 = vunpack.c.h.b16 %v2639
    %v2697 = vunpack.c.l.b16 %v2640
    %v2698 = vunpack.c.h.b16 %v2640
    %v2699 = vunpack.c.l.b16 %v2641
    %v2700 = vunpack.c.h.b16 %v2641
    %v2701 = vunpack.c.l.b16 %v2642
    %v2702 = vunpack.c.h.b16 %v2642
    %v2703 = vpack.c.b16 %v2673, %v2671
    %v2704 = vpack.c.b16 %v2674, %v2672
    %v2705 = vpack.c.b16 %v2677, %v2675
    %v2706 = vpack.c.b16 %v2678, %v2676
    %v2707 = vpack.c.b16 %v2681, %v2679
    %v2708 = vpack.c.b16 %v2682, %v2680
    %v2709 = vpack.c.b16 %v2685, %v2683
    %v2710 = vpack.c.b16 %v2686, %v2684
    %v2711 = vpack.c.b16 %v2689, %v2687
    %v2712 = vpack.c.b16 %v2690, %v2688
    %v2713 = vpack.c.b16 %v2693, %v2691
    %v2714 = vpack.c.b16 %v2694, %v2692
    %v2715 = vpack.c.b16 %v2697, %v2695
    %v2716 = vpack.c.b16 %v2698, %v2696
    %v2717 = vpack.c.b16 %v2701, %v2699
    %v2718 = vpack.c.b16 %v2702, %v2700
    %2735 = vmatprep.subr.bf16.mxu0 %v2704
    %2736 = vmatpush1.bf16.msra.mxu0 %v2703
    %2737 = vmatprep.subr.bf16.mxu0 %v2706
    %2738 = vmatpush1.bf16.msra.mxu0 %v2705
    %2739 = vmatprep.subr.bf16.mxu0 %v2708
    %2740 = vmatpush1.bf16.msra.mxu0 %v2707
    %2741 = vmatprep.subr.bf16.mxu0 %v2710
    %2742 = vmatpush1.bf16.msra.mxu0 %v2709
    %2743 = vmatprep.subr.bf16.mxu0 %v2712
    %2744 = vmatpush1.bf16.msra.mxu0 %v2711
    %2745 = vmatprep.subr.bf16.mxu0 %v2714
    %2746 = vmatpush1.bf16.msra.mxu0 %v2713
    %2747 = vmatprep.subr.bf16.mxu0 %v2716
    %2748 = vmatpush1.bf16.msra.mxu0 %v2715
    %2749 = vmatprep.subr.bf16.mxu0 %v2718
    %2750 = vmatpush1.bf16.msra.mxu0 %v2717
    %2751 = vmatprep.subr.bf16.mxu0 0
    %2752 = vmatpush1.bf16.msra.mxu0 0
    %2753 = vmatprep.subr.bf16.mxu0 0
    %2754 = vmatpush1.bf16.msra.mxu0 0
    %2755 = vmatprep.subr.bf16.mxu0 0
    %2756 = vmatpush1.bf16.msra.mxu0 0
    %2757 = vmatprep.subr.bf16.mxu0 0
    %2758 = vmatpush1.bf16.msra.mxu0 0
    %2759 = vmatprep.subr.bf16.mxu0 0
    %2760 = vmatpush1.bf16.msra.mxu0 0
    %2761 = vmatprep.subr.bf16.mxu0 0
    %2762 = vmatpush1.bf16.msra.mxu0 0
    %2763 = vmatprep.subr.bf16.mxu0 0
    %2764 = vmatpush1.bf16.msra.mxu0 0
    %2765 = vmatprep.subr.bf16.mxu0 0
    %2766 = vmatpush1.bf16.msra.mxu0 0
    %2767 = vmatprep.mubr.f32.mxu0 0.0
    %2768 = vmatmul.mubr.f32.gmra.mrb[0].mxu0 %v2625
    %v2769 = vpop.f32.mrb[0].mxu0
    %v2770 = vadd.f32 %v2648, %v2769
    %v2771 = vpop.f32.mrb[0].mxu0
    %v2772 = vadd.f32 %v2652, %v2771
    %2773 = vmatprep.mubr.f32.mxu0 0.0
    %2774 = vmatmul.mubr.f32.gmra.mrb[0].mxu0 %v2626
    %v2775 = vpop.f32.mrb[0].mxu0
    %v2776 = vadd.f32 %v2648, %v2775
    %v2777 = vpop.f32.mrb[0].mxu0
    %v2778 = vadd.f32 %v2652, %v2777
    %2779 = vdwg.mxu0
    %v2780 = vmul.f32 %v2770, 0.5
    %v2781 = vmul.f32 %v2772, 0.5
    %v2782 = vmul.f32 %v2776, 0.5
    %v2783 = vmul.f32 %v2778, 0.5
    %v2784 = vmul.f32 %v2770, 0.044715
    %v2785 = vmul.f32 %v2772, 0.044715
    %v2786 = vmul.f32 %v2776, 0.044715
    %v2787 = vmul.f32 %v2778, 0.044715
    %v2788 = vmul.f32 %v2784, %v2770
    %v2789 = vmul.f32 %v2785, %v2772
    %v2790 = vmul.f32 %v2786, %v2776
    %v2791 = vmul.f32 %v2787, %v2778
    %v2792 = vmul.f32 %v2788, %v2770
    %v2793 = vmul.f32 %v2789, %v2772
    %v2794 = vmul.f32 %v2790, %v2776
    %v2795 = vmul.f32 %v2791, %v2778
    %v2796 = vadd.f32 %v2770, %v2792
    %v2797 = vadd.f32 %v2772, %v2793
    %v2798 = vadd.f32 %v2776, %v2794
    %v2799 = vadd.f32 %v2778, %v2795
    %v2800 = vmul.f32 %v2796, 0.7978846
    %v2801 = vmul.f32 %v2797, 0.7978846
    %v2802 = vmul.f32 %v2798, 0.7978846
    %v2803 = vmul.f32 %v2799, 0.7978846
    %v2804 = vtanh.pop %v2800
    %v2805 = vtanh.pop %v2801
    %v2806 = vtanh.pop %v2802
    %v2807 = vtanh.pop %v2803
    %v2808 = vadd.f32 %v2804, 1.0
    %v2809 = vadd.f32 %v2805, 1.0
    %v2810 = vadd.f32 %v2806, 1.0
    %v2811 = vadd.f32 %v2807, 1.0
    %v2812 = vmul.f32 %v2780, %v2808
    %v2813 = vmul.f32 %v2781, %v2809
    %v2814 = vmul.f32 %v2782, %v2810
    %v2815 = vmul.f32 %v2783, %v2811
    %v2816 = vld [vmem:[%s31] sm:$0xf]
    %v2817 = vld [vmem:[%s31 + $0x4] sm:$0xf]
    %v2818 = vld [vmem:[%s31 + $0x8] sm:$0xf]
    %v2819 = vld [vmem:[%s31 + $0xc] sm:$0xf]
    %v2820 = vld [vmem:[%s31 + $0x10] sm:$0xf]
    %v2821 = vld [vmem:[%s31 + $0x14] sm:$0xf]
    %v2822 = vld [vmem:[%s31 + $0x18] sm:$0xf]
    %v2823 = vld [vmem:[%s31 + $0x1c] sm:$0xf]
    %v2824 = vld [vmem:[%s31 + $0x20] sm:$0xf]
    %v2825 = vld [vmem:[%s31 + $0x24] sm:$0xf]
    %v2826 = vld [vmem:[%s31 + $0x28] sm:$0xf]
    %v2827 = vld [vmem:[%s31 + $0x2c] sm:$0xf]
    %v2828 = vld [vmem:[%s31 + $0x30] sm:$0xf]
    %v2829 = vld [vmem:[%s31 + $0x34] sm:$0xf]
    %v2830 = vld [vmem:[%s31 + $0x38] sm:$0xf]
    %v2831 = vld [vmem:[%s31 + $0x3c] sm:$0xf]
    %v2832 = vld [vmem:[%s31 + $0x40] sm:$0xf]
    %v2833 = vld [vmem:[%s31 + $0x44] sm:$0xf]
    %v2834 = vld [vmem:[%s31 + $0x48] sm:$0xf]
    %v2835 = vld [vmem:[%s31 + $0x4c] sm:$0xf]
    %v2836 = vld [vmem:[%s31 + $0x50] sm:$0xf]
    %v2837 = vld [vmem:[%s31 + $0x54] sm:$0xf]
    %v2838 = vld [vmem:[%s31 + $0x58] sm:$0xf]
    %v2839 = vld [vmem:[%s31 + $0x5c] sm:$0xf]
    %v2840 = vld [vmem:[%s31 + $0x60] sm:$0xf]
    %v2841 = vld [vmem:[%s31 + $0x64] sm:$0xf]
    %v2842 = vld [vmem:[%s31 + $0x68] sm:$0xf]
    %v2843 = vld [vmem:[%s31 + $0x6c] sm:$0xf]
    %v2844 = vld [vmem:[%s31 + $0x70] sm:$0xf]
    %v2845 = vld [vmem:[%s31 + $0x74] sm:$0xf]
    %v2846 = vld [vmem:[%s31 + $0x78] sm:$0xf]
    %v2847 = vld [vmem:[%s31 + $0x7c] sm:$0xf]
    %v2848 = vld [vmem:[%s33] sm:$0x1]
    %v2850 = vlaneseq
    %v2851 = vshrl.u32 %v2850, 7
    %v2852 = vsub.s32 0, %v2851
    %v2853 = vrot.slane %v2848, %v2852
    %v2887 = vunpack.c.l.b16 %v2816
    %v2888 = vunpack.c.l.b16 %v2817
    %v2889 = vunpack.c.l.b16 %v2818
    %v2890 = vunpack.c.l.b16 %v2819
    %v2891 = vunpack.c.l.b16 %v2820
    %v2892 = vunpack.c.l.b16 %v2821
    %v2893 = vunpack.c.l.b16 %v2822
    %v2894 = vunpack.c.l.b16 %v2823
    %v2895 = vunpack.c.l.b16 %v2824
    %v2896 = vunpack.c.l.b16 %v2825
    %v2897 = vunpack.c.l.b16 %v2826
    %v2898 = vunpack.c.l.b16 %v2827
    %v2899 = vunpack.c.l.b16 %v2828
    %v2900 = vunpack.c.l.b16 %v2829
    %v2901 = vunpack.c.l.b16 %v2830
    %v2902 = vunpack.c.l.b16 %v2831
    %v2903 = vunpack.c.l.b16 %v2832
    %v2904 = vunpack.c.l.b16 %v2833
    %v2905 = vunpack.c.l.b16 %v2834
    %v2906 = vunpack.c.l.b16 %v2835
    %v2907 = vunpack.c.l.b16 %v2836
    %v2908 = vunpack.c.l.b16 %v2837
    %v2909 = vunpack.c.l.b16 %v2838
    %v2910 = vunpack.c.l.b16 %v2839
    %v2911 = vunpack.c.l.b16 %v2840
    %v2912 = vunpack.c.l.b16 %v2841
    %v2913 = vunpack.c.l.b16 %v2842
    %v2914 = vunpack.c.l.b16 %v2843
    %v2915 = vunpack.c.l.b16 %v2844
    %v2916 = vunpack.c.l.b16 %v2845
    %v2917 = vunpack.c.l.b16 %v2846
    %v2918 = vunpack.c.l.b16 %v2847
    %v2919 = vpack.c.b16 %v2888, %v2887
    %v2920 = vpack.c.b16 %v2890, %v2889
    %v2921 = vpack.c.b16 %v2892, %v2891
    %v2922 = vpack.c.b16 %v2894, %v2893
    %v2923 = vpack.c.b16 %v2896, %v2895
    %v2924 = vpack.c.b16 %v2898, %v2897
    %v2925 = vpack.c.b16 %v2900, %v2899
    %v2926 = vpack.c.b16 %v2902, %v2901
    %v2927 = vpack.c.b16 %v2904, %v2903
    %v2928 = vpack.c.b16 %v2906, %v2905
    %v2929 = vpack.c.b16 %v2908, %v2907
    %v2930 = vpack.c.b16 %v2910, %v2909
    %v2931 = vpack.c.b16 %v2912, %v2911
    %v2932 = vpack.c.b16 %v2914, %v2913
    %v2933 = vpack.c.b16 %v2916, %v2915
    %v2934 = vpack.c.b16 %v2918, %v2917
    %2951 = vmatprep.subr.bf16.mxu0 0
    %2952 = vmatpush1.bf16.msra.mxu0 %v2919
    %2953 = vmatprep.subr.bf16.mxu0 0
    %2954 = vmatpush1.bf16.msra.mxu0 %v2920
    %2955 = vmatprep.subr.bf16.mxu0 0
    %2956 = vmatpush1.bf16.msra.mxu0 %v2921
    %2957 = vmatprep.subr.bf16.mxu0 0
    %2958 = vmatpush1.bf16.msra.mxu0 %v2922
    %2959 = vmatprep.subr.bf16.mxu0 0
    %2960 = vmatpush1.bf16.msra.mxu0 %v2923
    %2961 = vmatprep.subr.bf16.mxu0 0
    %2962 = vmatpush1.bf16.msra.mxu0 %v2924
    %2963 = vmatprep.subr.bf16.mxu0 0
    %2964 = vmatpush1.bf16.msra.mxu0 %v2925
    %2965 = vmatprep.subr.bf16.mxu0 0
    %2966 = vmatpush1.bf16.msra.mxu0 %v2926
    %2967 = vmatprep.subr.bf16.mxu0 0
    %2968 = vmatpush1.bf16.msra.mxu0 %v2927
    %2969 = vmatprep.subr.bf16.mxu0 0
    %2970 = vmatpush1.bf16.msra.mxu0 %v2928
    %2971 = vmatprep.subr.bf16.mxu0 0
    %2972 = vmatpush1.bf16.msra.mxu0 %v2929
    %2973 = vmatprep.subr.bf16.mxu0 0
    %2974 = vmatpush1.bf16.msra.mxu0 %v2930
    %2975 = vmatprep.subr.bf16.mxu0 0
    %2976 = vmatpush1.bf16.msra.mxu0 %v2931
    %2977 = vmatprep.subr.bf16.mxu0 0
    %2978 = vmatpush1.bf16.msra.mxu0 %v2932
    %2979 = vmatprep.subr.bf16.mxu0 0
    %2980 = vmatpush1.bf16.msra.mxu0 %v2933
    %2981 = vmatprep.subr.bf16.mxu0 0
    %2982 = vmatpush1.bf16.msra.mxu0 %v2934
    %2983 = vmatprep.mubr.f32.mxu0 %v2813
    %2984 = vmatmul.mubr.f32.gmra.mrb[0].mxu0 %v2812
    %v2985 = vpop.f32.mrb[0].mxu0
    %v2986 = vadd.f32 %v2853, %v2985
    %v2987 = vpop.f32.mrb[0].mxu0
    %2988 = vmatprep.mubr.f32.mxu0 %v2815
    %2989 = vmatmul.mubr.f32.gmra.mrb[0].mxu0 %v2814
    %v2990 = vpop.f32.mrb[0].mxu0
    %v2991 = vadd.f32 %v2853, %v2990
    %v2992 = vpop.f32.mrb[0].mxu0
    %2993 = vdwg.mxu0
    %v2994 = vadd.f32 %v2625, %v2986
    %v2995 = vadd.f32 %v2626, %v2991
    %v2996 = vld [vmem:[%s39] sm:$0x1]
    %v2997 = vld [vmem:[%s41] sm:$0x1]
    %2998 = vadd.xlane.f32.xlu0 %v2994
    %v2999 = vpop.xlane.xlu0 %2998
    %3000 = vadd.xlane.f32.xlu0 %v2995
    %v3001 = vpop.xlane.xlu0 %3000
    %v3002 = vmul.f32 %v2999, %v2592
    %v3003 = vmul.f32 %v3001, %v2592
    %v3004 = vsub.f32 %v2994, %v3002
    %v3005 = vsub.f32 %v2995, %v3003
    %v3006 = vmul.f32 %v3004, %v3004
    %v3007 = vmul.f32 %v3005, %v3005
    %3008 = vadd.xlane.f32.xlu0 %v3006
    %v3009 = vpop.xlane.xlu0 %3008
    %3010 = vadd.xlane.f32.xlu0 %v3007
    %v3011 = vpop.xlane.xlu0 %3010
    %v3012 = vmul.f32 %v3009, %v2592
    %v3013 = vmul.f32 %v3011, %v2592
    %v3014 = vadd.f32 %v3012, 1e-05
    %v3015 = vadd.f32 %v3013, 1e-05
    %v3016 = vrsqrt.pop %v3014
    %v3017 = vrsqrt.pop %v3015
    %v3018 = vmul.f32 %v3004, %v3016
    %v3019 = vmul.f32 %v3005, %v3017
    %v3021 = vlaneseq
    %v3022 = vshrl.u32 %v3021, 7
    %v3023 = vsub.s32 0, %v3022
    %v3024 = vrot.slane %v2996, %v3023
    %v3026 = vmul.f32 %v3018, %v3024
    %v3027 = vmul.f32 %v3019, %v3024
    %v3029 = vlaneseq
    %v3030 = vshrl.u32 %v3029, 7
    %v3031 = vsub.s32 0, %v3030
    %v3032 = vrot.slane %v2997, %v3031
    %v3034 = vadd.f32 %v3026, %v3032
    %v3035 = vadd.f32 %v3027, %v3032
    %s3036 = scalar_lea.vmem %s11, 512
    %v3037 = vld [vmem:[%s3036] sm:$0xff]
    %v3038 = vld [vmem:[%s3036 + $0x8] sm:$0xff]
    %v3039 = vld [vmem:[%s3036 + $0x10] sm:$0xff]
    %v3040 = vld [vmem:[%s3036 + $0x18] sm:$0xff]
    %v3041 = vld [vmem:[%s3036 + $0x20] sm:$0xff]
    %v3042 = vld [vmem:[%s3036 + $0x28] sm:$0xff]
    %v3043 = vld [vmem:[%s3036 + $0x30] sm:$0xff]
    %v3044 = vld [vmem:[%s3036 + $0x38] sm:$0xff]
    %v3045 = vld [vmem:[%s3036 + $0x40] sm:$0xff]
    %v3046 = vld [vmem:[%s3036 + $0x48] sm:$0xff]
    %v3047 = vld [vmem:[%s3036 + $0x50] sm:$0xff]
    %v3048 = vld [vmem:[%s3036 + $0x58] sm:$0xff]
    %v3049 = vld [vmem:[%s3036 + $0x60] sm:$0xff]
    %v3050 = vld [vmem:[%s3036 + $0x68] sm:$0xff]
    %v3051 = vld [vmem:[%s3036 + $0x70] sm:$0xff]
    %v3052 = vld [vmem:[%s3036 + $0x78] sm:$0xff]
    %s3053 = scalar_lea.vmem %s13, 4
    %v3054 = vld [vmem:[%s3053] sm:$0x1]
    %v3056 = vlaneseq
    %v3057 = vshrl.u32 %v3056, 7
    %v3058 = vsub.s32 0, %v3057
    %v3059 = vrot.slane %v3054, %v3058
    %3061 = vmatprep.subr.mxu0 0.0
    %3062 = vmatpush1.msra.mxu0 %v3037
    %3063 = vmatprep.subr.mxu0 0.0
    %3064 = vmatpush1.msra.mxu0 %v3038
    %3065 = vmatprep.subr.mxu0 0.0
    %3066 = vmatpush1.msra.mxu0 %v3039
    %3067 = vmatprep.subr.mxu0 0.0
    %3068 = vmatpush1.msra.mxu0 %v3040
    %3069 = vmatprep.subr.mxu0 0.0
    %3070 = vmatpush1.msra.mxu0 %v3041
    %3071 = vmatprep.subr.mxu0 0.0
    %3072 = vmatpush1.msra.mxu0 %v3042
    %3073 = vmatprep.subr.mxu0 0.0
    %3074 = vmatpush1.msra.mxu0 %v3043
    %3075 = vmatprep.subr.mxu0 0.0
    %3076 = vmatpush1.msra.mxu0 %v3044
    %3077 = vmatprep.subr.mxu0 0.0
    %3078 = vmatpush1.msra.mxu0 %v3045
    %3079 = vmatprep.subr.mxu0 0.0
    %3080 = vmatpush1.msra.mxu0 %v3046
    %3081 = vmatprep.subr.mxu0 0.0
    %3082 = vmatpush1.msra.mxu0 %v3047
    %3083 = vmatprep.subr.mxu0 0.0
    %3084 = vmatpush1.msra.mxu0 %v3048
    %3085 = vmatprep.subr.mxu0 0.0
    %3086 = vmatpush1.msra.mxu0 %v3049
    %3087 = vmatprep.subr.mxu0 0.0
    %3088 = vmatpush1.msra.mxu0 %v3050
    %3089 = vmatprep.subr.mxu0 0.0
    %3090 = vmatpush1.msra.mxu0 %v3051
    %3091 = vmatprep.subr.mxu0 0.0
    %3092 = vmatpush1.msra.mxu0 %v3052
    %3093 = vmatprep.subr.mxu0 0.0
    %3094 = vmatpush1.msra.mxu0 0.0
    %3095 = vmatprep.subr.mxu0 0.0
    %3096 = vmatpush1.msra.mxu0 0.0
    %3097 = vmatprep.subr.mxu0 0.0
    %3098 = vmatpush1.msra.mxu0 0.0
    %3099 = vmatprep.subr.mxu0 0.0
    %3100 = vmatpush1.msra.mxu0 0.0
    %3101 = vmatprep.subr.mxu0 0.0
    %3102 = vmatpush1.msra.mxu0 0.0
    %3103 = vmatprep.subr.mxu0 0.0
    %3104 = vmatpush1.msra.mxu0 0.0
    %3105 = vmatprep.subr.mxu0 0.0
    %3106 = vmatpush1.msra.mxu0 0.0
    %3107 = vmatprep.subr.mxu0 0.0
    %3108 = vmatpush1.msra.mxu0 0.0
    %3109 = vmatprep.subr.mxu0 0.0
    %3110 = vmatpush1.msra.mxu0 0.0
    %3111 = vmatprep.subr.mxu0 0.0
    %3112 = vmatpush1.msra.mxu0 0.0
    %3113 = vmatprep.subr.mxu0 0.0
    %3114 = vmatpush1.msra.mxu0 0.0
    %3115 = vmatprep.subr.mxu0 0.0
    %3116 = vmatpush1.msra.mxu0 0.0
    %3117 = vmatprep.subr.mxu0 0.0
    %3118 = vmatpush1.msra.mxu0 0.0
    %3119 = vmatprep.subr.mxu0 0.0
    %3120 = vmatpush1.msra.mxu0 0.0
    %3121 = vmatprep.subr.mxu0 0.0
    %3122 = vmatpush1.msra.mxu0 0.0
    %3123 = vmatprep.subr.mxu0 0.0
    %3124 = vmatpush1.msra.mxu0 0.0
    %3125 = vmatprep.mubr.f32.mxu0 0.0
    %3126 = vmatmul.mubr.f32.gmra.mrb[0].mxu0 %v3034
    %v3127 = vpop.f32.mrb[0].mxu0
    %v3128 = vadd.f32 %v3059, %v3127
    %v3129 = vpop.f32.mrb[0].mxu0
    %3130 = vmatprep.mubr.f32.mxu0 0.0
    %3131 = vmatmul.mubr.f32.gmra.mrb[0].mxu0 %v3035
    %v3132 = vpop.f32.mrb[0].mxu0
    %v3133 = vadd.f32 %v3059, %v3132
    %v3134 = vpop.f32.mrb[0].mxu0
    %3135 = vdwg.mxu0
    %s3136 = scalar_lea.vmem %s15, 256
    %v3137 = vld [vmem:[%s3136] sm:$0xf]
    %v3138 = vld [vmem:[%s3136 + $0x4] sm:$0xf]
    %v3139 = vld [vmem:[%s3136 + $0x8] sm:$0xf]
    %v3140 = vld [vmem:[%s3136 + $0xc] sm:$0xf]
    %v3141 = vld [vmem:[%s3136 + $0x10] sm:$0xf]
    %v3142 = vld [vmem:[%s3136 + $0x14] sm:$0xf]
    %v3143 = vld [vmem:[%s3136 + $0x18] sm:$0xf]
    %v3144 = vld [vmem:[%s3136 + $0x1c] sm:$0xf]
    %v3145 = vld [vmem:[%s3136 + $0x20] sm:$0xf]
    %v3146 = vld [vmem:[%s3136 + $0x24] sm:$0xf]
    %v3147 = vld [vmem:[%s3136 + $0x28] sm:$0xf]
    %v3148 = vld [vmem:[%s3136 + $0x2c] sm:$0xf]
    %v3149 = vld [vmem:[%s3136 + $0x30] sm:$0xf]
    %v3150 = vld [vmem:[%s3136 + $0x34] sm:$0xf]
    %v3151 = vld [vmem:[%s3136 + $0x38] sm:$0xf]
    %v3152 = vld [vmem:[%s3136 + $0x3c] sm:$0xf]
    %s3153 = scalar_lea.vmem %s17, 4
    %v3154 = vld [vmem:[%s3153] sm:$0x1]
    %v3156 = vlaneseq
    %v3157 = vshrl.u32 %v3156, 7
    %v3158 = vsub.s32 0, %v3157
    %v3159 = vrot.slane %v3154, %v3158
    %v3177 = vunpack.c.l.b16 %v3137
    %v3178 = vunpack.c.l.b16 %v3138
    %v3179 = vunpack.c.l.b16 %v3139
    %v3180 = vunpack.c.l.b16 %v3140
    %v3181 = vunpack.c.l.b16 %v3141
    %v3182 = vunpack.c.l.b16 %v3142
    %v3183 = vunpack.c.l.b16 %v3143
    %v3184 = vunpack.c.l.b16 %v3144
    %v3185 = vunpack.c.l.b16 %v3145
    %v3186 = vunpack.c.l.b16 %v3146
    %v3187 = vunpack.c.l.b16 %v3147
    %v3188 = vunpack.c.l.b16 %v3148
    %v3189 = vunpack.c.l.b16 %v3149
    %v3190 = vunpack.c.l.b16 %v3150
    %v3191 = vunpack.c.l.b16 %v3151
    %v3192 = vunpack.c.l.b16 %v3152
    %v3193 = vpack.c.b16 %v3178, %v3177
    %v3194 = vpack.c.b16 %v3180, %v3179
    %v3195 = vpack.c.b16 %v3182, %v3181
    %v3196 = vpack.c.b16 %v3184, %v3183
    %v3197 = vpack.c.b16 %v3186, %v3185
    %v3198 = vpack.c.b16 %v3188, %v3187
    %v3199 = vpack.c.b16 %v3190, %v3189
    %v3200 = vpack.c.b16 %v3192, %v3191
    %3209 = vmatprep.subr.bf16.mxu0 0
    %3210 = vmatpush1.bf16.msra.mxu0 %v3193
    %3211 = vmatprep.subr.bf16.mxu0 0
    %3212 = vmatpush1.bf16.msra.mxu0 %v3194
    %3213 = vmatprep.subr.bf16.mxu0 0
    %3214 = vmatpush1.bf16.msra.mxu0 %v3195
    %3215 = vmatprep.subr.bf16.mxu0 0
    %3216 = vmatpush1.bf16.msra.mxu0 %v3196
    %3217 = vmatprep.subr.bf16.mxu0 0
    %3218 = vmatpush1.bf16.msra.mxu0 %v3197
    %3219 = vmatprep.subr.bf16.mxu0 0
    %3220 = vmatpush1.bf16.msra.mxu0 %v3198
    %3221 = vmatprep.subr.bf16.mxu0 0
    %3222 = vmatpush1.bf16.msra.mxu0 %v3199
    %3223 = vmatprep.subr.bf16.mxu0 0
    %3224 = vmatpush1.bf16.msra.mxu0 %v3200
    %3225 = vmatprep.subr.bf16.mxu0 0
    %3226 = vmatpush1.bf16.msra.mxu0 0
    %3227 = vmatprep.subr.bf16.mxu0 0
    %3228 = vmatpush1.bf16.msra.mxu0 0
    %3229 = vmatprep.subr.bf16.mxu0 0
    %3230 = vmatpush1.bf16.msra.mxu0 0
    %3231 = vmatprep.subr.bf16.mxu0 0
    %3232 = vmatpush1.bf16.msra.mxu0 0
    %3233 = vmatprep.subr.bf16.mxu0 0
    %3234 = vmatpush1.bf16.msra.mxu0 0
    %3235 = vmatprep.subr.bf16.mxu0 0
    %3236 = vmatpush1.bf16.msra.mxu0 0
    %3237 = vmatprep.subr.bf16.mxu0 0
    %3238 = vmatpush1.bf16.msra.mxu0 0
    %3239 = vmatprep.subr.bf16.mxu0 0
    %3240 = vmatpush1.bf16.msra.mxu0 0
    %3241 = vmatprep.mubr.f32.mxu0 0.0
    %3242 = vmatmul.mubr.f32.gmra.mrb[0].mxu0 %v3034
    %v3243 = vpop.f32.mrb[0].mxu0
    %v3244 = vadd.f32 %v3159, %v3243
    %v3245 = vpop.f32.mrb[0].mxu0
    %3246 = vmatprep.mubr.f32.mxu0 0.0
    %3247 = vmatmul.mubr.f32.gmra.mrb[0].mxu0 %v3035
    %v3248 = vpop.f32.mrb[0].mxu0
    %v3249 = vadd.f32 %v3159, %v3248
    %v3250 = vpop.f32.mrb[0].mxu0
    %3251 = vdwg.mxu0
    %s3252 = scalar_lea.vmem %s19, 256
    %v3253 = vld [vmem:[%s3252] sm:$0xf]
    %v3254 = vld [vmem:[%s3252 + $0x4] sm:$0xf]
    %v3255 = vld [vmem:[%s3252 + $0x8] sm:$0xf]
    %v3256 = vld [vmem:[%s3252 + $0xc] sm:$0xf]
    %v3257 = vld [vmem:[%s3252 + $0x10] sm:$0xf]
    %v3258 = vld [vmem:[%s3252 + $0x14] sm:$0xf]
    %v3259 = vld [vmem:[%s3252 + $0x18] sm:$0xf]
    %v3260 = vld [vmem:[%s3252 + $0x1c] sm:$0xf]
    %v3261 = vld [vmem:[%s3252 + $0x20] sm:$0xf]
    %v3262 = vld [vmem:[%s3252 + $0x24] sm:$0xf]
    %v3263 = vld [vmem:[%s3252 + $0x28] sm:$0xf]
    %v3264 = vld [vmem:[%s3252 + $0x2c] sm:$0xf]
    %v3265 = vld [vmem:[%s3252 + $0x30] sm:$0xf]
    %v3266 = vld [vmem:[%s3252 + $0x34] sm:$0xf]
    %v3267 = vld [vmem:[%s3252 + $0x38] sm:$0xf]
    %v3268 = vld [vmem:[%s3252 + $0x3c] sm:$0xf]
    %s3269 = scalar_lea.vmem %s21, 4
    %v3270 = vld [vmem:[%s3269] sm:$0x1]
    %v3272 = vlaneseq
    %v3273 = vshrl.u32 %v3272, 7
    %v3274 = vsub.s32 0, %v3273
    %v3275 = vrot.slane %v3270, %v3274
    %v3293 = vunpack.c.l.b16 %v3253
    %v3294 = vunpack.c.l.b16 %v3254
    %v3295 = vunpack.c.l.b16 %v3255
    %v3296 = vunpack.c.l.b16 %v3256
    %v3297 = vunpack.c.l.b16 %v3257
    %v3298 = vunpack.c.l.b16 %v3258
    %v3299 = vunpack.c.l.b16 %v3259
    %v3300 = vunpack.c.l.b16 %v3260
    %v3301 = vunpack.c.l.b16 %v3261
    %v3302 = vunpack.c.l.b16 %v3262
    %v3303 = vunpack.c.l.b16 %v3263
    %v3304 = vunpack.c.l.b16 %v3264
    %v3305 = vunpack.c.l.b16 %v3265
    %v3306 = vunpack.c.l.b16 %v3266
    %v3307 = vunpack.c.l.b16 %v3267
    %v3308 = vunpack.c.l.b16 %v3268
    %v3309 = vpack.c.b16 %v3294, %v3293
    %v3310 = vpack.c.b16 %v3296, %v3295
    %v3311 = vpack.c.b16 %v3298, %v3297
    %v3312 = vpack.c.b16 %v3300, %v3299
    %v3313 = vpack.c.b16 %v3302, %v3301
    %v3314 = vpack.c.b16 %v3304, %v3303
    %v3315 = vpack.c.b16 %v3306, %v3305
    %v3316 = vpack.c.b16 %v3308, %v3307
    %3325 = vmatprep.subr.bf16.mxu0 0
    %3326 = vmatpush1.bf16.msra.mxu0 %v3309
    %3327 = vmatprep.subr.bf16.mxu0 0
    %3328 = vmatpush1.bf16.msra.mxu0 %v3310
    %3329 = vmatprep.subr.bf16.mxu0 0
    %3330 = vmatpush1.bf16.msra.mxu0 %v3311
    %3331 = vmatprep.subr.bf16.mxu0 0
    %3332 = vmatpush1.bf16.msra.mxu0 %v3312
    %3333 = vmatprep.subr.bf16.mxu0 0
    %3334 = vmatpush1.bf16.msra.mxu0 %v3313
    %3335 = vmatprep.subr.bf16.mxu0 0
    %3336 = vmatpush1.bf16.msra.mxu0 %v3314
    %3337 = vmatprep.subr.bf16.mxu0 0
    %3338 = vmatpush1.bf16.msra.mxu0 %v3315
    %3339 = vmatprep.subr.bf16.mxu0 0
    %3340 = vmatpush1.bf16.msra.mxu0 %v3316
    %3341 = vmatprep.subr.bf16.mxu0 0
    %3342 = vmatpush1.bf16.msra.mxu0 0
    %3343 = vmatprep.subr.bf16.mxu0 0
    %3344 = vmatpush1.bf16.msra.mxu0 0
    %3345 = vmatprep.subr.bf16.mxu0 0
    %3346 = vmatpush1.bf16.msra.mxu0 0
    %3347 = vmatprep.subr.bf16.mxu0 0
    %3348 = vmatpush1.bf16.msra.mxu0 0
    %3349 = vmatprep.subr.bf16.mxu0 0
    %3350 = vmatpush1.bf16.msra.mxu0 0
    %3351 = vmatprep.subr.bf16.mxu0 0
    %3352 = vmatpush1.bf16.msra.mxu0 0
    %3353 = vmatprep.subr.bf16.mxu0 0
    %3354 = vmatpush1.bf16.msra.mxu0 0
    %3355 = vmatprep.subr.bf16.mxu0 0
    %3356 = vmatpush1.bf16.msra.mxu0 0
    %3357 = vmatprep.mubr.f32.mxu0 0.0
    %3358 = vmatmul.mubr.f32.gmra.mrb[0].mxu0 %v3034
    %v3359 = vpop.f32.mrb[0].mxu0
    %v3360 = vadd.f32 %v3275, %v3359
    %v3361 = vpop.f32.mrb[0].mxu0
    %3362 = vmatprep.mubr.f32.mxu0 0.0
    %3363 = vmatmul.mubr.f32.gmra.mrb[0].mxu0 %v3035
    %v3364 = vpop.f32.mrb[0].mxu0
    %v3365 = vadd.f32 %v3275, %v3364
    %v3366 = vpop.f32.mrb[0].mxu0
    %3367 = vdwg.mxu0
    %v3369 = vsel %vm549, %v3128, 0
    %v3372 = vsel %vm549, %v3133, 0
    %v3375 = vsel %vm549, %v3244, 0
    %v3378 = vsel %vm549, %v3249, 0
    %3380 = vmatprep.subr.mxu0 0.0
    %3381 = vmatpush1.xpose.msra.mxu0 %v3375
    %3382 = vmatprep.subr.mxu0 0.0
    %3383 = vmatpush1.xpose.msra.mxu0 %v3378
    %3384 = vmatprep.subr.mxu0 0.0
    %3385 = vmatpush1.xpose.msra.mxu0 0.0
    %3386 = vmatprep.subr.mxu0 0.0
    %3387 = vmatpush1.xpose.msra.mxu0 0.0
    %3388 = vmatprep.subr.mxu0 0.0
    %3389 = vmatpush1.xpose.msra.mxu0 0.0
    %3390 = vmatprep.subr.mxu0 0.0
    %3391 = vmatpush1.xpose.msra.mxu0 0.0
    %3392 = vmatprep.subr.mxu0 0.0
    %3393 = vmatpush1.xpose.msra.mxu0 0.0
    %3394 = vmatprep.subr.mxu0 0.0
    %3395 = vmatpush1.xpose.msra.mxu0 0.0
    %3396 = vmatprep.subr.mxu0 0.0
    %3397 = vmatpush1.xpose.msra.mxu0 0.0
    %3398 = vmatprep.subr.mxu0 0.0
    %3399 = vmatpush1.xpose.msra.mxu0 0.0
    %3400 = vmatprep.subr.mxu0 0.0
    %3401 = vmatpush1.xpose.msra.mxu0 0.0
    %3402 = vmatprep.subr.mxu0 0.0
    %3403 = vmatpush1.xpose.msra.mxu0 0.0
    %3404 = vmatprep.subr.mxu0 0.0
    %3405 = vmatpush1.xpose.msra.mxu0 0.0
    %3406 = vmatprep.subr.mxu0 0.0
    %3407 = vmatpush1.xpose.msra.mxu0 0.0
    %3408 = vmatprep.subr.mxu0 0.0
    %3409 = vmatpush1.xpose.msra.mxu0 0.0
    %3410 = vmatprep.subr.mxu0 0.0
    %3411 = vmatpush1.xpose.msra.mxu0 0.0
    %3412 = vmatprep.subr.mxu0 0.0
    %3413 = vmatpush1.xpose.msra.mxu0 0.0
    %3414 = vmatprep.subr.mxu0 0.0
    %3415 = vmatpush1.xpose.msra.mxu0 0.0
    %3416 = vmatprep.subr.mxu0 0.0
    %3417 = vmatpush1.xpose.msra.mxu0 0.0
    %3418 = vmatprep.subr.mxu0 0.0
    %3419 = vmatpush1.xpose.msra.mxu0 0.0
    %3420 = vmatprep.subr.mxu0 0.0
    %3421 = vmatpush1.xpose.msra.mxu0 0.0
    %3422 = vmatprep.subr.mxu0 0.0
    %3423 = vmatpush1.xpose.msra.mxu0 0.0
    %3424 = vmatprep.subr.mxu0 0.0
    %3425 = vmatpush1.xpose.msra.mxu0 0.0
    %3426 = vmatprep.subr.mxu0 0.0
    %3427 = vmatpush1.xpose.msra.mxu0 0.0
    %3428 = vmatprep.subr.mxu0 0.0
    %3429 = vmatpush1.xpose.msra.mxu0 0.0
    %3430 = vmatprep.subr.mxu0 0.0
    %3431 = vmatpush1.xpose.msra.mxu0 0.0
    %3432 = vmatprep.subr.mxu0 0.0
    %3433 = vmatpush1.xpose.msra.mxu0 0.0
    %3434 = vmatprep.subr.mxu0 0.0
    %3435 = vmatpush1.xpose.msra.mxu0 0.0
    %3436 = vmatprep.subr.mxu0 0.0
    %3437 = vmatpush1.xpose.msra.mxu0 0.0
    %3438 = vmatprep.subr.mxu0 0.0
    %3439 = vmatpush1.xpose.msra.mxu0 0.0
    %3440 = vmatprep.subr.mxu0 0.0
    %3441 = vmatpush1.xpose.msra.mxu0 0.0
    %3442 = vmatprep.subr.mxu0 0.0
    %3443 = vmatpush1.xpose.msra.mxu0 0.0
    %3444 = vmatprep.mubr.f32.mxu0 0.0
    %3445 = vmatmul.mubr.f32.gmra.mrb[0].mxu0 %v3369
    %v3446 = vpop.f32.mrb[0].mxu0
    %v3447 = vadd.f32 %v124, %v3446
    %v3448 = vpop.f32.mrb[0].mxu0
    %3449 = vmatprep.mubr.f32.mxu0 0.0
    %3450 = vmatmul.mubr.f32.gmra.mrb[0].mxu0 %v3372
    %v3451 = vpop.f32.mrb[0].mxu0
    %v3452 = vadd.f32 %v125, %v3451
    %v3453 = vpop.f32.mrb[0].mxu0
    %3454 = vdwg.mxu0
    %s3455 = scalar_lea.vmem %s11, 640
    %v3456 = vld [vmem:[%s3455] sm:$0xff]
    %v3457 = vld [vmem:[%s3455 + $0x8] sm:$0xff]
    %v3458 = vld [vmem:[%s3455 + $0x10] sm:$0xff]
    %v3459 = vld [vmem:[%s3455 + $0x18] sm:$0xff]
    %v3460 = vld [vmem:[%s3455 + $0x20] sm:$0xff]
    %v3461 = vld [vmem:[%s3455 + $0x28] sm:$0xff]
    %v3462 = vld [vmem:[%s3455 + $0x30] sm:$0xff]
    %v3463 = vld [vmem:[%s3455 + $0x38] sm:$0xff]
    %v3464 = vld [vmem:[%s3455 + $0x40] sm:$0xff]
    %v3465 = vld [vmem:[%s3455 + $0x48] sm:$0xff]
    %v3466 = vld [vmem:[%s3455 + $0x50] sm:$0xff]
    %v3467 = vld [vmem:[%s3455 + $0x58] sm:$0xff]
    %v3468 = vld [vmem:[%s3455 + $0x60] sm:$0xff]
    %v3469 = vld [vmem:[%s3455 + $0x68] sm:$0xff]
    %v3470 = vld [vmem:[%s3455 + $0x70] sm:$0xff]
    %v3471 = vld [vmem:[%s3455 + $0x78] sm:$0xff]
    %s3472 = scalar_lea.vmem %s13, 5
    %v3473 = vld [vmem:[%s3472] sm:$0x1]
    %v3475 = vlaneseq
    %v3476 = vshrl.u32 %v3475, 7
    %v3477 = vsub.s32 0, %v3476
    %v3478 = vrot.slane %v3473, %v3477
    %3480 = vmatprep.subr.mxu0 0.0
    %3481 = vmatpush1.msra.mxu0 %v3456
    %3482 = vmatprep.subr.mxu0 0.0
    %3483 = vmatpush1.msra.mxu0 %v3457
    %3484 = vmatprep.subr.mxu0 0.0
    %3485 = vmatpush1.msra.mxu0 %v3458
    %3486 = vmatprep.subr.mxu0 0.0
    %3487 = vmatpush1.msra.mxu0 %v3459
    %3488 = vmatprep.subr.mxu0 0.0
    %3489 = vmatpush1.msra.mxu0 %v3460
    %3490 = vmatprep.subr.mxu0 0.0
    %3491 = vmatpush1.msra.mxu0 %v3461
    %3492 = vmatprep.subr.mxu0 0.0
    %3493 = vmatpush1.msra.mxu0 %v3462
    %3494 = vmatprep.subr.mxu0 0.0
    %3495 = vmatpush1.msra.mxu0 %v3463
    %3496 = vmatprep.subr.mxu0 0.0
    %3497 = vmatpush1.msra.mxu0 %v3464
    %3498 = vmatprep.subr.mxu0 0.0
    %3499 = vmatpush1.msra.mxu0 %v3465
    %3500 = vmatprep.subr.mxu0 0.0
    %3501 = vmatpush1.msra.mxu0 %v3466
    %3502 = vmatprep.subr.mxu0 0.0
    %3503 = vmatpush1.msra.mxu0 %v3467
    %3504 = vmatprep.subr.mxu0 0.0
    %3505 = vmatpush1.msra.mxu0 %v3468
    %3506 = vmatprep.subr.mxu0 0.0
    %3507 = vmatpush1.msra.mxu0 %v3469
    %3508 = vmatprep.subr.mxu0 0.0
    %3509 = vmatpush1.msra.mxu0 %v3470
    %3510 = vmatprep.subr.mxu0 0.0
    %3511 = vmatpush1.msra.mxu0 %v3471
    %3512 = vmatprep.subr.mxu0 0.0
    %3513 = vmatpush1.msra.mxu0 0.0
    %3514 = vmatprep.subr.mxu0 0.0
    %3515 = vmatpush1.msra.mxu0 0.0
    %3516 = vmatprep.subr.mxu0 0.0
    %3517 = vmatpush1.msra.mxu0 0.0
    %3518 = vmatprep.subr.mxu0 0.0
    %3519 = vmatpush1.msra.mxu0 0.0
    %3520 = vmatprep.subr.mxu0 0.0
    %3521 = vmatpush1.msra.mxu0 0.0
    %3522 = vmatprep.subr.mxu0 0.0
    %3523 = vmatpush1.msra.mxu0 0.0
    %3524 = vmatprep.subr.mxu0 0.0
    %3525 = vmatpush1.msra.mxu0 0.0
    %3526 = vmatprep.subr.mxu0 0.0
    %3527 = vmatpush1.msra.mxu0 0.0
    %3528 = vmatprep.subr.mxu0 0.0
    %3529 = vmatpush1.msra.mxu0 0.0
    %3530 = vmatprep.subr.mxu0 0.0
    %3531 = vmatpush1.msra.mxu0 0.0
    %3532 = vmatprep.subr.mxu0 0.0
    %3533 = vmatpush1.msra.mxu0 0.0
    %3534 = vmatprep.subr.mxu0 0.0
    %3535 = vmatpush1.msra.mxu0 0.0
    %3536 = vmatprep.subr.mxu0 0.0
    %3537 = vmatpush1.msra.mxu0 0.0
    %3538 = vmatprep.subr.mxu0 0.0
    %3539 = vmatpush1.msra.mxu0 0.0
    %3540 = vmatprep.subr.mxu0 0.0
    %3541 = vmatpush1.msra.mxu0 0.0
    %3542 = vmatprep.subr.mxu0 0.0
    %3543 = vmatpush1.msra.mxu0 0.0
    %3544 = vmatprep.mubr.f32.mxu0 0.0
    %3545 = vmatmul.mubr.f32.gmra.mrb[0].mxu0 %v3034
    %v3546 = vpop.f32.mrb[0].mxu0
    %v3547 = vadd.f32 %v3478, %v3546
    %v3548 = vpop.f32.mrb[0].mxu0
    %3549 = vmatprep.mubr.f32.mxu0 0.0
    %3550 = vmatmul.mubr.f32.gmra.mrb[0].mxu0 %v3035
    %v3551 = vpop.f32.mrb[0].mxu0
    %v3552 = vadd.f32 %v3478, %v3551
    %v3553 = vpop.f32.mrb[0].mxu0
    %3554 = vdwg.mxu0
    %s3555 = scalar_lea.vmem %s15, 320
    %v3556 = vld [vmem:[%s3555] sm:$0xf]
    %v3557 = vld [vmem:[%s3555 + $0x4] sm:$0xf]
    %v3558 = vld [vmem:[%s3555 + $0x8] sm:$0xf]
    %v3559 = vld [vmem:[%s3555 + $0xc] sm:$0xf]
    %v3560 = vld [vmem:[%s3555 + $0x10] sm:$0xf]
    %v3561 = vld [vmem:[%s3555 + $0x14] sm:$0xf]
    %v3562 = vld [vmem:[%s3555 + $0x18] sm:$0xf]
    %v3563 = vld [vmem:[%s3555 + $0x1c] sm:$0xf]
    %v3564 = vld [vmem:[%s3555 + $0x20] sm:$0xf]
    %v3565 = vld [vmem:[%s3555 + $0x24] sm:$0xf]
    %v3566 = vld [vmem:[%s3555 + $0x28] sm:$0xf]
    %v3567 = vld [vmem:[%s3555 + $0x2c] sm:$0xf]
    %v3568 = vld [vmem:[%s3555 + $0x30] sm:$0xf]
    %v3569 = vld [vmem:[%s3555 + $0x34] sm:$0xf]
    %v3570 = vld [vmem:[%s3555 + $0x38] sm:$0xf]
    %v3571 = vld [vmem:[%s3555 + $0x3c] sm:$0xf]
    %s3572 = scalar_lea.vmem %s17, 5
    %v3573 = vld [vmem:[%s3572] sm:$0x1]
    %v3575 = vlaneseq
    %v3576 = vshrl.u32 %v3575, 7
    %v3577 = vsub.s32 0, %v3576
    %v3578 = vrot.slane %v3573, %v3577
    %v3596 = vunpack.c.l.b16 %v3556
    %v3597 = vunpack.c.l.b16 %v3557
    %v3598 = vunpack.c.l.b16 %v3558
    %v3599 = vunpack.c.l.b16 %v3559
    %v3600 = vunpack.c.l.b16 %v3560
    %v3601 = vunpack.c.l.b16 %v3561
    %v3602 = vunpack.c.l.b16 %v3562
    %v3603 = vunpack.c.l.b16 %v3563
    %v3604 = vunpack.c.l.b16 %v3564
    %v3605 = vunpack.c.l.b16 %v3565
    %v3606 = vunpack.c.l.b16 %v3566
    %v3607 = vunpack.c.l.b16 %v3567
    %v3608 = vunpack.c.l.b16 %v3568
    %v3609 = vunpack.c.l.b16 %v3569
    %v3610 = vunpack.c.l.b16 %v3570
    %v3611 = vunpack.c.l.b16 %v3571
    %v3612 = vpack.c.b16 %v3597, %v3596
    %v3613 = vpack.c.b16 %v3599, %v3598
    %v3614 = vpack.c.b16 %v3601, %v3600
    %v3615 = vpack.c.b16 %v3603, %v3602
    %v3616 = vpack.c.b16 %v3605, %v3604
    %v3617 = vpack.c.b16 %v3607, %v3606
    %v3618 = vpack.c.b16 %v3609, %v3608
    %v3619 = vpack.c.b16 %v3611, %v3610
    %3628 = vmatprep.subr.bf16.mxu0 0
    %3629 = vmatpush1.bf16.msra.mxu0 %v3612
    %3630 = vmatprep.subr.bf16.mxu0 0
    %3631 = vmatpush1.bf16.msra.mxu0 %v3613
    %3632 = vmatprep.subr.bf16.mxu0 0
    %3633 = vmatpush1.bf16.msra.mxu0 %v3614
    %3634 = vmatprep.subr.bf16.mxu0 0
    %3635 = vmatpush1.bf16.msra.mxu0 %v3615
    %3636 = vmatprep.subr.bf16.mxu0 0
    %3637 = vmatpush1.bf16.msra.mxu0 %v3616
    %3638 = vmatprep.subr.bf16.mxu0 0
    %3639 = vmatpush1.bf16.msra.mxu0 %v3617
    %3640 = vmatprep.subr.bf16.mxu0 0
    %3641 = vmatpush1.bf16.msra.mxu0 %v3618
    %3642 = vmatprep.subr.bf16.mxu0 0
    %3643 = vmatpush1.bf16.msra.mxu0 %v3619
    %3644 = vmatprep.subr.bf16.mxu0 0
    %3645 = vmatpush1.bf16.msra.mxu0 0
    %3646 = vmatprep.subr.bf16.mxu0 0
    %3647 = vmatpush1.bf16.msra.mxu0 0
    %3648 = vmatprep.subr.bf16.mxu0 0
    %3649 = vmatpush1.bf16.msra.mxu0 0
    %3650 = vmatprep.subr.bf16.mxu0 0
    %3651 = vmatpush1.bf16.msra.mxu0 0
    %3652 = vmatprep.subr.bf16.mxu0 0
    %3653 = vmatpush1.bf16.msra.mxu0 0
    %3654 = vmatprep.subr.bf16.mxu0 0
    %3655 = vmatpush1.bf16.msra.mxu0 0
    %3656 = vmatprep.subr.bf16.mxu0 0
    %3657 = vmatpush1.bf16.msra.mxu0 0
    %3658 = vmatprep.subr.bf16.mxu0 0
    %3659 = vmatpush1.bf16.msra.mxu0 0
    %3660 = vmatprep.mubr.f32.mxu0 0.0
    %3661 = vmatmul.mubr.f32.gmra.mrb[0].mxu0 %v3034
    %v3662 = vpop.f32.mrb[0].mxu0
    %v3663 = vadd.f32 %v3578, %v3662
    %v3664 = vpop.f32.mrb[0].mxu0
    %3665 = vmatprep.mubr.f32.mxu0 0.0
    %3666 = vmatmul.mubr.f32.gmra.mrb[0].mxu0 %v3035
    %v3667 = vpop.f32.mrb[0].mxu0
    %v3668 = vadd.f32 %v3578, %v3667
    %v3669 = vpop.f32.mrb[0].mxu0
    %3670 = vdwg.mxu0
    %s3671 = scalar_lea.vmem %s19, 320
    %v3672 = vld [vmem:[%s3671] sm:$0xf]
    %v3673 = vld [vmem:[%s3671 + $0x4] sm:$0xf]
    %v3674 = vld [vmem:[%s3671 + $0x8] sm:$0xf]
    %v3675 = vld [vmem:[%s3671 + $0xc] sm:$0xf]
    %v3676 = vld [vmem:[%s3671 + $0x10] sm:$0xf]
    %v3677 = vld [vmem:[%s3671 + $0x14] sm:$0xf]
    %v3678 = vld [vmem:[%s3671 + $0x18] sm:$0xf]
    %v3679 = vld [vmem:[%s3671 + $0x1c] sm:$0xf]
    %v3680 = vld [vmem:[%s3671 + $0x20] sm:$0xf]
    %v3681 = vld [vmem:[%s3671 + $0x24] sm:$0xf]
    %v3682 = vld [vmem:[%s3671 + $0x28] sm:$0xf]
    %v3683 = vld [vmem:[%s3671 + $0x2c] sm:$0xf]
    %v3684 = vld [vmem:[%s3671 + $0x30] sm:$0xf]
    %v3685 = vld [vmem:[%s3671 + $0x34] sm:$0xf]
    %v3686 = vld [vmem:[%s3671 + $0x38] sm:$0xf]
    %v3687 = vld [vmem:[%s3671 + $0x3c] sm:$0xf]
    %s3688 = scalar_lea.vmem %s21, 5
    %v3689 = vld [vmem:[%s3688] sm:$0x1]
    %v3691 = vlaneseq
    %v3692 = vshrl.u32 %v3691, 7
    %v3693 = vsub.s32 0, %v3692
    %v3694 = vrot.slane %v3689, %v3693
    %v3712 = vunpack.c.l.b16 %v3672
    %v3713 = vunpack.c.l.b16 %v3673
    %v3714 = vunpack.c.l.b16 %v3674
    %v3715 = vunpack.c.l.b16 %v3675
    %v3716 = vunpack.c.l.b16 %v3676
    %v3717 = vunpack.c.l.b16 %v3677
    %v3718 = vunpack.c.l.b16 %v3678
    %v3719 = vunpack.c.l.b16 %v3679
    %v3720 = vunpack.c.l.b16 %v3680
    %v3721 = vunpack.c.l.b16 %v3681
    %v3722 = vunpack.c.l.b16 %v3682
    %v3723 = vunpack.c.l.b16 %v3683
    %v3724 = vunpack.c.l.b16 %v3684
    %v3725 = vunpack.c.l.b16 %v3685
    %v3726 = vunpack.c.l.b16 %v3686
    %v3727 = vunpack.c.l.b16 %v3687
    %v3728 = vpack.c.b16 %v3713, %v3712
    %v3729 = vpack.c.b16 %v3715, %v3714
    %v3730 = vpack.c.b16 %v3717, %v3716
    %v3731 = vpack.c.b16 %v3719, %v3718
    %v3732 = vpack.c.b16 %v3721, %v3720
    %v3733 = vpack.c.b16 %v3723, %v3722
    %v3734 = vpack.c.b16 %v3725, %v3724
    %v3735 = vpack.c.b16 %v3727, %v3726
    %3744 = vmatprep.subr.bf16.mxu0 0
    %3745 = vmatpush1.bf16.msra.mxu0 %v3728
    %3746 = vmatprep.subr.bf16.mxu0 0
    %3747 = vmatpush1.bf16.msra.mxu0 %v3729
    %3748 = vmatprep.subr.bf16.mxu0 0
    %3749 = vmatpush1.bf16.msra.mxu0 %v3730
    %3750 = vmatprep.subr.bf16.mxu0 0
    %3751 = vmatpush1.bf16.msra.mxu0 %v3731
    %3752 = vmatprep.subr.bf16.mxu0 0
    %3753 = vmatpush1.bf16.msra.mxu0 %v3732
    %3754 = vmatprep.subr.bf16.mxu0 0
    %3755 = vmatpush1.bf16.msra.mxu0 %v3733
    %3756 = vmatprep.subr.bf16.mxu0 0
    %3757 = vmatpush1.bf16.msra.mxu0 %v3734
    %3758 = vmatprep.subr.bf16.mxu0 0
    %3759 = vmatpush1.bf16.msra.mxu0 %v3735
    %3760 = vmatprep.subr.bf16.mxu0 0
    %3761 = vmatpush1.bf16.msra.mxu0 0
    %3762 = vmatprep.subr.bf16.mxu0 0
    %3763 = vmatpush1.bf16.msra.mxu0 0
    %3764 = vmatprep.subr.bf16.mxu0 0
    %3765 = vmatpush1.bf16.msra.mxu0 0
    %3766 = vmatprep.subr.bf16.mxu0 0
    %3767 = vmatpush1.bf16.msra.mxu0 0
    %3768 = vmatprep.subr.bf16.mxu0 0
    %3769 = vmatpush1.bf16.msra.mxu0 0
    %3770 = vmatprep.subr.bf16.mxu0 0
    %3771 = vmatpush1.bf16.msra.mxu0 0
    %3772 = vmatprep.subr.bf16.mxu0 0
    %3773 = vmatpush1.bf16.msra.mxu0 0
    %3774 = vmatprep.subr.bf16.mxu0 0
    %3775 = vmatpush1.bf16.msra.mxu0 0
    %3776 = vmatprep.mubr.f32.mxu0 0.0
    %3777 = vmatmul.mubr.f32.gmra.mrb[0].mxu0 %v3034
    %v3778 = vpop.f32.mrb[0].mxu0
    %v3779 = vadd.f32 %v3694, %v3778
    %v3780 = vpop.f32.mrb[0].mxu0
    %3781 = vmatprep.mubr.f32.mxu0 0.0
    %3782 = vmatmul.mubr.f32.gmra.mrb[0].mxu0 %v3035
    %v3783 = vpop.f32.mrb[0].mxu0
    %v3784 = vadd.f32 %v3694, %v3783
    %v3785 = vpop.f32.mrb[0].mxu0
    %3786 = vdwg.mxu0
    %v3788 = vsel %vm549, %v3547, 0
    %v3791 = vsel %vm549, %v3552, 0
    %v3794 = vsel %vm549, %v3663, 0
    %v3797 = vsel %vm549, %v3668, 0
    %3799 = vmatprep.subr.mxu0 0.0
    %3800 = vmatpush1.xpose.msra.mxu0 %v3794
    %3801 = vmatprep.subr.mxu0 0.0
    %3802 = vmatpush1.xpose.msra.mxu0 %v3797
    %3803 = vmatprep.subr.mxu0 0.0
    %3804 = vmatpush1.xpose.msra.mxu0 0.0
    %3805 = vmatprep.subr.mxu0 0.0
    %3806 = vmatpush1.xpose.msra.mxu0 0.0
    %3807 = vmatprep.subr.mxu0 0.0
    %3808 = vmatpush1.xpose.msra.mxu0 0.0
    %3809 = vmatprep.subr.mxu0 0.0
    %3810 = vmatpush1.xpose.msra.mxu0 0.0
    %3811 = vmatprep.subr.mxu0 0.0
    %3812 = vmatpush1.xpose.msra.mxu0 0.0
    %3813 = vmatprep.subr.mxu0 0.0
    %3814 = vmatpush1.xpose.msra.mxu0 0.0
    %3815 = vmatprep.subr.mxu0 0.0
    %3816 = vmatpush1.xpose.msra.mxu0 0.0
    %3817 = vmatprep.subr.mxu0 0.0
    %3818 = vmatpush1.xpose.msra.mxu0 0.0
    %3819 = vmatprep.subr.mxu0 0.0
    %3820 = vmatpush1.xpose.msra.mxu0 0.0
    %3821 = vmatprep.subr.mxu0 0.0
    %3822 = vmatpush1.xpose.msra.mxu0 0.0
    %3823 = vmatprep.subr.mxu0 0.0
    %3824 = vmatpush1.xpose.msra.mxu0 0.0
    %3825 = vmatprep.subr.mxu0 0.0
    %3826 = vmatpush1.xpose.msra.mxu0 0.0
    %3827 = vmatprep.subr.mxu0 0.0
    %3828 = vmatpush1.xpose.msra.mxu0 0.0
    %3829 = vmatprep.subr.mxu0 0.0
    %3830 = vmatpush1.xpose.msra.mxu0 0.0
    %3831 = vmatprep.subr.mxu0 0.0
    %3832 = vmatpush1.xpose.msra.mxu0 0.0
    %3833 = vmatprep.subr.mxu0 0.0
    %3834 = vmatpush1.xpose.msra.mxu0 0.0
    %3835 = vmatprep.subr.mxu0 0.0
    %3836 = vmatpush1.xpose.msra.mxu0 0.0
    %3837 = vmatprep.subr.mxu0 0.0
    %3838 = vmatpush1.xpose.msra.mxu0 0.0
    %3839 = vmatprep.subr.mxu0 0.0
    %3840 = vmatpush1.xpose.msra.mxu0 0.0
    %3841 = vmatprep.subr.mxu0 0.0
    %3842 = vmatpush1.xpose.msra.mxu0 0.0
    %3843 = vmatprep.subr.mxu0 0.0
    %3844 = vmatpush1.xpose.msra.mxu0 0.0
    %3845 = vmatprep.subr.mxu0 0.0
    %3846 = vmatpush1.xpose.msra.mxu0 0.0
    %3847 = vmatprep.subr.mxu0 0.0
    %3848 = vmatpush1.xpose.msra.mxu0 0.0
    %3849 = vmatprep.subr.mxu0 0.0
    %3850 = vmatpush1.xpose.msra.mxu0 0.0
    %3851 = vmatprep.subr.mxu0 0.0
    %3852 = vmatpush1.xpose.msra.mxu0 0.0
    %3853 = vmatprep.subr.mxu0 0.0
    %3854 = vmatpush1.xpose.msra.mxu0 0.0
    %3855 = vmatprep.subr.mxu0 0.0
    %3856 = vmatpush1.xpose.msra.mxu0 0.0
    %3857 = vmatprep.subr.mxu0 0.0
    %3858 = vmatpush1.xpose.msra.mxu0 0.0
    %3859 = vmatprep.subr.mxu0 0.0
    %3860 = vmatpush1.xpose.msra.mxu0 0.0
    %3861 = vmatprep.subr.mxu0 0.0
    %3862 = vmatpush1.xpose.msra.mxu0 0.0
    %3863 = vmatprep.mubr.f32.mxu0 0.0
    %3864 = vmatmul.mubr.f32.gmra.mrb[0].mxu0 %v3788
    %v3865 = vpop.f32.mrb[0].mxu0
    %v3866 = vadd.f32 %v124, %v3865
    %v3867 = vpop.f32.mrb[0].mxu0
    %3868 = vmatprep.mubr.f32.mxu0 0.0
    %3869 = vmatmul.mubr.f32.gmra.mrb[0].mxu0 %v3791
    %v3870 = vpop.f32.mrb[0].mxu0
    %v3871 = vadd.f32 %v125, %v3870
    %v3872 = vpop.f32.mrb[0].mxu0
    %3873 = vdwg.mxu0
    %s3874 = scalar_lea.vmem %s11, 768
    %v3875 = vld [vmem:[%s3874] sm:$0xff]
    %v3876 = vld [vmem:[%s3874 + $0x8] sm:$0xff]
    %v3877 = vld [vmem:[%s3874 + $0x10] sm:$0xff]
    %v3878 = vld [vmem:[%s3874 + $0x18] sm:$0xff]
    %v3879 = vld [vmem:[%s3874 + $0x20] sm:$0xff]
    %v3880 = vld [vmem:[%s3874 + $0x28] sm:$0xff]
    %v3881 = vld [vmem:[%s3874 + $0x30] sm:$0xff]
    %v3882 = vld [vmem:[%s3874 + $0x38] sm:$0xff]
    %v3883 = vld [vmem:[%s3874 + $0x40] sm:$0xff]
    %v3884 = vld [vmem:[%s3874 + $0x48] sm:$0xff]
    %v3885 = vld [vmem:[%s3874 + $0x50] sm:$0xff]
    %v3886 = vld [vmem:[%s3874 + $0x58] sm:$0xff]
    %v3887 = vld [vmem:[%s3874 + $0x60] sm:$0xff]
    %v3888 = vld [vmem:[%s3874 + $0x68] sm:$0xff]
    %v3889 = vld [vmem:[%s3874 + $0x70] sm:$0xff]
    %v3890 = vld [vmem:[%s3874 + $0x78] sm:$0xff]
    %s3891 = scalar_lea.vmem %s13, 6
    %v3892 = vld [vmem:[%s3891] sm:$0x1]
    %v3894 = vlaneseq
    %v3895 = vshrl.u32 %v3894, 7
    %v3896 = vsub.s32 0, %v3895
    %v3897 = vrot.slane %v3892, %v3896
    %3899 = vmatprep.subr.mxu0 0.0
    %3900 = vmatpush1.msra.mxu0 %v3875
    %3901 = vmatprep.subr.mxu0 0.0
    %3902 = vmatpush1.msra.mxu0 %v3876
    %3903 = vmatprep.subr.mxu0 0.0
    %3904 = vmatpush1.msra.mxu0 %v3877
    %3905 = vmatprep.subr.mxu0 0.0
    %3906 = vmatpush1.msra.mxu0 %v3878
    %3907 = vmatprep.subr.mxu0 0.0
    %3908 = vmatpush1.msra.mxu0 %v3879
    %3909 = vmatprep.subr.mxu0 0.0
    %3910 = vmatpush1.msra.mxu0 %v3880
    %3911 = vmatprep.subr.mxu0 0.0
    %3912 = vmatpush1.msra.mxu0 %v3881
    %3913 = vmatprep.subr.mxu0 0.0
    %3914 = vmatpush1.msra.mxu0 %v3882
    %3915 = vmatprep.subr.mxu0 0.0
    %3916 = vmatpush1.msra.mxu0 %v3883
    %3917 = vmatprep.subr.mxu0 0.0
    %3918 = vmatpush1.msra.mxu0 %v3884
    %3919 = vmatprep.subr.mxu0 0.0
    %3920 = vmatpush1.msra.mxu0 %v3885
    %3921 = vmatprep.subr.mxu0 0.0
    %3922 = vmatpush1.msra.mxu0 %v3886
    %3923 = vmatprep.subr.mxu0 0.0
    %3924 = vmatpush1.msra.mxu0 %v3887
    %3925 = vmatprep.subr.mxu0 0.0
    %3926 = vmatpush1.msra.mxu0 %v3888
    %3927 = vmatprep.subr.mxu0 0.0
    %3928 = vmatpush1.msra.mxu0 %v3889
    %3929 = vmatprep.subr.mxu0 0.0
    %3930 = vmatpush1.msra.mxu0 %v3890
    %3931 = vmatprep.subr.mxu0 0.0
    %3932 = vmatpush1.msra.mxu0 0.0
    %3933 = vmatprep.subr.mxu0 0.0
    %3934 = vmatpush1.msra.mxu0 0.0
    %3935 = vmatprep.subr.mxu0 0.0
    %3936 = vmatpush1.msra.mxu0 0.0
    %3937 = vmatprep.subr.mxu0 0.0
    %3938 = vmatpush1.msra.mxu0 0.0
    %3939 = vmatprep.subr.mxu0 0.0
    %3940 = vmatpush1.msra.mxu0 0.0
    %3941 = vmatprep.subr.mxu0 0.0
    %3942 = vmatpush1.msra.mxu0 0.0
    %3943 = vmatprep.subr.mxu0 0.0
    %3944 = vmatpush1.msra.mxu0 0.0
    %3945 = vmatprep.subr.mxu0 0.0
    %3946 = vmatpush1.msra.mxu0 0.0
    %3947 = vmatprep.subr.mxu0 0.0
    %3948 = vmatpush1.msra.mxu0 0.0
    %3949 = vmatprep.subr.mxu0 0.0
    %3950 = vmatpush1.msra.mxu0 0.0
    %3951 = vmatprep.subr.mxu0 0.0
    %3952 = vmatpush1.msra.mxu0 0.0
    %3953 = vmatprep.subr.mxu0 0.0
    %3954 = vmatpush1.msra.mxu0 0.0
    %3955 = vmatprep.subr.mxu0 0.0
    %3956 = vmatpush1.msra.mxu0 0.0
    %3957 = vmatprep.subr.mxu0 0.0
    %3958 = vmatpush1.msra.mxu0 0.0
    %3959 = vmatprep.subr.mxu0 0.0
    %3960 = vmatpush1.msra.mxu0 0.0
    %3961 = vmatprep.subr.mxu0 0.0
    %3962 = vmatpush1.msra.mxu0 0.0
    %3963 = vmatprep.mubr.f32.mxu0 0.0
    %3964 = vmatmul.mubr.f32.gmra.mrb[0].mxu0 %v3034
    %v3965 = vpop.f32.mrb[0].mxu0
    %v3966 = vadd.f32 %v3897, %v3965
    %v3967 = vpop.f32.mrb[0].mxu0
    %3968 = vmatprep.mubr.f32.mxu0 0.0
    %3969 = vmatmul.mubr.f32.gmra.mrb[0].mxu0 %v3035
    %v3970 = vpop.f32.mrb[0].mxu0
    %v3971 = vadd.f32 %v3897, %v3970
    %v3972 = vpop.f32.mrb[0].mxu0
    %3973 = vdwg.mxu0
    %s3974 = scalar_lea.vmem %s15, 384
    %v3975 = vld [vmem:[%s3974] sm:$0xf]
    %v3976 = vld [vmem:[%s3974 + $0x4] sm:$0xf]
    %v3977 = vld [vmem:[%s3974 + $0x8] sm:$0xf]
    %v3978 = vld [vmem:[%s3974 + $0xc] sm:$0xf]
    %v3979 = vld [vmem:[%s3974 + $0x10] sm:$0xf]
    %v3980 = vld [vmem:[%s3974 + $0x14] sm:$0xf]
    %v3981 = vld [vmem:[%s3974 + $0x18] sm:$0xf]
    %v3982 = vld [vmem:[%s3974 + $0x1c] sm:$0xf]
    %v3983 = vld [vmem:[%s3974 + $0x20] sm:$0xf]
    %v3984 = vld [vmem:[%s3974 + $0x24] sm:$0xf]
    %v3985 = vld [vmem:[%s3974 + $0x28] sm:$0xf]
    %v3986 = vld [vmem:[%s3974 + $0x2c] sm:$0xf]
    %v3987 = vld [vmem:[%s3974 + $0x30] sm:$0xf]
    %v3988 = vld [vmem:[%s3974 + $0x34] sm:$0xf]
    %v3989 = vld [vmem:[%s3974 + $0x38] sm:$0xf]
    %v3990 = vld [vmem:[%s3974 + $0x3c] sm:$0xf]
    %s3991 = scalar_lea.vmem %s17, 6
    %v3992 = vld [vmem:[%s3991] sm:$0x1]
    %v3994 = vlaneseq
    %v3995 = vshrl.u32 %v3994, 7
    %v3996 = vsub.s32 0, %v3995
    %v3997 = vrot.slane %v3992, %v3996
    %v4015 = vunpack.c.l.b16 %v3975
    %v4016 = vunpack.c.l.b16 %v3976
    %v4017 = vunpack.c.l.b16 %v3977
    %v4018 = vunpack.c.l.b16 %v3978
    %v4019 = vunpack.c.l.b16 %v3979
    %v4020 = vunpack.c.l.b16 %v3980
    %v4021 = vunpack.c.l.b16 %v3981
    %v4022 = vunpack.c.l.b16 %v3982
    %v4023 = vunpack.c.l.b16 %v3983
    %v4024 = vunpack.c.l.b16 %v3984
    %v4025 = vunpack.c.l.b16 %v3985
    %v4026 = vunpack.c.l.b16 %v3986
    %v4027 = vunpack.c.l.b16 %v3987
    %v4028 = vunpack.c.l.b16 %v3988
    %v4029 = vunpack.c.l.b16 %v3989
    %v4030 = vunpack.c.l.b16 %v3990
    %v4031 = vpack.c.b16 %v4016, %v4015
    %v4032 = vpack.c.b16 %v4018, %v4017
    %v4033 = vpack.c.b16 %v4020, %v4019
    %v4034 = vpack.c.b16 %v4022, %v4021
    %v4035 = vpack.c.b16 %v4024, %v4023
    %v4036 = vpack.c.b16 %v4026, %v4025
    %v4037 = vpack.c.b16 %v4028, %v4027
    %v4038 = vpack.c.b16 %v4030, %v4029
    %4047 = vmatprep.subr.bf16.mxu0 0
    %4048 = vmatpush1.bf16.msra.mxu0 %v4031
    %4049 = vmatprep.subr.bf16.mxu0 0
    %4050 = vmatpush1.bf16.msra.mxu0 %v4032
    %4051 = vmatprep.subr.bf16.mxu0 0
    %4052 = vmatpush1.bf16.msra.mxu0 %v4033
    %4053 = vmatprep.subr.bf16.mxu0 0
    %4054 = vmatpush1.bf16.msra.mxu0 %v4034
    %4055 = vmatprep.subr.bf16.mxu0 0
    %4056 = vmatpush1.bf16.msra.mxu0 %v4035
    %4057 = vmatprep.subr.bf16.mxu0 0
    %4058 = vmatpush1.bf16.msra.mxu0 %v4036
    %4059 = vmatprep.subr.bf16.mxu0 0
    %4060 = vmatpush1.bf16.msra.mxu0 %v4037
    %4061 = vmatprep.subr.bf16.mxu0 0
    %4062 = vmatpush1.bf16.msra.mxu0 %v4038
    %4063 = vmatprep.subr.bf16.mxu0 0
    %4064 = vmatpush1.bf16.msra.mxu0 0
    %4065 = vmatprep.subr.bf16.mxu0 0
    %4066 = vmatpush1.bf16.msra.mxu0 0
    %4067 = vmatprep.subr.bf16.mxu0 0
    %4068 = vmatpush1.bf16.msra.mxu0 0
    %4069 = vmatprep.subr.bf16.mxu0 0
    %4070 = vmatpush1.bf16.msra.mxu0 0
    %4071 = vmatprep.subr.bf16.mxu0 0
    %4072 = vmatpush1.bf16.msra.mxu0 0
    %4073 = vmatprep.subr.bf16.mxu0 0
    %4074 = vmatpush1.bf16.msra.mxu0 0
    %4075 = vmatprep.subr.bf16.mxu0 0
    %4076 = vmatpush1.bf16.msra.mxu0 0
    %4077 = vmatprep.subr.bf16.mxu0 0
    %4078 = vmatpush1.bf16.msra.mxu0 0
    %4079 = vmatprep.mubr.f32.mxu0 0.0
    %4080 = vmatmul.mubr.f32.gmra.mrb[0].mxu0 %v3034
    %v4081 = vpop.f32.mrb[0].mxu0
    %v4082 = vadd.f32 %v3997, %v4081
    %v4083 = vpop.f32.mrb[0].mxu0
    %4084 = vmatprep.mubr.f32.mxu0 0.0
    %4085 = vmatmul.mubr.f32.gmra.mrb[0].mxu0 %v3035
    %v4086 = vpop.f32.mrb[0].mxu0
    %v4087 = vadd.f32 %v3997, %v4086
    %v4088 = vpop.f32.mrb[0].mxu0
    %4089 = vdwg.mxu0
    %s4090 = scalar_lea.vmem %s19, 384
    %v4091 = vld [vmem:[%s4090] sm:$0xf]
    %v4092 = vld [vmem:[%s4090 + $0x4] sm:$0xf]
    %v4093 = vld [vmem:[%s4090 + $0x8] sm:$0xf]
    %v4094 = vld [vmem:[%s4090 + $0xc] sm:$0xf]
    %v4095 = vld [vmem:[%s4090 + $0x10] sm:$0xf]
    %v4096 = vld [vmem:[%s4090 + $0x14] sm:$0xf]
    %v4097 = vld [vmem:[%s4090 + $0x18] sm:$0xf]
    %v4098 = vld [vmem:[%s4090 + $0x1c] sm:$0xf]
    %v4099 = vld [vmem:[%s4090 + $0x20] sm:$0xf]
    %v4100 = vld [vmem:[%s4090 + $0x24] sm:$0xf]
    %v4101 = vld [vmem:[%s4090 + $0x28] sm:$0xf]
    %v4102 = vld [vmem:[%s4090 + $0x2c] sm:$0xf]
    %v4103 = vld [vmem:[%s4090 + $0x30] sm:$0xf]
    %v4104 = vld [vmem:[%s4090 + $0x34] sm:$0xf]
    %v4105 = vld [vmem:[%s4090 + $0x38] sm:$0xf]
    %v4106 = vld [vmem:[%s4090 + $0x3c] sm:$0xf]
    %s4107 = scalar_lea.vmem %s21, 6
    %v4108 = vld [vmem:[%s4107] sm:$0x1]
    %v4110 = vlaneseq
    %v4111 = vshrl.u32 %v4110, 7
    %v4112 = vsub.s32 0, %v4111
    %v4113 = vrot.slane %v4108, %v4112
    %v4131 = vunpack.c.l.b16 %v4091
    %v4132 = vunpack.c.l.b16 %v4092
    %v4133 = vunpack.c.l.b16 %v4093
    %v4134 = vunpack.c.l.b16 %v4094
    %v4135 = vunpack.c.l.b16 %v4095
    %v4136 = vunpack.c.l.b16 %v4096
    %v4137 = vunpack.c.l.b16 %v4097
    %v4138 = vunpack.c.l.b16 %v4098
    %v4139 = vunpack.c.l.b16 %v4099
    %v4140 = vunpack.c.l.b16 %v4100
    %v4141 = vunpack.c.l.b16 %v4101
    %v4142 = vunpack.c.l.b16 %v4102
    %v4143 = vunpack.c.l.b16 %v4103
    %v4144 = vunpack.c.l.b16 %v4104
    %v4145 = vunpack.c.l.b16 %v4105
    %v4146 = vunpack.c.l.b16 %v4106
    %v4147 = vpack.c.b16 %v4132, %v4131
    %v4148 = vpack.c.b16 %v4134, %v4133
    %v4149 = vpack.c.b16 %v4136, %v4135
    %v4150 = vpack.c.b16 %v4138, %v4137
    %v4151 = vpack.c.b16 %v4140, %v4139
    %v4152 = vpack.c.b16 %v4142, %v4141
    %v4153 = vpack.c.b16 %v4144, %v4143
    %v4154 = vpack.c.b16 %v4146, %v4145
    %4163 = vmatprep.subr.bf16.mxu0 0
    %4164 = vmatpush1.bf16.msra.mxu0 %v4147
    %4165 = vmatprep.subr.bf16.mxu0 0
    %4166 = vmatpush1.bf16.msra.mxu0 %v4148
    %4167 = vmatprep.subr.bf16.mxu0 0
    %4168 = vmatpush1.bf16.msra.mxu0 %v4149
    %4169 = vmatprep.subr.bf16.mxu0 0
    %4170 = vmatpush1.bf16.msra.mxu0 %v4150
    %4171 = vmatprep.subr.bf16.mxu0 0
    %4172 = vmatpush1.bf16.msra.mxu0 %v4151
    %4173 = vmatprep.subr.bf16.mxu0 0
    %4174 = vmatpush1.bf16.msra.mxu0 %v4152
    %4175 = vmatprep.subr.bf16.mxu0 0
    %4176 = vmatpush1.bf16.msra.mxu0 %v4153
    %4177 = vmatprep.subr.bf16.mxu0 0
    %4178 = vmatpush1.bf16.msra.mxu0 %v4154
    %4179 = vmatprep.subr.bf16.mxu0 0
    %4180 = vmatpush1.bf16.msra.mxu0 0
    %4181 = vmatprep.subr.bf16.mxu0 0
    %4182 = vmatpush1.bf16.msra.mxu0 0
    %4183 = vmatprep.subr.bf16.mxu0 0
    %4184 = vmatpush1.bf16.msra.mxu0 0
    %4185 = vmatprep.subr.bf16.mxu0 0
    %4186 = vmatpush1.bf16.msra.mxu0 0
    %4187 = vmatprep.subr.bf16.mxu0 0
    %4188 = vmatpush1.bf16.msra.mxu0 0
    %4189 = vmatprep.subr.bf16.mxu0 0
    %4190 = vmatpush1.bf16.msra.mxu0 0
    %4191 = vmatprep.subr.bf16.mxu0 0
    %4192 = vmatpush1.bf16.msra.mxu0 0
    %4193 = vmatprep.subr.bf16.mxu0 0
    %4194 = vmatpush1.bf16.msra.mxu0 0
    %4195 = vmatprep.mubr.f32.mxu0 0.0
    %4196 = vmatmul.mubr.f32.gmra.mrb[0].mxu0 %v3034
    %v4197 = vpop.f32.mrb[0].mxu0
    %v4198 = vadd.f32 %v4113, %v4197
    %v4199 = vpop.f32.mrb[0].mxu0
    %4200 = vmatprep.mubr.f32.mxu0 0.0
    %4201 = vmatmul.mubr.f32.gmra.mrb[0].mxu0 %v3035
    %v4202 = vpop.f32.mrb[0].mxu0
    %v4203 = vadd.f32 %v4113, %v4202
    %v4204 = vpop.f32.mrb[0].mxu0
    %4205 = vdwg.mxu0
    %v4207 = vsel %vm549, %v3966, 0
    %v4210 = vsel %vm549, %v3971, 0
    %v4213 = vsel %vm549, %v4082, 0
    %v4216 = vsel %vm549, %v4087, 0
    %4218 = vmatprep.subr.mxu0 0.0
    %4219 = vmatpush1.xpose.msra.mxu0 %v4213
    %4220 = vmatprep.subr.mxu0 0.0
    %4221 = vmatpush1.xpose.msra.mxu0 %v4216
    %4222 = vmatprep.subr.mxu0 0.0
    %4223 = vmatpush1.xpose.msra.mxu0 0.0
    %4224 = vmatprep.subr.mxu0 0.0
    %4225 = vmatpush1.xpose.msra.mxu0 0.0
    %4226 = vmatprep.subr.mxu0 0.0
    %4227 = vmatpush1.xpose.msra.mxu0 0.0
    %4228 = vmatprep.subr.mxu0 0.0
    %4229 = vmatpush1.xpose.msra.mxu0 0.0
    %4230 = vmatprep.subr.mxu0 0.0
    %4231 = vmatpush1.xpose.msra.mxu0 0.0
    %4232 = vmatprep.subr.mxu0 0.0
    %4233 = vmatpush1.xpose.msra.mxu0 0.0
    %4234 = vmatprep.subr.mxu0 0.0
    %4235 = vmatpush1.xpose.msra.mxu0 0.0
    %4236 = vmatprep.subr.mxu0 0.0
    %4237 = vmatpush1.xpose.msra.mxu0 0.0
    %4238 = vmatprep.subr.mxu0 0.0
    %4239 = vmatpush1.xpose.msra.mxu0 0.0
    %4240 = vmatprep.subr.mxu0 0.0
    %4241 = vmatpush1.xpose.msra.mxu0 0.0
    %4242 = vmatprep.subr.mxu0 0.0
    %4243 = vmatpush1.xpose.msra.mxu0 0.0
    %4244 = vmatprep.subr.mxu0 0.0
    %4245 = vmatpush1.xpose.msra.mxu0 0.0
    %4246 = vmatprep.subr.mxu0 0.0
    %4247 = vmatpush1.xpose.msra.mxu0 0.0
    %4248 = vmatprep.subr.mxu0 0.0
    %4249 = vmatpush1.xpose.msra.mxu0 0.0
    %4250 = vmatprep.subr.mxu0 0.0
    %4251 = vmatpush1.xpose.msra.mxu0 0.0
    %4252 = vmatprep.subr.mxu0 0.0
    %4253 = vmatpush1.xpose.msra.mxu0 0.0
    %4254 = vmatprep.subr.mxu0 0.0
    %4255 = vmatpush1.xpose.msra.mxu0 0.0
    %4256 = vmatprep.subr.mxu0 0.0
    %4257 = vmatpush1.xpose.msra.mxu0 0.0
    %4258 = vmatprep.subr.mxu0 0.0
    %4259 = vmatpush1.xpose.msra.mxu0 0.0
    %4260 = vmatprep.subr.mxu0 0.0
    %4261 = vmatpush1.xpose.msra.mxu0 0.0
    %4262 = vmatprep.subr.mxu0 0.0
    %4263 = vmatpush1.xpose.msra.mxu0 0.0
    %4264 = vmatprep.subr.mxu0 0.0
    %4265 = vmatpush1.xpose.msra.mxu0 0.0
    %4266 = vmatprep.subr.mxu0 0.0
    %4267 = vmatpush1.xpose.msra.mxu0 0.0
    %4268 = vmatprep.subr.mxu0 0.0
    %4269 = vmatpush1.xpose.msra.mxu0 0.0
    %4270 = vmatprep.subr.mxu0 0.0
    %4271 = vmatpush1.xpose.msra.mxu0 0.0
    %4272 = vmatprep.subr.mxu0 0.0
    %4273 = vmatpush1.xpose.msra.mxu0 0.0
    %4274 = vmatprep.subr.mxu0 0.0
    %4275 = vmatpush1.xpose.msra.mxu0 0.0
    %4276 = vmatprep.subr.mxu0 0.0
    %4277 = vmatpush1.xpose.msra.mxu0 0.0
    %4278 = vmatprep.subr.mxu0 0.0
    %4279 = vmatpush1.xpose.msra.mxu0 0.0
    %4280 = vmatprep.subr.mxu0 0.0
    %4281 = vmatpush1.xpose.msra.mxu0 0.0
    %4282 = vmatprep.mubr.f32.mxu0 0.0
    %4283 = vmatmul.mubr.f32.gmra.mrb[0].mxu0 %v4207
    %v4284 = vpop.f32.mrb[0].mxu0
    %v4285 = vadd.f32 %v124, %v4284
    %v4286 = vpop.f32.mrb[0].mxu0
    %4287 = vmatprep.mubr.f32.mxu0 0.0
    %4288 = vmatmul.mubr.f32.gmra.mrb[0].mxu0 %v4210
    %v4289 = vpop.f32.mrb[0].mxu0
    %v4290 = vadd.f32 %v125, %v4289
    %v4291 = vpop.f32.mrb[0].mxu0
    %4292 = vdwg.mxu0
    %s4293 = scalar_lea.vmem %s11, 896
    %v4294 = vld [vmem:[%s4293] sm:$0xff]
    %v4295 = vld [vmem:[%s4293 + $0x8] sm:$0xff]
    %v4296 = vld [vmem:[%s4293 + $0x10] sm:$0xff]
    %v4297 = vld [vmem:[%s4293 + $0x18] sm:$0xff]
    %v4298 = vld [vmem:[%s4293 + $0x20] sm:$0xff]
    %v4299 = vld [vmem:[%s4293 + $0x28] sm:$0xff]
    %v4300 = vld [vmem:[%s4293 + $0x30] sm:$0xff]
    %v4301 = vld [vmem:[%s4293 + $0x38] sm:$0xff]
    %v4302 = vld [vmem:[%s4293 + $0x40] sm:$0xff]
    %v4303 = vld [vmem:[%s4293 + $0x48] sm:$0xff]
    %v4304 = vld [vmem:[%s4293 + $0x50] sm:$0xff]
    %v4305 = vld [vmem:[%s4293 + $0x58] sm:$0xff]
    %v4306 = vld [vmem:[%s4293 + $0x60] sm:$0xff]
    %v4307 = vld [vmem:[%s4293 + $0x68] sm:$0xff]
    %v4308 = vld [vmem:[%s4293 + $0x70] sm:$0xff]
    %v4309 = vld [vmem:[%s4293 + $0x78] sm:$0xff]
    %s4310 = scalar_lea.vmem %s13, 7
    %v4311 = vld [vmem:[%s4310] sm:$0x1]
    %v4313 = vlaneseq
    %v4314 = vshrl.u32 %v4313, 7
    %v4315 = vsub.s32 0, %v4314
    %v4316 = vrot.slane %v4311, %v4315
    %4318 = vmatprep.subr.mxu0 0.0
    %4319 = vmatpush1.msra.mxu0 %v4294
    %4320 = vmatprep.subr.mxu0 0.0
    %4321 = vmatpush1.msra.mxu0 %v4295
    %4322 = vmatprep.subr.mxu0 0.0
    %4323 = vmatpush1.msra.mxu0 %v4296
    %4324 = vmatprep.subr.mxu0 0.0
    %4325 = vmatpush1.msra.mxu0 %v4297
    %4326 = vmatprep.subr.mxu0 0.0
    %4327 = vmatpush1.msra.mxu0 %v4298
    %4328 = vmatprep.subr.mxu0 0.0
    %4329 = vmatpush1.msra.mxu0 %v4299
    %4330 = vmatprep.subr.mxu0 0.0
    %4331 = vmatpush1.msra.mxu0 %v4300
    %4332 = vmatprep.subr.mxu0 0.0
    %4333 = vmatpush1.msra.mxu0 %v4301
    %4334 = vmatprep.subr.mxu0 0.0
    %4335 = vmatpush1.msra.mxu0 %v4302
    %4336 = vmatprep.subr.mxu0 0.0
    %4337 = vmatpush1.msra.mxu0 %v4303
    %4338 = vmatprep.subr.mxu0 0.0
    %4339 = vmatpush1.msra.mxu0 %v4304
    %4340 = vmatprep.subr.mxu0 0.0
    %4341 = vmatpush1.msra.mxu0 %v4305
    %4342 = vmatprep.subr.mxu0 0.0
    %4343 = vmatpush1.msra.mxu0 %v4306
    %4344 = vmatprep.subr.mxu0 0.0
    %4345 = vmatpush1.msra.mxu0 %v4307
    %4346 = vmatprep.subr.mxu0 0.0
    %4347 = vmatpush1.msra.mxu0 %v4308
    %4348 = vmatprep.subr.mxu0 0.0
    %4349 = vmatpush1.msra.mxu0 %v4309
    %4350 = vmatprep.subr.mxu0 0.0
    %4351 = vmatpush1.msra.mxu0 0.0
    %4352 = vmatprep.subr.mxu0 0.0
    %4353 = vmatpush1.msra.mxu0 0.0
    %4354 = vmatprep.subr.mxu0 0.0
    %4355 = vmatpush1.msra.mxu0 0.0
    %4356 = vmatprep.subr.mxu0 0.0
    %4357 = vmatpush1.msra.mxu0 0.0
    %4358 = vmatprep.subr.mxu0 0.0
    %4359 = vmatpush1.msra.mxu0 0.0
    %4360 = vmatprep.subr.mxu0 0.0
    %4361 = vmatpush1.msra.mxu0 0.0
    %4362 = vmatprep.subr.mxu0 0.0
    %4363 = vmatpush1.msra.mxu0 0.0
    %4364 = vmatprep.subr.mxu0 0.0
    %4365 = vmatpush1.msra.mxu0 0.0
    %4366 = vmatprep.subr.mxu0 0.0
    %4367 = vmatpush1.msra.mxu0 0.0
    %4368 = vmatprep.subr.mxu0 0.0
    %4369 = vmatpush1.msra.mxu0 0.0
    %4370 = vmatprep.subr.mxu0 0.0
    %4371 = vmatpush1.msra.mxu0 0.0
    %4372 = vmatprep.subr.mxu0 0.0
    %4373 = vmatpush1.msra.mxu0 0.0
    %4374 = vmatprep.subr.mxu0 0.0
    %4375 = vmatpush1.msra.mxu0 0.0
    %4376 = vmatprep.subr.mxu0 0.0
    %4377 = vmatpush1.msra.mxu0 0.0
    %4378 = vmatprep.subr.mxu0 0.0
    %4379 = vmatpush1.msra.mxu0 0.0
    %4380 = vmatprep.subr.mxu0 0.0
    %4381 = vmatpush1.msra.mxu0 0.0
    %4382 = vmatprep.mubr.f32.mxu0 0.0
    %4383 = vmatmul.mubr.f32.gmra.mrb[0].mxu0 %v3034
    %v4384 = vpop.f32.mrb[0].mxu0
    %v4385 = vadd.f32 %v4316, %v4384
    %v4386 = vpop.f32.mrb[0].mxu0
    %4387 = vmatprep.mubr.f32.mxu0 0.0
    %4388 = vmatmul.mubr.f32.gmra.mrb[0].mxu0 %v3035
    %v4389 = vpop.f32.mrb[0].mxu0
    %v4390 = vadd.f32 %v4316, %v4389
    %v4391 = vpop.f32.mrb[0].mxu0
    %4392 = vdwg.mxu0
    %s4393 = scalar_lea.vmem %s15, 448
    %v4394 = vld [vmem:[%s4393] sm:$0xf]
    %v4395 = vld [vmem:[%s4393 + $0x4] sm:$0xf]
    %v4396 = vld [vmem:[%s4393 + $0x8] sm:$0xf]
    %v4397 = vld [vmem:[%s4393 + $0xc] sm:$0xf]
    %v4398 = vld [vmem:[%s4393 + $0x10] sm:$0xf]
    %v4399 = vld [vmem:[%s4393 + $0x14] sm:$0xf]
    %v4400 = vld [vmem:[%s4393 + $0x18] sm:$0xf]
    %v4401 = vld [vmem:[%s4393 + $0x1c] sm:$0xf]
    %v4402 = vld [vmem:[%s4393 + $0x20] sm:$0xf]
    %v4403 = vld [vmem:[%s4393 + $0x24] sm:$0xf]
    %v4404 = vld [vmem:[%s4393 + $0x28] sm:$0xf]
    %v4405 = vld [vmem:[%s4393 + $0x2c] sm:$0xf]
    %v4406 = vld [vmem:[%s4393 + $0x30] sm:$0xf]
    %v4407 = vld [vmem:[%s4393 + $0x34] sm:$0xf]
    %v4408 = vld [vmem:[%s4393 + $0x38] sm:$0xf]
    %v4409 = vld [vmem:[%s4393 + $0x3c] sm:$0xf]
    %s4410 = scalar_lea.vmem %s17, 7
    %v4411 = vld [vmem:[%s4410] sm:$0x1]
    %v4413 = vlaneseq
    %v4414 = vshrl.u32 %v4413, 7
    %v4415 = vsub.s32 0, %v4414
    %v4416 = vrot.slane %v4411, %v4415
    %v4434 = vunpack.c.l.b16 %v4394
    %v4435 = vunpack.c.l.b16 %v4395
    %v4436 = vunpack.c.l.b16 %v4396
    %v4437 = vunpack.c.l.b16 %v4397
    %v4438 = vunpack.c.l.b16 %v4398
    %v4439 = vunpack.c.l.b16 %v4399
    %v4440 = vunpack.c.l.b16 %v4400
    %v4441 = vunpack.c.l.b16 %v4401
    %v4442 = vunpack.c.l.b16 %v4402
    %v4443 = vunpack.c.l.b16 %v4403
    %v4444 = vunpack.c.l.b16 %v4404
    %v4445 = vunpack.c.l.b16 %v4405
    %v4446 = vunpack.c.l.b16 %v4406
    %v4447 = vunpack.c.l.b16 %v4407
    %v4448 = vunpack.c.l.b16 %v4408
    %v4449 = vunpack.c.l.b16 %v4409
    %v4450 = vpack.c.b16 %v4435, %v4434
    %v4451 = vpack.c.b16 %v4437, %v4436
    %v4452 = vpack.c.b16 %v4439, %v4438
    %v4453 = vpack.c.b16 %v4441, %v4440
    %v4454 = vpack.c.b16 %v4443, %v4442
    %v4455 = vpack.c.b16 %v4445, %v4444
    %v4456 = vpack.c.b16 %v4447, %v4446
    %v4457 = vpack.c.b16 %v4449, %v4448
    %4466 = vmatprep.subr.bf16.mxu0 0
    %4467 = vmatpush1.bf16.msra.mxu0 %v4450
    %4468 = vmatprep.subr.bf16.mxu0 0
    %4469 = vmatpush1.bf16.msra.mxu0 %v4451
    %4470 = vmatprep.subr.bf16.mxu0 0
    %4471 = vmatpush1.bf16.msra.mxu0 %v4452
    %4472 = vmatprep.subr.bf16.mxu0 0
    %4473 = vmatpush1.bf16.msra.mxu0 %v4453
    %4474 = vmatprep.subr.bf16.mxu0 0
    %4475 = vmatpush1.bf16.msra.mxu0 %v4454
    %4476 = vmatprep.subr.bf16.mxu0 0
    %4477 = vmatpush1.bf16.msra.mxu0 %v4455
    %4478 = vmatprep.subr.bf16.mxu0 0
    %4479 = vmatpush1.bf16.msra.mxu0 %v4456
    %4480 = vmatprep.subr.bf16.mxu0 0
    %4481 = vmatpush1.bf16.msra.mxu0 %v4457
    %4482 = vmatprep.subr.bf16.mxu0 0
    %4483 = vmatpush1.bf16.msra.mxu0 0
    %4484 = vmatprep.subr.bf16.mxu0 0
    %4485 = vmatpush1.bf16.msra.mxu0 0
    %4486 = vmatprep.subr.bf16.mxu0 0
    %4487 = vmatpush1.bf16.msra.mxu0 0
    %4488 = vmatprep.subr.bf16.mxu0 0
    %4489 = vmatpush1.bf16.msra.mxu0 0
    %4490 = vmatprep.subr.bf16.mxu0 0
    %4491 = vmatpush1.bf16.msra.mxu0 0
    %4492 = vmatprep.subr.bf16.mxu0 0
    %4493 = vmatpush1.bf16.msra.mxu0 0
    %4494 = vmatprep.subr.bf16.mxu0 0
    %4495 = vmatpush1.bf16.msra.mxu0 0
    %4496 = vmatprep.subr.bf16.mxu0 0
    %4497 = vmatpush1.bf16.msra.mxu0 0
    %4498 = vmatprep.mubr.f32.mxu0 0.0
    %4499 = vmatmul.mubr.f32.gmra.mrb[0].mxu0 %v3034
    %v4500 = vpop.f32.mrb[0].mxu0
    %v4501 = vadd.f32 %v4416, %v4500
    %v4502 = vpop.f32.mrb[0].mxu0
    %4503 = vmatprep.mubr.f32.mxu0 0.0
    %4504 = vmatmul.mubr.f32.gmra.mrb[0].mxu0 %v3035
    %v4505 = vpop.f32.mrb[0].mxu0
    %v4506 = vadd.f32 %v4416, %v4505
    %v4507 = vpop.f32.mrb[0].mxu0
    %4508 = vdwg.mxu0
    %s4509 = scalar_lea.vmem %s19, 448
    %v4510 = vld [vmem:[%s4509] sm:$0xf]
    %v4511 = vld [vmem:[%s4509 + $0x4] sm:$0xf]
    %v4512 = vld [vmem:[%s4509 + $0x8] sm:$0xf]
    %v4513 = vld [vmem:[%s4509 + $0xc] sm:$0xf]
    %v4514 = vld [vmem:[%s4509 + $0x10] sm:$0xf]
    %v4515 = vld [vmem:[%s4509 + $0x14] sm:$0xf]
    %v4516 = vld [vmem:[%s4509 + $0x18] sm:$0xf]
    %v4517 = vld [vmem:[%s4509 + $0x1c] sm:$0xf]
    %v4518 = vld [vmem:[%s4509 + $0x20] sm:$0xf]
    %v4519 = vld [vmem:[%s4509 + $0x24] sm:$0xf]
    %v4520 = vld [vmem:[%s4509 + $0x28] sm:$0xf]
    %v4521 = vld [vmem:[%s4509 + $0x2c] sm:$0xf]
    %v4522 = vld [vmem:[%s4509 + $0x30] sm:$0xf]
    %v4523 = vld [vmem:[%s4509 + $0x34] sm:$0xf]
    %v4524 = vld [vmem:[%s4509 + $0x38] sm:$0xf]
    %v4525 = vld [vmem:[%s4509 + $0x3c] sm:$0xf]
    %s4526 = scalar_lea.vmem %s21, 7
    %v4527 = vld [vmem:[%s4526] sm:$0x1]
    %v4529 = vlaneseq
    %v4530 = vshrl.u32 %v4529, 7
    %v4531 = vsub.s32 0, %v4530
    %v4532 = vrot.slane %v4527, %v4531
    %v4550 = vunpack.c.l.b16 %v4510
    %v4551 = vunpack.c.l.b16 %v4511
    %v4552 = vunpack.c.l.b16 %v4512
    %v4553 = vunpack.c.l.b16 %v4513
    %v4554 = vunpack.c.l.b16 %v4514
    %v4555 = vunpack.c.l.b16 %v4515
    %v4556 = vunpack.c.l.b16 %v4516
    %v4557 = vunpack.c.l.b16 %v4517
    %v4558 = vunpack.c.l.b16 %v4518
    %v4559 = vunpack.c.l.b16 %v4519
    %v4560 = vunpack.c.l.b16 %v4520
    %v4561 = vunpack.c.l.b16 %v4521
    %v4562 = vunpack.c.l.b16 %v4522
    %v4563 = vunpack.c.l.b16 %v4523
    %v4564 = vunpack.c.l.b16 %v4524
    %v4565 = vunpack.c.l.b16 %v4525
    %v4566 = vpack.c.b16 %v4551, %v4550
    %v4567 = vpack.c.b16 %v4553, %v4552
    %v4568 = vpack.c.b16 %v4555, %v4554
    %v4569 = vpack.c.b16 %v4557, %v4556
    %v4570 = vpack.c.b16 %v4559, %v4558
    %v4571 = vpack.c.b16 %v4561, %v4560
    %v4572 = vpack.c.b16 %v4563, %v4562
    %v4573 = vpack.c.b16 %v4565, %v4564
    %4582 = vmatprep.subr.bf16.mxu0 0
    %4583 = vmatpush1.bf16.msra.mxu0 %v4566
    %4584 = vmatprep.subr.bf16.mxu0 0
    %4585 = vmatpush1.bf16.msra.mxu0 %v4567
    %4586 = vmatprep.subr.bf16.mxu0 0
    %4587 = vmatpush1.bf16.msra.mxu0 %v4568
    %4588 = vmatprep.subr.bf16.mxu0 0
    %4589 = vmatpush1.bf16.msra.mxu0 %v4569
    %4590 = vmatprep.subr.bf16.mxu0 0
    %4591 = vmatpush1.bf16.msra.mxu0 %v4570
    %4592 = vmatprep.subr.bf16.mxu0 0
    %4593 = vmatpush1.bf16.msra.mxu0 %v4571
    %4594 = vmatprep.subr.bf16.mxu0 0
    %4595 = vmatpush1.bf16.msra.mxu0 %v4572
    %4596 = vmatprep.subr.bf16.mxu0 0
    %4597 = vmatpush1.bf16.msra.mxu0 %v4573
    %4598 = vmatprep.subr.bf16.mxu0 0
    %4599 = vmatpush1.bf16.msra.mxu0 0
    %4600 = vmatprep.subr.bf16.mxu0 0
    %4601 = vmatpush1.bf16.msra.mxu0 0
    %4602 = vmatprep.subr.bf16.mxu0 0
    %4603 = vmatpush1.bf16.msra.mxu0 0
    %4604 = vmatprep.subr.bf16.mxu0 0
    %4605 = vmatpush1.bf16.msra.mxu0 0
    %4606 = vmatprep.subr.bf16.mxu0 0
    %4607 = vmatpush1.bf16.msra.mxu0 0
    %4608 = vmatprep.subr.bf16.mxu0 0
    %4609 = vmatpush1.bf16.msra.mxu0 0
    %4610 = vmatprep.subr.bf16.mxu0 0
    %4611 = vmatpush1.bf16.msra.mxu0 0
    %4612 = vmatprep.subr.bf16.mxu0 0
    %4613 = vmatpush1.bf16.msra.mxu0 0
    %4614 = vmatprep.mubr.f32.mxu0 0.0
    %4615 = vmatmul.mubr.f32.gmra.mrb[0].mxu0 %v3034
    %v4616 = vpop.f32.mrb[0].mxu0
    %v4617 = vadd.f32 %v4532, %v4616
    %v4618 = vpop.f32.mrb[0].mxu0
    %4619 = vmatprep.mubr.f32.mxu0 0.0
    %4620 = vmatmul.mubr.f32.gmra.mrb[0].mxu0 %v3035
    %v4621 = vpop.f32.mrb[0].mxu0
    %v4622 = vadd.f32 %v4532, %v4621
    %v4623 = vpop.f32.mrb[0].mxu0
    %4624 = vdwg.mxu0
    %v4626 = vsel %vm549, %v4385, 0
    %v4629 = vsel %vm549, %v4390, 0
    %v4632 = vsel %vm549, %v4501, 0
    %v4635 = vsel %vm549, %v4506, 0
    %4637 = vmatprep.subr.mxu0 0.0
    %4638 = vmatpush1.xpose.msra.mxu0 %v4632
    %4639 = vmatprep.subr.mxu0 0.0
    %4640 = vmatpush1.xpose.msra.mxu0 %v4635
    %4641 = vmatprep.subr.mxu0 0.0
    %4642 = vmatpush1.xpose.msra.mxu0 0.0
    %4643 = vmatprep.subr.mxu0 0.0
    %4644 = vmatpush1.xpose.msra.mxu0 0.0
    %4645 = vmatprep.subr.mxu0 0.0
    %4646 = vmatpush1.xpose.msra.mxu0 0.0
    %4647 = vmatprep.subr.mxu0 0.0
    %4648 = vmatpush1.xpose.msra.mxu0 0.0
    %4649 = vmatprep.subr.mxu0 0.0
    %4650 = vmatpush1.xpose.msra.mxu0 0.0
    %4651 = vmatprep.subr.mxu0 0.0
    %4652 = vmatpush1.xpose.msra.mxu0 0.0
    %4653 = vmatprep.subr.mxu0 0.0
    %4654 = vmatpush1.xpose.msra.mxu0 0.0
    %4655 = vmatprep.subr.mxu0 0.0
    %4656 = vmatpush1.xpose.msra.mxu0 0.0
    %4657 = vmatprep.subr.mxu0 0.0
    %4658 = vmatpush1.xpose.msra.mxu0 0.0
    %4659 = vmatprep.subr.mxu0 0.0
    %4660 = vmatpush1.xpose.msra.mxu0 0.0
    %4661 = vmatprep.subr.mxu0 0.0
    %4662 = vmatpush1.xpose.msra.mxu0 0.0
    %4663 = vmatprep.subr.mxu0 0.0
    %4664 = vmatpush1.xpose.msra.mxu0 0.0
    %4665 = vmatprep.subr.mxu0 0.0
    %4666 = vmatpush1.xpose.msra.mxu0 0.0
    %4667 = vmatprep.subr.mxu0 0.0
    %4668 = vmatpush1.xpose.msra.mxu0 0.0
    %4669 = vmatprep.subr.mxu0 0.0
    %4670 = vmatpush1.xpose.msra.mxu0 0.0
    %4671 = vmatprep.subr.mxu0 0.0
    %4672 = vmatpush1.xpose.msra.mxu0 0.0
    %4673 = vmatprep.subr.mxu0 0.0
    %4674 = vmatpush1.xpose.msra.mxu0 0.0
    %4675 = vmatprep.subr.mxu0 0.0
    %4676 = vmatpush1.xpose.msra.mxu0 0.0
    %4677 = vmatprep.subr.mxu0 0.0
    %4678 = vmatpush1.xpose.msra.mxu0 0.0
    %4679 = vmatprep.subr.mxu0 0.0
    %4680 = vmatpush1.xpose.msra.mxu0 0.0
    %4681 = vmatprep.subr.mxu0 0.0
    %4682 = vmatpush1.xpose.msra.mxu0 0.0
    %4683 = vmatprep.subr.mxu0 0.0
    %4684 = vmatpush1.xpose.msra.mxu0 0.0
    %4685 = vmatprep.subr.mxu0 0.0
    %4686 = vmatpush1.xpose.msra.mxu0 0.0
    %4687 = vmatprep.subr.mxu0 0.0
    %4688 = vmatpush1.xpose.msra.mxu0 0.0
    %4689 = vmatprep.subr.mxu0 0.0
    %4690 = vmatpush1.xpose.msra.mxu0 0.0
    %4691 = vmatprep.subr.mxu0 0.0
    %4692 = vmatpush1.xpose.msra.mxu0 0.0
    %4693 = vmatprep.subr.mxu0 0.0
    %4694 = vmatpush1.xpose.msra.mxu0 0.0
    %4695 = vmatprep.subr.mxu0 0.0
    %4696 = vmatpush1.xpose.msra.mxu0 0.0
    %4697 = vmatprep.subr.mxu0 0.0
    %4698 = vmatpush1.xpose.msra.mxu0 0.0
    %4699 = vmatprep.subr.mxu0 0.0
    %4700 = vmatpush1.xpose.msra.mxu0 0.0
    %4701 = vmatprep.mubr.f32.mxu0 0.0
    %4702 = vmatmul.mubr.f32.gmra.mrb[0].mxu0 %v4626
    %v4703 = vpop.f32.mrb[0].mxu0
    %v4704 = vadd.f32 %v124, %v4703
    %v4705 = vpop.f32.mrb[0].mxu0
    %4706 = vmatprep.mubr.f32.mxu0 0.0
    %4707 = vmatmul.mubr.f32.gmra.mrb[0].mxu0 %v4629
    %v4708 = vpop.f32.mrb[0].mxu0
    %v4709 = vadd.f32 %v125, %v4708
    %v4710 = vpop.f32.mrb[0].mxu0
    %4711 = vdwg.mxu0
    %v4712 = vsel %vm137, %v3447, -inf
    %4713 = vmax.xlane.f32.xlu0 %v4712
    %v4714 = vpop.xlane.xlu0 %4713
    %v4715 = vsel %vm137, %v3452, -inf
    %4716 = vmax.xlane.f32.xlu0 %v4715
    %v4717 = vpop.xlane.xlu0 %4716
    %v4718 = vsel %vm137, %v3866, -inf
    %4719 = vmax.xlane.f32.xlu0 %v4718
    %v4720 = vpop.xlane.xlu0 %4719
    %v4721 = vsel %vm137, %v3871, -inf
    %4722 = vmax.xlane.f32.xlu0 %v4721
    %v4723 = vpop.xlane.xlu0 %4722
    %v4724 = vsel %vm137, %v4285, -inf
    %4725 = vmax.xlane.f32.xlu0 %v4724
    %v4726 = vpop.xlane.xlu0 %4725
    %v4727 = vsel %vm137, %v4290, -inf
    %4728 = vmax.xlane.f32.xlu0 %v4727
    %v4729 = vpop.xlane.xlu0 %4728
    %v4730 = vsel %vm137, %v4704, -inf
    %4731 = vmax.xlane.f32.xlu0 %v4730
    %v4732 = vpop.xlane.xlu0 %4731
    %v4733 = vsel %vm137, %v4709, -inf
    %4734 = vmax.xlane.f32.xlu0 %v4733
    %v4735 = vpop.xlane.xlu0 %4734
    %v4736 = vsub.f32 %v3447, %v4714
    %v4737 = vsub.f32 %v3452, %v4717
    %v4738 = vsub.f32 %v3866, %v4720
    %v4739 = vsub.f32 %v3871, %v4723
    %v4740 = vsub.f32 %v4285, %v4726
    %v4741 = vsub.f32 %v4290, %v4729
    %v4742 = vsub.f32 %v4704, %v4732
    %v4743 = vsub.f32 %v4709, %v4735
    %v4744 = vmul.f32 %v4736, 1.442695
    %v4745 = vpow.pop %v4744
    %v4746 = vmul.f32 %v4737, 1.442695
    %v4747 = vpow.pop %v4746
    %v4748 = vmul.f32 %v4738, 1.442695
    %v4749 = vpow.pop %v4748
    %v4750 = vmul.f32 %v4739, 1.442695
    %v4751 = vpow.pop %v4750
    %v4752 = vmul.f32 %v4740, 1.442695
    %v4753 = vpow.pop %v4752
    %v4754 = vmul.f32 %v4741, 1.442695
    %v4755 = vpow.pop %v4754
    %v4756 = vmul.f32 %v4742, 1.442695
    %v4757 = vpow.pop %v4756
    %v4758 = vmul.f32 %v4743, 1.442695
    %v4759 = vpow.pop %v4758
    %v4760 = vsel %vm137, %v4745, 0.0
    %4761 = vadd.xlane.f32.xlu0 %v4760
    %v4762 = vpop.xlane.xlu0 %4761
    %v4763 = vsel %vm137, %v4747, 0.0
    %4764 = vadd.xlane.f32.xlu0 %v4763
    %v4765 = vpop.xlane.xlu0 %4764
    %v4766 = vsel %vm137, %v4749, 0.0
    %4767 = vadd.xlane.f32.xlu0 %v4766
    %v4768 = vpop.xlane.xlu0 %4767
    %v4769 = vsel %vm137, %v4751, 0.0
    %4770 = vadd.xlane.f32.xlu0 %v4769
    %v4771 = vpop.xlane.xlu0 %4770
    %v4772 = vsel %vm137, %v4753, 0.0
    %4773 = vadd.xlane.f32.xlu0 %v4772
    %v4774 = vpop.xlane.xlu0 %4773
    %v4775 = vsel %vm137, %v4755, 0.0
    %4776 = vadd.xlane.f32.xlu0 %v4775
    %v4777 = vpop.xlane.xlu0 %4776
    %v4778 = vsel %vm137, %v4757, 0.0
    %4779 = vadd.xlane.f32.xlu0 %v4778
    %v4780 = vpop.xlane.xlu0 %4779
    %v4781 = vsel %vm137, %v4759, 0.0
    %4782 = vadd.xlane.f32.xlu0 %v4781
    %v4783 = vpop.xlane.xlu0 %4782
    %v4784 = vrcp.pop %v4762
    %v4785 = vrcp.pop %v4765
    %v4786 = vrcp.pop %v4768
    %v4787 = vrcp.pop %v4771
    %v4788 = vrcp.pop %v4774
    %v4789 = vrcp.pop %v4777
    %v4790 = vrcp.pop %v4780
    %v4791 = vrcp.pop %v4783
    %v4792 = vmul.f32 %v4745, %v4784
    %v4793 = vmul.f32 %v4747, %v4785
    %v4794 = vmul.f32 %v4749, %v4786
    %v4795 = vmul.f32 %v4751, %v4787
    %v4796 = vmul.f32 %v4753, %v4788
    %v4797 = vmul.f32 %v4755, %v4789
    %v4798 = vmul.f32 %v4757, %v4790
    %v4799 = vmul.f32 %v4759, %v4791
    %s4800 = scalar_lea.vmem %s25, 1
    %v4801 = vld [vmem:[%s4800] sm:$0x1]
    %v4803 = vsel %vm137, %v4792, 0
    %v4806 = vsel %vm137, %v4793, 0
    %4808 = vmatprep.subr.mxu0 0.0
    %4809 = vmatpush1.msra.mxu0 %v3360
    %4810 = vmatprep.subr.mxu0 0.0
    %4811 = vmatpush1.msra.mxu0 %v3365
    %4812 = vmatprep.subr.mxu0 0.0
    %4813 = vmatpush1.msra.mxu0 0.0
    %4814 = vmatprep.subr.mxu0 0.0
    %4815 = vmatpush1.msra.mxu0 0.0
    %4816 = vmatprep.subr.mxu0 0.0
    %4817 = vmatpush1.msra.mxu0 0.0
    %4818 = vmatprep.subr.mxu0 0.0
    %4819 = vmatpush1.msra.mxu0 0.0
    %4820 = vmatprep.subr.mxu0 0.0
    %4821 = vmatpush1.msra.mxu0 0.0
    %4822 = vmatprep.subr.mxu0 0.0
    %4823 = vmatpush1.msra.mxu0 0.0
    %4824 = vmatprep.subr.mxu0 0.0
    %4825 = vmatpush1.msra.mxu0 0.0
    %4826 = vmatprep.subr.mxu0 0.0
    %4827 = vmatpush1.msra.mxu0 0.0
    %4828 = vmatprep.subr.mxu0 0.0
    %4829 = vmatpush1.msra.mxu0 0.0
    %4830 = vmatprep.subr.mxu0 0.0
    %4831 = vmatpush1.msra.mxu0 0.0
    %4832 = vmatprep.subr.mxu0 0.0
    %4833 = vmatpush1.msra.mxu0 0.0
    %4834 = vmatprep.subr.mxu0 0.0
    %4835 = vmatpush1.msra.mxu0 0.0
    %4836 = vmatprep.subr.mxu0 0.0
    %4837 = vmatpush1.msra.mxu0 0.0
    %4838 = vmatprep.subr.mxu0 0.0
    %4839 = vmatpush1.msra.mxu0 0.0
    %4840 = vmatprep.subr.mxu0 0.0
    %4841 = vmatpush1.msra.mxu0 0.0
    %4842 = vmatprep.subr.mxu0 0.0
    %4843 = vmatpush1.msra.mxu0 0.0
    %4844 = vmatprep.subr.mxu0 0.0
    %4845 = vmatpush1.msra.mxu0 0.0
    %4846 = vmatprep.subr.mxu0 0.0
    %4847 = vmatpush1.msra.mxu0 0.0
    %4848 = vmatprep.subr.mxu0 0.0
    %4849 = vmatpush1.msra.mxu0 0.0
    %4850 = vmatprep.subr.mxu0 0.0
    %4851 = vmatpush1.msra.mxu0 0.0
    %4852 = vmatprep.subr.mxu0 0.0
    %4853 = vmatpush1.msra.mxu0 0.0
    %4854 = vmatprep.subr.mxu0 0.0
    %4855 = vmatpush1.msra.mxu0 0.0
    %4856 = vmatprep.subr.mxu0 0.0
    %4857 = vmatpush1.msra.mxu0 0.0
    %4858 = vmatprep.subr.mxu0 0.0
    %4859 = vmatpush1.msra.mxu0 0.0
    %4860 = vmatprep.subr.mxu0 0.0
    %4861 = vmatpush1.msra.mxu0 0.0
    %4862 = vmatprep.subr.mxu0 0.0
    %4863 = vmatpush1.msra.mxu0 0.0
    %4864 = vmatprep.subr.mxu0 0.0
    %4865 = vmatpush1.msra.mxu0 0.0
    %4866 = vmatprep.subr.mxu0 0.0
    %4867 = vmatpush1.msra.mxu0 0.0
    %4868 = vmatprep.subr.mxu0 0.0
    %4869 = vmatpush1.msra.mxu0 0.0
    %4870 = vmatprep.subr.mxu0 0.0
    %4871 = vmatpush1.msra.mxu0 0.0
    %4872 = vmatprep.mubr.f32.mxu0 0.0
    %4873 = vmatmul.mubr.f32.gmra.mrb[0].mxu0 %v4803
    %v4874 = vpop.f32.mrb[0].mxu0
    %v4875 = vadd.f32 0.0, %v4874
    %v4876 = vpop.f32.mrb[0].mxu0
    %4877 = vmatprep.mubr.f32.mxu0 0.0
    %4878 = vmatmul.mubr.f32.gmra.mrb[0].mxu0 %v4806
    %v4879 = vpop.f32.mrb[0].mxu0
    %v4880 = vadd.f32 0.0, %v4879
    %v4881 = vpop.f32.mrb[0].mxu0
    %4882 = vdwg.mxu0
    %s4883 = scalar_lea.vmem %s23, 64
    %v4884 = vld [vmem:[%s4883] sm:$0xf]
    %v4885 = vld [vmem:[%s4883 + $0x4] sm:$0xf]
    %v4886 = vld [vmem:[%s4883 + $0x8] sm:$0xf]
    %v4887 = vld [vmem:[%s4883 + $0xc] sm:$0xf]
    %v4892 = vunpack.c.l.b16 %v4884
    %v4893 = vunpack.c.l.b16 %v4885
    %v4894 = vunpack.c.l.b16 %v4886
    %v4895 = vunpack.c.l.b16 %v4887
    %v4896 = vpack.c.b16 %v4893, %v4892
    %v4897 = vpack.c.b16 %v4895, %v4894
    %v4901 = vsel %vm549, %v4875, 0
    %v4904 = vsel %vm549, %v4880, 0
    %4906 = vmatprep.subr.bf16.mxu0 0
    %4907 = vmatpush1.bf16.msra.mxu0 %v4896
    %4908 = vmatprep.subr.bf16.mxu0 0
    %4909 = vmatpush1.bf16.msra.mxu0 %v4897
    %4910 = vmatprep.subr.bf16.mxu0 0
    %4911 = vmatpush1.bf16.msra.mxu0 0
    %4912 = vmatprep.subr.bf16.mxu0 0
    %4913 = vmatpush1.bf16.msra.mxu0 0
    %4914 = vmatprep.subr.bf16.mxu0 0
    %4915 = vmatpush1.bf16.msra.mxu0 0
    %4916 = vmatprep.subr.bf16.mxu0 0
    %4917 = vmatpush1.bf16.msra.mxu0 0
    %4918 = vmatprep.subr.bf16.mxu0 0
    %4919 = vmatpush1.bf16.msra.mxu0 0
    %4920 = vmatprep.subr.bf16.mxu0 0
    %4921 = vmatpush1.bf16.msra.mxu0 0
    %4922 = vmatprep.subr.bf16.mxu0 0
    %4923 = vmatpush1.bf16.msra.mxu0 0
    %4924 = vmatprep.subr.bf16.mxu0 0
    %4925 = vmatpush1.bf16.msra.mxu0 0
    %4926 = vmatprep.subr.bf16.mxu0 0
    %4927 = vmatpush1.bf16.msra.mxu0 0
    %4928 = vmatprep.subr.bf16.mxu0 0
    %4929 = vmatpush1.bf16.msra.mxu0 0
    %4930 = vmatprep.subr.bf16.mxu0 0
    %4931 = vmatpush1.bf16.msra.mxu0 0
    %4932 = vmatprep.subr.bf16.mxu0 0
    %4933 = vmatpush1.bf16.msra.mxu0 0
    %4934 = vmatprep.subr.bf16.mxu0 0
    %4935 = vmatpush1.bf16.msra.mxu0 0
    %4936 = vmatprep.subr.bf16.mxu0 0
    %4937 = vmatpush1.bf16.msra.mxu0 0
    %4938 = vmatprep.mubr.f32.mxu0 0.0
    %4939 = vmatmul.mubr.f32.gmra.mrb[0].mxu0 %v4901
    %v4940 = vpop.f32.mrb[0].mxu0
    %v4941 = vadd.f32 0.0, %v4940
    %v4942 = vpop.f32.mrb[0].mxu0
    %4943 = vmatprep.mubr.f32.mxu0 0.0
    %4944 = vmatmul.mubr.f32.gmra.mrb[0].mxu0 %v4904
    %v4945 = vpop.f32.mrb[0].mxu0
    %v4946 = vadd.f32 0.0, %v4945
    %v4947 = vpop.f32.mrb[0].mxu0
    %4948 = vdwg.mxu0
    %v4950 = vlaneseq
    %v4951 = vshrl.u32 %v4950, 7
    %v4952 = vsub.s32 0, %v4951
    %v4953 = vrot.slane %v4801, %v4952
    %v4955 = vadd.f32 %v4953, %v4941
    %v4956 = vadd.f32 %v4953, %v4946
    %v4958 = vsel %vm137, %v4794, 0
    %v4961 = vsel %vm137, %v4795, 0
    %4963 = vmatprep.subr.mxu0 0.0
    %4964 = vmatpush1.msra.mxu0 %v3779
    %4965 = vmatprep.subr.mxu0 0.0
    %4966 = vmatpush1.msra.mxu0 %v3784
    %4967 = vmatprep.subr.mxu0 0.0
    %4968 = vmatpush1.msra.mxu0 0.0
    %4969 = vmatprep.subr.mxu0 0.0
    %4970 = vmatpush1.msra.mxu0 0.0
    %4971 = vmatprep.subr.mxu0 0.0
    %4972 = vmatpush1.msra.mxu0 0.0
    %4973 = vmatprep.subr.mxu0 0.0
    %4974 = vmatpush1.msra.mxu0 0.0
    %4975 = vmatprep.subr.mxu0 0.0
    %4976 = vmatpush1.msra.mxu0 0.0
    %4977 = vmatprep.subr.mxu0 0.0
    %4978 = vmatpush1.msra.mxu0 0.0
    %4979 = vmatprep.subr.mxu0 0.0
    %4980 = vmatpush1.msra.mxu0 0.0
    %4981 = vmatprep.subr.mxu0 0.0
    %4982 = vmatpush1.msra.mxu0 0.0
    %4983 = vmatprep.subr.mxu0 0.0
    %4984 = vmatpush1.msra.mxu0 0.0
    %4985 = vmatprep.subr.mxu0 0.0
    %4986 = vmatpush1.msra.mxu0 0.0
    %4987 = vmatprep.subr.mxu0 0.0
    %4988 = vmatpush1.msra.mxu0 0.0
    %4989 = vmatprep.subr.mxu0 0.0
    %4990 = vmatpush1.msra.mxu0 0.0
    %4991 = vmatprep.subr.mxu0 0.0
    %4992 = vmatpush1.msra.mxu0 0.0
    %4993 = vmatprep.subr.mxu0 0.0
    %4994 = vmatpush1.msra.mxu0 0.0
    %4995 = vmatprep.subr.mxu0 0.0
    %4996 = vmatpush1.msra.mxu0 0.0
    %4997 = vmatprep.subr.mxu0 0.0
    %4998 = vmatpush1.msra.mxu0 0.0
    %4999 = vmatprep.subr.mxu0 0.0
    %5000 = vmatpush1.msra.mxu0 0.0
    %5001 = vmatprep.subr.mxu0 0.0
    %5002 = vmatpush1.msra.mxu0 0.0
    %5003 = vmatprep.subr.mxu0 0.0
    %5004 = vmatpush1.msra.mxu0 0.0
    %5005 = vmatprep.subr.mxu0 0.0
    %5006 = vmatpush1.msra.mxu0 0.0
    %5007 = vmatprep.subr.mxu0 0.0
    %5008 = vmatpush1.msra.mxu0 0.0
    %5009 = vmatprep.subr.mxu0 0.0
    %5010 = vmatpush1.msra.mxu0 0.0
    %5011 = vmatprep.subr.mxu0 0.0
    %5012 = vmatpush1.msra.mxu0 0.0
    %5013 = vmatprep.subr.mxu0 0.0
    %5014 = vmatpush1.msra.mxu0 0.0
    %5015 = vmatprep.subr.mxu0 0.0
    %5016 = vmatpush1.msra.mxu0 0.0
    %5017 = vmatprep.subr.mxu0 0.0
    %5018 = vmatpush1.msra.mxu0 0.0
    %5019 = vmatprep.subr.mxu0 0.0
    %5020 = vmatpush1.msra.mxu0 0.0
    %5021 = vmatprep.subr.mxu0 0.0
    %5022 = vmatpush1.msra.mxu0 0.0
    %5023 = vmatprep.subr.mxu0 0.0
    %5024 = vmatpush1.msra.mxu0 0.0
    %5025 = vmatprep.subr.mxu0 0.0
    %5026 = vmatpush1.msra.mxu0 0.0
    %5027 = vmatprep.mubr.f32.mxu0 0.0
    %5028 = vmatmul.mubr.f32.gmra.mrb[0].mxu0 %v4958
    %v5029 = vpop.f32.mrb[0].mxu0
    %v5030 = vadd.f32 0.0, %v5029
    %v5031 = vpop.f32.mrb[0].mxu0
    %5032 = vmatprep.mubr.f32.mxu0 0.0
    %5033 = vmatmul.mubr.f32.gmra.mrb[0].mxu0 %v4961
    %v5034 = vpop.f32.mrb[0].mxu0
    %v5035 = vadd.f32 0.0, %v5034
    %v5036 = vpop.f32.mrb[0].mxu0
    %5037 = vdwg.mxu0
    %s5038 = scalar_lea.vmem %s23, 80
    %v5039 = vld [vmem:[%s5038] sm:$0xf]
    %v5040 = vld [vmem:[%s5038 + $0x4] sm:$0xf]
    %v5041 = vld [vmem:[%s5038 + $0x8] sm:$0xf]
    %v5042 = vld [vmem:[%s5038 + $0xc] sm:$0xf]
    %v5047 = vunpack.c.l.b16 %v5039
    %v5048 = vunpack.c.l.b16 %v5040
    %v5049 = vunpack.c.l.b16 %v5041
    %v5050 = vunpack.c.l.b16 %v5042
    %v5051 = vpack.c.b16 %v5048, %v5047
    %v5052 = vpack.c.b16 %v5050, %v5049
    %v5056 = vsel %vm549, %v5030, 0
    %v5059 = vsel %vm549, %v5035, 0
    %5061 = vmatprep.subr.bf16.mxu0 0
    %5062 = vmatpush1.bf16.msra.mxu0 %v5051
    %5063 = vmatprep.subr.bf16.mxu0 0
    %5064 = vmatpush1.bf16.msra.mxu0 %v5052
    %5065 = vmatprep.subr.bf16.mxu0 0
    %5066 = vmatpush1.bf16.msra.mxu0 0
    %5067 = vmatprep.subr.bf16.mxu0 0
    %5068 = vmatpush1.bf16.msra.mxu0 0
    %5069 = vmatprep.subr.bf16.mxu0 0
    %5070 = vmatpush1.bf16.msra.mxu0 0
    %5071 = vmatprep.subr.bf16.mxu0 0
    %5072 = vmatpush1.bf16.msra.mxu0 0
    %5073 = vmatprep.subr.bf16.mxu0 0
    %5074 = vmatpush1.bf16.msra.mxu0 0
    %5075 = vmatprep.subr.bf16.mxu0 0
    %5076 = vmatpush1.bf16.msra.mxu0 0
    %5077 = vmatprep.subr.bf16.mxu0 0
    %5078 = vmatpush1.bf16.msra.mxu0 0
    %5079 = vmatprep.subr.bf16.mxu0 0
    %5080 = vmatpush1.bf16.msra.mxu0 0
    %5081 = vmatprep.subr.bf16.mxu0 0
    %5082 = vmatpush1.bf16.msra.mxu0 0
    %5083 = vmatprep.subr.bf16.mxu0 0
    %5084 = vmatpush1.bf16.msra.mxu0 0
    %5085 = vmatprep.subr.bf16.mxu0 0
    %5086 = vmatpush1.bf16.msra.mxu0 0
    %5087 = vmatprep.subr.bf16.mxu0 0
    %5088 = vmatpush1.bf16.msra.mxu0 0
    %5089 = vmatprep.subr.bf16.mxu0 0
    %5090 = vmatpush1.bf16.msra.mxu0 0
    %5091 = vmatprep.subr.bf16.mxu0 0
    %5092 = vmatpush1.bf16.msra.mxu0 0
    %5093 = vmatprep.mubr.f32.mxu0 0.0
    %5094 = vmatmul.mubr.f32.gmra.mrb[0].mxu0 %v5056
    %v5095 = vpop.f32.mrb[0].mxu0
    %v5096 = vadd.f32 0.0, %v5095
    %v5097 = vpop.f32.mrb[0].mxu0
    %5098 = vmatprep.mubr.f32.mxu0 0.0
    %5099 = vmatmul.mubr.f32.gmra.mrb[0].mxu0 %v5059
    %v5100 = vpop.f32.mrb[0].mxu0
    %v5101 = vadd.f32 0.0, %v5100
    %v5102 = vpop.f32.mrb[0].mxu0
    %5103 = vdwg.mxu0
    %v5104 = vadd.f32 %v4955, %v5096
    %v5105 = vadd.f32 %v4956, %v5101
    %v5107 = vsel %vm137, %v4796, 0
    %v5110 = vsel %vm137, %v4797, 0
    %5112 = vmatprep.subr.mxu0 0.0
    %5113 = vmatpush1.msra.mxu0 %v4198
    %5114 = vmatprep.subr.mxu0 0.0
    %5115 = vmatpush1.msra.mxu0 %v4203
    %5116 = vmatprep.subr.mxu0 0.0
    %5117 = vmatpush1.msra.mxu0 0.0
    %5118 = vmatprep.subr.mxu0 0.0
    %5119 = vmatpush1.msra.mxu0 0.0
    %5120 = vmatprep.subr.mxu0 0.0
    %5121 = vmatpush1.msra.mxu0 0.0
    %5122 = vmatprep.subr.mxu0 0.0
    %5123 = vmatpush1.msra.mxu0 0.0
    %5124 = vmatprep.subr.mxu0 0.0
    %5125 = vmatpush1.msra.mxu0 0.0
    %5126 = vmatprep.subr.mxu0 0.0
    %5127 = vmatpush1.msra.mxu0 0.0
    %5128 = vmatprep.subr.mxu0 0.0
    %5129 = vmatpush1.msra.mxu0 0.0
    %5130 = vmatprep.subr.mxu0 0.0
    %5131 = vmatpush1.msra.mxu0 0.0
    %5132 = vmatprep.subr.mxu0 0.0
    %5133 = vmatpush1.msra.mxu0 0.0
    %5134 = vmatprep.subr.mxu0 0.0
    %5135 = vmatpush1.msra.mxu0 0.0
    %5136 = vmatprep.subr.mxu0 0.0
    %5137 = vmatpush1.msra.mxu0 0.0
    %5138 = vmatprep.subr.mxu0 0.0
    %5139 = vmatpush1.msra.mxu0 0.0
    %5140 = vmatprep.subr.mxu0 0.0
    %5141 = vmatpush1.msra.mxu0 0.0
    %5142 = vmatprep.subr.mxu0 0.0
    %5143 = vmatpush1.msra.mxu0 0.0
    %5144 = vmatprep.subr.mxu0 0.0
    %5145 = vmatpush1.msra.mxu0 0.0
    %5146 = vmatprep.subr.mxu0 0.0
    %5147 = vmatpush1.msra.mxu0 0.0
    %5148 = vmatprep.subr.mxu0 0.0
    %5149 = vmatpush1.msra.mxu0 0.0
    %5150 = vmatprep.subr.mxu0 0.0
    %5151 = vmatpush1.msra.mxu0 0.0
    %5152 = vmatprep.subr.mxu0 0.0
    %5153 = vmatpush1.msra.mxu0 0.0
    %5154 = vmatprep.subr.mxu0 0.0
    %5155 = vmatpush1.msra.mxu0 0.0
    %5156 = vmatprep.subr.mxu0 0.0
    %5157 = vmatpush1.msra.mxu0 0.0
    %5158 = vmatprep.subr.mxu0 0.0
    %5159 = vmatpush1.msra.mxu0 0.0
    %5160 = vmatprep.subr.mxu0 0.0
    %5161 = vmatpush1.msra.mxu0 0.0
    %5162 = vmatprep.subr.mxu0 0.0
    %5163 = vmatpush1.msra.mxu0 0.0
    %5164 = vmatprep.subr.mxu0 0.0
    %5165 = vmatpush1.msra.mxu0 0.0
    %5166 = vmatprep.subr.mxu0 0.0
    %5167 = vmatpush1.msra.mxu0 0.0
    %5168 = vmatprep.subr.mxu0 0.0
    %5169 = vmatpush1.msra.mxu0 0.0
    %5170 = vmatprep.subr.mxu0 0.0
    %5171 = vmatpush1.msra.mxu0 0.0
    %5172 = vmatprep.subr.mxu0 0.0
    %5173 = vmatpush1.msra.mxu0 0.0
    %5174 = vmatprep.subr.mxu0 0.0
    %5175 = vmatpush1.msra.mxu0 0.0
    %5176 = vmatprep.mubr.f32.mxu0 0.0
    %5177 = vmatmul.mubr.f32.gmra.mrb[0].mxu0 %v5107
    %v5178 = vpop.f32.mrb[0].mxu0
    %v5179 = vadd.f32 0.0, %v5178
    %v5180 = vpop.f32.mrb[0].mxu0
    %5181 = vmatprep.mubr.f32.mxu0 0.0
    %5182 = vmatmul.mubr.f32.gmra.mrb[0].mxu0 %v5110
    %v5183 = vpop.f32.mrb[0].mxu0
    %v5184 = vadd.f32 0.0, %v5183
    %v5185 = vpop.f32.mrb[0].mxu0
    %5186 = vdwg.mxu0
    %s5187 = scalar_lea.vmem %s23, 96
    %v5188 = vld [vmem:[%s5187] sm:$0xf]
    %v5189 = vld [vmem:[%s5187 + $0x4] sm:$0xf]
    %v5190 = vld [vmem:[%s5187 + $0x8] sm:$0xf]
    %v5191 = vld [vmem:[%s5187 + $0xc] sm:$0xf]
    %v5196 = vunpack.c.l.b16 %v5188
    %v5197 = vunpack.c.l.b16 %v5189
    %v5198 = vunpack.c.l.b16 %v5190
    %v5199 = vunpack.c.l.b16 %v5191
    %v5200 = vpack.c.b16 %v5197, %v5196
    %v5201 = vpack.c.b16 %v5199, %v5198
    %v5205 = vsel %vm549, %v5179, 0
    %v5208 = vsel %vm549, %v5184, 0
    %5210 = vmatprep.subr.bf16.mxu0 0
    %5211 = vmatpush1.bf16.msra.mxu0 %v5200
    %5212 = vmatprep.subr.bf16.mxu0 0
    %5213 = vmatpush1.bf16.msra.mxu0 %v5201
    %5214 = vmatprep.subr.bf16.mxu0 0
    %5215 = vmatpush1.bf16.msra.mxu0 0
    %5216 = vmatprep.subr.bf16.mxu0 0
    %5217 = vmatpush1.bf16.msra.mxu0 0
    %5218 = vmatprep.subr.bf16.mxu0 0
    %5219 = vmatpush1.bf16.msra.mxu0 0
    %5220 = vmatprep.subr.bf16.mxu0 0
    %5221 = vmatpush1.bf16.msra.mxu0 0
    %5222 = vmatprep.subr.bf16.mxu0 0
    %5223 = vmatpush1.bf16.msra.mxu0 0
    %5224 = vmatprep.subr.bf16.mxu0 0
    %5225 = vmatpush1.bf16.msra.mxu0 0
    %5226 = vmatprep.subr.bf16.mxu0 0
    %5227 = vmatpush1.bf16.msra.mxu0 0
    %5228 = vmatprep.subr.bf16.mxu0 0
    %5229 = vmatpush1.bf16.msra.mxu0 0
    %5230 = vmatprep.subr.bf16.mxu0 0
    %5231 = vmatpush1.bf16.msra.mxu0 0
    %5232 = vmatprep.subr.bf16.mxu0 0
    %5233 = vmatpush1.bf16.msra.mxu0 0
    %5234 = vmatprep.subr.bf16.mxu0 0
    %5235 = vmatpush1.bf16.msra.mxu0 0
    %5236 = vmatprep.subr.bf16.mxu0 0
    %5237 = vmatpush1.bf16.msra.mxu0 0
    %5238 = vmatprep.subr.bf16.mxu0 0
    %5239 = vmatpush1.bf16.msra.mxu0 0
    %5240 = vmatprep.subr.bf16.mxu0 0
    %5241 = vmatpush1.bf16.msra.mxu0 0
    %5242 = vmatprep.mubr.f32.mxu0 0.0
    %5243 = vmatmul.mubr.f32.gmra.mrb[0].mxu0 %v5205
    %v5244 = vpop.f32.mrb[0].mxu0
    %v5245 = vadd.f32 0.0, %v5244
    %v5246 = vpop.f32.mrb[0].mxu0
    %5247 = vmatprep.mubr.f32.mxu0 0.0
    %5248 = vmatmul.mubr.f32.gmra.mrb[0].mxu0 %v5208
    %v5249 = vpop.f32.mrb[0].mxu0
    %v5250 = vadd.f32 0.0, %v5249
    %v5251 = vpop.f32.mrb[0].mxu0
    %5252 = vdwg.mxu0
    %v5253 = vadd.f32 %v5104, %v5245
    %v5254 = vadd.f32 %v5105, %v5250
    %v5256 = vsel %vm137, %v4798, 0
    %v5259 = vsel %vm137, %v4799, 0
    %5261 = vmatprep.subr.mxu0 0.0
    %5262 = vmatpush1.msra.mxu0 %v4617
    %5263 = vmatprep.subr.mxu0 0.0
    %5264 = vmatpush1.msra.mxu0 %v4622
    %5265 = vmatprep.subr.mxu0 0.0
    %5266 = vmatpush1.msra.mxu0 0.0
    %5267 = vmatprep.subr.mxu0 0.0
    %5268 = vmatpush1.msra.mxu0 0.0
    %5269 = vmatprep.subr.mxu0 0.0
    %5270 = vmatpush1.msra.mxu0 0.0
    %5271 = vmatprep.subr.mxu0 0.0
    %5272 = vmatpush1.msra.mxu0 0.0
    %5273 = vmatprep.subr.mxu0 0.0
    %5274 = vmatpush1.msra.mxu0 0.0
    %5275 = vmatprep.subr.mxu0 0.0
    %5276 = vmatpush1.msra.mxu0 0.0
    %5277 = vmatprep.subr.mxu0 0.0
    %5278 = vmatpush1.msra.mxu0 0.0
    %5279 = vmatprep.subr.mxu0 0.0
    %5280 = vmatpush1.msra.mxu0 0.0
    %5281 = vmatprep.subr.mxu0 0.0
    %5282 = vmatpush1.msra.mxu0 0.0
    %5283 = vmatprep.subr.mxu0 0.0
    %5284 = vmatpush1.msra.mxu0 0.0
    %5285 = vmatprep.subr.mxu0 0.0
    %5286 = vmatpush1.msra.mxu0 0.0
    %5287 = vmatprep.subr.mxu0 0.0
    %5288 = vmatpush1.msra.mxu0 0.0
    %5289 = vmatprep.subr.mxu0 0.0
    %5290 = vmatpush1.msra.mxu0 0.0
    %5291 = vmatprep.subr.mxu0 0.0
    %5292 = vmatpush1.msra.mxu0 0.0
    %5293 = vmatprep.subr.mxu0 0.0
    %5294 = vmatpush1.msra.mxu0 0.0
    %5295 = vmatprep.subr.mxu0 0.0
    %5296 = vmatpush1.msra.mxu0 0.0
    %5297 = vmatprep.subr.mxu0 0.0
    %5298 = vmatpush1.msra.mxu0 0.0
    %5299 = vmatprep.subr.mxu0 0.0
    %5300 = vmatpush1.msra.mxu0 0.0
    %5301 = vmatprep.subr.mxu0 0.0
    %5302 = vmatpush1.msra.mxu0 0.0
    %5303 = vmatprep.subr.mxu0 0.0
    %5304 = vmatpush1.msra.mxu0 0.0
    %5305 = vmatprep.subr.mxu0 0.0
    %5306 = vmatpush1.msra.mxu0 0.0
    %5307 = vmatprep.subr.mxu0 0.0
    %5308 = vmatpush1.msra.mxu0 0.0
    %5309 = vmatprep.subr.mxu0 0.0
    %5310 = vmatpush1.msra.mxu0 0.0
    %5311 = vmatprep.subr.mxu0 0.0
    %5312 = vmatpush1.msra.mxu0 0.0
    %5313 = vmatprep.subr.mxu0 0.0
    %5314 = vmatpush1.msra.mxu0 0.0
    %5315 = vmatprep.subr.mxu0 0.0
    %5316 = vmatpush1.msra.mxu0 0.0
    %5317 = vmatprep.subr.mxu0 0.0
    %5318 = vmatpush1.msra.mxu0 0.0
    %5319 = vmatprep.subr.mxu0 0.0
    %5320 = vmatpush1.msra.mxu0 0.0
    %5321 = vmatprep.subr.mxu0 0.0
    %5322 = vmatpush1.msra.mxu0 0.0
    %5323 = vmatprep.subr.mxu0 0.0
    %5324 = vmatpush1.msra.mxu0 0.0
    %5325 = vmatprep.mubr.f32.mxu0 0.0
    %5326 = vmatmul.mubr.f32.gmra.mrb[0].mxu0 %v5256
    %v5327 = vpop.f32.mrb[0].mxu0
    %v5328 = vadd.f32 0.0, %v5327
    %v5329 = vpop.f32.mrb[0].mxu0
    %5330 = vmatprep.mubr.f32.mxu0 0.0
    %5331 = vmatmul.mubr.f32.gmra.mrb[0].mxu0 %v5259
    %v5332 = vpop.f32.mrb[0].mxu0
    %v5333 = vadd.f32 0.0, %v5332
    %v5334 = vpop.f32.mrb[0].mxu0
    %5335 = vdwg.mxu0
    %s5336 = scalar_lea.vmem %s23, 112
    %v5337 = vld [vmem:[%s5336] sm:$0xf]
    %v5338 = vld [vmem:[%s5336 + $0x4] sm:$0xf]
    %v5339 = vld [vmem:[%s5336 + $0x8] sm:$0xf]
    %v5340 = vld [vmem:[%s5336 + $0xc] sm:$0xf]
    %v5345 = vunpack.c.l.b16 %v5337
    %v5346 = vunpack.c.l.b16 %v5338
    %v5347 = vunpack.c.l.b16 %v5339
    %v5348 = vunpack.c.l.b16 %v5340
    %v5349 = vpack.c.b16 %v5346, %v5345
    %v5350 = vpack.c.b16 %v5348, %v5347
    %v5354 = vsel %vm549, %v5328, 0
    %v5357 = vsel %vm549, %v5333, 0
    %5359 = vmatprep.subr.bf16.mxu0 0
    %5360 = vmatpush1.bf16.msra.mxu0 %v5349
    %5361 = vmatprep.subr.bf16.mxu0 0
    %5362 = vmatpush1.bf16.msra.mxu0 %v5350
    %5363 = vmatprep.subr.bf16.mxu0 0
    %5364 = vmatpush1.bf16.msra.mxu0 0
    %5365 = vmatprep.subr.bf16.mxu0 0
    %5366 = vmatpush1.bf16.msra.mxu0 0
    %5367 = vmatprep.subr.bf16.mxu0 0
    %5368 = vmatpush1.bf16.msra.mxu0 0
    %5369 = vmatprep.subr.bf16.mxu0 0
    %5370 = vmatpush1.bf16.msra.mxu0 0
    %5371 = vmatprep.subr.bf16.mxu0 0
    %5372 = vmatpush1.bf16.msra.mxu0 0
    %5373 = vmatprep.subr.bf16.mxu0 0
    %5374 = vmatpush1.bf16.msra.mxu0 0
    %5375 = vmatprep.subr.bf16.mxu0 0
    %5376 = vmatpush1.bf16.msra.mxu0 0
    %5377 = vmatprep.subr.bf16.mxu0 0
    %5378 = vmatpush1.bf16.msra.mxu0 0
    %5379 = vmatprep.subr.bf16.mxu0 0
    %5380 = vmatpush1.bf16.msra.mxu0 0
    %5381 = vmatprep.subr.bf16.mxu0 0
    %5382 = vmatpush1.bf16.msra.mxu0 0
    %5383 = vmatprep.subr.bf16.mxu0 0
    %5384 = vmatpush1.bf16.msra.mxu0 0
    %5385 = vmatprep.subr.bf16.mxu0 0
    %5386 = vmatpush1.bf16.msra.mxu0 0
    %5387 = vmatprep.subr.bf16.mxu0 0
    %5388 = vmatpush1.bf16.msra.mxu0 0
    %5389 = vmatprep.subr.bf16.mxu0 0
    %5390 = vmatpush1.bf16.msra.mxu0 0
    %5391 = vmatprep.mubr.f32.mxu0 0.0
    %5392 = vmatmul.mubr.f32.gmra.mrb[0].mxu0 %v5354
    %v5393 = vpop.f32.mrb[0].mxu0
    %v5394 = vadd.f32 0.0, %v5393
    %v5395 = vpop.f32.mrb[0].mxu0
    %5396 = vmatprep.mubr.f32.mxu0 0.0
    %5397 = vmatmul.mubr.f32.gmra.mrb[0].mxu0 %v5357
    %v5398 = vpop.f32.mrb[0].mxu0
    %v5399 = vadd.f32 0.0, %v5398
    %v5400 = vpop.f32.mrb[0].mxu0
    %5401 = vdwg.mxu0
    %v5402 = vadd.f32 %v5253, %v5394
    %v5403 = vadd.f32 %v5254, %v5399
    %v5404 = vadd.f32 %v3034, %v5402
    %v5405 = vadd.f32 %v3035, %v5403
    %s5406 = scalar_lea.vmem %s35, 1
    %v5407 = vld [vmem:[%s5406] sm:$0x1]
    %s5408 = scalar_lea.vmem %s37, 1
    %v5409 = vld [vmem:[%s5408] sm:$0x1]
    %5410 = vadd.xlane.f32.xlu0 %v5404
    %v5411 = vpop.xlane.xlu0 %5410
    %5412 = vadd.xlane.f32.xlu0 %v5405
    %v5413 = vpop.xlane.xlu0 %5412
    %v5414 = vmul.f32 %v5411, %v2592
    %v5415 = vmul.f32 %v5413, %v2592
    %v5416 = vsub.f32 %v5404, %v5414
    %v5417 = vsub.f32 %v5405, %v5415
    %v5418 = vmul.f32 %v5416, %v5416
    %v5419 = vmul.f32 %v5417, %v5417
    %5420 = vadd.xlane.f32.xlu0 %v5418
    %v5421 = vpop.xlane.xlu0 %5420
    %5422 = vadd.xlane.f32.xlu0 %v5419
    %v5423 = vpop.xlane.xlu0 %5422
    %v5424 = vmul.f32 %v5421, %v2592
    %v5425 = vmul.f32 %v5423, %v2592
    %v5426 = vadd.f32 %v5424, 1e-05
    %v5427 = vadd.f32 %v5425, 1e-05
    %v5428 = vrsqrt.pop %v5426
    %v5429 = vrsqrt.pop %v5427
    %v5430 = vmul.f32 %v5416, %v5428
    %v5431 = vmul.f32 %v5417, %v5429
    %v5433 = vlaneseq
    %v5434 = vshrl.u32 %v5433, 7
    %v5435 = vsub.s32 0, %v5434
    %v5436 = vrot.slane %v5407, %v5435
    %v5438 = vmul.f32 %v5430, %v5436
    %v5439 = vmul.f32 %v5431, %v5436
    %v5441 = vlaneseq
    %v5442 = vshrl.u32 %v5441, 7
    %v5443 = vsub.s32 0, %v5442
    %v5444 = vrot.slane %v5409, %v5443
    %v5446 = vadd.f32 %v5438, %v5444
    %v5447 = vadd.f32 %v5439, %v5444
    %s5448 = scalar_lea.vmem %s27, 128
    %v5449 = vld [vmem:[%s5448] sm:$0xff]
    %v5450 = vld [vmem:[%s5448 + $0x8] sm:$0xff]
    %v5451 = vld [vmem:[%s5448 + $0x10] sm:$0xff]
    %v5452 = vld [vmem:[%s5448 + $0x18] sm:$0xff]
    %v5453 = vld [vmem:[%s5448 + $0x20] sm:$0xff]
    %v5454 = vld [vmem:[%s5448 + $0x28] sm:$0xff]
    %v5455 = vld [vmem:[%s5448 + $0x30] sm:$0xff]
    %v5456 = vld [vmem:[%s5448 + $0x38] sm:$0xff]
    %v5457 = vld [vmem:[%s5448 + $0x40] sm:$0xff]
    %v5458 = vld [vmem:[%s5448 + $0x48] sm:$0xff]
    %v5459 = vld [vmem:[%s5448 + $0x50] sm:$0xff]
    %v5460 = vld [vmem:[%s5448 + $0x58] sm:$0xff]
    %v5461 = vld [vmem:[%s5448 + $0x60] sm:$0xff]
    %v5462 = vld [vmem:[%s5448 + $0x68] sm:$0xff]
    %v5463 = vld [vmem:[%s5448 + $0x70] sm:$0xff]
    %v5464 = vld [vmem:[%s5448 + $0x78] sm:$0xff]
    %s5465 = scalar_lea.vmem %s29, 2
    %v5466 = vld [vmem:[%s5465] sm:$0x3]
    %v5468 = vlaneseq
    %v5469 = vshrl.u32 %v5468, 7
    %v5470 = vsub.s32 0, %v5469
    %v5471 = vrot.slane %v5466, %v5470
    %v5472 = vlaneseq
    %v5473 = vshrl.u32 %v5472, 7
    %v5474 = vsub.s32 1, %v5473
    %v5475 = vrot.slane %v5466, %v5474
    %v5494 = vunpack.c.l.b16 %v5449
    %v5495 = vunpack.c.h.b16 %v5449
    %v5496 = vunpack.c.l.b16 %v5450
    %v5497 = vunpack.c.h.b16 %v5450
    %v5498 = vunpack.c.l.b16 %v5451
    %v5499 = vunpack.c.h.b16 %v5451
    %v5500 = vunpack.c.l.b16 %v5452
    %v5501 = vunpack.c.h.b16 %v5452
    %v5502 = vunpack.c.l.b16 %v5453
    %v5503 = vunpack.c.h.b16 %v5453
    %v5504 = vunpack.c.l.b16 %v5454
    %v5505 = vunpack.c.h.b16 %v5454
    %v5506 = vunpack.c.l.b16 %v5455
    %v5507 = vunpack.c.h.b16 %v5455
    %v5508 = vunpack.c.l.b16 %v5456
    %v5509 = vunpack.c.h.b16 %v5456
    %v5510 = vunpack.c.l.b16 %v5457
    %v5511 = vunpack.c.h.b16 %v5457
    %v5512 = vunpack.c.l.b16 %v5458
    %v5513 = vunpack.c.h.b16 %v5458
    %v5514 = vunpack.c.l.b16 %v5459
    %v5515 = vunpack.c.h.b16 %v5459
    %v5516 = vunpack.c.l.b16 %v5460
    %v5517 = vunpack.c.h.b16 %v5460
    %v5518 = vunpack.c.l.b16 %v5461
    %v5519 = vunpack.c.h.b16 %v5461
    %v5520 = vunpack.c.l.b16 %v5462
    %v5521 = vunpack.c.h.b16 %v5462
    %v5522 = vunpack.c.l.b16 %v5463
    %v5523 = vunpack.c.h.b16 %v5463
    %v5524 = vunpack.c.l.b16 %v5464
    %v5525 = vunpack.c.h.b16 %v5464
    %v5526 = vpack.c.b16 %v5496, %v5494
    %v5527 = vpack.c.b16 %v5497, %v5495
    %v5528 = vpack.c.b16 %v5500, %v5498
    %v5529 = vpack.c.b16 %v5501, %v5499
    %v5530 = vpack.c.b16 %v5504, %v5502
    %v5531 = vpack.c.b16 %v5505, %v5503
    %v5532 = vpack.c.b16 %v5508, %v5506
    %v5533 = vpack.c.b16 %v5509, %v5507
    %v5534 = vpack.c.b16 %v5512, %v5510
    %v5535 = vpack.c.b16 %v5513, %v5511
    %v5536 = vpack.c.b16 %v5516, %v5514
    %v5537 = vpack.c.b16 %v5517, %v5515
    %v5538 = vpack.c.b16 %v5520, %v5518
    %v5539 = vpack.c.b16 %v5521, %v5519
    %v5540 = vpack.c.b16 %v5524, %v5522
    %v5541 = vpack.c.b16 %v5525, %v5523
    %5558 = vmatprep.subr.bf16.mxu0 %v5527
    %5559 = vmatpush1.bf16.msra.mxu0 %v5526
    %5560 = vmatprep.subr.bf16.mxu0 %v5529
    %5561 = vmatpush1.bf16.msra.mxu0 %v5528
    %5562 = vmatprep.subr.bf16.mxu0 %v5531
    %5563 = vmatpush1.bf16.msra.mxu0 %v5530
    %5564 = vmatprep.subr.bf16.mxu0 %v5533
    %5565 = vmatpush1.bf16.msra.mxu0 %v5532
    %5566 = vmatprep.subr.bf16.mxu0 %v5535
    %5567 = vmatpush1.bf16.msra.mxu0 %v5534
    %5568 = vmatprep.subr.bf16.mxu0 %v5537
    %5569 = vmatpush1.bf16.msra.mxu0 %v5536
    %5570 = vmatprep.subr.bf16.mxu0 %v5539
    %5571 = vmatpush1.bf16.msra.mxu0 %v5538
    %5572 = vmatprep.subr.bf16.mxu0 %v5541
    %5573 = vmatpush1.bf16.msra.mxu0 %v5540
    %5574 = vmatprep.subr.bf16.mxu0 0
    %5575 = vmatpush1.bf16.msra.mxu0 0
    %5576 = vmatprep.subr.bf16.mxu0 0
    %5577 = vmatpush1.bf16.msra.mxu0 0
    %5578 = vmatprep.subr.bf16.mxu0 0
    %5579 = vmatpush1.bf16.msra.mxu0 0
    %5580 = vmatprep.subr.bf16.mxu0 0
    %5581 = vmatpush1.bf16.msra.mxu0 0
    %5582 = vmatprep.subr.bf16.mxu0 0
    %5583 = vmatpush1.bf16.msra.mxu0 0
    %5584 = vmatprep.subr.bf16.mxu0 0
    %5585 = vmatpush1.bf16.msra.mxu0 0
    %5586 = vmatprep.subr.bf16.mxu0 0
    %5587 = vmatpush1.bf16.msra.mxu0 0
    %5588 = vmatprep.subr.bf16.mxu0 0
    %5589 = vmatpush1.bf16.msra.mxu0 0
    %5590 = vmatprep.mubr.f32.mxu0 0.0
    %5591 = vmatmul.mubr.f32.gmra.mrb[0].mxu0 %v5446
    %v5592 = vpop.f32.mrb[0].mxu0
    %v5593 = vadd.f32 %v5471, %v5592
    %v5594 = vpop.f32.mrb[0].mxu0
    %v5595 = vadd.f32 %v5475, %v5594
    %5596 = vmatprep.mubr.f32.mxu0 0.0
    %5597 = vmatmul.mubr.f32.gmra.mrb[0].mxu0 %v5447
    %v5598 = vpop.f32.mrb[0].mxu0
    %v5599 = vadd.f32 %v5471, %v5598
    %v5600 = vpop.f32.mrb[0].mxu0
    %v5601 = vadd.f32 %v5475, %v5600
    %5602 = vdwg.mxu0
    %v5603 = vmul.f32 %v5593, 0.5
    %v5604 = vmul.f32 %v5595, 0.5
    %v5605 = vmul.f32 %v5599, 0.5
    %v5606 = vmul.f32 %v5601, 0.5
    %v5607 = vmul.f32 %v5593, 0.044715
    %v5608 = vmul.f32 %v5595, 0.044715
    %v5609 = vmul.f32 %v5599, 0.044715
    %v5610 = vmul.f32 %v5601, 0.044715
    %v5611 = vmul.f32 %v5607, %v5593
    %v5612 = vmul.f32 %v5608, %v5595
    %v5613 = vmul.f32 %v5609, %v5599
    %v5614 = vmul.f32 %v5610, %v5601
    %v5615 = vmul.f32 %v5611, %v5593
    %v5616 = vmul.f32 %v5612, %v5595
    %v5617 = vmul.f32 %v5613, %v5599
    %v5618 = vmul.f32 %v5614, %v5601
    %v5619 = vadd.f32 %v5593, %v5615
    %v5620 = vadd.f32 %v5595, %v5616
    %v5621 = vadd.f32 %v5599, %v5617
    %v5622 = vadd.f32 %v5601, %v5618
    %v5623 = vmul.f32 %v5619, 0.7978846
    %v5624 = vmul.f32 %v5620, 0.7978846
    %v5625 = vmul.f32 %v5621, 0.7978846
    %v5626 = vmul.f32 %v5622, 0.7978846
    %v5627 = vtanh.pop %v5623
    %v5628 = vtanh.pop %v5624
    %v5629 = vtanh.pop %v5625
    %v5630 = vtanh.pop %v5626
    %v5631 = vadd.f32 %v5627, 1.0
    %v5632 = vadd.f32 %v5628, 1.0
    %v5633 = vadd.f32 %v5629, 1.0
    %v5634 = vadd.f32 %v5630, 1.0
    %v5635 = vmul.f32 %v5603, %v5631
    %v5636 = vmul.f32 %v5604, %v5632
    %v5637 = vmul.f32 %v5605, %v5633
    %v5638 = vmul.f32 %v5606, %v5634
    %s5639 = scalar_lea.vmem %s31, 128
    %v5640 = vld [vmem:[%s5639] sm:$0xf]
    %v5641 = vld [vmem:[%s5639 + $0x4] sm:$0xf]
    %v5642 = vld [vmem:[%s5639 + $0x8] sm:$0xf]
    %v5643 = vld [vmem:[%s5639 + $0xc] sm:$0xf]
    %v5644 = vld [vmem:[%s5639 + $0x10] sm:$0xf]
    %v5645 = vld [vmem:[%s5639 + $0x14] sm:$0xf]
    %v5646 = vld [vmem:[%s5639 + $0x18] sm:$0xf]
    %v5647 = vld [vmem:[%s5639 + $0x1c] sm:$0xf]
    %v5648 = vld [vmem:[%s5639 + $0x20] sm:$0xf]
    %v5649 = vld [vmem:[%s5639 + $0x24] sm:$0xf]
    %v5650 = vld [vmem:[%s5639 + $0x28] sm:$0xf]
    %v5651 = vld [vmem:[%s5639 + $0x2c] sm:$0xf]
    %v5652 = vld [vmem:[%s5639 + $0x30] sm:$0xf]
    %v5653 = vld [vmem:[%s5639 + $0x34] sm:$0xf]
    %v5654 = vld [vmem:[%s5639 + $0x38] sm:$0xf]
    %v5655 = vld [vmem:[%s5639 + $0x3c] sm:$0xf]
    %v5656 = vld [vmem:[%s5639 + $0x40] sm:$0xf]
    %v5657 = vld [vmem:[%s5639 + $0x44] sm:$0xf]
    %v5658 = vld [vmem:[%s5639 + $0x48] sm:$0xf]
    %v5659 = vld [vmem:[%s5639 + $0x4c] sm:$0xf]
    %v5660 = vld [vmem:[%s5639 + $0x50] sm:$0xf]
    %v5661 = vld [vmem:[%s5639 + $0x54] sm:$0xf]
    %v5662 = vld [vmem:[%s5639 + $0x58] sm:$0xf]
    %v5663 = vld [vmem:[%s5639 + $0x5c] sm:$0xf]
    %v5664 = vld [vmem:[%s5639 + $0x60] sm:$0xf]
    %v5665 = vld [vmem:[%s5639 + $0x64] sm:$0xf]
    %v5666 = vld [vmem:[%s5639 + $0x68] sm:$0xf]
    %v5667 = vld [vmem:[%s5639 + $0x6c] sm:$0xf]
    %v5668 = vld [vmem:[%s5639 + $0x70] sm:$0xf]
    %v5669 = vld [vmem:[%s5639 + $0x74] sm:$0xf]
    %v5670 = vld [vmem:[%s5639 + $0x78] sm:$0xf]
    %v5671 = vld [vmem:[%s5639 + $0x7c] sm:$0xf]
    %s5672 = scalar_lea.vmem %s33, 1
    %v5673 = vld [vmem:[%s5672] sm:$0x1]
    %v5675 = vlaneseq
    %v5676 = vshrl.u32 %v5675, 7
    %v5677 = vsub.s32 0, %v5676
    %v5678 = vrot.slane %v5673, %v5677
    %v5712 = vunpack.c.l.b16 %v5640
    %v5713 = vunpack.c.l.b16 %v5641
    %v5714 = vunpack.c.l.b16 %v5642
    %v5715 = vunpack.c.l.b16 %v5643
    %v5716 = vunpack.c.l.b16 %v5644
    %v5717 = vunpack.c.l.b16 %v5645
    %v5718 = vunpack.c.l.b16 %v5646
    %v5719 = vunpack.c.l.b16 %v5647
    %v5720 = vunpack.c.l.b16 %v5648
    %v5721 = vunpack.c.l.b16 %v5649
    %v5722 = vunpack.c.l.b16 %v5650
    %v5723 = vunpack.c.l.b16 %v5651
    %v5724 = vunpack.c.l.b16 %v5652
    %v5725 = vunpack.c.l.b16 %v5653
    %v5726 = vunpack.c.l.b16 %v5654
    %v5727 = vunpack.c.l.b16 %v5655
    %v5728 = vunpack.c.l.b16 %v5656
    %v5729 = vunpack.c.l.b16 %v5657
    %v5730 = vunpack.c.l.b16 %v5658
    %v5731 = vunpack.c.l.b16 %v5659
    %v5732 = vunpack.c.l.b16 %v5660
    %v5733 = vunpack.c.l.b16 %v5661
    %v5734 = vunpack.c.l.b16 %v5662
    %v5735 = vunpack.c.l.b16 %v5663
    %v5736 = vunpack.c.l.b16 %v5664
    %v5737 = vunpack.c.l.b16 %v5665
    %v5738 = vunpack.c.l.b16 %v5666
    %v5739 = vunpack.c.l.b16 %v5667
    %v5740 = vunpack.c.l.b16 %v5668
    %v5741 = vunpack.c.l.b16 %v5669
    %v5742 = vunpack.c.l.b16 %v5670
    %v5743 = vunpack.c.l.b16 %v5671
    %v5744 = vpack.c.b16 %v5713, %v5712
    %v5745 = vpack.c.b16 %v5715, %v5714
    %v5746 = vpack.c.b16 %v5717, %v5716
    %v5747 = vpack.c.b16 %v5719, %v5718
    %v5748 = vpack.c.b16 %v5721, %v5720
    %v5749 = vpack.c.b16 %v5723, %v5722
    %v5750 = vpack.c.b16 %v5725, %v5724
    %v5751 = vpack.c.b16 %v5727, %v5726
    %v5752 = vpack.c.b16 %v5729, %v5728
    %v5753 = vpack.c.b16 %v5731, %v5730
    %v5754 = vpack.c.b16 %v5733, %v5732
    %v5755 = vpack.c.b16 %v5735, %v5734
    %v5756 = vpack.c.b16 %v5737, %v5736
    %v5757 = vpack.c.b16 %v5739, %v5738
    %v5758 = vpack.c.b16 %v5741, %v5740
    %v5759 = vpack.c.b16 %v5743, %v5742
    %5776 = vmatprep.subr.bf16.mxu0 0
    %5777 = vmatpush1.bf16.msra.mxu0 %v5744
    %5778 = vmatprep.subr.bf16.mxu0 0
    %5779 = vmatpush1.bf16.msra.mxu0 %v5745
    %5780 = vmatprep.subr.bf16.mxu0 0
    %5781 = vmatpush1.bf16.msra.mxu0 %v5746
    %5782 = vmatprep.subr.bf16.mxu0 0
    %5783 = vmatpush1.bf16.msra.mxu0 %v5747
    %5784 = vmatprep.subr.bf16.mxu0 0
    %5785 = vmatpush1.bf16.msra.mxu0 %v5748
    %5786 = vmatprep.subr.bf16.mxu0 0
    %5787 = vmatpush1.bf16.msra.mxu0 %v5749
    %5788 = vmatprep.subr.bf16.mxu0 0
    %5789 = vmatpush1.bf16.msra.mxu0 %v5750
    %5790 = vmatprep.subr.bf16.mxu0 0
    %5791 = vmatpush1.bf16.msra.mxu0 %v5751
    %5792 = vmatprep.subr.bf16.mxu0 0
    %5793 = vmatpush1.bf16.msra.mxu0 %v5752
    %5794 = vmatprep.subr.bf16.mxu0 0
    %5795 = vmatpush1.bf16.msra.mxu0 %v5753
    %5796 = vmatprep.subr.bf16.mxu0 0
    %5797 = vmatpush1.bf16.msra.mxu0 %v5754
    %5798 = vmatprep.subr.bf16.mxu0 0
    %5799 = vmatpush1.bf16.msra.mxu0 %v5755
    %5800 = vmatprep.subr.bf16.mxu0 0
    %5801 = vmatpush1.bf16.msra.mxu0 %v5756
    %5802 = vmatprep.subr.bf16.mxu0 0
    %5803 = vmatpush1.bf16.msra.mxu0 %v5757
    %5804 = vmatprep.subr.bf16.mxu0 0
    %5805 = vmatpush1.bf16.msra.mxu0 %v5758
    %5806 = vmatprep.subr.bf16.mxu0 0
    %5807 = vmatpush1.bf16.msra.mxu0 %v5759
    %5808 = vmatprep.mubr.f32.mxu0 %v5636
    %5809 = vmatmul.mubr.f32.gmra.mrb[0].mxu0 %v5635
    %v5810 = vpop.f32.mrb[0].mxu0
    %v5811 = vadd.f32 %v5678, %v5810
    %v5812 = vpop.f32.mrb[0].mxu0
    %5813 = vmatprep.mubr.f32.mxu0 %v5638
    %5814 = vmatmul.mubr.f32.gmra.mrb[0].mxu0 %v5637
    %v5815 = vpop.f32.mrb[0].mxu0
    %v5816 = vadd.f32 %v5678, %v5815
    %v5817 = vpop.f32.mrb[0].mxu0
    %5818 = vdwg.mxu0
    %v5819 = vadd.f32 %v5446, %v5811
    %v5820 = vadd.f32 %v5447, %v5816
    %s5821 = scalar_lea.vmem %s39, 1
    %v5822 = vld [vmem:[%s5821] sm:$0x1]
    %s5823 = scalar_lea.vmem %s41, 1
    %v5824 = vld [vmem:[%s5823] sm:$0x1]
    %5825 = vadd.xlane.f32.xlu0 %v5819
    %v5826 = vpop.xlane.xlu0 %5825
    %5827 = vadd.xlane.f32.xlu0 %v5820
    %v5828 = vpop.xlane.xlu0 %5827
    %v5829 = vmul.f32 %v5826, %v2592
    %v5830 = vmul.f32 %v5828, %v2592
    %v5831 = vsub.f32 %v5819, %v5829
    %v5832 = vsub.f32 %v5820, %v5830
    %v5833 = vmul.f32 %v5831, %v5831
    %v5834 = vmul.f32 %v5832, %v5832
    %5835 = vadd.xlane.f32.xlu0 %v5833
    %v5836 = vpop.xlane.xlu0 %5835
    %5837 = vadd.xlane.f32.xlu0 %v5834
    %v5838 = vpop.xlane.xlu0 %5837
    %v5839 = vmul.f32 %v5836, %v2592
    %v5840 = vmul.f32 %v5838, %v2592
    %v5841 = vadd.f32 %v5839, 1e-05
    %v5842 = vadd.f32 %v5840, 1e-05
    %v5843 = vrsqrt.pop %v5841
    %v5844 = vrsqrt.pop %v5842
    %v5845 = vmul.f32 %v5831, %v5843
    %v5846 = vmul.f32 %v5832, %v5844
    %v5848 = vlaneseq
    %v5849 = vshrl.u32 %v5848, 7
    %v5850 = vsub.s32 0, %v5849
    %v5851 = vrot.slane %v5822, %v5850
    %v5853 = vmul.f32 %v5845, %v5851
    %v5854 = vmul.f32 %v5846, %v5851
    %v5856 = vlaneseq
    %v5857 = vshrl.u32 %v5856, 7
    %v5858 = vsub.s32 0, %v5857
    %v5859 = vrot.slane %v5824, %v5858
    %v5861 = vadd.f32 %v5853, %v5859
    %v5862 = vadd.f32 %v5854, %v5859
    %v5863 = vld [vmem:[%s43] sm:$0xf]
    %v5864 = vld [vmem:[%s43 + $0x4] sm:$0xf]
    %v5865 = vld [vmem:[%s43 + $0x8] sm:$0xf]
    %v5866 = vld [vmem:[%s43 + $0xc] sm:$0xf]
    %v5867 = vld [vmem:[%s43 + $0x10] sm:$0xf]
    %v5868 = vld [vmem:[%s43 + $0x14] sm:$0xf]
    %v5869 = vld [vmem:[%s43 + $0x18] sm:$0xf]
    %v5870 = vld [vmem:[%s43 + $0x1c] sm:$0xf]
    %v5871 = vld [vmem:[%s43 + $0x20] sm:$0xf]
    %v5872 = vld [vmem:[%s43 + $0x24] sm:$0xf]
    %v5873 = vld [vmem:[%s43 + $0x28] sm:$0xf]
    %v5874 = vld [vmem:[%s43 + $0x2c] sm:$0xf]
    %v5875 = vld [vmem:[%s43 + $0x30] sm:$0xf]
    %v5876 = vld [vmem:[%s43 + $0x34] sm:$0xf]
    %v5877 = vld [vmem:[%s43 + $0x38] sm:$0xf]
    %v5878 = vld [vmem:[%s43 + $0x3c] sm:$0xf]
    %v5879 = vld [vmem:[%s45] sm:$0x1]
    %v5881 = vlaneseq
    %v5882 = vshrl.u32 %v5881, 7
    %v5883 = vsub.s32 0, %v5882
    %v5884 = vrot.slane %v5879, %v5883
    %v5902 = vunpack.c.l.b16 %v5863
    %v5903 = vunpack.c.l.b16 %v5864
    %v5904 = vunpack.c.l.b16 %v5865
    %v5905 = vunpack.c.l.b16 %v5866
    %v5906 = vunpack.c.l.b16 %v5867
    %v5907 = vunpack.c.l.b16 %v5868
    %v5908 = vunpack.c.l.b16 %v5869
    %v5909 = vunpack.c.l.b16 %v5870
    %v5910 = vunpack.c.l.b16 %v5871
    %v5911 = vunpack.c.l.b16 %v5872
    %v5912 = vunpack.c.l.b16 %v5873
    %v5913 = vunpack.c.l.b16 %v5874
    %v5914 = vunpack.c.l.b16 %v5875
    %v5915 = vunpack.c.l.b16 %v5876
    %v5916 = vunpack.c.l.b16 %v5877
    %v5917 = vunpack.c.l.b16 %v5878
    %v5918 = vpack.c.b16 %v5903, %v5902
    %v5919 = vpack.c.b16 %v5905, %v5904
    %v5920 = vpack.c.b16 %v5907, %v5906
    %v5921 = vpack.c.b16 %v5909, %v5908
    %v5922 = vpack.c.b16 %v5911, %v5910
    %v5923 = vpack.c.b16 %v5913, %v5912
    %v5924 = vpack.c.b16 %v5915, %v5914
    %v5925 = vpack.c.b16 %v5917, %v5916
    %5934 = vmatprep.subr.bf16.mxu0 0
    %5935 = vmatpush1.bf16.msra.mxu0 %v5918
    %5936 = vmatprep.subr.bf16.mxu0 0
    %5937 = vmatpush1.bf16.msra.mxu0 %v5919
    %5938 = vmatprep.subr.bf16.mxu0 0
    %5939 = vmatpush1.bf16.msra.mxu0 %v5920
    %5940 = vmatprep.subr.bf16.mxu0 0
    %5941 = vmatpush1.bf16.msra.mxu0 %v5921
    %5942 = vmatprep.subr.bf16.mxu0 0
    %5943 = vmatpush1.bf16.msra.mxu0 %v5922
    %5944 = vmatprep.subr.bf16.mxu0 0
    %5945 = vmatpush1.bf16.msra.mxu0 %v5923
    %5946 = vmatprep.subr.bf16.mxu0 0
    %5947 = vmatpush1.bf16.msra.mxu0 %v5924
    %5948 = vmatprep.subr.bf16.mxu0 0
    %5949 = vmatpush1.bf16.msra.mxu0 %v5925
    %5950 = vmatprep.subr.bf16.mxu0 0
    %5951 = vmatpush1.bf16.msra.mxu0 0
    %5952 = vmatprep.subr.bf16.mxu0 0
    %5953 = vmatpush1.bf16.msra.mxu0 0
    %5954 = vmatprep.subr.bf16.mxu0 0
    %5955 = vmatpush1.bf16.msra.mxu0 0
    %5956 = vmatprep.subr.bf16.mxu0 0
    %5957 = vmatpush1.bf16.msra.mxu0 0
    %5958 = vmatprep.subr.bf16.mxu0 0
    %5959 = vmatpush1.bf16.msra.mxu0 0
    %5960 = vmatprep.subr.bf16.mxu0 0
    %5961 = vmatpush1.bf16.msra.mxu0 0
    %5962 = vmatprep.subr.bf16.mxu0 0
    %5963 = vmatpush1.bf16.msra.mxu0 0
    %5964 = vmatprep.subr.bf16.mxu0 0
    %5965 = vmatpush1.bf16.msra.mxu0 0
    %5966 = vmatprep.mubr.f32.mxu0 0.0
    %5967 = vmatmul.mubr.f32.gmra.mrb[0].mxu0 %v5861
    %v5968 = vpop.f32.mrb[0].mxu0
    %v5969 = vadd.f32 %v5884, %v5968
    %v5970 = vpop.f32.mrb[0].mxu0
    %5971 = vmatprep.mubr.f32.mxu0 0.0
    %5972 = vmatmul.mubr.f32.gmra.mrb[0].mxu0 %v5862
    %v5973 = vpop.f32.mrb[0].mxu0
    %v5974 = vadd.f32 %v5884, %v5973
    %v5975 = vpop.f32.mrb[0].mxu0
    %5976 = vdwg.mxu0
    %5977 = vst [vmem:[#allocation3] sm:$0xff] %v5969
    %5978 = vst [vmem:[#allocation3 + $0x8] sm:$0xff] %v5974
    %v5979 = vrot.slane %v5969, 4
    %v5980 = vadd.f32 %v5969, %v5979
    %v5981 = vrot.slane %v5980, 2
    %v5982 = vadd.f32 %v5980, %v5981
    %v5983 = vrot.slane %v5982, 1
    %v5984 = vadd.f32 %v5982, %v5983
    %v5985 = vrot.slane %v5974, 4
    %v5986 = vadd.f32 %v5974, %v5985
    %v5987 = vrot.slane %v5986, 2
    %v5988 = vadd.f32 %v5986, %v5987
    %v5989 = vrot.slane %v5988, 1
    %v5990 = vadd.f32 %v5988, %v5989
    %v5991 = vrcp.pop 8.0
    %v5992 = vmul.f32 %v5984, %v5991
    %v5993 = vmul.f32 %v5990, %v5991
    %vm5996 = vcmask 1041409
    %v5997 = vsel %vm5996, %v5993, %v5992
    %5999 = vst [vmem:[#allocation5] sm:$0x3] %v5997
    %v6000 = vld [vmem:[%s47] sm:$0xf]
    %v6001 = vld [vmem:[%s47 + $0x4] sm:$0xf]
    %v6002 = vld [vmem:[%s47 + $0x8] sm:$0xf]
    %v6003 = vld [vmem:[%s47 + $0xc] sm:$0xf]
    %v6004 = vld [vmem:[%s47 + $0x10] sm:$0xf]
    %v6005 = vld [vmem:[%s47 + $0x14] sm:$0xf]
    %v6006 = vld [vmem:[%s47 + $0x18] sm:$0xf]
    %v6007 = vld [vmem:[%s47 + $0x1c] sm:$0xf]
    %v6008 = vld [vmem:[%s47 + $0x20] sm:$0xf]
    %v6009 = vld [vmem:[%s47 + $0x24] sm:$0xf]
    %v6010 = vld [vmem:[%s47 + $0x28] sm:$0xf]
    %v6011 = vld [vmem:[%s47 + $0x2c] sm:$0xf]
    %v6012 = vld [vmem:[%s47 + $0x30] sm:$0xf]
    %v6013 = vld [vmem:[%s47 + $0x34] sm:$0xf]
    %v6014 = vld [vmem:[%s47 + $0x38] sm:$0xf]
    %v6015 = vld [vmem:[%s47 + $0x3c] sm:$0xf]
    %v6016 = vld [vmem:[%s49] sm:$0x1]
    %v6018 = vlaneseq
    %v6019 = vshrl.u32 %v6018, 7
    %v6020 = vsub.s32 0, %v6019
    %v6021 = vrot.slane %v6016, %v6020
    %v6039 = vunpack.c.l.b16 %v6000
    %v6040 = vunpack.c.l.b16 %v6001
    %v6041 = vunpack.c.l.b16 %v6002
    %v6042 = vunpack.c.l.b16 %v6003
    %v6043 = vunpack.c.l.b16 %v6004
    %v6044 = vunpack.c.l.b16 %v6005
    %v6045 = vunpack.c.l.b16 %v6006
    %v6046 = vunpack.c.l.b16 %v6007
    %v6047 = vunpack.c.l.b16 %v6008
    %v6048 = vunpack.c.l.b16 %v6009
    %v6049 = vunpack.c.l.b16 %v6010
    %v6050 = vunpack.c.l.b16 %v6011
    %v6051 = vunpack.c.l.b16 %v6012
    %v6052 = vunpack.c.l.b16 %v6013
    %v6053 = vunpack.c.l.b16 %v6014
    %v6054 = vunpack.c.l.b16 %v6015
    %v6055 = vpack.c.b16 %v6040, %v6039
    %v6056 = vpack.c.b16 %v6042, %v6041
    %v6057 = vpack.c.b16 %v6044, %v6043
    %v6058 = vpack.c.b16 %v6046, %v6045
    %v6059 = vpack.c.b16 %v6048, %v6047
    %v6060 = vpack.c.b16 %v6050, %v6049
    %v6061 = vpack.c.b16 %v6052, %v6051
    %v6062 = vpack.c.b16 %v6054, %v6053
    %6071 = vmatprep.subr.bf16.mxu0 0
    %6072 = vmatpush1.bf16.msra.mxu0 %v6055
    %6073 = vmatprep.subr.bf16.mxu0 0
    %6074 = vmatpush1.bf16.msra.mxu0 %v6056
    %6075 = vmatprep.subr.bf16.mxu0 0
    %6076 = vmatpush1.bf16.msra.mxu0 %v6057
    %6077 = vmatprep.subr.bf16.mxu0 0
    %6078 = vmatpush1.bf16.msra.mxu0 %v6058
    %6079 = vmatprep.subr.bf16.mxu0 0
    %6080 = vmatpush1.bf16.msra.mxu0 %v6059
    %6081 = vmatprep.subr.bf16.mxu0 0
    %6082 = vmatpush1.bf16.msra.mxu0 %v6060
    %6083 = vmatprep.subr.bf16.mxu0 0
    %6084 = vmatpush1.bf16.msra.mxu0 %v6061
    %6085 = vmatprep.subr.bf16.mxu0 0
    %6086 = vmatpush1.bf16.msra.mxu0 %v6062
    %6087 = vmatprep.subr.bf16.mxu0 0
    %6088 = vmatpush1.bf16.msra.mxu0 0
    %6089 = vmatprep.subr.bf16.mxu0 0
    %6090 = vmatpush1.bf16.msra.mxu0 0
    %6091 = vmatprep.subr.bf16.mxu0 0
    %6092 = vmatpush1.bf16.msra.mxu0 0
    %6093 = vmatprep.subr.bf16.mxu0 0
    %6094 = vmatpush1.bf16.msra.mxu0 0
    %6095 = vmatprep.subr.bf16.mxu0 0
    %6096 = vmatpush1.bf16.msra.mxu0 0
    %6097 = vmatprep.subr.bf16.mxu0 0
    %6098 = vmatpush1.bf16.msra.mxu0 0
    %6099 = vmatprep.subr.bf16.mxu0 0
    %6100 = vmatpush1.bf16.msra.mxu0 0
    %6101 = vmatprep.subr.bf16.mxu0 0
    %6102 = vmatpush1.bf16.msra.mxu0 0
    %6103 = vmatprep.mubr.f32.mxu0 0.0
    %6104 = vmatmul.mubr.f32.gmra.mrb[0].mxu0 %v5997
    %v6105 = vpop.f32.mrb[0].mxu0
    %v6106 = vadd.f32 %v6021, %v6105
    %v6107 = vpop.f32.mrb[0].mxu0
    %6108 = vdwg.mxu0
    %v6109 = vmul.f32 %v6106, 0.5
    %v6110 = vmul.f32 %v6106, 0.044715
    %v6111 = vmul.f32 %v6110, %v6106
    %v6112 = vmul.f32 %v6111, %v6106
    %v6113 = vadd.f32 %v6106, %v6112
    %v6114 = vmul.f32 %v6113, 0.7978846
    %v6115 = vtanh.pop %v6114
    %v6116 = vadd.f32 %v6115, 1.0
    %v6117 = vmul.f32 %v6109, %v6116
    %v6118 = vld [vmem:[%s51] sm:$0xff]
    %v6119 = vld [vmem:[%s51 + $0x8] sm:$0xff]
    %v6120 = vld [vmem:[%s51 + $0x10] sm:$0xff]
    %v6121 = vld [vmem:[%s51 + $0x18] sm:$0xff]
    %v6122 = vld [vmem:[%s51 + $0x20] sm:$0xff]
    %v6123 = vld [vmem:[%s51 + $0x28] sm:$0xff]
    %v6124 = vld [vmem:[%s51 + $0x30] sm:$0xff]
    %v6125 = vld [vmem:[%s51 + $0x38] sm:$0xff]
    %v6126 = vld [vmem:[%s51 + $0x40] sm:$0xff]
    %v6127 = vld [vmem:[%s51 + $0x48] sm:$0xff]
    %v6128 = vld [vmem:[%s51 + $0x50] sm:$0xff]
    %v6129 = vld [vmem:[%s51 + $0x58] sm:$0xff]
    %v6130 = vld [vmem:[%s51 + $0x60] sm:$0xff]
    %v6131 = vld [vmem:[%s51 + $0x68] sm:$0xff]
    %v6132 = vld [vmem:[%s51 + $0x70] sm:$0xff]
    %v6133 = vld [vmem:[%s51 + $0x78] sm:$0xff]
    %v6134 = vld [vmem:[#allocation2] sm:$0x1]
    %v6136 = vlaneseq
    %v6137 = vshrl.u32 %v6136, 7
    %v6138 = vsub.s32 0, %v6137
    %v6139 = vrot.slane %v6134, %v6138
    %6141 = vmatprep.subr.mxu0 0.0
    %6142 = vmatpush1.msra.mxu0 %v6118
    %6143 = vmatprep.subr.mxu0 0.0
    %6144 = vmatpush1.msra.mxu0 %v6119
    %6145 = vmatprep.subr.mxu0 0.0
    %6146 = vmatpush1.msra.mxu0 %v6120
    %6147 = vmatprep.subr.mxu0 0.0
    %6148 = vmatpush1.msra.mxu0 %v6121
    %6149 = vmatprep.subr.mxu0 0.0
    %6150 = vmatpush1.msra.mxu0 %v6122
    %6151 = vmatprep.subr.mxu0 0.0
    %6152 = vmatpush1.msra.mxu0 %v6123
    %6153 = vmatprep.subr.mxu0 0.0
    %6154 = vmatpush1.msra.mxu0 %v6124
    %6155 = vmatprep.subr.mxu0 0.0
    %6156 = vmatpush1.msra.mxu0 %v6125
    %6157 = vmatprep.subr.mxu0 0.0
    %6158 = vmatpush1.msra.mxu0 %v6126
    %6159 = vmatprep.subr.mxu0 0.0
    %6160 = vmatpush1.msra.mxu0 %v6127
    %6161 = vmatprep.subr.mxu0 0.0
    %6162 = vmatpush1.msra.mxu0 %v6128
    %6163 = vmatprep.subr.mxu0 0.0
    %6164 = vmatpush1.msra.mxu0 %v6129
    %6165 = vmatprep.subr.mxu0 0.0
    %6166 = vmatpush1.msra.mxu0 %v6130
    %6167 = vmatprep.subr.mxu0 0.0
    %6168 = vmatpush1.msra.mxu0 %v6131
    %6169 = vmatprep.subr.mxu0 0.0
    %6170 = vmatpush1.msra.mxu0 %v6132
    %6171 = vmatprep.subr.mxu0 0.0
    %6172 = vmatpush1.msra.mxu0 %v6133
    %6173 = vmatprep.subr.mxu0 0.0
    %6174 = vmatpush1.msra.mxu0 0.0
    %6175 = vmatprep.subr.mxu0 0.0
    %6176 = vmatpush1.msra.mxu0 0.0
    %6177 = vmatprep.subr.mxu0 0.0
    %6178 = vmatpush1.msra.mxu0 0.0
    %6179 = vmatprep.subr.mxu0 0.0
    %6180 = vmatpush1.msra.mxu0 0.0
    %6181 = vmatprep.subr.mxu0 0.0
    %6182 = vmatpush1.msra.mxu0 0.0
    %6183 = vmatprep.subr.mxu0 0.0
    %6184 = vmatpush1.msra.mxu0 0.0
    %6185 = vmatprep.subr.mxu0 0.0
    %6186 = vmatpush1.msra.mxu0 0.0
    %6187 = vmatprep.subr.mxu0 0.0
    %6188 = vmatpush1.msra.mxu0 0.0
    %6189 = vmatprep.subr.mxu0 0.0
    %6190 = vmatpush1.msra.mxu0 0.0
    %6191 = vmatprep.subr.mxu0 0.0
    %6192 = vmatpush1.msra.mxu0 0.0
    %6193 = vmatprep.subr.mxu0 0.0
    %6194 = vmatpush1.msra.mxu0 0.0
    %6195 = vmatprep.subr.mxu0 0.0
    %6196 = vmatpush1.msra.mxu0 0.0
    %6197 = vmatprep.subr.mxu0 0.0
    %6198 = vmatpush1.msra.mxu0 0.0
    %6199 = vmatprep.subr.mxu0 0.0
    %6200 = vmatpush1.msra.mxu0 0.0
    %6201 = vmatprep.subr.mxu0 0.0
    %6202 = vmatpush1.msra.mxu0 0.0
    %6203 = vmatprep.subr.mxu0 0.0
    %6204 = vmatpush1.msra.mxu0 0.0
    %6205 = vmatprep.mubr.f32.mxu0 0.0
    %6206 = vmatmul.mubr.f32.gmra.mrb[0].mxu0 %v6117
    %v6207 = vpop.f32.mrb[0].mxu0
    %v6208 = vadd.f32 %v6139, %v6207
    %v6209 = vpop.f32.mrb[0].mxu0
    %6210 = vdwg.mxu0
    %vm6211 = vcmask 1024
    %6212 = vst.msk [vmem:[%s59] sm:$0x3] %vm6211, %v6208
    // Predicated region
    $region110: #{tpu_custom_call.1} parent=1 // pred_check
      _
    $region111: #{tpu_custom_call.1} parent=1 // pred_check_branch
      %6214 = sbr.rel (0) target = $region113
    $region112: #{tpu_custom_call.1} parent=1 // pred_region
      %s6216 = ssub.s32 256, 256
      %6217 = vsyncadd [#allocation4], %s6216
      %s6218 = sshll.u32 [#allocation3], 4
      %s6219 = int_to_ptr.vmem [resolvable:$true] %s6218
      %6224 = dma.vmem_to_hbm [thread:$0]  %s6219, 256, %s55, [#allocation4], 128, 128, 8
    $region113: #{tpu_custom_call.1} parent=1 // pred_fallthru
      _
    // Predicated region
    $region114: #{tpu_custom_call.1} parent=1 // pred_check
      _
    $region115: #{tpu_custom_call.1} parent=1 // pred_check_branch
      %6226 = sbr.rel (0) target = $region117
    $region116: #{tpu_custom_call.1} parent=1 // pred_region
      %s6228 = ssub.s32 32, 32
      %6229 = vsyncadd [#allocation6], %s6228
      %s6231 = sshll.u32 [#allocation5], 4
      %s6232 = int_to_ptr.vmem [resolvable:$true] %s6231
      %6234 = dma.vmem_to_hbm [thread:$0]  %s6232, 32, %s57, [#allocation6]
    $region117: #{tpu_custom_call.1} parent=1 // pred_fallthru
      _
    // Predicated region
    $region118: #{tpu_custom_call.1} parent=1 // pred_check
      _
    $region119: #{tpu_custom_call.1} parent=1 // pred_check_branch
      %6236 = sbr.rel (0) target = $region121
    $region120: #{tpu_custom_call.1} parent=1 // pred_region
      _
    $region121: #{tpu_custom_call.1} parent=1 // pred_fallthru
      _
    // Predicated region
    $region122: #{tpu_custom_call.1} parent=1 // pred_check
      _
    $region123: #{tpu_custom_call.1} parent=1 // pred_check_branch
      %6238 = sbr.rel (0) target = $region125
    $region124: #{tpu_custom_call.1} parent=1 // pred_region
      %6239 = dma.done [#allocation4], 256
    $region125: #{tpu_custom_call.1} parent=1 // pred_fallthru
      _
    // Predicated region
    $region126: #{tpu_custom_call.1} parent=1 // pred_check
      _
    $region127: #{tpu_custom_call.1} parent=1 // pred_check_branch
      %6241 = sbr.rel (0) target = $region129
    $region128: #{tpu_custom_call.1} parent=1 // pred_region
      %6242 = dma.done [#allocation6], 32
    $region129: #{tpu_custom_call.1} parent=1 // pred_fallthru
      _
    // Predicated region
    $region130: #{tpu_custom_call.1} parent=1 // pred_check
      _
    $region131: #{tpu_custom_call.1} parent=1 // pred_check_branch
      %6244 = sbr.rel (0) target = $region133
    $region132: #{tpu_custom_call.1} parent=1 // pred_region
      _
    $region133: #{tpu_custom_call.1} parent=1 // pred_fallthru
      _
    %6245 = vsyncpa [#allocation4], 1
    %6246 = vsyncpa [#allocation6], 1

</llo_original>
